<compile_context>
chip_gen: v7x
topology: tpu7x:2x2x1
jax: 0.10.0
libtpu: 0.0.40
codegen_flags: <defaults>
</compile_context>

<pallas_src>
import jax
import jax.numpy as jnp
from jax.experimental import pallas as pl
from jax.experimental.pallas import tpu as pltpu

N_PHYS = 1000   # rows of Ur (logical physical grid size)
H_MU = 10       # mu_map hidden/output width
H1 = 1000       # linear_relu_stack hidden/output width (logical)
NP = 1024       # lane-dense padded width used inside the kernel


def _round_up(n, m):
    return -(-n // m) * m


def nn1_kernel(x_ref, mu_ref, ur_t_ref,
               wmu1_ref, bmu1_ref, wmu2_t_ref, bmu2_ref,
               w3a_t_ref, w3b_t_ref, b3_ref, w4_t_ref,
               out_ref):
    # ---- x branch: front(Ur @ x.T).T == front(x @ Ur.T); front(v) = sigmoid(-v)
    x = x_ref[...]                                                    # (TB, r) f32
    x_phys = jnp.dot(x, ur_t_ref[...],
                     preferred_element_type=jnp.float32)              # (TB, NP)
    front = jax.nn.sigmoid(-x_phys)                                   # (TB, NP)

    # ---- mu branch: Sigmoid(Linear(1,10)) -> Sigmoid(Linear(10,10))
    mu = mu_ref[...]                                                  # (TB, 1)
    # Linear(1,10): contraction dim is 1 -> broadcast multiply.
    h1 = jax.nn.sigmoid(mu * wmu1_ref[...] + bmu1_ref[...])           # (TB, 10)
    y = jax.nn.sigmoid(jnp.dot(h1, wmu2_t_ref[...],
                               preferred_element_type=jnp.float32)
                       + bmu2_ref[...])                               # (TB, 10)

    # ---- z = cat([front, y]); Linear(1010,1000) split into two matmuls (exact).
    pre = (jnp.dot(front.astype(jnp.bfloat16), w3a_t_ref[...],
                   preferred_element_type=jnp.float32)                # (TB, NP)
           + jnp.dot(y, w3b_t_ref[...],
                     preferred_element_type=jnp.float32)              # (TB, NP)
           + b3_ref[...])
    h = jax.nn.sigmoid(pre)                                           # (TB, NP)

    # ---- Linear(1000,1000,bias=False) + ReLU   (padded cols are exactly 0)
    out_ref[...] = jnp.maximum(
        jnp.dot(h.astype(jnp.bfloat16), w4_t_ref[...],
                preferred_element_type=jnp.float32), 0.0)             # (TB, NP)


def make_params(key, r):
    """Deterministic synthetic parameters with the module's shapes."""
    ks = jax.random.split(key, 8)
    s = 0.1
    return dict(
        Ur=jax.random.normal(ks[0], (N_PHYS, r), jnp.float32) * s,
        W_mu1=jax.random.normal(ks[1], (H_MU, 1), jnp.float32) * s,        # Linear(1,10).weight
        b_mu1=jax.random.normal(ks[2], (H_MU,), jnp.float32) * s,
        W_mu2=jax.random.normal(ks[3], (H_MU, H_MU), jnp.float32) * s,     # Linear(10,10).weight
        b_mu2=jax.random.normal(ks[4], (H_MU,), jnp.float32) * s,
        W3=jax.random.normal(ks[5], (H1, N_PHYS + H_MU), jnp.float32) * s, # Linear(1010,1000).weight
        b3=jax.random.normal(ks[6], (H1,), jnp.float32) * s,
        W4=jax.random.normal(ks[7], (H1, H1), jnp.float32) * s,            # Linear(1000,1000,bias=False).weight
    )


def prepare_params(params):
    """One-time preprocessing (hoisted out of the per-call hot path):
    transpose to (in,out), zero-pad 1000 -> 1024, cast the big mats to bf16.
    Zero padding on the contraction rows makes the padded lanes contribute 0."""
    Ur = params["Ur"]
    r = Ur.shape[1]

    ur_t = jnp.zeros((r, NP), jnp.float32).at[:, :N_PHYS].set(Ur.T)            # (r, 1024)
    wmu1 = params["W_mu1"].T                                                   # (1, 10)
    bmu1 = params["b_mu1"].reshape(1, H_MU)                                    # (1, 10)
    wmu2_t = params["W_mu2"].T                                                 # (10, 10)
    bmu2 = params["b_mu2"].reshape(1, H_MU)                                    # (1, 10)

    W3 = params["W3"]
    w3a = jnp.zeros((NP, NP), jnp.float32).at[:N_PHYS, :H1].set(W3[:, :N_PHYS].T)
    w3b = jnp.zeros((H_MU, NP), jnp.float32).at[:, :H1].set(W3[:, N_PHYS:].T)
    b3 = jnp.zeros((1, NP), jnp.float32).at[:, :H1].set(params["b3"])
    w4 = jnp.zeros((NP, NP), jnp.float32).at[:H1, :H1].set(params["W4"].T)

    return dict(
        ur_t=ur_t,
        wmu1=wmu1, bmu1=bmu1, wmu2_t=wmu2_t, bmu2=bmu2,
        w3a_t=w3a.astype(jnp.bfloat16),   # streamed as bf16 (mem-bound)
        w3b_t=w3b,                        # tiny, keep f32
        b3=b3,
        w4_t=w4.astype(jnp.bfloat16),     # streamed as bf16
    )


def neural_network1_forward(x, mu, prep, *, tb=256):
    """x: (B, r) f32, mu: (B, 1) f32, prep: output of prepare_params()."""
    B, r = x.shape
    B8 = _round_up(max(B, 8), 8)          # f32 sublane multiple
    if B8 <= tb:
        TB, B_pad = B8, B8                # single batch tile for small B
    else:
        TB, B_pad = tb, _round_up(B, tb)
    if B_pad != B:
        x = jnp.pad(x, ((0, B_pad - B), (0, 0)))
        mu = jnp.pad(mu, ((0, B_pad - B), (0, 0)))

    grid = (B_pad // TB,)

    def batch_spec(w):
        return pl.BlockSpec((TB, w), lambda i: (i, 0))

    def const_spec(shape):
        # weights: same block every grid step -> DMA'd once, VMEM-resident
        return pl.BlockSpec(shape, lambda i: (0, 0))

    out = pl.pallas_call(
        nn1_kernel,
        out_shape=jax.ShapeDtypeStruct((B_pad, NP), jnp.float32),
        grid=grid,
        in_specs=[
            batch_spec(r),                 # x
            batch_spec(1),                 # mu
            const_spec((r, NP)),           # ur_t
            const_spec((1, H_MU)),         # wmu1
            const_spec((1, H_MU)),         # bmu1
            const_spec((H_MU, H_MU)),      # wmu2_t
            const_spec((1, H_MU)),         # bmu2
            const_spec((NP, NP)),          # w3a_t (bf16)
            const_spec((H_MU, NP)),        # w3b_t
            const_spec((1, NP)),           # b3
            const_spec((NP, NP)),          # w4_t (bf16)
        ],
        out_specs=batch_spec(NP),
        compiler_params=pltpu.CompilerParams(
            dimension_semantics=("parallel",),   # v7x: shard batch tiles over 2 TCs
            vmem_limit_bytes=32 << 20),          # ~14 MiB footprint + headroom
    )(x, mu, prep["ur_t"], prep["wmu1"], prep["bmu1"], prep["wmu2_t"],
      prep["bmu2"], prep["w3a_t"], prep["w3b_t"], prep["b3"], prep["w4_t"])

    return out[:B, :H1]                    # drop batch + lane padding


def reference_forward(x, mu, params):
    """Pure-JAX (f32) mirror of the PyTorch forward, for correctness check."""
    x_phys = params["Ur"] @ x.T                              # (N, B)
    front = (0.5 * (1.0 - jnp.tanh(x_phys / 2.0))).T         # (B, N)
    h1 = jax.nn.sigmoid(mu @ params["W_mu1"].T + params["b_mu1"])
    y = jax.nn.sigmoid(h1 @ params["W_mu2"].T + params["b_mu2"])
    z = jnp.concatenate([front, y], axis=1)                  # (B, 1010)
    h = jax.nn.sigmoid(z @ params["W3"].T + params["b3"])
    return jnp.maximum(h @ params["W4"].T, 0.0)


if __name__ == "__main__":
    key = jax.random.PRNGKey(0)
    k_param, k_x, k_mu = jax.random.split(key, 3)

    B, r = 2, 8                       # small batch, small ROM rank
    params = make_params(k_param, r)
    prep = prepare_params(params)     # one-time weight prep, outside hot path

    x = jax.random.normal(k_x, (B, r), jnp.float32)
    mu = jax.random.normal(k_mu, (B, 1), jnp.float32)

    out = jax.block_until_ready(neural_network1_forward(x, mu, prep))

    ref = reference_forward(x, mu, params)
    assert out.shape == (B, H1), out.shape
    # Tolerance loosened vs f32 reference because the two big weights are
    # streamed as bf16 (f32 accumulation on the MXU).
    assert jnp.allclose(out, ref, atol=1e-1, rtol=1e-2), \
        float(jnp.max(jnp.abs(out - ref)))

    print("KERNEL_OK")
</pallas_src>

<mosaic_0001>
module attributes {stable_mosaic.version = 11 : i64} {
  func.func @nn1_kernel(%arg0: i32, %arg1: memref<8x8xf32, #tpu.memory_space<vmem>>, %arg2: memref<8x1xf32, #tpu.memory_space<vmem>>, %arg3: memref<8x1024xf32, #tpu.memory_space<vmem>>, %arg4: memref<1x10xf32, #tpu.memory_space<vmem>>, %arg5: memref<1x10xf32, #tpu.memory_space<vmem>>, %arg6: memref<10x10xf32, #tpu.memory_space<vmem>>, %arg7: memref<1x10xf32, #tpu.memory_space<vmem>>, %arg8: memref<1024x1024xbf16, #tpu.memory_space<vmem>>, %arg9: memref<10x1024xf32, #tpu.memory_space<vmem>>, %arg10: memref<1x1024xf32, #tpu.memory_space<vmem>>, %arg11: memref<1024x1024xbf16, #tpu.memory_space<vmem>>, %arg12: memref<8x1024xf32, #tpu.memory_space<vmem>>) attributes {dimension_semantics = [#tpu.dimension_semantics<parallel>], iteration_bounds = array<i64: 1>, scalar_prefetch = 0 : i64, scratch_operands = 0 : i64, tpu.core_type = #tpu.core_type<tc>, window_params = [{transform_indices = @transform_0, window_bounds = array<i64: 8, 8>}, {transform_indices = @transform_1, window_bounds = array<i64: 8, 1>}, {pipeline_mode = #tpu.pipeline_mode<synchronous>, transform_indices = @transform_2, window_bounds = array<i64: 8, 1024>}, {pipeline_mode = #tpu.pipeline_mode<synchronous>, transform_indices = @transform_3, window_bounds = array<i64: 1, 10>}, {pipeline_mode = #tpu.pipeline_mode<synchronous>, transform_indices = @transform_4, window_bounds = array<i64: 1, 10>}, {pipeline_mode = #tpu.pipeline_mode<synchronous>, transform_indices = @transform_5, window_bounds = array<i64: 10, 10>}, {pipeline_mode = #tpu.pipeline_mode<synchronous>, transform_indices = @transform_6, window_bounds = array<i64: 1, 10>}, {pipeline_mode = #tpu.pipeline_mode<synchronous>, transform_indices = @transform_7, window_bounds = array<i64: 1024, 1024>}, {pipeline_mode = #tpu.pipeline_mode<synchronous>, transform_indices = @transform_8, window_bounds = array<i64: 10, 1024>}, {pipeline_mode = #tpu.pipeline_mode<synchronous>, transform_indices = @transform_9, window_bounds = array<i64: 1, 1024>}, {pipeline_mode = #tpu.pipeline_mode<synchronous>, transform_indices = @transform_10, window_bounds = array<i64: 1024, 1024>}, {transform_indices = @transform_11, window_bounds = array<i64: 8, 1024>}]} {
    %c0 = arith.constant 0 : index
    %c0_0 = arith.constant 0 : index
    %0 = vector.load %arg1[%c0, %c0_0] : memref<8x8xf32, #tpu.memory_space<vmem>>, vector<8x8xf32>
    %c0_1 = arith.constant 0 : index
    %c0_2 = arith.constant 0 : index
    %1 = vector.load %arg3[%c0_1, %c0_2] : memref<8x1024xf32, #tpu.memory_space<vmem>>, vector<8x1024xf32>
    %cst = arith.constant dense<0.000000e+00> : vector<8x1024xf32>
    %2 = tpu.matmul %0, %1, %cst {dimension_numbers = #tpu.dot_dimension_numbers<[1], [0], [0], [1], [0, 0, 1, 1], [], []>} : vector<8x8xf32>, vector<8x1024xf32>, vector<8x1024xf32> -> vector<8x1024xf32>
    %cst_3 = arith.constant 0.000000e+00 : f32
    %3 = vector.broadcast %cst_3 : f32 to vector<8x1024xf32>
    %4 = arith.subf %3, %2 : vector<8x1024xf32>
    %5 = arith.negf %4 : vector<8x1024xf32>
    %6 = math.exp %5 : vector<8x1024xf32>
    %cst_4 = arith.constant 1.000000e+00 : f32
    %7 = vector.broadcast %cst_4 : f32 to vector<8x1024xf32>
    %8 = arith.addf %7, %6 : vector<8x1024xf32>
    %9 = arith.divf %7, %8 : vector<8x1024xf32>
    %c0_5 = arith.constant 0 : index
    %c0_6 = arith.constant 0 : index
    %10 = vector.load %arg2[%c0_5, %c0_6] : memref<8x1xf32, #tpu.memory_space<vmem>>, vector<8x1xf32>
    %c0_7 = arith.constant 0 : index
    %c0_8 = arith.constant 0 : index
    %11 = vector.load %arg4[%c0_7, %c0_8] : memref<1x10xf32, #tpu.memory_space<vmem>>, vector<1x10xf32>
    %12 = vector.broadcast %10 : vector<8x1xf32> to vector<8x10xf32>
    %13 = vector.broadcast %11 : vector<1x10xf32> to vector<8x10xf32>
    %14 = arith.mulf %12, %13 : vector<8x10xf32>
    %c0_9 = arith.constant 0 : index
    %c0_10 = arith.constant 0 : index
    %15 = vector.load %arg5[%c0_9, %c0_10] : memref<1x10xf32, #tpu.memory_space<vmem>>, vector<1x10xf32>
    %16 = vector.broadcast %15 : vector<1x10xf32> to vector<8x10xf32>
    %17 = arith.addf %14, %16 : vector<8x10xf32>
    %18 = arith.negf %17 : vector<8x10xf32>
    %19 = math.exp %18 : vector<8x10xf32>
    %cst_11 = arith.constant 1.000000e+00 : f32
    %20 = vector.broadcast %cst_11 : f32 to vector<8x10xf32>
    %21 = arith.addf %20, %19 : vector<8x10xf32>
    %22 = arith.divf %20, %21 : vector<8x10xf32>
    %c0_12 = arith.constant 0 : index
    %c0_13 = arith.constant 0 : index
    %23 = vector.load %arg6[%c0_12, %c0_13] : memref<10x10xf32, #tpu.memory_space<vmem>>, vector<10x10xf32>
    %cst_14 = arith.constant dense<0.000000e+00> : vector<8x10xf32>
    %24 = tpu.matmul %22, %23, %cst_14 {dimension_numbers = #tpu.dot_dimension_numbers<[1], [0], [0], [1], [0, 0, 1, 1], [], []>} : vector<8x10xf32>, vector<10x10xf32>, vector<8x10xf32> -> vector<8x10xf32>
    %c0_15 = arith.constant 0 : index
    %c0_16 = arith.constant 0 : index
    %25 = vector.load %arg7[%c0_15, %c0_16] : memref<1x10xf32, #tpu.memory_space<vmem>>, vector<1x10xf32>
    %26 = vector.broadcast %25 : vector<1x10xf32> to vector<8x10xf32>
    %27 = arith.addf %24, %26 : vector<8x10xf32>
    %28 = arith.negf %27 : vector<8x10xf32>
    %29 = math.exp %28 : vector<8x10xf32>
    %cst_17 = arith.constant 1.000000e+00 : f32
    %30 = vector.broadcast %cst_17 : f32 to vector<8x10xf32>
    %31 = arith.addf %30, %29 : vector<8x10xf32>
    %32 = arith.divf %30, %31 : vector<8x10xf32>
    %33 = arith.truncf %9 : vector<8x1024xf32> to vector<8x1024xbf16>
    %c0_18 = arith.constant 0 : index
    %c0_19 = arith.constant 0 : index
    %34 = vector.load %arg8[%c0_18, %c0_19] : memref<1024x1024xbf16, #tpu.memory_space<vmem>>, vector<1024x1024xbf16>
    %cst_20 = arith.constant dense<0.000000e+00> : vector<8x1024xf32>
    %35 = tpu.matmul %33, %34, %cst_20 {dimension_numbers = #tpu.dot_dimension_numbers<[1], [0], [0], [1], [0, 0, 1, 1], [], []>} : vector<8x1024xbf16>, vector<1024x1024xbf16>, vector<8x1024xf32> -> vector<8x1024xf32>
    %c0_21 = arith.constant 0 : index
    %c0_22 = arith.constant 0 : index
    %36 = vector.load %arg9[%c0_21, %c0_22] : memref<10x1024xf32, #tpu.memory_space<vmem>>, vector<10x1024xf32>
    %cst_23 = arith.constant dense<0.000000e+00> : vector<8x1024xf32>
    %37 = tpu.matmul %32, %36, %cst_23 {dimension_numbers = #tpu.dot_dimension_numbers<[1], [0], [0], [1], [0, 0, 1, 1], [], []>} : vector<8x10xf32>, vector<10x1024xf32>, vector<8x1024xf32> -> vector<8x1024xf32>
    %38 = arith.addf %35, %37 : vector<8x1024xf32>
    %c0_24 = arith.constant 0 : index
    %c0_25 = arith.constant 0 : index
    %39 = vector.load %arg10[%c0_24, %c0_25] : memref<1x1024xf32, #tpu.memory_space<vmem>>, vector<1x1024xf32>
    %40 = vector.broadcast %39 : vector<1x1024xf32> to vector<8x1024xf32>
    %41 = arith.addf %38, %40 : vector<8x1024xf32>
    %42 = arith.negf %41 : vector<8x1024xf32>
    %43 = math.exp %42 : vector<8x1024xf32>
    %cst_26 = arith.constant 1.000000e+00 : f32
    %44 = vector.broadcast %cst_26 : f32 to vector<8x1024xf32>
    %45 = arith.addf %44, %43 : vector<8x1024xf32>
    %46 = arith.divf %44, %45 : vector<8x1024xf32>
    %47 = arith.truncf %46 : vector<8x1024xf32> to vector<8x1024xbf16>
    %c0_27 = arith.constant 0 : index
    %c0_28 = arith.constant 0 : index
    %48 = vector.load %arg11[%c0_27, %c0_28] : memref<1024x1024xbf16, #tpu.memory_space<vmem>>, vector<1024x1024xbf16>
    %cst_29 = arith.constant dense<0.000000e+00> : vector<8x1024xf32>
    %49 = tpu.matmul %47, %48, %cst_29 {dimension_numbers = #tpu.dot_dimension_numbers<[1], [0], [0], [1], [0, 0, 1, 1], [], []>} : vector<8x1024xbf16>, vector<1024x1024xbf16>, vector<8x1024xf32> -> vector<8x1024xf32>
    %cst_30 = arith.constant 0.000000e+00 : f32
    %50 = vector.broadcast %cst_30 : f32 to vector<8x1024xf32>
    %51 = arith.maximumf %49, %50 : vector<8x1024xf32>
    %c0_31 = arith.constant 0 : index
    %c0_32 = arith.constant 0 : index
    %52 = vector.load %arg12[%c0_31, %c0_32] : memref<8x1024xf32, #tpu.memory_space<vmem>>, vector<8x1024xf32>
    tpu.vector_store %arg12[%c0_31, %c0_32], %51 {strides = array<i32>} : memref<8x1024xf32, #tpu.memory_space<vmem>>, vector<8x1024xf32>,
    return
  }
  func.func @transform_0(%arg0: i32) -> (i32, i32) {
    %c0_i32 = arith.constant 0 : i32
    %c0_i32_0 = arith.constant 0 : i32
    return %arg0, %c0_i32 : i32, i32
  }
  func.func @transform_1(%arg0: i32) -> (i32, i32) {
    %c0_i32 = arith.constant 0 : i32
    %c0_i32_0 = arith.constant 0 : i32
    return %arg0, %c0_i32 : i32, i32
  }
  func.func @transform_2(%arg0: i32) -> (i32, i32) {
    %c0_i32 = arith.constant 0 : i32
    %c0_i32_0 = arith.constant 0 : i32
    %c0_i32_1 = arith.constant 0 : i32
    return %c0_i32, %c0_i32_0 : i32, i32
  }
  func.func @transform_3(%arg0: i32) -> (i32, i32) {
    %c0_i32 = arith.constant 0 : i32
    %c0_i32_0 = arith.constant 0 : i32
    %c0_i32_1 = arith.constant 0 : i32
    return %c0_i32, %c0_i32_0 : i32, i32
  }
  func.func @transform_4(%arg0: i32) -> (i32, i32) {
    %c0_i32 = arith.constant 0 : i32
    %c0_i32_0 = arith.constant 0 : i32
    %c0_i32_1 = arith.constant 0 : i32
    return %c0_i32, %c0_i32_0 : i32, i32
  }
  func.func @transform_5(%arg0: i32) -> (i32, i32) {
    %c0_i32 = arith.constant 0 : i32
    %c0_i32_0 = arith.constant 0 : i32
    %c0_i32_1 = arith.constant 0 : i32
    return %c0_i32, %c0_i32_0 : i32, i32
  }
  func.func @transform_6(%arg0: i32) -> (i32, i32) {
    %c0_i32 = arith.constant 0 : i32
    %c0_i32_0 = arith.constant 0 : i32
    %c0_i32_1 = arith.constant 0 : i32
    return %c0_i32, %c0_i32_0 : i32, i32
  }
  func.func @transform_7(%arg0: i32) -> (i32, i32) {
    %c0_i32 = arith.constant 0 : i32
    %c0_i32_0 = arith.constant 0 : i32
    %c0_i32_1 = arith.constant 0 : i32
    return %c0_i32, %c0_i32_0 : i32, i32
  }
  func.func @transform_8(%arg0: i32) -> (i32, i32) {
    %c0_i32 = arith.constant 0 : i32
    %c0_i32_0 = arith.constant 0 : i32
    %c0_i32_1 = arith.constant 0 : i32
    return %c0_i32, %c0_i32_0 : i32, i32
  }
  func.func @transform_9(%arg0: i32) -> (i32, i32) {
    %c0_i32 = arith.constant 0 : i32
    %c0_i32_0 = arith.constant 0 : i32
    %c0_i32_1 = arith.constant 0 : i32
    return %c0_i32, %c0_i32_0 : i32, i32
  }
  func.func @transform_10(%arg0: i32) -> (i32, i32) {
    %c0_i32 = arith.constant 0 : i32
    %c0_i32_0 = arith.constant 0 : i32
    %c0_i32_1 = arith.constant 0 : i32
    return %c0_i32, %c0_i32_0 : i32, i32
  }
  func.func @transform_11(%arg0: i32) -> (i32, i32) {
    %c0_i32 = arith.constant 0 : i32
    %c0_i32_0 = arith.constant 0 : i32
    return %arg0, %c0_i32 : i32, i32
  }
}

</mosaic_0001>

<llo_original>
// kernel: tpu_custom_call.1
$region0: #{tpu_custom_call.1}
  #allocation0 [shape = 'u32[]', space=smem, size = 0x4, offset = 0x4, fixed_abs, tag = 'smem constant byte address 0x4 - core index']
  #allocation1 [shape = 'u32[144,128]{1,0:T(1,128)}', space=vmem, size = 0x12000, scoped, tag = 'internal scratch']
  %s0 = inlined_call_operand.hbm [shape: f32[8,8], index: 0, kind: input, shape index: {}]
  %s1 = inlined_call_operand.vmem [shape: f32[8,1], index: 1, kind: input, shape index: {}]
  %s2 = inlined_call_operand.hbm [shape: f32[8,1024], index: 2, kind: input, shape index: {}]
  %s3 = inlined_call_operand.hbm [shape: f32[1,10], index: 3, kind: input, shape index: {}]
  %s4 = inlined_call_operand.hbm [shape: f32[1,10], index: 4, kind: input, shape index: {}]
  %s5 = inlined_call_operand.hbm [shape: f32[10,10], index: 5, kind: input, shape index: {}]
  %s6 = inlined_call_operand.hbm [shape: f32[1,10], index: 6, kind: input, shape index: {}]
  %s7 = inlined_call_operand.hbm [shape: bf16[1024,1024], index: 7, kind: input, shape index: {}]
  %s8 = inlined_call_operand.hbm [shape: f32[10,1024], index: 8, kind: input, shape index: {}]
  %s9 = inlined_call_operand.hbm [shape: f32[1,1024], index: 9, kind: input, shape index: {}]
  %s10 = inlined_call_operand.hbm [shape: bf16[1024,1024], index: 10, kind: input, shape index: {}]
  %s11 = inlined_call_operand.hbm [shape: f32[8,1024], index: 11, kind: output, shape index: {}]
  %s12 = sld [smem:[#allocation0]]
  $region94: #{tpu_custom_call.1} parent=0
    _
  %s14 = ssub.s32 1, %s12
  %s15 = scalar_select 0, %s14, %s12
  $region1: #{tpu_custom_call.1} parent=0
    #allocation2 [shape = 'u8[4096]{0}', space=vmem, size = 0x1000, scoped, tag = 'input window, operand 0, single buffered']
    #allocation3 [shape = 's32[1]{0}', space=sflag, size = 0x4, scoped, tag = 'scoped memory for tpu_custom_call.1']
    #allocation4 [shape = 's32[1]{0}', space=sflag, size = 0x4, scoped, tag = 'scoped memory for tpu_custom_call.1']
    #allocation5 [shape = 'u8[32768]{0}', space=vmem, size = 0x8000, scoped, tag = 'input window, operand 2, single buffered']
    #allocation6 [shape = 's32[1]{0}', space=sflag, size = 0x4, scoped, tag = 'scoped memory for tpu_custom_call.1']
    #allocation7 [shape = 'u8[512]{0}', space=vmem, size = 0x400, scoped, tag = 'input window, operand 3, single buffered']
    #allocation8 [shape = 'u8[512]{0}', space=vmem, size = 0x400, scoped, tag = 'input window, operand 4, single buffered']
    #allocation9 [shape = 's32[1]{0}', space=sflag, size = 0x4, scoped, tag = 'scoped memory for tpu_custom_call.1']
    #allocation10 [shape = 'u8[8192]{0}', space=vmem, size = 0x2000, scoped, tag = 'input window, operand 5, single buffered']
    #allocation11 [shape = 'u8[512]{0}', space=vmem, size = 0x400, scoped, tag = 'input window, operand 6, single buffered']
    #allocation12 [shape = 's32[1]{0}', space=sflag, size = 0x4, scoped, tag = 'scoped memory for tpu_custom_call.1']
    #allocation13 [shape = 'u8[2097152]{0}', space=vmem, size = 0x200000, scoped, tag = 'input window, operand 7, single buffered']
    #allocation14 [shape = 'u8[65536]{0}', space=vmem, size = 0x10000, scoped, tag = 'input window, operand 8, single buffered']
    #allocation15 [shape = 's32[1]{0}', space=sflag, size = 0x4, scoped, tag = 'scoped memory for tpu_custom_call.1']
    #allocation16 [shape = 'u8[4096]{0}', space=vmem, size = 0x1000, scoped, tag = 'input window, operand 9, single buffered']
    #allocation17 [shape = 'u8[2097152]{0}', space=vmem, size = 0x200000, scoped, tag = 'input window, operand 10, single buffered']
    #allocation18 [shape = 's32[1]{0}', space=sflag, size = 0x4, scoped, tag = 'scoped memory for tpu_custom_call.1']
    #allocation19 [shape = 'u8[32768]{0}', space=vmem, size = 0x8000, scoped, tag = 'output window, operand 0, single buffered']
    %16 = vsyncpa [#allocation3], 0
    %17 = vsyncpa [#allocation6], 0
    %18 = vsyncpa [#allocation9], 0
    %19 = vsyncpa [#allocation12], 0
    %20 = vsyncpa [#allocation15], 0
    %21 = vsyncpa [#allocation18], 0
    %22 = vsyncpa [#allocation4], 0
    // Predicated region
    $region2: #{tpu_custom_call.1} parent=1 // pred_check
      _
    $region3: #{tpu_custom_call.1} parent=1 // pred_check_branch
      %24 = sbr.rel (0) target = $region5
    $region4: #{tpu_custom_call.1} parent=1 // pred_region
      %s26 = ssub.s32 128, 128
      %27 = vsyncadd [#allocation3], %s26
      %s29 = sshll.u32 [#allocation2], 4
      %s30 = int_to_ptr.vmem [resolvable:$true] %s29
      %32 = dma.hbm_to_vmem [thread:$0]  %s0, 128, %s30, [#allocation3]
    $region5: #{tpu_custom_call.1} parent=1 // pred_fallthru
      _
    // Predicated region
    $region6: #{tpu_custom_call.1} parent=1 // pred_check
      _
    $region7: #{tpu_custom_call.1} parent=1 // pred_check_branch
      %34 = sbr.rel (0) target = $region9
    $region8: #{tpu_custom_call.1} parent=1 // pred_region
      _
    $region9: #{tpu_custom_call.1} parent=1 // pred_fallthru
      _
    // Predicated region
    $region10: #{tpu_custom_call.1} parent=1 // pred_check
      _
    $region11: #{tpu_custom_call.1} parent=1 // pred_check_branch
      %36 = sbr.rel (0) target = $region13
    $region12: #{tpu_custom_call.1} parent=1 // pred_region
      %s38 = ssub.s32 1024, 1024
      %39 = vsyncadd [#allocation6], %s38
      %s41 = sshll.u32 [#allocation5], 4
      %s42 = int_to_ptr.vmem [resolvable:$true] %s41
      %44 = dma.hbm_to_vmem [thread:$0]  %s2, 1024, %s42, [#allocation6]
    $region13: #{tpu_custom_call.1} parent=1 // pred_fallthru
      _
    // Predicated region
    $region14: #{tpu_custom_call.1} parent=1 // pred_check
      _
    $region15: #{tpu_custom_call.1} parent=1 // pred_check_branch
      %46 = sbr.rel (0) target = $region17
    $region16: #{tpu_custom_call.1} parent=1 // pred_region
      %s48 = ssub.s32 16, 16
      %49 = vsyncadd [#allocation6], %s48
      %s51 = sshll.u32 [#allocation7], 4
      %s52 = int_to_ptr.vmem [resolvable:$true] %s51
      %54 = dma.hbm_to_vmem [thread:$0]  %s3, 16, %s52, [#allocation6]
    $region17: #{tpu_custom_call.1} parent=1 // pred_fallthru
      _
    // Predicated region
    $region18: #{tpu_custom_call.1} parent=1 // pred_check
      _
    $region19: #{tpu_custom_call.1} parent=1 // pred_check_branch
      %56 = sbr.rel (0) target = $region21
    $region20: #{tpu_custom_call.1} parent=1 // pred_region
      %s58 = ssub.s32 16, 16
      %59 = vsyncadd [#allocation9], %s58
      %s61 = sshll.u32 [#allocation8], 4
      %s62 = int_to_ptr.vmem [resolvable:$true] %s61
      %64 = dma.hbm_to_vmem [thread:$0]  %s4, 16, %s62, [#allocation9]
    $region21: #{tpu_custom_call.1} parent=1 // pred_fallthru
      _
    // Predicated region
    $region22: #{tpu_custom_call.1} parent=1 // pred_check
      _
    $region23: #{tpu_custom_call.1} parent=1 // pred_check_branch
      %66 = sbr.rel (0) target = $region25
    $region24: #{tpu_custom_call.1} parent=1 // pred_region
      %s68 = ssub.s32 256, 256
      %69 = vsyncadd [#allocation9], %s68
      %s70 = sshll.u32 [#allocation10], 4
      %s71 = int_to_ptr.vmem [resolvable:$true] %s70
      %76 = dma.hbm_to_vmem [thread:$0]  %s5, 256, %s71, [#allocation9], 128, 128, 8
    $region25: #{tpu_custom_call.1} parent=1 // pred_fallthru
      _
    // Predicated region
    $region26: #{tpu_custom_call.1} parent=1 // pred_check
      _
    $region27: #{tpu_custom_call.1} parent=1 // pred_check_branch
      %78 = sbr.rel (0) target = $region29
    $region28: #{tpu_custom_call.1} parent=1 // pred_region
      %s80 = ssub.s32 16, 16
      %81 = vsyncadd [#allocation12], %s80
      %s83 = sshll.u32 [#allocation11], 4
      %s84 = int_to_ptr.vmem [resolvable:$true] %s83
      %86 = dma.hbm_to_vmem [thread:$0]  %s6, 16, %s84, [#allocation12]
    $region29: #{tpu_custom_call.1} parent=1 // pred_fallthru
      _
    // Predicated region
    $region30: #{tpu_custom_call.1} parent=1 // pred_check
      _
    $region31: #{tpu_custom_call.1} parent=1 // pred_check_branch
      %88 = sbr.rel (0) target = $region33
    $region32: #{tpu_custom_call.1} parent=1 // pred_region
      %s90 = ssub.s32 65536, 65536
      %91 = vsyncadd [#allocation12], %s90
      %s92 = sshll.u32 [#allocation13], 4
      %s93 = int_to_ptr.vmem [resolvable:$true] %s92
      %98 = dma.hbm_to_vmem [thread:$0]  %s7, 65536, %s93, [#allocation12], 512, 512, 32
    $region33: #{tpu_custom_call.1} parent=1 // pred_fallthru
      _
    // Predicated region
    $region34: #{tpu_custom_call.1} parent=1 // pred_check
      _
    $region35: #{tpu_custom_call.1} parent=1 // pred_check_branch
      %100 = sbr.rel (0) target = $region37
    $region36: #{tpu_custom_call.1} parent=1 // pred_region
      %s102 = ssub.s32 2048, 2048
      %103 = vsyncadd [#allocation15], %s102
      %s104 = sshll.u32 [#allocation14], 4
      %s105 = int_to_ptr.vmem [resolvable:$true] %s104
      %110 = dma.hbm_to_vmem [thread:$0]  %s8, 2048, %s105, [#allocation15], 1024, 1024, 64
    $region37: #{tpu_custom_call.1} parent=1 // pred_fallthru
      _
    // Predicated region
    $region38: #{tpu_custom_call.1} parent=1 // pred_check
      _
    $region39: #{tpu_custom_call.1} parent=1 // pred_check_branch
      %112 = sbr.rel (0) target = $region41
    $region40: #{tpu_custom_call.1} parent=1 // pred_region
      %s114 = ssub.s32 128, 128
      %115 = vsyncadd [#allocation15], %s114
      %s117 = sshll.u32 [#allocation16], 4
      %s118 = int_to_ptr.vmem [resolvable:$true] %s117
      %120 = dma.hbm_to_vmem [thread:$0]  %s9, 128, %s118, [#allocation15]
    $region41: #{tpu_custom_call.1} parent=1 // pred_fallthru
      _
    // Predicated region
    $region42: #{tpu_custom_call.1} parent=1 // pred_check
      _
    $region43: #{tpu_custom_call.1} parent=1 // pred_check_branch
      %122 = sbr.rel (0) target = $region45
    $region44: #{tpu_custom_call.1} parent=1 // pred_region
      %s124 = ssub.s32 65536, 65536
      %125 = vsyncadd [#allocation18], %s124
      %s126 = sshll.u32 [#allocation17], 4
      %s127 = int_to_ptr.vmem [resolvable:$true] %s126
      %132 = dma.hbm_to_vmem [thread:$0]  %s10, 65536, %s127, [#allocation18], 512, 512, 32
    $region45: #{tpu_custom_call.1} parent=1 // pred_fallthru
      _
    // Predicated region
    $region46: #{tpu_custom_call.1} parent=1 // pred_check
      _
    $region47: #{tpu_custom_call.1} parent=1 // pred_check_branch
      %134 = sbr.rel (0) target = $region49
    $region48: #{tpu_custom_call.1} parent=1 // pred_region
      %135 = dma.done [#allocation3], 128
    $region49: #{tpu_custom_call.1} parent=1 // pred_fallthru
      _
    // Predicated region
    $region50: #{tpu_custom_call.1} parent=1 // pred_check
      _
    $region51: #{tpu_custom_call.1} parent=1 // pred_check_branch
      %137 = sbr.rel (0) target = $region53
    $region52: #{tpu_custom_call.1} parent=1 // pred_region
      %138 = dma.done [#allocation6], 1024
    $region53: #{tpu_custom_call.1} parent=1 // pred_fallthru
      _
    // Predicated region
    $region54: #{tpu_custom_call.1} parent=1 // pred_check
      _
    $region55: #{tpu_custom_call.1} parent=1 // pred_check_branch
      %140 = sbr.rel (0) target = $region57
    $region56: #{tpu_custom_call.1} parent=1 // pred_region
      %141 = dma.done [#allocation6], 16
    $region57: #{tpu_custom_call.1} parent=1 // pred_fallthru
      _
    // Predicated region
    $region58: #{tpu_custom_call.1} parent=1 // pred_check
      _
    $region59: #{tpu_custom_call.1} parent=1 // pred_check_branch
      %143 = sbr.rel (0) target = $region61
    $region60: #{tpu_custom_call.1} parent=1 // pred_region
      %144 = dma.done [#allocation9], 16
    $region61: #{tpu_custom_call.1} parent=1 // pred_fallthru
      _
    // Predicated region
    $region62: #{tpu_custom_call.1} parent=1 // pred_check
      _
    $region63: #{tpu_custom_call.1} parent=1 // pred_check_branch
      %146 = sbr.rel (0) target = $region65
    $region64: #{tpu_custom_call.1} parent=1 // pred_region
      %147 = dma.done [#allocation9], 256
    $region65: #{tpu_custom_call.1} parent=1 // pred_fallthru
      _
    // Predicated region
    $region66: #{tpu_custom_call.1} parent=1 // pred_check
      _
    $region67: #{tpu_custom_call.1} parent=1 // pred_check_branch
      %149 = sbr.rel (0) target = $region69
    $region68: #{tpu_custom_call.1} parent=1 // pred_region
      %150 = dma.done [#allocation12], 16
    $region69: #{tpu_custom_call.1} parent=1 // pred_fallthru
      _
    // Predicated region
    $region70: #{tpu_custom_call.1} parent=1 // pred_check
      _
    $region71: #{tpu_custom_call.1} parent=1 // pred_check_branch
      %152 = sbr.rel (0) target = $region73
    $region72: #{tpu_custom_call.1} parent=1 // pred_region
      %153 = dma.done [#allocation12], 65536
    $region73: #{tpu_custom_call.1} parent=1 // pred_fallthru
      _
    // Predicated region
    $region74: #{tpu_custom_call.1} parent=1 // pred_check
      _
    $region75: #{tpu_custom_call.1} parent=1 // pred_check_branch
      %155 = sbr.rel (0) target = $region77
    $region76: #{tpu_custom_call.1} parent=1 // pred_region
      %156 = dma.done [#allocation15], 2048
    $region77: #{tpu_custom_call.1} parent=1 // pred_fallthru
      _
    // Predicated region
    $region78: #{tpu_custom_call.1} parent=1 // pred_check
      _
    $region79: #{tpu_custom_call.1} parent=1 // pred_check_branch
      %158 = sbr.rel (0) target = $region81
    $region80: #{tpu_custom_call.1} parent=1 // pred_region
      %159 = dma.done [#allocation15], 128
    $region81: #{tpu_custom_call.1} parent=1 // pred_fallthru
      _
    // Predicated region
    $region82: #{tpu_custom_call.1} parent=1 // pred_check
      _
    $region83: #{tpu_custom_call.1} parent=1 // pred_check_branch
      %161 = sbr.rel (0) target = $region85
    $region84: #{tpu_custom_call.1} parent=1 // pred_region
      %162 = dma.done [#allocation18], 65536
    $region85: #{tpu_custom_call.1} parent=1 // pred_fallthru
      _
    %v163 = vld [vmem:[#allocation2] sm:$0xff]
    %v164 = vld [vmem:[#allocation5] sm:$0xff]
    %v165 = vld [vmem:[#allocation5 + $0x8] sm:$0xff]
    %v166 = vld [vmem:[#allocation5 + $0x10] sm:$0xff]
    %v167 = vld [vmem:[#allocation5 + $0x18] sm:$0xff]
    %v168 = vld [vmem:[#allocation5 + $0x20] sm:$0xff]
    %v169 = vld [vmem:[#allocation5 + $0x28] sm:$0xff]
    %v170 = vld [vmem:[#allocation5 + $0x30] sm:$0xff]
    %v171 = vld [vmem:[#allocation5 + $0x38] sm:$0xff]
    %vm172 = vcmask 64512
    %v174 = vsel %vm172, %v163, 0
    %176 = vmatprep.subr.mxu0 %v165
    %177 = vmatpush1.msra.mxu0 %v164
    %178 = vmatprep.subr.mxu0 0.0
    %179 = vmatpush1.msra.mxu0 0.0
    %180 = vmatprep.subr.mxu0 0.0
    %181 = vmatpush1.msra.mxu0 0.0
    %182 = vmatprep.subr.mxu0 0.0
    %183 = vmatpush1.msra.mxu0 0.0
    %184 = vmatprep.subr.mxu0 0.0
    %185 = vmatpush1.msra.mxu0 0.0
    %186 = vmatprep.subr.mxu0 0.0
    %187 = vmatpush1.msra.mxu0 0.0
    %188 = vmatprep.subr.mxu0 0.0
    %189 = vmatpush1.msra.mxu0 0.0
    %190 = vmatprep.subr.mxu0 0.0
    %191 = vmatpush1.msra.mxu0 0.0
    %192 = vmatprep.subr.mxu0 0.0
    %193 = vmatpush1.msra.mxu0 0.0
    %194 = vmatprep.subr.mxu0 0.0
    %195 = vmatpush1.msra.mxu0 0.0
    %196 = vmatprep.subr.mxu0 0.0
    %197 = vmatpush1.msra.mxu0 0.0
    %198 = vmatprep.subr.mxu0 0.0
    %199 = vmatpush1.msra.mxu0 0.0
    %200 = vmatprep.subr.mxu0 0.0
    %201 = vmatpush1.msra.mxu0 0.0
    %202 = vmatprep.subr.mxu0 0.0
    %203 = vmatpush1.msra.mxu0 0.0
    %204 = vmatprep.subr.mxu0 0.0
    %205 = vmatpush1.msra.mxu0 0.0
    %206 = vmatprep.subr.mxu0 0.0
    %207 = vmatpush1.msra.mxu0 0.0
    %208 = vmatprep.subr.mxu0 0.0
    %209 = vmatpush1.msra.mxu0 0.0
    %210 = vmatprep.subr.mxu0 0.0
    %211 = vmatpush1.msra.mxu0 0.0
    %212 = vmatprep.subr.mxu0 0.0
    %213 = vmatpush1.msra.mxu0 0.0
    %214 = vmatprep.subr.mxu0 0.0
    %215 = vmatpush1.msra.mxu0 0.0
    %216 = vmatprep.subr.mxu0 0.0
    %217 = vmatpush1.msra.mxu0 0.0
    %218 = vmatprep.subr.mxu0 0.0
    %219 = vmatpush1.msra.mxu0 0.0
    %220 = vmatprep.subr.mxu0 0.0
    %221 = vmatpush1.msra.mxu0 0.0
    %222 = vmatprep.subr.mxu0 0.0
    %223 = vmatpush1.msra.mxu0 0.0
    %224 = vmatprep.subr.mxu0 0.0
    %225 = vmatpush1.msra.mxu0 0.0
    %226 = vmatprep.subr.mxu0 0.0
    %227 = vmatpush1.msra.mxu0 0.0
    %228 = vmatprep.subr.mxu0 0.0
    %229 = vmatpush1.msra.mxu0 0.0
    %230 = vmatprep.subr.mxu0 0.0
    %231 = vmatpush1.msra.mxu0 0.0
    %232 = vmatprep.subr.mxu0 0.0
    %233 = vmatpush1.msra.mxu0 0.0
    %234 = vmatprep.subr.mxu0 0.0
    %235 = vmatpush1.msra.mxu0 0.0
    %236 = vmatprep.subr.mxu0 0.0
    %237 = vmatpush1.msra.mxu0 0.0
    %238 = vmatprep.subr.mxu0 0.0
    %239 = vmatpush1.msra.mxu0 0.0
    %240 = vmatprep.mubr.f32.mxu0 0.0
    %241 = vmatmul.mubr.f32.gmra.mrb[0].mxu0 %v174
    %v242 = vpop.f32.mrb[0].mxu0
    %v243 = vadd.f32 0.0, %v242
    %v244 = vpop.f32.mrb[0].mxu0
    %v245 = vadd.f32 0.0, %v244
    %246 = vdwg.mxu0
    %247 = vmatprep.subr.mxu0 %v167
    %248 = vmatpush1.msra.mxu0 %v166
    %249 = vmatprep.subr.mxu0 0.0
    %250 = vmatpush1.msra.mxu0 0.0
    %251 = vmatprep.subr.mxu0 0.0
    %252 = vmatpush1.msra.mxu0 0.0
    %253 = vmatprep.subr.mxu0 0.0
    %254 = vmatpush1.msra.mxu0 0.0
    %255 = vmatprep.subr.mxu0 0.0
    %256 = vmatpush1.msra.mxu0 0.0
    %257 = vmatprep.subr.mxu0 0.0
    %258 = vmatpush1.msra.mxu0 0.0
    %259 = vmatprep.subr.mxu0 0.0
    %260 = vmatpush1.msra.mxu0 0.0
    %261 = vmatprep.subr.mxu0 0.0
    %262 = vmatpush1.msra.mxu0 0.0
    %263 = vmatprep.subr.mxu0 0.0
    %264 = vmatpush1.msra.mxu0 0.0
    %265 = vmatprep.subr.mxu0 0.0
    %266 = vmatpush1.msra.mxu0 0.0
    %267 = vmatprep.subr.mxu0 0.0
    %268 = vmatpush1.msra.mxu0 0.0
    %269 = vmatprep.subr.mxu0 0.0
    %270 = vmatpush1.msra.mxu0 0.0
    %271 = vmatprep.subr.mxu0 0.0
    %272 = vmatpush1.msra.mxu0 0.0
    %273 = vmatprep.subr.mxu0 0.0
    %274 = vmatpush1.msra.mxu0 0.0
    %275 = vmatprep.subr.mxu0 0.0
    %276 = vmatpush1.msra.mxu0 0.0
    %277 = vmatprep.subr.mxu0 0.0
    %278 = vmatpush1.msra.mxu0 0.0
    %279 = vmatprep.subr.mxu0 0.0
    %280 = vmatpush1.msra.mxu0 0.0
    %281 = vmatprep.subr.mxu0 0.0
    %282 = vmatpush1.msra.mxu0 0.0
    %283 = vmatprep.subr.mxu0 0.0
    %284 = vmatpush1.msra.mxu0 0.0
    %285 = vmatprep.subr.mxu0 0.0
    %286 = vmatpush1.msra.mxu0 0.0
    %287 = vmatprep.subr.mxu0 0.0
    %288 = vmatpush1.msra.mxu0 0.0
    %289 = vmatprep.subr.mxu0 0.0
    %290 = vmatpush1.msra.mxu0 0.0
    %291 = vmatprep.subr.mxu0 0.0
    %292 = vmatpush1.msra.mxu0 0.0
    %293 = vmatprep.subr.mxu0 0.0
    %294 = vmatpush1.msra.mxu0 0.0
    %295 = vmatprep.subr.mxu0 0.0
    %296 = vmatpush1.msra.mxu0 0.0
    %297 = vmatprep.subr.mxu0 0.0
    %298 = vmatpush1.msra.mxu0 0.0
    %299 = vmatprep.subr.mxu0 0.0
    %300 = vmatpush1.msra.mxu0 0.0
    %301 = vmatprep.subr.mxu0 0.0
    %302 = vmatpush1.msra.mxu0 0.0
    %303 = vmatprep.subr.mxu0 0.0
    %304 = vmatpush1.msra.mxu0 0.0
    %305 = vmatprep.subr.mxu0 0.0
    %306 = vmatpush1.msra.mxu0 0.0
    %307 = vmatprep.subr.mxu0 0.0
    %308 = vmatpush1.msra.mxu0 0.0
    %309 = vmatprep.subr.mxu0 0.0
    %310 = vmatpush1.msra.mxu0 0.0
    %311 = vmatprep.mubr.f32.mxu0 0.0
    %312 = vmatmul.mubr.f32.gmra.mrb[0].mxu0 %v174
    %v313 = vpop.f32.mrb[0].mxu0
    %v314 = vadd.f32 0.0, %v313
    %v315 = vpop.f32.mrb[0].mxu0
    %v316 = vadd.f32 0.0, %v315
    %317 = vdwg.mxu0
    %318 = vmatprep.subr.mxu0 %v169
    %319 = vmatpush1.msra.mxu0 %v168
    %320 = vmatprep.subr.mxu0 0.0
    %321 = vmatpush1.msra.mxu0 0.0
    %322 = vmatprep.subr.mxu0 0.0
    %323 = vmatpush1.msra.mxu0 0.0
    %324 = vmatprep.subr.mxu0 0.0
    %325 = vmatpush1.msra.mxu0 0.0
    %326 = vmatprep.subr.mxu0 0.0
    %327 = vmatpush1.msra.mxu0 0.0
    %328 = vmatprep.subr.mxu0 0.0
    %329 = vmatpush1.msra.mxu0 0.0
    %330 = vmatprep.subr.mxu0 0.0
    %331 = vmatpush1.msra.mxu0 0.0
    %332 = vmatprep.subr.mxu0 0.0
    %333 = vmatpush1.msra.mxu0 0.0
    %334 = vmatprep.subr.mxu0 0.0
    %335 = vmatpush1.msra.mxu0 0.0
    %336 = vmatprep.subr.mxu0 0.0
    %337 = vmatpush1.msra.mxu0 0.0
    %338 = vmatprep.subr.mxu0 0.0
    %339 = vmatpush1.msra.mxu0 0.0
    %340 = vmatprep.subr.mxu0 0.0
    %341 = vmatpush1.msra.mxu0 0.0
    %342 = vmatprep.subr.mxu0 0.0
    %343 = vmatpush1.msra.mxu0 0.0
    %344 = vmatprep.subr.mxu0 0.0
    %345 = vmatpush1.msra.mxu0 0.0
    %346 = vmatprep.subr.mxu0 0.0
    %347 = vmatpush1.msra.mxu0 0.0
    %348 = vmatprep.subr.mxu0 0.0
    %349 = vmatpush1.msra.mxu0 0.0
    %350 = vmatprep.subr.mxu0 0.0
    %351 = vmatpush1.msra.mxu0 0.0
    %352 = vmatprep.subr.mxu0 0.0
    %353 = vmatpush1.msra.mxu0 0.0
    %354 = vmatprep.subr.mxu0 0.0
    %355 = vmatpush1.msra.mxu0 0.0
    %356 = vmatprep.subr.mxu0 0.0
    %357 = vmatpush1.msra.mxu0 0.0
    %358 = vmatprep.subr.mxu0 0.0
    %359 = vmatpush1.msra.mxu0 0.0
    %360 = vmatprep.subr.mxu0 0.0
    %361 = vmatpush1.msra.mxu0 0.0
    %362 = vmatprep.subr.mxu0 0.0
    %363 = vmatpush1.msra.mxu0 0.0
    %364 = vmatprep.subr.mxu0 0.0
    %365 = vmatpush1.msra.mxu0 0.0
    %366 = vmatprep.subr.mxu0 0.0
    %367 = vmatpush1.msra.mxu0 0.0
    %368 = vmatprep.subr.mxu0 0.0
    %369 = vmatpush1.msra.mxu0 0.0
    %370 = vmatprep.subr.mxu0 0.0
    %371 = vmatpush1.msra.mxu0 0.0
    %372 = vmatprep.subr.mxu0 0.0
    %373 = vmatpush1.msra.mxu0 0.0
    %374 = vmatprep.subr.mxu0 0.0
    %375 = vmatpush1.msra.mxu0 0.0
    %376 = vmatprep.subr.mxu0 0.0
    %377 = vmatpush1.msra.mxu0 0.0
    %378 = vmatprep.subr.mxu0 0.0
    %379 = vmatpush1.msra.mxu0 0.0
    %380 = vmatprep.subr.mxu0 0.0
    %381 = vmatpush1.msra.mxu0 0.0
    %382 = vmatprep.mubr.f32.mxu0 0.0
    %383 = vmatmul.mubr.f32.gmra.mrb[0].mxu0 %v174
    %v384 = vpop.f32.mrb[0].mxu0
    %v385 = vadd.f32 0.0, %v384
    %v386 = vpop.f32.mrb[0].mxu0
    %v387 = vadd.f32 0.0, %v386
    %388 = vdwg.mxu0
    %389 = vmatprep.subr.mxu0 %v171
    %390 = vmatpush1.msra.mxu0 %v170
    %391 = vmatprep.subr.mxu0 0.0
    %392 = vmatpush1.msra.mxu0 0.0
    %393 = vmatprep.subr.mxu0 0.0
    %394 = vmatpush1.msra.mxu0 0.0
    %395 = vmatprep.subr.mxu0 0.0
    %396 = vmatpush1.msra.mxu0 0.0
    %397 = vmatprep.subr.mxu0 0.0
    %398 = vmatpush1.msra.mxu0 0.0
    %399 = vmatprep.subr.mxu0 0.0
    %400 = vmatpush1.msra.mxu0 0.0
    %401 = vmatprep.subr.mxu0 0.0
    %402 = vmatpush1.msra.mxu0 0.0
    %403 = vmatprep.subr.mxu0 0.0
    %404 = vmatpush1.msra.mxu0 0.0
    %405 = vmatprep.subr.mxu0 0.0
    %406 = vmatpush1.msra.mxu0 0.0
    %407 = vmatprep.subr.mxu0 0.0
    %408 = vmatpush1.msra.mxu0 0.0
    %409 = vmatprep.subr.mxu0 0.0
    %410 = vmatpush1.msra.mxu0 0.0
    %411 = vmatprep.subr.mxu0 0.0
    %412 = vmatpush1.msra.mxu0 0.0
    %413 = vmatprep.subr.mxu0 0.0
    %414 = vmatpush1.msra.mxu0 0.0
    %415 = vmatprep.subr.mxu0 0.0
    %416 = vmatpush1.msra.mxu0 0.0
    %417 = vmatprep.subr.mxu0 0.0
    %418 = vmatpush1.msra.mxu0 0.0
    %419 = vmatprep.subr.mxu0 0.0
    %420 = vmatpush1.msra.mxu0 0.0
    %421 = vmatprep.subr.mxu0 0.0
    %422 = vmatpush1.msra.mxu0 0.0
    %423 = vmatprep.subr.mxu0 0.0
    %424 = vmatpush1.msra.mxu0 0.0
    %425 = vmatprep.subr.mxu0 0.0
    %426 = vmatpush1.msra.mxu0 0.0
    %427 = vmatprep.subr.mxu0 0.0
    %428 = vmatpush1.msra.mxu0 0.0
    %429 = vmatprep.subr.mxu0 0.0
    %430 = vmatpush1.msra.mxu0 0.0
    %431 = vmatprep.subr.mxu0 0.0
    %432 = vmatpush1.msra.mxu0 0.0
    %433 = vmatprep.subr.mxu0 0.0
    %434 = vmatpush1.msra.mxu0 0.0
    %435 = vmatprep.subr.mxu0 0.0
    %436 = vmatpush1.msra.mxu0 0.0
    %437 = vmatprep.subr.mxu0 0.0
    %438 = vmatpush1.msra.mxu0 0.0
    %439 = vmatprep.subr.mxu0 0.0
    %440 = vmatpush1.msra.mxu0 0.0
    %441 = vmatprep.subr.mxu0 0.0
    %442 = vmatpush1.msra.mxu0 0.0
    %443 = vmatprep.subr.mxu0 0.0
    %444 = vmatpush1.msra.mxu0 0.0
    %445 = vmatprep.subr.mxu0 0.0
    %446 = vmatpush1.msra.mxu0 0.0
    %447 = vmatprep.subr.mxu0 0.0
    %448 = vmatpush1.msra.mxu0 0.0
    %449 = vmatprep.subr.mxu0 0.0
    %450 = vmatpush1.msra.mxu0 0.0
    %451 = vmatprep.subr.mxu0 0.0
    %452 = vmatpush1.msra.mxu0 0.0
    %453 = vmatprep.mubr.f32.mxu0 0.0
    %454 = vmatmul.mubr.f32.gmra.mrb[0].mxu0 %v174
    %v455 = vpop.f32.mrb[0].mxu0
    %v456 = vadd.f32 0.0, %v455
    %v457 = vpop.f32.mrb[0].mxu0
    %v458 = vadd.f32 0.0, %v457
    %459 = vdwg.mxu0
    %v460 = vsub.f32 0.0, %v243
    %v461 = vsub.f32 0.0, %v245
    %v462 = vsub.f32 0.0, %v314
    %v463 = vsub.f32 0.0, %v316
    %v464 = vsub.f32 0.0, %v385
    %v465 = vsub.f32 0.0, %v387
    %v466 = vsub.f32 0.0, %v456
    %v467 = vsub.f32 0.0, %v458
    %v468 = vxor.u32 %v460, 2147483648
    %v469 = vxor.u32 %v461, 2147483648
    %v470 = vxor.u32 %v462, 2147483648
    %v471 = vxor.u32 %v463, 2147483648
    %v472 = vxor.u32 %v464, 2147483648
    %v473 = vxor.u32 %v465, 2147483648
    %v474 = vxor.u32 %v466, 2147483648
    %v475 = vxor.u32 %v467, 2147483648
    %v476 = vmul.f32 %v468, 1.442695
    %v477 = vpow.pop %v476
    %v478 = vmul.f32 %v469, 1.442695
    %v479 = vpow.pop %v478
    %v480 = vmul.f32 %v470, 1.442695
    %v481 = vpow.pop %v480
    %v482 = vmul.f32 %v471, 1.442695
    %v483 = vpow.pop %v482
    %v484 = vmul.f32 %v472, 1.442695
    %v485 = vpow.pop %v484
    %v486 = vmul.f32 %v473, 1.442695
    %v487 = vpow.pop %v486
    %v488 = vmul.f32 %v474, 1.442695
    %v489 = vpow.pop %v488
    %v490 = vmul.f32 %v475, 1.442695
    %v491 = vpow.pop %v490
    %v492 = vadd.f32 %v477, 1.0
    %v493 = vadd.f32 %v479, 1.0
    %v494 = vadd.f32 %v481, 1.0
    %v495 = vadd.f32 %v483, 1.0
    %v496 = vadd.f32 %v485, 1.0
    %v497 = vadd.f32 %v487, 1.0
    %v498 = vadd.f32 %v489, 1.0
    %v499 = vadd.f32 %v491, 1.0
    %v500 = vrcp.pop %v492
    %v501 = vmul.f32 1.0, %v500
    %v502 = vrcp.pop %v493
    %v503 = vmul.f32 1.0, %v502
    %v504 = vrcp.pop %v494
    %v505 = vmul.f32 1.0, %v504
    %v506 = vrcp.pop %v495
    %v507 = vmul.f32 1.0, %v506
    %v508 = vrcp.pop %v496
    %v509 = vmul.f32 1.0, %v508
    %v510 = vrcp.pop %v497
    %v511 = vmul.f32 1.0, %v510
    %v512 = vrcp.pop %v498
    %v513 = vmul.f32 1.0, %v512
    %v514 = vrcp.pop %v499
    %v515 = vmul.f32 1.0, %v514
    %v516 = vld [vmem:[%s1] sm:$0xff]
    %v517 = vld [vmem:[#allocation7] sm:$0x1]
    %519 = vset.pattern.permute.xlu0 0
    %520 = vperm.xlu0 %519, %v516
    %v521 = vpop.permute.xlu0 %520
    %v524 = vlaneseq
    %v525 = vshrl.u32 %v524, 7
    %v526 = vsub.s32 0, %v525
    %v527 = vrot.slane %v517, %v526
    %v529 = vmul.f32 %v521, %v527
    %v530 = vld [vmem:[#allocation8] sm:$0x1]
    %v532 = vlaneseq
    %v533 = vshrl.u32 %v532, 7
    %v534 = vsub.s32 0, %v533
    %v535 = vrot.slane %v530, %v534
    %v537 = vadd.f32 %v529, %v535
    %v538 = vxor.u32 %v537, 2147483648
    %v539 = vmul.f32 %v538, 1.442695
    %v540 = vpow.pop %v539
    %v541 = vadd.f32 %v540, 1.0
    %v542 = vrcp.pop %v541
    %v543 = vmul.f32 1.0, %v542
    %v544 = vld [vmem:[#allocation10] sm:$0xff]
    %v545 = vld [vmem:[#allocation10 + $0x8] sm:$0x3]
    %v546 = vld [vmem:[#allocation11] sm:$0x1]
    %v548 = vlaneseq
    %v549 = vshrl.u32 %v548, 7
    %v550 = vsub.s32 0, %v549
    %v551 = vrot.slane %v546, %v550
    %vm553 = vcmask 80896
    %v555 = vsel %vm553, %v543, 0
    %vm557 = vcmask 1041408
    %v559 = vsel %vm557, %v545, 0
    %561 = vmatprep.subr.mxu0 0.0
    %562 = vmatpush1.msra.mxu0 %v544
    %563 = vmatprep.subr.mxu0 0.0
    %564 = vmatpush1.msra.mxu0 %v559
    %565 = vmatprep.subr.mxu0 0.0
    %566 = vmatpush1.msra.mxu0 0.0
    %567 = vmatprep.subr.mxu0 0.0
    %568 = vmatpush1.msra.mxu0 0.0
    %569 = vmatprep.subr.mxu0 0.0
    %570 = vmatpush1.msra.mxu0 0.0
    %571 = vmatprep.subr.mxu0 0.0
    %572 = vmatpush1.msra.mxu0 0.0
    %573 = vmatprep.subr.mxu0 0.0
    %574 = vmatpush1.msra.mxu0 0.0
    %575 = vmatprep.subr.mxu0 0.0
    %576 = vmatpush1.msra.mxu0 0.0
    %577 = vmatprep.subr.mxu0 0.0
    %578 = vmatpush1.msra.mxu0 0.0
    %579 = vmatprep.subr.mxu0 0.0
    %580 = vmatpush1.msra.mxu0 0.0
    %581 = vmatprep.subr.mxu0 0.0
    %582 = vmatpush1.msra.mxu0 0.0
    %583 = vmatprep.subr.mxu0 0.0
    %584 = vmatpush1.msra.mxu0 0.0
    %585 = vmatprep.subr.mxu0 0.0
    %586 = vmatpush1.msra.mxu0 0.0
    %587 = vmatprep.subr.mxu0 0.0
    %588 = vmatpush1.msra.mxu0 0.0
    %589 = vmatprep.subr.mxu0 0.0
    %590 = vmatpush1.msra.mxu0 0.0
    %591 = vmatprep.subr.mxu0 0.0
    %592 = vmatpush1.msra.mxu0 0.0
    %593 = vmatprep.subr.mxu0 0.0
    %594 = vmatpush1.msra.mxu0 0.0
    %595 = vmatprep.subr.mxu0 0.0
    %596 = vmatpush1.msra.mxu0 0.0
    %597 = vmatprep.subr.mxu0 0.0
    %598 = vmatpush1.msra.mxu0 0.0
    %599 = vmatprep.subr.mxu0 0.0
    %600 = vmatpush1.msra.mxu0 0.0
    %601 = vmatprep.subr.mxu0 0.0
    %602 = vmatpush1.msra.mxu0 0.0
    %603 = vmatprep.subr.mxu0 0.0
    %604 = vmatpush1.msra.mxu0 0.0
    %605 = vmatprep.subr.mxu0 0.0
    %606 = vmatpush1.msra.mxu0 0.0
    %607 = vmatprep.subr.mxu0 0.0
    %608 = vmatpush1.msra.mxu0 0.0
    %609 = vmatprep.subr.mxu0 0.0
    %610 = vmatpush1.msra.mxu0 0.0
    %611 = vmatprep.subr.mxu0 0.0
    %612 = vmatpush1.msra.mxu0 0.0
    %613 = vmatprep.subr.mxu0 0.0
    %614 = vmatpush1.msra.mxu0 0.0
    %615 = vmatprep.subr.mxu0 0.0
    %616 = vmatpush1.msra.mxu0 0.0
    %617 = vmatprep.subr.mxu0 0.0
    %618 = vmatpush1.msra.mxu0 0.0
    %619 = vmatprep.subr.mxu0 0.0
    %620 = vmatpush1.msra.mxu0 0.0
    %621 = vmatprep.subr.mxu0 0.0
    %622 = vmatpush1.msra.mxu0 0.0
    %623 = vmatprep.subr.mxu0 0.0
    %624 = vmatpush1.msra.mxu0 0.0
    %625 = vmatprep.mubr.f32.mxu0 0.0
    %626 = vmatmul.mubr.f32.gmra.mrb[0].mxu0 %v555
    %v627 = vpop.f32.mrb[0].mxu0
    %v628 = vadd.f32 %v551, %v627
    %v629 = vpop.f32.mrb[0].mxu0
    %630 = vdwg.mxu0
    %v631 = vxor.u32 %v628, 2147483648
    %v632 = vmul.f32 %v631, 1.442695
    %v633 = vpow.pop %v632
    %v634 = vadd.f32 %v633, 1.0
    %v635 = vrcp.pop %v634
    %v636 = vmul.f32 1.0, %v635
    %v637 = vpack.c.bf16 %v501, %v501
    %v638 = vpack.c.bf16 %v503, %v503
    %v639 = vpack.c.bf16 %v505, %v505
    %v640 = vpack.c.bf16 %v507, %v507
    %v641 = vpack.c.bf16 %v509, %v509
    %v642 = vpack.c.bf16 %v511, %v511
    %v643 = vpack.c.bf16 %v513, %v513
    %v644 = vpack.c.bf16 %v515, %v515
    %v645 = vld [vmem:[#allocation13] sm:$0xff]
    %v646 = vld [vmem:[#allocation13 + $0x8] sm:$0xff]
    %v647 = vld [vmem:[#allocation13 + $0x10] sm:$0xff]
    %v648 = vld [vmem:[#allocation13 + $0x18] sm:$0xff]
    %v649 = vld [vmem:[#allocation13 + $0x20] sm:$0xff]
    %v650 = vld [vmem:[#allocation13 + $0x28] sm:$0xff]
    %v651 = vld [vmem:[#allocation13 + $0x30] sm:$0xff]
    %v652 = vld [vmem:[#allocation13 + $0x38] sm:$0xff]
    %v653 = vld [vmem:[#allocation13 + $0x40] sm:$0xff]
    %v654 = vld [vmem:[#allocation13 + $0x48] sm:$0xff]
    %v655 = vld [vmem:[#allocation13 + $0x50] sm:$0xff]
    %v656 = vld [vmem:[#allocation13 + $0x58] sm:$0xff]
    %v657 = vld [vmem:[#allocation13 + $0x60] sm:$0xff]
    %v658 = vld [vmem:[#allocation13 + $0x68] sm:$0xff]
    %v659 = vld [vmem:[#allocation13 + $0x70] sm:$0xff]
    %v660 = vld [vmem:[#allocation13 + $0x78] sm:$0xff]
    %v661 = vld [vmem:[#allocation13 + $0x80] sm:$0xff]
    %v662 = vld [vmem:[#allocation13 + $0x88] sm:$0xff]
    %v663 = vld [vmem:[#allocation13 + $0x90] sm:$0xff]
    %v664 = vld [vmem:[#allocation13 + $0x98] sm:$0xff]
    %v665 = vld [vmem:[#allocation13 + $0xa0] sm:$0xff]
    %v666 = vld [vmem:[#allocation13 + $0xa8] sm:$0xff]
    %v667 = vld [vmem:[#allocation13 + $0xb0] sm:$0xff]
    %v668 = vld [vmem:[#allocation13 + $0xb8] sm:$0xff]
    %v669 = vld [vmem:[#allocation13 + $0xc0] sm:$0xff]
    %v670 = vld [vmem:[#allocation13 + $0xc8] sm:$0xff]
    %v671 = vld [vmem:[#allocation13 + $0xd0] sm:$0xff]
    %v672 = vld [vmem:[#allocation13 + $0xd8] sm:$0xff]
    %v673 = vld [vmem:[#allocation13 + $0xe0] sm:$0xff]
    %v674 = vld [vmem:[#allocation13 + $0xe8] sm:$0xff]
    %v675 = vld [vmem:[#allocation13 + $0xf0] sm:$0xff]
    %v676 = vld [vmem:[#allocation13 + $0xf8] sm:$0xff]
    %v677 = vld [vmem:[#allocation13 + $0x100] sm:$0xff]
    %v678 = vld [vmem:[#allocation13 + $0x108] sm:$0xff]
    %v679 = vld [vmem:[#allocation13 + $0x110] sm:$0xff]
    %v680 = vld [vmem:[#allocation13 + $0x118] sm:$0xff]
    %v681 = vld [vmem:[#allocation13 + $0x120] sm:$0xff]
    %v682 = vld [vmem:[#allocation13 + $0x128] sm:$0xff]
    %v683 = vld [vmem:[#allocation13 + $0x130] sm:$0xff]
    %v684 = vld [vmem:[#allocation13 + $0x138] sm:$0xff]
    %v685 = vld [vmem:[#allocation13 + $0x140] sm:$0xff]
    %v686 = vld [vmem:[#allocation13 + $0x148] sm:$0xff]
    %v687 = vld [vmem:[#allocation13 + $0x150] sm:$0xff]
    %v688 = vld [vmem:[#allocation13 + $0x158] sm:$0xff]
    %v689 = vld [vmem:[#allocation13 + $0x160] sm:$0xff]
    %v690 = vld [vmem:[#allocation13 + $0x168] sm:$0xff]
    %v691 = vld [vmem:[#allocation13 + $0x170] sm:$0xff]
    %v692 = vld [vmem:[#allocation13 + $0x178] sm:$0xff]
    %v693 = vld [vmem:[#allocation13 + $0x180] sm:$0xff]
    %v694 = vld [vmem:[#allocation13 + $0x188] sm:$0xff]
    %v695 = vld [vmem:[#allocation13 + $0x190] sm:$0xff]
    %v696 = vld [vmem:[#allocation13 + $0x198] sm:$0xff]
    %v697 = vld [vmem:[#allocation13 + $0x1a0] sm:$0xff]
    %v698 = vld [vmem:[#allocation13 + $0x1a8] sm:$0xff]
    %v699 = vld [vmem:[#allocation13 + $0x1b0] sm:$0xff]
    %v700 = vld [vmem:[#allocation13 + $0x1b8] sm:$0xff]
    %v701 = vld [vmem:[#allocation13 + $0x1c0] sm:$0xff]
    %v702 = vld [vmem:[#allocation13 + $0x1c8] sm:$0xff]
    %v703 = vld [vmem:[#allocation13 + $0x1d0] sm:$0xff]
    %v704 = vld [vmem:[#allocation13 + $0x1d8] sm:$0xff]
    %v705 = vld [vmem:[#allocation13 + $0x1e0] sm:$0xff]
    %v706 = vld [vmem:[#allocation13 + $0x1e8] sm:$0xff]
    %v707 = vld [vmem:[#allocation13 + $0x1f0] sm:$0xff]
    %v708 = vld [vmem:[#allocation13 + $0x1f8] sm:$0xff]
    %v709 = vld [vmem:[#allocation13 + $0x200] sm:$0xff]
    %v710 = vld [vmem:[#allocation13 + $0x208] sm:$0xff]
    %v711 = vld [vmem:[#allocation13 + $0x210] sm:$0xff]
    %v712 = vld [vmem:[#allocation13 + $0x218] sm:$0xff]
    %v713 = vld [vmem:[#allocation13 + $0x220] sm:$0xff]
    %v714 = vld [vmem:[#allocation13 + $0x228] sm:$0xff]
    %v715 = vld [vmem:[#allocation13 + $0x230] sm:$0xff]
    %v716 = vld [vmem:[#allocation13 + $0x238] sm:$0xff]
    %v717 = vld [vmem:[#allocation13 + $0x240] sm:$0xff]
    %v718 = vld [vmem:[#allocation13 + $0x248] sm:$0xff]
    %v719 = vld [vmem:[#allocation13 + $0x250] sm:$0xff]
    %v720 = vld [vmem:[#allocation13 + $0x258] sm:$0xff]
    %v721 = vld [vmem:[#allocation13 + $0x260] sm:$0xff]
    %v722 = vld [vmem:[#allocation13 + $0x268] sm:$0xff]
    %v723 = vld [vmem:[#allocation13 + $0x270] sm:$0xff]
    %v724 = vld [vmem:[#allocation13 + $0x278] sm:$0xff]
    %v725 = vld [vmem:[#allocation13 + $0x280] sm:$0xff]
    %v726 = vld [vmem:[#allocation13 + $0x288] sm:$0xff]
    %v727 = vld [vmem:[#allocation13 + $0x290] sm:$0xff]
    %v728 = vld [vmem:[#allocation13 + $0x298] sm:$0xff]
    %v729 = vld [vmem:[#allocation13 + $0x2a0] sm:$0xff]
    %v730 = vld [vmem:[#allocation13 + $0x2a8] sm:$0xff]
    %v731 = vld [vmem:[#allocation13 + $0x2b0] sm:$0xff]
    %v732 = vld [vmem:[#allocation13 + $0x2b8] sm:$0xff]
    %v733 = vld [vmem:[#allocation13 + $0x2c0] sm:$0xff]
    %v734 = vld [vmem:[#allocation13 + $0x2c8] sm:$0xff]
    %v735 = vld [vmem:[#allocation13 + $0x2d0] sm:$0xff]
    %v736 = vld [vmem:[#allocation13 + $0x2d8] sm:$0xff]
    %v737 = vld [vmem:[#allocation13 + $0x2e0] sm:$0xff]
    %v738 = vld [vmem:[#allocation13 + $0x2e8] sm:$0xff]
    %v739 = vld [vmem:[#allocation13 + $0x2f0] sm:$0xff]
    %v740 = vld [vmem:[#allocation13 + $0x2f8] sm:$0xff]
    %v741 = vld [vmem:[#allocation13 + $0x300] sm:$0xff]
    %v742 = vld [vmem:[#allocation13 + $0x308] sm:$0xff]
    %v743 = vld [vmem:[#allocation13 + $0x310] sm:$0xff]
    %v744 = vld [vmem:[#allocation13 + $0x318] sm:$0xff]
    %v745 = vld [vmem:[#allocation13 + $0x320] sm:$0xff]
    %v746 = vld [vmem:[#allocation13 + $0x328] sm:$0xff]
    %v747 = vld [vmem:[#allocation13 + $0x330] sm:$0xff]
    %v748 = vld [vmem:[#allocation13 + $0x338] sm:$0xff]
    %v749 = vld [vmem:[#allocation13 + $0x340] sm:$0xff]
    %v750 = vld [vmem:[#allocation13 + $0x348] sm:$0xff]
    %v751 = vld [vmem:[#allocation13 + $0x350] sm:$0xff]
    %v752 = vld [vmem:[#allocation13 + $0x358] sm:$0xff]
    %v753 = vld [vmem:[#allocation13 + $0x360] sm:$0xff]
    %v754 = vld [vmem:[#allocation13 + $0x368] sm:$0xff]
    %v755 = vld [vmem:[#allocation13 + $0x370] sm:$0xff]
    %v756 = vld [vmem:[#allocation13 + $0x378] sm:$0xff]
    %v757 = vld [vmem:[#allocation13 + $0x380] sm:$0xff]
    %v758 = vld [vmem:[#allocation13 + $0x388] sm:$0xff]
    %v759 = vld [vmem:[#allocation13 + $0x390] sm:$0xff]
    %v760 = vld [vmem:[#allocation13 + $0x398] sm:$0xff]
    %v761 = vld [vmem:[#allocation13 + $0x3a0] sm:$0xff]
    %v762 = vld [vmem:[#allocation13 + $0x3a8] sm:$0xff]
    %v763 = vld [vmem:[#allocation13 + $0x3b0] sm:$0xff]
    %v764 = vld [vmem:[#allocation13 + $0x3b8] sm:$0xff]
    %v765 = vld [vmem:[#allocation13 + $0x3c0] sm:$0xff]
    %v766 = vld [vmem:[#allocation13 + $0x3c8] sm:$0xff]
    %v767 = vld [vmem:[#allocation13 + $0x3d0] sm:$0xff]
    %v768 = vld [vmem:[#allocation13 + $0x3d8] sm:$0xff]
    %v769 = vld [vmem:[#allocation13 + $0x3e0] sm:$0xff]
    %v770 = vld [vmem:[#allocation13 + $0x3e8] sm:$0xff]
    %v771 = vld [vmem:[#allocation13 + $0x3f0] sm:$0xff]
    %v772 = vld [vmem:[#allocation13 + $0x3f8] sm:$0xff]
    %v773 = vld [vmem:[#allocation13 + $0x400] sm:$0xff]
    %v774 = vld [vmem:[#allocation13 + $0x408] sm:$0xff]
    %v775 = vld [vmem:[#allocation13 + $0x410] sm:$0xff]
    %v776 = vld [vmem:[#allocation13 + $0x418] sm:$0xff]
    %v777 = vld [vmem:[#allocation13 + $0x420] sm:$0xff]
    %v778 = vld [vmem:[#allocation13 + $0x428] sm:$0xff]
    %v779 = vld [vmem:[#allocation13 + $0x430] sm:$0xff]
    %v780 = vld [vmem:[#allocation13 + $0x438] sm:$0xff]
    %v781 = vld [vmem:[#allocation13 + $0x440] sm:$0xff]
    %v782 = vld [vmem:[#allocation13 + $0x448] sm:$0xff]
    %v783 = vld [vmem:[#allocation13 + $0x450] sm:$0xff]
    %v784 = vld [vmem:[#allocation13 + $0x458] sm:$0xff]
    %v785 = vld [vmem:[#allocation13 + $0x460] sm:$0xff]
    %v786 = vld [vmem:[#allocation13 + $0x468] sm:$0xff]
    %v787 = vld [vmem:[#allocation13 + $0x470] sm:$0xff]
    %v788 = vld [vmem:[#allocation13 + $0x478] sm:$0xff]
    %v789 = vld [vmem:[#allocation13 + $0x480] sm:$0xff]
    %v790 = vld [vmem:[#allocation13 + $0x488] sm:$0xff]
    %v791 = vld [vmem:[#allocation13 + $0x490] sm:$0xff]
    %v792 = vld [vmem:[#allocation13 + $0x498] sm:$0xff]
    %v793 = vld [vmem:[#allocation13 + $0x4a0] sm:$0xff]
    %v794 = vld [vmem:[#allocation13 + $0x4a8] sm:$0xff]
    %v795 = vld [vmem:[#allocation13 + $0x4b0] sm:$0xff]
    %v796 = vld [vmem:[#allocation13 + $0x4b8] sm:$0xff]
    %v797 = vld [vmem:[#allocation13 + $0x4c0] sm:$0xff]
    %v798 = vld [vmem:[#allocation13 + $0x4c8] sm:$0xff]
    %v799 = vld [vmem:[#allocation13 + $0x4d0] sm:$0xff]
    %v800 = vld [vmem:[#allocation13 + $0x4d8] sm:$0xff]
    %v801 = vld [vmem:[#allocation13 + $0x4e0] sm:$0xff]
    %v802 = vld [vmem:[#allocation13 + $0x4e8] sm:$0xff]
    %v803 = vld [vmem:[#allocation13 + $0x4f0] sm:$0xff]
    %v804 = vld [vmem:[#allocation13 + $0x4f8] sm:$0xff]
    %v805 = vld [vmem:[#allocation13 + $0x500] sm:$0xff]
    %v806 = vld [vmem:[#allocation13 + $0x508] sm:$0xff]
    %v807 = vld [vmem:[#allocation13 + $0x510] sm:$0xff]
    %v808 = vld [vmem:[#allocation13 + $0x518] sm:$0xff]
    %v809 = vld [vmem:[#allocation13 + $0x520] sm:$0xff]
    %v810 = vld [vmem:[#allocation13 + $0x528] sm:$0xff]
    %v811 = vld [vmem:[#allocation13 + $0x530] sm:$0xff]
    %v812 = vld [vmem:[#allocation13 + $0x538] sm:$0xff]
    %v813 = vld [vmem:[#allocation13 + $0x540] sm:$0xff]
    %v814 = vld [vmem:[#allocation13 + $0x548] sm:$0xff]
    %v815 = vld [vmem:[#allocation13 + $0x550] sm:$0xff]
    %v816 = vld [vmem:[#allocation13 + $0x558] sm:$0xff]
    %v817 = vld [vmem:[#allocation13 + $0x560] sm:$0xff]
    %v818 = vld [vmem:[#allocation13 + $0x568] sm:$0xff]
    %v819 = vld [vmem:[#allocation13 + $0x570] sm:$0xff]
    %v820 = vld [vmem:[#allocation13 + $0x578] sm:$0xff]
    %v821 = vld [vmem:[#allocation13 + $0x580] sm:$0xff]
    %v822 = vld [vmem:[#allocation13 + $0x588] sm:$0xff]
    %v823 = vld [vmem:[#allocation13 + $0x590] sm:$0xff]
    %v824 = vld [vmem:[#allocation13 + $0x598] sm:$0xff]
    %v825 = vld [vmem:[#allocation13 + $0x5a0] sm:$0xff]
    %v826 = vld [vmem:[#allocation13 + $0x5a8] sm:$0xff]
    %v827 = vld [vmem:[#allocation13 + $0x5b0] sm:$0xff]
    %v828 = vld [vmem:[#allocation13 + $0x5b8] sm:$0xff]
    %v829 = vld [vmem:[#allocation13 + $0x5c0] sm:$0xff]
    %v830 = vld [vmem:[#allocation13 + $0x5c8] sm:$0xff]
    %v831 = vld [vmem:[#allocation13 + $0x5d0] sm:$0xff]
    %v832 = vld [vmem:[#allocation13 + $0x5d8] sm:$0xff]
    %v833 = vld [vmem:[#allocation13 + $0x5e0] sm:$0xff]
    %v834 = vld [vmem:[#allocation13 + $0x5e8] sm:$0xff]
    %v835 = vld [vmem:[#allocation13 + $0x5f0] sm:$0xff]
    %v836 = vld [vmem:[#allocation13 + $0x5f8] sm:$0xff]
    %v837 = vld [vmem:[#allocation13 + $0x600] sm:$0xff]
    %v838 = vld [vmem:[#allocation13 + $0x608] sm:$0xff]
    %v839 = vld [vmem:[#allocation13 + $0x610] sm:$0xff]
    %v840 = vld [vmem:[#allocation13 + $0x618] sm:$0xff]
    %v841 = vld [vmem:[#allocation13 + $0x620] sm:$0xff]
    %v842 = vld [vmem:[#allocation13 + $0x628] sm:$0xff]
    %v843 = vld [vmem:[#allocation13 + $0x630] sm:$0xff]
    %v844 = vld [vmem:[#allocation13 + $0x638] sm:$0xff]
    %v845 = vld [vmem:[#allocation13 + $0x640] sm:$0xff]
    %v846 = vld [vmem:[#allocation13 + $0x648] sm:$0xff]
    %v847 = vld [vmem:[#allocation13 + $0x650] sm:$0xff]
    %v848 = vld [vmem:[#allocation13 + $0x658] sm:$0xff]
    %v849 = vld [vmem:[#allocation13 + $0x660] sm:$0xff]
    %v850 = vld [vmem:[#allocation13 + $0x668] sm:$0xff]
    %v851 = vld [vmem:[#allocation13 + $0x670] sm:$0xff]
    %v852 = vld [vmem:[#allocation13 + $0x678] sm:$0xff]
    %v853 = vld [vmem:[#allocation13 + $0x680] sm:$0xff]
    %v854 = vld [vmem:[#allocation13 + $0x688] sm:$0xff]
    %v855 = vld [vmem:[#allocation13 + $0x690] sm:$0xff]
    %v856 = vld [vmem:[#allocation13 + $0x698] sm:$0xff]
    %v857 = vld [vmem:[#allocation13 + $0x6a0] sm:$0xff]
    %v858 = vld [vmem:[#allocation13 + $0x6a8] sm:$0xff]
    %v859 = vld [vmem:[#allocation13 + $0x6b0] sm:$0xff]
    %v860 = vld [vmem:[#allocation13 + $0x6b8] sm:$0xff]
    %v861 = vld [vmem:[#allocation13 + $0x6c0] sm:$0xff]
    %v862 = vld [vmem:[#allocation13 + $0x6c8] sm:$0xff]
    %v863 = vld [vmem:[#allocation13 + $0x6d0] sm:$0xff]
    %v864 = vld [vmem:[#allocation13 + $0x6d8] sm:$0xff]
    %v865 = vld [vmem:[#allocation13 + $0x6e0] sm:$0xff]
    %v866 = vld [vmem:[#allocation13 + $0x6e8] sm:$0xff]
    %v867 = vld [vmem:[#allocation13 + $0x6f0] sm:$0xff]
    %v868 = vld [vmem:[#allocation13 + $0x6f8] sm:$0xff]
    %v869 = vld [vmem:[#allocation13 + $0x700] sm:$0xff]
    %v870 = vld [vmem:[#allocation13 + $0x708] sm:$0xff]
    %v871 = vld [vmem:[#allocation13 + $0x710] sm:$0xff]
    %v872 = vld [vmem:[#allocation13 + $0x718] sm:$0xff]
    %v873 = vld [vmem:[#allocation13 + $0x720] sm:$0xff]
    %v874 = vld [vmem:[#allocation13 + $0x728] sm:$0xff]
    %v875 = vld [vmem:[#allocation13 + $0x730] sm:$0xff]
    %v876 = vld [vmem:[#allocation13 + $0x738] sm:$0xff]
    %v877 = vld [vmem:[#allocation13 + $0x740] sm:$0xff]
    %v878 = vld [vmem:[#allocation13 + $0x748] sm:$0xff]
    %v879 = vld [vmem:[#allocation13 + $0x750] sm:$0xff]
    %v880 = vld [vmem:[#allocation13 + $0x758] sm:$0xff]
    %v881 = vld [vmem:[#allocation13 + $0x760] sm:$0xff]
    %v882 = vld [vmem:[#allocation13 + $0x768] sm:$0xff]
    %v883 = vld [vmem:[#allocation13 + $0x770] sm:$0xff]
    %v884 = vld [vmem:[#allocation13 + $0x778] sm:$0xff]
    %v885 = vld [vmem:[#allocation13 + $0x780] sm:$0xff]
    %v886 = vld [vmem:[#allocation13 + $0x788] sm:$0xff]
    %v887 = vld [vmem:[#allocation13 + $0x790] sm:$0xff]
    %v888 = vld [vmem:[#allocation13 + $0x798] sm:$0xff]
    %v889 = vld [vmem:[#allocation13 + $0x7a0] sm:$0xff]
    %v890 = vld [vmem:[#allocation13 + $0x7a8] sm:$0xff]
    %v891 = vld [vmem:[#allocation13 + $0x7b0] sm:$0xff]
    %v892 = vld [vmem:[#allocation13 + $0x7b8] sm:$0xff]
    %v893 = vld [vmem:[#allocation13 + $0x7c0] sm:$0xff]
    %v894 = vld [vmem:[#allocation13 + $0x7c8] sm:$0xff]
    %v895 = vld [vmem:[#allocation13 + $0x7d0] sm:$0xff]
    %v896 = vld [vmem:[#allocation13 + $0x7d8] sm:$0xff]
    %v897 = vld [vmem:[#allocation13 + $0x7e0] sm:$0xff]
    %v898 = vld [vmem:[#allocation13 + $0x7e8] sm:$0xff]
    %v899 = vld [vmem:[#allocation13 + $0x7f0] sm:$0xff]
    %v900 = vld [vmem:[#allocation13 + $0x7f8] sm:$0xff]
    %v901 = vld [vmem:[#allocation13 + $0x800] sm:$0xff]
    %v902 = vld [vmem:[#allocation13 + $0x808] sm:$0xff]
    %v903 = vld [vmem:[#allocation13 + $0x810] sm:$0xff]
    %v904 = vld [vmem:[#allocation13 + $0x818] sm:$0xff]
    %v905 = vld [vmem:[#allocation13 + $0x820] sm:$0xff]
    %v906 = vld [vmem:[#allocation13 + $0x828] sm:$0xff]
    %v907 = vld [vmem:[#allocation13 + $0x830] sm:$0xff]
    %v908 = vld [vmem:[#allocation13 + $0x838] sm:$0xff]
    %v909 = vld [vmem:[#allocation13 + $0x840] sm:$0xff]
    %v910 = vld [vmem:[#allocation13 + $0x848] sm:$0xff]
    %v911 = vld [vmem:[#allocation13 + $0x850] sm:$0xff]
    %v912 = vld [vmem:[#allocation13 + $0x858] sm:$0xff]
    %v913 = vld [vmem:[#allocation13 + $0x860] sm:$0xff]
    %v914 = vld [vmem:[#allocation13 + $0x868] sm:$0xff]
    %v915 = vld [vmem:[#allocation13 + $0x870] sm:$0xff]
    %v916 = vld [vmem:[#allocation13 + $0x878] sm:$0xff]
    %v917 = vld [vmem:[#allocation13 + $0x880] sm:$0xff]
    %v918 = vld [vmem:[#allocation13 + $0x888] sm:$0xff]
    %v919 = vld [vmem:[#allocation13 + $0x890] sm:$0xff]
    %v920 = vld [vmem:[#allocation13 + $0x898] sm:$0xff]
    %v921 = vld [vmem:[#allocation13 + $0x8a0] sm:$0xff]
    %v922 = vld [vmem:[#allocation13 + $0x8a8] sm:$0xff]
    %v923 = vld [vmem:[#allocation13 + $0x8b0] sm:$0xff]
    %v924 = vld [vmem:[#allocation13 + $0x8b8] sm:$0xff]
    %v925 = vld [vmem:[#allocation13 + $0x8c0] sm:$0xff]
    %v926 = vld [vmem:[#allocation13 + $0x8c8] sm:$0xff]
    %v927 = vld [vmem:[#allocation13 + $0x8d0] sm:$0xff]
    %v928 = vld [vmem:[#allocation13 + $0x8d8] sm:$0xff]
    %v929 = vld [vmem:[#allocation13 + $0x8e0] sm:$0xff]
    %v930 = vld [vmem:[#allocation13 + $0x8e8] sm:$0xff]
    %v931 = vld [vmem:[#allocation13 + $0x8f0] sm:$0xff]
    %v932 = vld [vmem:[#allocation13 + $0x8f8] sm:$0xff]
    %v933 = vld [vmem:[#allocation13 + $0x900] sm:$0xff]
    %v934 = vld [vmem:[#allocation13 + $0x908] sm:$0xff]
    %v935 = vld [vmem:[#allocation13 + $0x910] sm:$0xff]
    %v936 = vld [vmem:[#allocation13 + $0x918] sm:$0xff]
    %v937 = vld [vmem:[#allocation13 + $0x920] sm:$0xff]
    %v938 = vld [vmem:[#allocation13 + $0x928] sm:$0xff]
    %v939 = vld [vmem:[#allocation13 + $0x930] sm:$0xff]
    %v940 = vld [vmem:[#allocation13 + $0x938] sm:$0xff]
    %v941 = vld [vmem:[#allocation13 + $0x940] sm:$0xff]
    %v942 = vld [vmem:[#allocation13 + $0x948] sm:$0xff]
    %v943 = vld [vmem:[#allocation13 + $0x950] sm:$0xff]
    %v944 = vld [vmem:[#allocation13 + $0x958] sm:$0xff]
    %v945 = vld [vmem:[#allocation13 + $0x960] sm:$0xff]
    %v946 = vld [vmem:[#allocation13 + $0x968] sm:$0xff]
    %v947 = vld [vmem:[#allocation13 + $0x970] sm:$0xff]
    %v948 = vld [vmem:[#allocation13 + $0x978] sm:$0xff]
    %v949 = vld [vmem:[#allocation13 + $0x980] sm:$0xff]
    %v950 = vld [vmem:[#allocation13 + $0x988] sm:$0xff]
    %v951 = vld [vmem:[#allocation13 + $0x990] sm:$0xff]
    %v952 = vld [vmem:[#allocation13 + $0x998] sm:$0xff]
    %v953 = vld [vmem:[#allocation13 + $0x9a0] sm:$0xff]
    %v954 = vld [vmem:[#allocation13 + $0x9a8] sm:$0xff]
    %v955 = vld [vmem:[#allocation13 + $0x9b0] sm:$0xff]
    %v956 = vld [vmem:[#allocation13 + $0x9b8] sm:$0xff]
    %v957 = vld [vmem:[#allocation13 + $0x9c0] sm:$0xff]
    %v958 = vld [vmem:[#allocation13 + $0x9c8] sm:$0xff]
    %v959 = vld [vmem:[#allocation13 + $0x9d0] sm:$0xff]
    %v960 = vld [vmem:[#allocation13 + $0x9d8] sm:$0xff]
    %v961 = vld [vmem:[#allocation13 + $0x9e0] sm:$0xff]
    %v962 = vld [vmem:[#allocation13 + $0x9e8] sm:$0xff]
    %v963 = vld [vmem:[#allocation13 + $0x9f0] sm:$0xff]
    %v964 = vld [vmem:[#allocation13 + $0x9f8] sm:$0xff]
    %v965 = vld [vmem:[#allocation13 + $0xa00] sm:$0xff]
    %v966 = vld [vmem:[#allocation13 + $0xa08] sm:$0xff]
    %v967 = vld [vmem:[#allocation13 + $0xa10] sm:$0xff]
    %v968 = vld [vmem:[#allocation13 + $0xa18] sm:$0xff]
    %v969 = vld [vmem:[#allocation13 + $0xa20] sm:$0xff]
    %v970 = vld [vmem:[#allocation13 + $0xa28] sm:$0xff]
    %v971 = vld [vmem:[#allocation13 + $0xa30] sm:$0xff]
    %v972 = vld [vmem:[#allocation13 + $0xa38] sm:$0xff]
    %v973 = vld [vmem:[#allocation13 + $0xa40] sm:$0xff]
    %v974 = vld [vmem:[#allocation13 + $0xa48] sm:$0xff]
    %v975 = vld [vmem:[#allocation13 + $0xa50] sm:$0xff]
    %v976 = vld [vmem:[#allocation13 + $0xa58] sm:$0xff]
    %v977 = vld [vmem:[#allocation13 + $0xa60] sm:$0xff]
    %v978 = vld [vmem:[#allocation13 + $0xa68] sm:$0xff]
    %v979 = vld [vmem:[#allocation13 + $0xa70] sm:$0xff]
    %v980 = vld [vmem:[#allocation13 + $0xa78] sm:$0xff]
    %v981 = vld [vmem:[#allocation13 + $0xa80] sm:$0xff]
    %v982 = vld [vmem:[#allocation13 + $0xa88] sm:$0xff]
    %v983 = vld [vmem:[#allocation13 + $0xa90] sm:$0xff]
    %v984 = vld [vmem:[#allocation13 + $0xa98] sm:$0xff]
    %v985 = vld [vmem:[#allocation13 + $0xaa0] sm:$0xff]
    %v986 = vld [vmem:[#allocation13 + $0xaa8] sm:$0xff]
    %v987 = vld [vmem:[#allocation13 + $0xab0] sm:$0xff]
    %v988 = vld [vmem:[#allocation13 + $0xab8] sm:$0xff]
    %v989 = vld [vmem:[#allocation13 + $0xac0] sm:$0xff]
    %v990 = vld [vmem:[#allocation13 + $0xac8] sm:$0xff]
    %v991 = vld [vmem:[#allocation13 + $0xad0] sm:$0xff]
    %v992 = vld [vmem:[#allocation13 + $0xad8] sm:$0xff]
    %v993 = vld [vmem:[#allocation13 + $0xae0] sm:$0xff]
    %v994 = vld [vmem:[#allocation13 + $0xae8] sm:$0xff]
    %v995 = vld [vmem:[#allocation13 + $0xaf0] sm:$0xff]
    %v996 = vld [vmem:[#allocation13 + $0xaf8] sm:$0xff]
    %v997 = vld [vmem:[#allocation13 + $0xb00] sm:$0xff]
    %v998 = vld [vmem:[#allocation13 + $0xb08] sm:$0xff]
    %v999 = vld [vmem:[#allocation13 + $0xb10] sm:$0xff]
    %v1000 = vld [vmem:[#allocation13 + $0xb18] sm:$0xff]
    %v1001 = vld [vmem:[#allocation13 + $0xb20] sm:$0xff]
    %v1002 = vld [vmem:[#allocation13 + $0xb28] sm:$0xff]
    %v1003 = vld [vmem:[#allocation13 + $0xb30] sm:$0xff]
    %v1004 = vld [vmem:[#allocation13 + $0xb38] sm:$0xff]
    %v1005 = vld [vmem:[#allocation13 + $0xb40] sm:$0xff]
    %v1006 = vld [vmem:[#allocation13 + $0xb48] sm:$0xff]
    %v1007 = vld [vmem:[#allocation13 + $0xb50] sm:$0xff]
    %v1008 = vld [vmem:[#allocation13 + $0xb58] sm:$0xff]
    %v1009 = vld [vmem:[#allocation13 + $0xb60] sm:$0xff]
    %v1010 = vld [vmem:[#allocation13 + $0xb68] sm:$0xff]
    %v1011 = vld [vmem:[#allocation13 + $0xb70] sm:$0xff]
    %v1012 = vld [vmem:[#allocation13 + $0xb78] sm:$0xff]
    %v1013 = vld [vmem:[#allocation13 + $0xb80] sm:$0xff]
    %v1014 = vld [vmem:[#allocation13 + $0xb88] sm:$0xff]
    %v1015 = vld [vmem:[#allocation13 + $0xb90] sm:$0xff]
    %v1016 = vld [vmem:[#allocation13 + $0xb98] sm:$0xff]
    %v1017 = vld [vmem:[#allocation13 + $0xba0] sm:$0xff]
    %v1018 = vld [vmem:[#allocation13 + $0xba8] sm:$0xff]
    %v1019 = vld [vmem:[#allocation13 + $0xbb0] sm:$0xff]
    %v1020 = vld [vmem:[#allocation13 + $0xbb8] sm:$0xff]
    %v1021 = vld [vmem:[#allocation13 + $0xbc0] sm:$0xff]
    %v1022 = vld [vmem:[#allocation13 + $0xbc8] sm:$0xff]
    %v1023 = vld [vmem:[#allocation13 + $0xbd0] sm:$0xff]
    %v1024 = vld [vmem:[#allocation13 + $0xbd8] sm:$0xff]
    %v1025 = vld [vmem:[#allocation13 + $0xbe0] sm:$0xff]
    %v1026 = vld [vmem:[#allocation13 + $0xbe8] sm:$0xff]
    %v1027 = vld [vmem:[#allocation13 + $0xbf0] sm:$0xff]
    %v1028 = vld [vmem:[#allocation13 + $0xbf8] sm:$0xff]
    %v1029 = vld [vmem:[#allocation13 + $0xc00] sm:$0xff]
    %v1030 = vld [vmem:[#allocation13 + $0xc08] sm:$0xff]
    %v1031 = vld [vmem:[#allocation13 + $0xc10] sm:$0xff]
    %v1032 = vld [vmem:[#allocation13 + $0xc18] sm:$0xff]
    %v1033 = vld [vmem:[#allocation13 + $0xc20] sm:$0xff]
    %v1034 = vld [vmem:[#allocation13 + $0xc28] sm:$0xff]
    %v1035 = vld [vmem:[#allocation13 + $0xc30] sm:$0xff]
    %v1036 = vld [vmem:[#allocation13 + $0xc38] sm:$0xff]
    %v1037 = vld [vmem:[#allocation13 + $0xc40] sm:$0xff]
    %v1038 = vld [vmem:[#allocation13 + $0xc48] sm:$0xff]
    %v1039 = vld [vmem:[#allocation13 + $0xc50] sm:$0xff]
    %v1040 = vld [vmem:[#allocation13 + $0xc58] sm:$0xff]
    %v1041 = vld [vmem:[#allocation13 + $0xc60] sm:$0xff]
    %v1042 = vld [vmem:[#allocation13 + $0xc68] sm:$0xff]
    %v1043 = vld [vmem:[#allocation13 + $0xc70] sm:$0xff]
    %v1044 = vld [vmem:[#allocation13 + $0xc78] sm:$0xff]
    %v1045 = vld [vmem:[#allocation13 + $0xc80] sm:$0xff]
    %v1046 = vld [vmem:[#allocation13 + $0xc88] sm:$0xff]
    %v1047 = vld [vmem:[#allocation13 + $0xc90] sm:$0xff]
    %v1048 = vld [vmem:[#allocation13 + $0xc98] sm:$0xff]
    %v1049 = vld [vmem:[#allocation13 + $0xca0] sm:$0xff]
    %v1050 = vld [vmem:[#allocation13 + $0xca8] sm:$0xff]
    %v1051 = vld [vmem:[#allocation13 + $0xcb0] sm:$0xff]
    %v1052 = vld [vmem:[#allocation13 + $0xcb8] sm:$0xff]
    %v1053 = vld [vmem:[#allocation13 + $0xcc0] sm:$0xff]
    %v1054 = vld [vmem:[#allocation13 + $0xcc8] sm:$0xff]
    %v1055 = vld [vmem:[#allocation13 + $0xcd0] sm:$0xff]
    %v1056 = vld [vmem:[#allocation13 + $0xcd8] sm:$0xff]
    %v1057 = vld [vmem:[#allocation13 + $0xce0] sm:$0xff]
    %v1058 = vld [vmem:[#allocation13 + $0xce8] sm:$0xff]
    %v1059 = vld [vmem:[#allocation13 + $0xcf0] sm:$0xff]
    %v1060 = vld [vmem:[#allocation13 + $0xcf8] sm:$0xff]
    %v1061 = vld [vmem:[#allocation13 + $0xd00] sm:$0xff]
    %v1062 = vld [vmem:[#allocation13 + $0xd08] sm:$0xff]
    %v1063 = vld [vmem:[#allocation13 + $0xd10] sm:$0xff]
    %v1064 = vld [vmem:[#allocation13 + $0xd18] sm:$0xff]
    %v1065 = vld [vmem:[#allocation13 + $0xd20] sm:$0xff]
    %v1066 = vld [vmem:[#allocation13 + $0xd28] sm:$0xff]
    %v1067 = vld [vmem:[#allocation13 + $0xd30] sm:$0xff]
    %v1068 = vld [vmem:[#allocation13 + $0xd38] sm:$0xff]
    %v1069 = vld [vmem:[#allocation13 + $0xd40] sm:$0xff]
    %v1070 = vld [vmem:[#allocation13 + $0xd48] sm:$0xff]
    %v1071 = vld [vmem:[#allocation13 + $0xd50] sm:$0xff]
    %v1072 = vld [vmem:[#allocation13 + $0xd58] sm:$0xff]
    %v1073 = vld [vmem:[#allocation13 + $0xd60] sm:$0xff]
    %v1074 = vld [vmem:[#allocation13 + $0xd68] sm:$0xff]
    %v1075 = vld [vmem:[#allocation13 + $0xd70] sm:$0xff]
    %v1076 = vld [vmem:[#allocation13 + $0xd78] sm:$0xff]
    %v1077 = vld [vmem:[#allocation13 + $0xd80] sm:$0xff]
    %v1078 = vld [vmem:[#allocation13 + $0xd88] sm:$0xff]
    %v1079 = vld [vmem:[#allocation13 + $0xd90] sm:$0xff]
    %v1080 = vld [vmem:[#allocation13 + $0xd98] sm:$0xff]
    %v1081 = vld [vmem:[#allocation13 + $0xda0] sm:$0xff]
    %v1082 = vld [vmem:[#allocation13 + $0xda8] sm:$0xff]
    %v1083 = vld [vmem:[#allocation13 + $0xdb0] sm:$0xff]
    %v1084 = vld [vmem:[#allocation13 + $0xdb8] sm:$0xff]
    %v1085 = vld [vmem:[#allocation13 + $0xdc0] sm:$0xff]
    %v1086 = vld [vmem:[#allocation13 + $0xdc8] sm:$0xff]
    %v1087 = vld [vmem:[#allocation13 + $0xdd0] sm:$0xff]
    %v1088 = vld [vmem:[#allocation13 + $0xdd8] sm:$0xff]
    %v1089 = vld [vmem:[#allocation13 + $0xde0] sm:$0xff]
    %v1090 = vld [vmem:[#allocation13 + $0xde8] sm:$0xff]
    %v1091 = vld [vmem:[#allocation13 + $0xdf0] sm:$0xff]
    %v1092 = vld [vmem:[#allocation13 + $0xdf8] sm:$0xff]
    %v1093 = vld [vmem:[#allocation13 + $0xe00] sm:$0xff]
    %v1094 = vld [vmem:[#allocation13 + $0xe08] sm:$0xff]
    %v1095 = vld [vmem:[#allocation13 + $0xe10] sm:$0xff]
    %v1096 = vld [vmem:[#allocation13 + $0xe18] sm:$0xff]
    %v1097 = vld [vmem:[#allocation13 + $0xe20] sm:$0xff]
    %v1098 = vld [vmem:[#allocation13 + $0xe28] sm:$0xff]
    %v1099 = vld [vmem:[#allocation13 + $0xe30] sm:$0xff]
    %v1100 = vld [vmem:[#allocation13 + $0xe38] sm:$0xff]
    %v1101 = vld [vmem:[#allocation13 + $0xe40] sm:$0xff]
    %v1102 = vld [vmem:[#allocation13 + $0xe48] sm:$0xff]
    %v1103 = vld [vmem:[#allocation13 + $0xe50] sm:$0xff]
    %v1104 = vld [vmem:[#allocation13 + $0xe58] sm:$0xff]
    %v1105 = vld [vmem:[#allocation13 + $0xe60] sm:$0xff]
    %v1106 = vld [vmem:[#allocation13 + $0xe68] sm:$0xff]
    %v1107 = vld [vmem:[#allocation13 + $0xe70] sm:$0xff]
    %v1108 = vld [vmem:[#allocation13 + $0xe78] sm:$0xff]
    %v1109 = vld [vmem:[#allocation13 + $0xe80] sm:$0xff]
    %v1110 = vld [vmem:[#allocation13 + $0xe88] sm:$0xff]
    %v1111 = vld [vmem:[#allocation13 + $0xe90] sm:$0xff]
    %v1112 = vld [vmem:[#allocation13 + $0xe98] sm:$0xff]
    %v1113 = vld [vmem:[#allocation13 + $0xea0] sm:$0xff]
    %v1114 = vld [vmem:[#allocation13 + $0xea8] sm:$0xff]
    %v1115 = vld [vmem:[#allocation13 + $0xeb0] sm:$0xff]
    %v1116 = vld [vmem:[#allocation13 + $0xeb8] sm:$0xff]
    %v1117 = vld [vmem:[#allocation13 + $0xec0] sm:$0xff]
    %v1118 = vld [vmem:[#allocation13 + $0xec8] sm:$0xff]
    %v1119 = vld [vmem:[#allocation13 + $0xed0] sm:$0xff]
    %v1120 = vld [vmem:[#allocation13 + $0xed8] sm:$0xff]
    %v1121 = vld [vmem:[#allocation13 + $0xee0] sm:$0xff]
    %v1122 = vld [vmem:[#allocation13 + $0xee8] sm:$0xff]
    %v1123 = vld [vmem:[#allocation13 + $0xef0] sm:$0xff]
    %v1124 = vld [vmem:[#allocation13 + $0xef8] sm:$0xff]
    %v1125 = vld [vmem:[#allocation13 + $0xf00] sm:$0xff]
    %v1126 = vld [vmem:[#allocation13 + $0xf08] sm:$0xff]
    %v1127 = vld [vmem:[#allocation13 + $0xf10] sm:$0xff]
    %v1128 = vld [vmem:[#allocation13 + $0xf18] sm:$0xff]
    %v1129 = vld [vmem:[#allocation13 + $0xf20] sm:$0xff]
    %v1130 = vld [vmem:[#allocation13 + $0xf28] sm:$0xff]
    %v1131 = vld [vmem:[#allocation13 + $0xf30] sm:$0xff]
    %v1132 = vld [vmem:[#allocation13 + $0xf38] sm:$0xff]
    %v1133 = vld [vmem:[#allocation13 + $0xf40] sm:$0xff]
    %v1134 = vld [vmem:[#allocation13 + $0xf48] sm:$0xff]
    %v1135 = vld [vmem:[#allocation13 + $0xf50] sm:$0xff]
    %v1136 = vld [vmem:[#allocation13 + $0xf58] sm:$0xff]
    %v1137 = vld [vmem:[#allocation13 + $0xf60] sm:$0xff]
    %v1138 = vld [vmem:[#allocation13 + $0xf68] sm:$0xff]
    %v1139 = vld [vmem:[#allocation13 + $0xf70] sm:$0xff]
    %v1140 = vld [vmem:[#allocation13 + $0xf78] sm:$0xff]
    %v1141 = vld [vmem:[#allocation13 + $0xf80] sm:$0xff]
    %v1142 = vld [vmem:[#allocation13 + $0xf88] sm:$0xff]
    %v1143 = vld [vmem:[#allocation13 + $0xf90] sm:$0xff]
    %v1144 = vld [vmem:[#allocation13 + $0xf98] sm:$0xff]
    %v1145 = vld [vmem:[#allocation13 + $0xfa0] sm:$0xff]
    %v1146 = vld [vmem:[#allocation13 + $0xfa8] sm:$0xff]
    %v1147 = vld [vmem:[#allocation13 + $0xfb0] sm:$0xff]
    %v1148 = vld [vmem:[#allocation13 + $0xfb8] sm:$0xff]
    %v1149 = vld [vmem:[#allocation13 + $0xfc0] sm:$0xff]
    %v1150 = vld [vmem:[#allocation13 + $0xfc8] sm:$0xff]
    %v1151 = vld [vmem:[#allocation13 + $0xfd0] sm:$0xff]
    %v1152 = vld [vmem:[#allocation13 + $0xfd8] sm:$0xff]
    %v1153 = vld [vmem:[#allocation13 + $0xfe0] sm:$0xff]
    %v1154 = vld [vmem:[#allocation13 + $0xfe8] sm:$0xff]
    %v1155 = vld [vmem:[#allocation13 + $0xff0] sm:$0xff]
    %v1156 = vld [vmem:[#allocation13 + $0xff8] sm:$0xff]
    %v1157 = vld [vmem:[#allocation14] sm:$0xff]
    %v1158 = vld [vmem:[#allocation14 + $0x8] sm:$0xff]
    %v1159 = vld [vmem:[#allocation14 + $0x10] sm:$0xff]
    %v1160 = vld [vmem:[#allocation14 + $0x18] sm:$0xff]
    %v1161 = vld [vmem:[#allocation14 + $0x20] sm:$0xff]
    %v1162 = vld [vmem:[#allocation14 + $0x28] sm:$0xff]
    %v1163 = vld [vmem:[#allocation14 + $0x30] sm:$0xff]
    %v1164 = vld [vmem:[#allocation14 + $0x38] sm:$0xff]
    %v1165 = vld [vmem:[#allocation14 + $0x40] sm:$0x3]
    %v1166 = vld [vmem:[#allocation14 + $0x48] sm:$0x3]
    %v1167 = vld [vmem:[#allocation14 + $0x50] sm:$0x3]
    %v1168 = vld [vmem:[#allocation14 + $0x58] sm:$0x3]
    %v1169 = vld [vmem:[#allocation14 + $0x60] sm:$0x3]
    %v1170 = vld [vmem:[#allocation14 + $0x68] sm:$0x3]
    %v1171 = vld [vmem:[#allocation14 + $0x70] sm:$0x3]
    %v1172 = vld [vmem:[#allocation14 + $0x78] sm:$0x3]
    %v1174 = vsel %vm553, %v636, 0
    %v1177 = vsel %vm557, %v1165, 0
    %v1180 = vsel %vm557, %v1166, 0
    %v1183 = vsel %vm557, %v1167, 0
    %v1186 = vsel %vm557, %v1168, 0
    %v1189 = vsel %vm557, %v1169, 0
    %v1192 = vsel %vm557, %v1170, 0
    %v1195 = vsel %vm557, %v1171, 0
    %v1198 = vsel %vm557, %v1172, 0
    %1200 = vmatprep.subr.mxu0 %v1158
    %1201 = vmatpush1.msra.mxu0 %v1157
    %1202 = vmatprep.subr.mxu0 %v1180
    %1203 = vmatpush1.msra.mxu0 %v1177
    %1204 = vmatprep.subr.mxu0 0.0
    %1205 = vmatpush1.msra.mxu0 0.0
    %1206 = vmatprep.subr.mxu0 0.0
    %1207 = vmatpush1.msra.mxu0 0.0
    %1208 = vmatprep.subr.mxu0 0.0
    %1209 = vmatpush1.msra.mxu0 0.0
    %1210 = vmatprep.subr.mxu0 0.0
    %1211 = vmatpush1.msra.mxu0 0.0
    %1212 = vmatprep.subr.mxu0 0.0
    %1213 = vmatpush1.msra.mxu0 0.0
    %1214 = vmatprep.subr.mxu0 0.0
    %1215 = vmatpush1.msra.mxu0 0.0
    %1216 = vmatprep.subr.mxu0 0.0
    %1217 = vmatpush1.msra.mxu0 0.0
    %1218 = vmatprep.subr.mxu0 0.0
    %1219 = vmatpush1.msra.mxu0 0.0
    %1220 = vmatprep.subr.mxu0 0.0
    %1221 = vmatpush1.msra.mxu0 0.0
    %1222 = vmatprep.subr.mxu0 0.0
    %1223 = vmatpush1.msra.mxu0 0.0
    %1224 = vmatprep.subr.mxu0 0.0
    %1225 = vmatpush1.msra.mxu0 0.0
    %1226 = vmatprep.subr.mxu0 0.0
    %1227 = vmatpush1.msra.mxu0 0.0
    %1228 = vmatprep.subr.mxu0 0.0
    %1229 = vmatpush1.msra.mxu0 0.0
    %1230 = vmatprep.subr.mxu0 0.0
    %1231 = vmatpush1.msra.mxu0 0.0
    %1232 = vmatprep.subr.mxu0 0.0
    %1233 = vmatpush1.msra.mxu0 0.0
    %1234 = vmatprep.subr.mxu0 0.0
    %1235 = vmatpush1.msra.mxu0 0.0
    %1236 = vmatprep.subr.mxu0 0.0
    %1237 = vmatpush1.msra.mxu0 0.0
    %1238 = vmatprep.subr.mxu0 0.0
    %1239 = vmatpush1.msra.mxu0 0.0
    %1240 = vmatprep.subr.mxu0 0.0
    %1241 = vmatpush1.msra.mxu0 0.0
    %1242 = vmatprep.subr.mxu0 0.0
    %1243 = vmatpush1.msra.mxu0 0.0
    %1244 = vmatprep.subr.mxu0 0.0
    %1245 = vmatpush1.msra.mxu0 0.0
    %1246 = vmatprep.subr.mxu0 0.0
    %1247 = vmatpush1.msra.mxu0 0.0
    %1248 = vmatprep.subr.mxu0 0.0
    %1249 = vmatpush1.msra.mxu0 0.0
    %1250 = vmatprep.subr.mxu0 0.0
    %1251 = vmatpush1.msra.mxu0 0.0
    %1252 = vmatprep.subr.mxu0 0.0
    %1253 = vmatpush1.msra.mxu0 0.0
    %1254 = vmatprep.subr.mxu0 0.0
    %1255 = vmatpush1.msra.mxu0 0.0
    %1256 = vmatprep.subr.mxu0 0.0
    %1257 = vmatpush1.msra.mxu0 0.0
    %1258 = vmatprep.subr.mxu0 0.0
    %1259 = vmatpush1.msra.mxu0 0.0
    %1260 = vmatprep.subr.mxu0 0.0
    %1261 = vmatpush1.msra.mxu0 0.0
    %1262 = vmatprep.subr.mxu0 0.0
    %1263 = vmatpush1.msra.mxu0 0.0
    %1264 = vmatprep.mubr.f32.mxu0 0.0
    %1265 = vmatmul.mubr.f32.gmra.mrb[0].mxu0 %v1174
    %v1266 = vpop.f32.mrb[0].mxu0
    %v1267 = vadd.f32 0.0, %v1266
    %v1268 = vpop.f32.mrb[0].mxu0
    %v1269 = vadd.f32 0.0, %v1268
    %1270 = vdwg.mxu0
    %1271 = vmatprep.subr.mxu0 %v1160
    %1272 = vmatpush1.msra.mxu0 %v1159
    %1273 = vmatprep.subr.mxu0 %v1186
    %1274 = vmatpush1.msra.mxu0 %v1183
    %1275 = vmatprep.subr.mxu0 0.0
    %1276 = vmatpush1.msra.mxu0 0.0
    %1277 = vmatprep.subr.mxu0 0.0
    %1278 = vmatpush1.msra.mxu0 0.0
    %1279 = vmatprep.subr.mxu0 0.0
    %1280 = vmatpush1.msra.mxu0 0.0
    %1281 = vmatprep.subr.mxu0 0.0
    %1282 = vmatpush1.msra.mxu0 0.0
    %1283 = vmatprep.subr.mxu0 0.0
    %1284 = vmatpush1.msra.mxu0 0.0
    %1285 = vmatprep.subr.mxu0 0.0
    %1286 = vmatpush1.msra.mxu0 0.0
    %1287 = vmatprep.subr.mxu0 0.0
    %1288 = vmatpush1.msra.mxu0 0.0
    %1289 = vmatprep.subr.mxu0 0.0
    %1290 = vmatpush1.msra.mxu0 0.0
    %1291 = vmatprep.subr.mxu0 0.0
    %1292 = vmatpush1.msra.mxu0 0.0
    %1293 = vmatprep.subr.mxu0 0.0
    %1294 = vmatpush1.msra.mxu0 0.0
    %1295 = vmatprep.subr.mxu0 0.0
    %1296 = vmatpush1.msra.mxu0 0.0
    %1297 = vmatprep.subr.mxu0 0.0
    %1298 = vmatpush1.msra.mxu0 0.0
    %1299 = vmatprep.subr.mxu0 0.0
    %1300 = vmatpush1.msra.mxu0 0.0
    %1301 = vmatprep.subr.mxu0 0.0
    %1302 = vmatpush1.msra.mxu0 0.0
    %1303 = vmatprep.subr.mxu0 0.0
    %1304 = vmatpush1.msra.mxu0 0.0
    %1305 = vmatprep.subr.mxu0 0.0
    %1306 = vmatpush1.msra.mxu0 0.0
    %1307 = vmatprep.subr.mxu0 0.0
    %1308 = vmatpush1.msra.mxu0 0.0
    %1309 = vmatprep.subr.mxu0 0.0
    %1310 = vmatpush1.msra.mxu0 0.0
    %1311 = vmatprep.subr.mxu0 0.0
    %1312 = vmatpush1.msra.mxu0 0.0
    %1313 = vmatprep.subr.mxu0 0.0
    %1314 = vmatpush1.msra.mxu0 0.0
    %1315 = vmatprep.subr.mxu0 0.0
    %1316 = vmatpush1.msra.mxu0 0.0
    %1317 = vmatprep.subr.mxu0 0.0
    %1318 = vmatpush1.msra.mxu0 0.0
    %1319 = vmatprep.subr.mxu0 0.0
    %1320 = vmatpush1.msra.mxu0 0.0
    %1321 = vmatprep.subr.mxu0 0.0
    %1322 = vmatpush1.msra.mxu0 0.0
    %1323 = vmatprep.subr.mxu0 0.0
    %1324 = vmatpush1.msra.mxu0 0.0
    %1325 = vmatprep.subr.mxu0 0.0
    %1326 = vmatpush1.msra.mxu0 0.0
    %1327 = vmatprep.subr.mxu0 0.0
    %1328 = vmatpush1.msra.mxu0 0.0
    %1329 = vmatprep.subr.mxu0 0.0
    %1330 = vmatpush1.msra.mxu0 0.0
    %1331 = vmatprep.subr.mxu0 0.0
    %1332 = vmatpush1.msra.mxu0 0.0
    %1333 = vmatprep.subr.mxu0 0.0
    %1334 = vmatpush1.msra.mxu0 0.0
    %1335 = vmatprep.mubr.f32.mxu0 0.0
    %1336 = vmatmul.mubr.f32.gmra.mrb[0].mxu0 %v1174
    %v1337 = vpop.f32.mrb[0].mxu0
    %v1338 = vadd.f32 0.0, %v1337
    %v1339 = vpop.f32.mrb[0].mxu0
    %v1340 = vadd.f32 0.0, %v1339
    %1341 = vdwg.mxu0
    %1342 = vmatprep.subr.mxu0 %v1162
    %1343 = vmatpush1.msra.mxu0 %v1161
    %1344 = vmatprep.subr.mxu0 %v1192
    %1345 = vmatpush1.msra.mxu0 %v1189
    %1346 = vmatprep.subr.mxu0 0.0
    %1347 = vmatpush1.msra.mxu0 0.0
    %1348 = vmatprep.subr.mxu0 0.0
    %1349 = vmatpush1.msra.mxu0 0.0
    %1350 = vmatprep.subr.mxu0 0.0
    %1351 = vmatpush1.msra.mxu0 0.0
    %1352 = vmatprep.subr.mxu0 0.0
    %1353 = vmatpush1.msra.mxu0 0.0
    %1354 = vmatprep.subr.mxu0 0.0
    %1355 = vmatpush1.msra.mxu0 0.0
    %1356 = vmatprep.subr.mxu0 0.0
    %1357 = vmatpush1.msra.mxu0 0.0
    %1358 = vmatprep.subr.mxu0 0.0
    %1359 = vmatpush1.msra.mxu0 0.0
    %1360 = vmatprep.subr.mxu0 0.0
    %1361 = vmatpush1.msra.mxu0 0.0
    %1362 = vmatprep.subr.mxu0 0.0
    %1363 = vmatpush1.msra.mxu0 0.0
    %1364 = vmatprep.subr.mxu0 0.0
    %1365 = vmatpush1.msra.mxu0 0.0
    %1366 = vmatprep.subr.mxu0 0.0
    %1367 = vmatpush1.msra.mxu0 0.0
    %1368 = vmatprep.subr.mxu0 0.0
    %1369 = vmatpush1.msra.mxu0 0.0
    %1370 = vmatprep.subr.mxu0 0.0
    %1371 = vmatpush1.msra.mxu0 0.0
    %1372 = vmatprep.subr.mxu0 0.0
    %1373 = vmatpush1.msra.mxu0 0.0
    %1374 = vmatprep.subr.mxu0 0.0
    %1375 = vmatpush1.msra.mxu0 0.0
    %1376 = vmatprep.subr.mxu0 0.0
    %1377 = vmatpush1.msra.mxu0 0.0
    %1378 = vmatprep.subr.mxu0 0.0
    %1379 = vmatpush1.msra.mxu0 0.0
    %1380 = vmatprep.subr.mxu0 0.0
    %1381 = vmatpush1.msra.mxu0 0.0
    %1382 = vmatprep.subr.mxu0 0.0
    %1383 = vmatpush1.msra.mxu0 0.0
    %1384 = vmatprep.subr.mxu0 0.0
    %1385 = vmatpush1.msra.mxu0 0.0
    %1386 = vmatprep.subr.mxu0 0.0
    %1387 = vmatpush1.msra.mxu0 0.0
    %1388 = vmatprep.subr.mxu0 0.0
    %1389 = vmatpush1.msra.mxu0 0.0
    %1390 = vmatprep.subr.mxu0 0.0
    %1391 = vmatpush1.msra.mxu0 0.0
    %1392 = vmatprep.subr.mxu0 0.0
    %1393 = vmatpush1.msra.mxu0 0.0
    %1394 = vmatprep.subr.mxu0 0.0
    %1395 = vmatpush1.msra.mxu0 0.0
    %1396 = vmatprep.subr.mxu0 0.0
    %1397 = vmatpush1.msra.mxu0 0.0
    %1398 = vmatprep.subr.mxu0 0.0
    %1399 = vmatpush1.msra.mxu0 0.0
    %1400 = vmatprep.subr.mxu0 0.0
    %1401 = vmatpush1.msra.mxu0 0.0
    %1402 = vmatprep.subr.mxu0 0.0
    %1403 = vmatpush1.msra.mxu0 0.0
    %1404 = vmatprep.subr.mxu0 0.0
    %1405 = vmatpush1.msra.mxu0 0.0
    %1406 = vmatprep.mubr.f32.mxu0 0.0
    %1407 = vmatmul.mubr.f32.gmra.mrb[0].mxu0 %v1174
    %v1408 = vpop.f32.mrb[0].mxu0
    %v1409 = vadd.f32 0.0, %v1408
    %v1410 = vpop.f32.mrb[0].mxu0
    %v1411 = vadd.f32 0.0, %v1410
    %1412 = vdwg.mxu0
    %1413 = vmatprep.subr.mxu0 %v1164
    %1414 = vmatpush1.msra.mxu0 %v1163
    %1415 = vmatprep.subr.mxu0 %v1198
    %1416 = vmatpush1.msra.mxu0 %v1195
    %1417 = vmatprep.subr.mxu0 0.0
    %1418 = vmatpush1.msra.mxu0 0.0
    %1419 = vmatprep.subr.mxu0 0.0
    %1420 = vmatpush1.msra.mxu0 0.0
    %1421 = vmatprep.subr.mxu0 0.0
    %1422 = vmatpush1.msra.mxu0 0.0
    %1423 = vmatprep.subr.mxu0 0.0
    %1424 = vmatpush1.msra.mxu0 0.0
    %1425 = vmatprep.subr.mxu0 0.0
    %1426 = vmatpush1.msra.mxu0 0.0
    %1427 = vmatprep.subr.mxu0 0.0
    %1428 = vmatpush1.msra.mxu0 0.0
    %1429 = vmatprep.subr.mxu0 0.0
    %1430 = vmatpush1.msra.mxu0 0.0
    %1431 = vmatprep.subr.mxu0 0.0
    %1432 = vmatpush1.msra.mxu0 0.0
    %1433 = vmatprep.subr.mxu0 0.0
    %1434 = vmatpush1.msra.mxu0 0.0
    %1435 = vmatprep.subr.mxu0 0.0
    %1436 = vmatpush1.msra.mxu0 0.0
    %1437 = vmatprep.subr.mxu0 0.0
    %1438 = vmatpush1.msra.mxu0 0.0
    %1439 = vmatprep.subr.mxu0 0.0
    %1440 = vmatpush1.msra.mxu0 0.0
    %1441 = vmatprep.subr.mxu0 0.0
    %1442 = vmatpush1.msra.mxu0 0.0
    %1443 = vmatprep.subr.mxu0 0.0
    %1444 = vmatpush1.msra.mxu0 0.0
    %1445 = vmatprep.subr.mxu0 0.0
    %1446 = vmatpush1.msra.mxu0 0.0
    %1447 = vmatprep.subr.mxu0 0.0
    %1448 = vmatpush1.msra.mxu0 0.0
    %1449 = vmatprep.subr.mxu0 0.0
    %1450 = vmatpush1.msra.mxu0 0.0
    %1451 = vmatprep.subr.mxu0 0.0
    %1452 = vmatpush1.msra.mxu0 0.0
    %1453 = vmatprep.subr.mxu0 0.0
    %1454 = vmatpush1.msra.mxu0 0.0
    %1455 = vmatprep.subr.mxu0 0.0
    %1456 = vmatpush1.msra.mxu0 0.0
    %1457 = vmatprep.subr.mxu0 0.0
    %1458 = vmatpush1.msra.mxu0 0.0
    %1459 = vmatprep.subr.mxu0 0.0
    %1460 = vmatpush1.msra.mxu0 0.0
    %1461 = vmatprep.subr.mxu0 0.0
    %1462 = vmatpush1.msra.mxu0 0.0
    %1463 = vmatprep.subr.mxu0 0.0
    %1464 = vmatpush1.msra.mxu0 0.0
    %1465 = vmatprep.subr.mxu0 0.0
    %1466 = vmatpush1.msra.mxu0 0.0
    %1467 = vmatprep.subr.mxu0 0.0
    %1468 = vmatpush1.msra.mxu0 0.0
    %1469 = vmatprep.subr.mxu0 0.0
    %1470 = vmatpush1.msra.mxu0 0.0
    %1471 = vmatprep.subr.mxu0 0.0
    %1472 = vmatpush1.msra.mxu0 0.0
    %1473 = vmatprep.subr.mxu0 0.0
    %1474 = vmatpush1.msra.mxu0 0.0
    %1475 = vmatprep.subr.mxu0 0.0
    %1476 = vmatpush1.msra.mxu0 0.0
    %1477 = vmatprep.mubr.f32.mxu0 0.0
    %1478 = vmatmul.mubr.f32.gmra.mrb[0].mxu0 %v1174
    %v1479 = vpop.f32.mrb[0].mxu0
    %v1480 = vadd.f32 0.0, %v1479
    %v1481 = vpop.f32.mrb[0].mxu0
    %v1482 = vadd.f32 0.0, %v1481
    %1483 = vdwg.mxu0
    %v1996 = vunpack.c.l.b16 %v645
    %v1997 = vunpack.c.h.b16 %v645
    %v1998 = vunpack.c.l.b16 %v646
    %v1999 = vunpack.c.h.b16 %v646
    %v2000 = vunpack.c.l.b16 %v647
    %v2001 = vunpack.c.h.b16 %v647
    %v2002 = vunpack.c.l.b16 %v648
    %v2003 = vunpack.c.h.b16 %v648
    %v2004 = vunpack.c.l.b16 %v649
    %v2005 = vunpack.c.h.b16 %v649
    %v2006 = vunpack.c.l.b16 %v650
    %v2007 = vunpack.c.h.b16 %v650
    %v2008 = vunpack.c.l.b16 %v651
    %v2009 = vunpack.c.h.b16 %v651
    %v2010 = vunpack.c.l.b16 %v652
    %v2011 = vunpack.c.h.b16 %v652
    %v2012 = vunpack.c.l.b16 %v653
    %v2013 = vunpack.c.h.b16 %v653
    %v2014 = vunpack.c.l.b16 %v654
    %v2015 = vunpack.c.h.b16 %v654
    %v2016 = vunpack.c.l.b16 %v655
    %v2017 = vunpack.c.h.b16 %v655
    %v2018 = vunpack.c.l.b16 %v656
    %v2019 = vunpack.c.h.b16 %v656
    %v2020 = vunpack.c.l.b16 %v657
    %v2021 = vunpack.c.h.b16 %v657
    %v2022 = vunpack.c.l.b16 %v658
    %v2023 = vunpack.c.h.b16 %v658
    %v2024 = vunpack.c.l.b16 %v659
    %v2025 = vunpack.c.h.b16 %v659
    %v2026 = vunpack.c.l.b16 %v660
    %v2027 = vunpack.c.h.b16 %v660
    %v2028 = vunpack.c.l.b16 %v661
    %v2029 = vunpack.c.h.b16 %v661
    %v2030 = vunpack.c.l.b16 %v662
    %v2031 = vunpack.c.h.b16 %v662
    %v2032 = vunpack.c.l.b16 %v663
    %v2033 = vunpack.c.h.b16 %v663
    %v2034 = vunpack.c.l.b16 %v664
    %v2035 = vunpack.c.h.b16 %v664
    %v2036 = vunpack.c.l.b16 %v665
    %v2037 = vunpack.c.h.b16 %v665
    %v2038 = vunpack.c.l.b16 %v666
    %v2039 = vunpack.c.h.b16 %v666
    %v2040 = vunpack.c.l.b16 %v667
    %v2041 = vunpack.c.h.b16 %v667
    %v2042 = vunpack.c.l.b16 %v668
    %v2043 = vunpack.c.h.b16 %v668
    %v2044 = vunpack.c.l.b16 %v669
    %v2045 = vunpack.c.h.b16 %v669
    %v2046 = vunpack.c.l.b16 %v670
    %v2047 = vunpack.c.h.b16 %v670
    %v2048 = vunpack.c.l.b16 %v671
    %v2049 = vunpack.c.h.b16 %v671
    %v2050 = vunpack.c.l.b16 %v672
    %v2051 = vunpack.c.h.b16 %v672
    %v2052 = vunpack.c.l.b16 %v673
    %v2053 = vunpack.c.h.b16 %v673
    %v2054 = vunpack.c.l.b16 %v674
    %v2055 = vunpack.c.h.b16 %v674
    %v2056 = vunpack.c.l.b16 %v675
    %v2057 = vunpack.c.h.b16 %v675
    %v2058 = vunpack.c.l.b16 %v676
    %v2059 = vunpack.c.h.b16 %v676
    %v2060 = vunpack.c.l.b16 %v677
    %v2061 = vunpack.c.h.b16 %v677
    %v2062 = vunpack.c.l.b16 %v678
    %v2063 = vunpack.c.h.b16 %v678
    %v2064 = vunpack.c.l.b16 %v679
    %v2065 = vunpack.c.h.b16 %v679
    %v2066 = vunpack.c.l.b16 %v680
    %v2067 = vunpack.c.h.b16 %v680
    %v2068 = vunpack.c.l.b16 %v681
    %v2069 = vunpack.c.h.b16 %v681
    %v2070 = vunpack.c.l.b16 %v682
    %v2071 = vunpack.c.h.b16 %v682
    %v2072 = vunpack.c.l.b16 %v683
    %v2073 = vunpack.c.h.b16 %v683
    %v2074 = vunpack.c.l.b16 %v684
    %v2075 = vunpack.c.h.b16 %v684
    %v2076 = vunpack.c.l.b16 %v685
    %v2077 = vunpack.c.h.b16 %v685
    %v2078 = vunpack.c.l.b16 %v686
    %v2079 = vunpack.c.h.b16 %v686
    %v2080 = vunpack.c.l.b16 %v687
    %v2081 = vunpack.c.h.b16 %v687
    %v2082 = vunpack.c.l.b16 %v688
    %v2083 = vunpack.c.h.b16 %v688
    %v2084 = vunpack.c.l.b16 %v689
    %v2085 = vunpack.c.h.b16 %v689
    %v2086 = vunpack.c.l.b16 %v690
    %v2087 = vunpack.c.h.b16 %v690
    %v2088 = vunpack.c.l.b16 %v691
    %v2089 = vunpack.c.h.b16 %v691
    %v2090 = vunpack.c.l.b16 %v692
    %v2091 = vunpack.c.h.b16 %v692
    %v2092 = vunpack.c.l.b16 %v693
    %v2093 = vunpack.c.h.b16 %v693
    %v2094 = vunpack.c.l.b16 %v694
    %v2095 = vunpack.c.h.b16 %v694
    %v2096 = vunpack.c.l.b16 %v695
    %v2097 = vunpack.c.h.b16 %v695
    %v2098 = vunpack.c.l.b16 %v696
    %v2099 = vunpack.c.h.b16 %v696
    %v2100 = vunpack.c.l.b16 %v697
    %v2101 = vunpack.c.h.b16 %v697
    %v2102 = vunpack.c.l.b16 %v698
    %v2103 = vunpack.c.h.b16 %v698
    %v2104 = vunpack.c.l.b16 %v699
    %v2105 = vunpack.c.h.b16 %v699
    %v2106 = vunpack.c.l.b16 %v700
    %v2107 = vunpack.c.h.b16 %v700
    %v2108 = vunpack.c.l.b16 %v701
    %v2109 = vunpack.c.h.b16 %v701
    %v2110 = vunpack.c.l.b16 %v702
    %v2111 = vunpack.c.h.b16 %v702
    %v2112 = vunpack.c.l.b16 %v703
    %v2113 = vunpack.c.h.b16 %v703
    %v2114 = vunpack.c.l.b16 %v704
    %v2115 = vunpack.c.h.b16 %v704
    %v2116 = vunpack.c.l.b16 %v705
    %v2117 = vunpack.c.h.b16 %v705
    %v2118 = vunpack.c.l.b16 %v706
    %v2119 = vunpack.c.h.b16 %v706
    %v2120 = vunpack.c.l.b16 %v707
    %v2121 = vunpack.c.h.b16 %v707
    %v2122 = vunpack.c.l.b16 %v708
    %v2123 = vunpack.c.h.b16 %v708
    %v2124 = vunpack.c.l.b16 %v709
    %v2125 = vunpack.c.h.b16 %v709
    %v2126 = vunpack.c.l.b16 %v710
    %v2127 = vunpack.c.h.b16 %v710
    %v2128 = vunpack.c.l.b16 %v711
    %v2129 = vunpack.c.h.b16 %v711
    %v2130 = vunpack.c.l.b16 %v712
    %v2131 = vunpack.c.h.b16 %v712
    %v2132 = vunpack.c.l.b16 %v713
    %v2133 = vunpack.c.h.b16 %v713
    %v2134 = vunpack.c.l.b16 %v714
    %v2135 = vunpack.c.h.b16 %v714
    %v2136 = vunpack.c.l.b16 %v715
    %v2137 = vunpack.c.h.b16 %v715
    %v2138 = vunpack.c.l.b16 %v716
    %v2139 = vunpack.c.h.b16 %v716
    %v2140 = vunpack.c.l.b16 %v717
    %v2141 = vunpack.c.h.b16 %v717
    %v2142 = vunpack.c.l.b16 %v718
    %v2143 = vunpack.c.h.b16 %v718
    %v2144 = vunpack.c.l.b16 %v719
    %v2145 = vunpack.c.h.b16 %v719
    %v2146 = vunpack.c.l.b16 %v720
    %v2147 = vunpack.c.h.b16 %v720
    %v2148 = vunpack.c.l.b16 %v721
    %v2149 = vunpack.c.h.b16 %v721
    %v2150 = vunpack.c.l.b16 %v722
    %v2151 = vunpack.c.h.b16 %v722
    %v2152 = vunpack.c.l.b16 %v723
    %v2153 = vunpack.c.h.b16 %v723
    %v2154 = vunpack.c.l.b16 %v724
    %v2155 = vunpack.c.h.b16 %v724
    %v2156 = vunpack.c.l.b16 %v725
    %v2157 = vunpack.c.h.b16 %v725
    %v2158 = vunpack.c.l.b16 %v726
    %v2159 = vunpack.c.h.b16 %v726
    %v2160 = vunpack.c.l.b16 %v727
    %v2161 = vunpack.c.h.b16 %v727
    %v2162 = vunpack.c.l.b16 %v728
    %v2163 = vunpack.c.h.b16 %v728
    %v2164 = vunpack.c.l.b16 %v729
    %v2165 = vunpack.c.h.b16 %v729
    %v2166 = vunpack.c.l.b16 %v730
    %v2167 = vunpack.c.h.b16 %v730
    %v2168 = vunpack.c.l.b16 %v731
    %v2169 = vunpack.c.h.b16 %v731
    %v2170 = vunpack.c.l.b16 %v732
    %v2171 = vunpack.c.h.b16 %v732
    %v2172 = vunpack.c.l.b16 %v733
    %v2173 = vunpack.c.h.b16 %v733
    %v2174 = vunpack.c.l.b16 %v734
    %v2175 = vunpack.c.h.b16 %v734
    %v2176 = vunpack.c.l.b16 %v735
    %v2177 = vunpack.c.h.b16 %v735
    %v2178 = vunpack.c.l.b16 %v736
    %v2179 = vunpack.c.h.b16 %v736
    %v2180 = vunpack.c.l.b16 %v737
    %v2181 = vunpack.c.h.b16 %v737
    %v2182 = vunpack.c.l.b16 %v738
    %v2183 = vunpack.c.h.b16 %v738
    %v2184 = vunpack.c.l.b16 %v739
    %v2185 = vunpack.c.h.b16 %v739
    %v2186 = vunpack.c.l.b16 %v740
    %v2187 = vunpack.c.h.b16 %v740
    %v2188 = vunpack.c.l.b16 %v741
    %v2189 = vunpack.c.h.b16 %v741
    %v2190 = vunpack.c.l.b16 %v742
    %v2191 = vunpack.c.h.b16 %v742
    %v2192 = vunpack.c.l.b16 %v743
    %v2193 = vunpack.c.h.b16 %v743
    %v2194 = vunpack.c.l.b16 %v744
    %v2195 = vunpack.c.h.b16 %v744
    %v2196 = vunpack.c.l.b16 %v745
    %v2197 = vunpack.c.h.b16 %v745
    %v2198 = vunpack.c.l.b16 %v746
    %v2199 = vunpack.c.h.b16 %v746
    %v2200 = vunpack.c.l.b16 %v747
    %v2201 = vunpack.c.h.b16 %v747
    %v2202 = vunpack.c.l.b16 %v748
    %v2203 = vunpack.c.h.b16 %v748
    %v2204 = vunpack.c.l.b16 %v749
    %v2205 = vunpack.c.h.b16 %v749
    %v2206 = vunpack.c.l.b16 %v750
    %v2207 = vunpack.c.h.b16 %v750
    %v2208 = vunpack.c.l.b16 %v751
    %v2209 = vunpack.c.h.b16 %v751
    %v2210 = vunpack.c.l.b16 %v752
    %v2211 = vunpack.c.h.b16 %v752
    %v2212 = vunpack.c.l.b16 %v753
    %v2213 = vunpack.c.h.b16 %v753
    %v2214 = vunpack.c.l.b16 %v754
    %v2215 = vunpack.c.h.b16 %v754
    %v2216 = vunpack.c.l.b16 %v755
    %v2217 = vunpack.c.h.b16 %v755
    %v2218 = vunpack.c.l.b16 %v756
    %v2219 = vunpack.c.h.b16 %v756
    %v2220 = vunpack.c.l.b16 %v757
    %v2221 = vunpack.c.h.b16 %v757
    %v2222 = vunpack.c.l.b16 %v758
    %v2223 = vunpack.c.h.b16 %v758
    %v2224 = vunpack.c.l.b16 %v759
    %v2225 = vunpack.c.h.b16 %v759
    %v2226 = vunpack.c.l.b16 %v760
    %v2227 = vunpack.c.h.b16 %v760
    %v2228 = vunpack.c.l.b16 %v761
    %v2229 = vunpack.c.h.b16 %v761
    %v2230 = vunpack.c.l.b16 %v762
    %v2231 = vunpack.c.h.b16 %v762
    %v2232 = vunpack.c.l.b16 %v763
    %v2233 = vunpack.c.h.b16 %v763
    %v2234 = vunpack.c.l.b16 %v764
    %v2235 = vunpack.c.h.b16 %v764
    %v2236 = vunpack.c.l.b16 %v765
    %v2237 = vunpack.c.h.b16 %v765
    %v2238 = vunpack.c.l.b16 %v766
    %v2239 = vunpack.c.h.b16 %v766
    %v2240 = vunpack.c.l.b16 %v767
    %v2241 = vunpack.c.h.b16 %v767
    %v2242 = vunpack.c.l.b16 %v768
    %v2243 = vunpack.c.h.b16 %v768
    %v2244 = vunpack.c.l.b16 %v769
    %v2245 = vunpack.c.h.b16 %v769
    %v2246 = vunpack.c.l.b16 %v770
    %v2247 = vunpack.c.h.b16 %v770
    %v2248 = vunpack.c.l.b16 %v771
    %v2249 = vunpack.c.h.b16 %v771
    %v2250 = vunpack.c.l.b16 %v772
    %v2251 = vunpack.c.h.b16 %v772
    %v2252 = vunpack.c.l.b16 %v773
    %v2253 = vunpack.c.h.b16 %v773
    %v2254 = vunpack.c.l.b16 %v774
    %v2255 = vunpack.c.h.b16 %v774
    %v2256 = vunpack.c.l.b16 %v775
    %v2257 = vunpack.c.h.b16 %v775
    %v2258 = vunpack.c.l.b16 %v776
    %v2259 = vunpack.c.h.b16 %v776
    %v2260 = vunpack.c.l.b16 %v777
    %v2261 = vunpack.c.h.b16 %v777
    %v2262 = vunpack.c.l.b16 %v778
    %v2263 = vunpack.c.h.b16 %v778
    %v2264 = vunpack.c.l.b16 %v779
    %v2265 = vunpack.c.h.b16 %v779
    %v2266 = vunpack.c.l.b16 %v780
    %v2267 = vunpack.c.h.b16 %v780
    %v2268 = vunpack.c.l.b16 %v781
    %v2269 = vunpack.c.h.b16 %v781
    %v2270 = vunpack.c.l.b16 %v782
    %v2271 = vunpack.c.h.b16 %v782
    %v2272 = vunpack.c.l.b16 %v783
    %v2273 = vunpack.c.h.b16 %v783
    %v2274 = vunpack.c.l.b16 %v784
    %v2275 = vunpack.c.h.b16 %v784
    %v2276 = vunpack.c.l.b16 %v785
    %v2277 = vunpack.c.h.b16 %v785
    %v2278 = vunpack.c.l.b16 %v786
    %v2279 = vunpack.c.h.b16 %v786
    %v2280 = vunpack.c.l.b16 %v787
    %v2281 = vunpack.c.h.b16 %v787
    %v2282 = vunpack.c.l.b16 %v788
    %v2283 = vunpack.c.h.b16 %v788
    %v2284 = vunpack.c.l.b16 %v789
    %v2285 = vunpack.c.h.b16 %v789
    %v2286 = vunpack.c.l.b16 %v790
    %v2287 = vunpack.c.h.b16 %v790
    %v2288 = vunpack.c.l.b16 %v791
    %v2289 = vunpack.c.h.b16 %v791
    %v2290 = vunpack.c.l.b16 %v792
    %v2291 = vunpack.c.h.b16 %v792
    %v2292 = vunpack.c.l.b16 %v793
    %v2293 = vunpack.c.h.b16 %v793
    %v2294 = vunpack.c.l.b16 %v794
    %v2295 = vunpack.c.h.b16 %v794
    %v2296 = vunpack.c.l.b16 %v795
    %v2297 = vunpack.c.h.b16 %v795
    %v2298 = vunpack.c.l.b16 %v796
    %v2299 = vunpack.c.h.b16 %v796
    %v2300 = vunpack.c.l.b16 %v797
    %v2301 = vunpack.c.h.b16 %v797
    %v2302 = vunpack.c.l.b16 %v798
    %v2303 = vunpack.c.h.b16 %v798
    %v2304 = vunpack.c.l.b16 %v799
    %v2305 = vunpack.c.h.b16 %v799
    %v2306 = vunpack.c.l.b16 %v800
    %v2307 = vunpack.c.h.b16 %v800
    %v2308 = vunpack.c.l.b16 %v801
    %v2309 = vunpack.c.h.b16 %v801
    %v2310 = vunpack.c.l.b16 %v802
    %v2311 = vunpack.c.h.b16 %v802
    %v2312 = vunpack.c.l.b16 %v803
    %v2313 = vunpack.c.h.b16 %v803
    %v2314 = vunpack.c.l.b16 %v804
    %v2315 = vunpack.c.h.b16 %v804
    %v2316 = vunpack.c.l.b16 %v805
    %v2317 = vunpack.c.h.b16 %v805
    %v2318 = vunpack.c.l.b16 %v806
    %v2319 = vunpack.c.h.b16 %v806
    %v2320 = vunpack.c.l.b16 %v807
    %v2321 = vunpack.c.h.b16 %v807
    %v2322 = vunpack.c.l.b16 %v808
    %v2323 = vunpack.c.h.b16 %v808
    %v2324 = vunpack.c.l.b16 %v809
    %v2325 = vunpack.c.h.b16 %v809
    %v2326 = vunpack.c.l.b16 %v810
    %v2327 = vunpack.c.h.b16 %v810
    %v2328 = vunpack.c.l.b16 %v811
    %v2329 = vunpack.c.h.b16 %v811
    %v2330 = vunpack.c.l.b16 %v812
    %v2331 = vunpack.c.h.b16 %v812
    %v2332 = vunpack.c.l.b16 %v813
    %v2333 = vunpack.c.h.b16 %v813
    %v2334 = vunpack.c.l.b16 %v814
    %v2335 = vunpack.c.h.b16 %v814
    %v2336 = vunpack.c.l.b16 %v815
    %v2337 = vunpack.c.h.b16 %v815
    %v2338 = vunpack.c.l.b16 %v816
    %v2339 = vunpack.c.h.b16 %v816
    %v2340 = vunpack.c.l.b16 %v817
    %v2341 = vunpack.c.h.b16 %v817
    %v2342 = vunpack.c.l.b16 %v818
    %v2343 = vunpack.c.h.b16 %v818
    %v2344 = vunpack.c.l.b16 %v819
    %v2345 = vunpack.c.h.b16 %v819
    %v2346 = vunpack.c.l.b16 %v820
    %v2347 = vunpack.c.h.b16 %v820
    %v2348 = vunpack.c.l.b16 %v821
    %v2349 = vunpack.c.h.b16 %v821
    %v2350 = vunpack.c.l.b16 %v822
    %v2351 = vunpack.c.h.b16 %v822
    %v2352 = vunpack.c.l.b16 %v823
    %v2353 = vunpack.c.h.b16 %v823
    %v2354 = vunpack.c.l.b16 %v824
    %v2355 = vunpack.c.h.b16 %v824
    %v2356 = vunpack.c.l.b16 %v825
    %v2357 = vunpack.c.h.b16 %v825
    %v2358 = vunpack.c.l.b16 %v826
    %v2359 = vunpack.c.h.b16 %v826
    %v2360 = vunpack.c.l.b16 %v827
    %v2361 = vunpack.c.h.b16 %v827
    %v2362 = vunpack.c.l.b16 %v828
    %v2363 = vunpack.c.h.b16 %v828
    %v2364 = vunpack.c.l.b16 %v829
    %v2365 = vunpack.c.h.b16 %v829
    %v2366 = vunpack.c.l.b16 %v830
    %v2367 = vunpack.c.h.b16 %v830
    %v2368 = vunpack.c.l.b16 %v831
    %v2369 = vunpack.c.h.b16 %v831
    %v2370 = vunpack.c.l.b16 %v832
    %v2371 = vunpack.c.h.b16 %v832
    %v2372 = vunpack.c.l.b16 %v833
    %v2373 = vunpack.c.h.b16 %v833
    %v2374 = vunpack.c.l.b16 %v834
    %v2375 = vunpack.c.h.b16 %v834
    %v2376 = vunpack.c.l.b16 %v835
    %v2377 = vunpack.c.h.b16 %v835
    %v2378 = vunpack.c.l.b16 %v836
    %v2379 = vunpack.c.h.b16 %v836
    %v2380 = vunpack.c.l.b16 %v837
    %v2381 = vunpack.c.h.b16 %v837
    %v2382 = vunpack.c.l.b16 %v838
    %v2383 = vunpack.c.h.b16 %v838
    %v2384 = vunpack.c.l.b16 %v839
    %v2385 = vunpack.c.h.b16 %v839
    %v2386 = vunpack.c.l.b16 %v840
    %v2387 = vunpack.c.h.b16 %v840
    %v2388 = vunpack.c.l.b16 %v841
    %v2389 = vunpack.c.h.b16 %v841
    %v2390 = vunpack.c.l.b16 %v842
    %v2391 = vunpack.c.h.b16 %v842
    %v2392 = vunpack.c.l.b16 %v843
    %v2393 = vunpack.c.h.b16 %v843
    %v2394 = vunpack.c.l.b16 %v844
    %v2395 = vunpack.c.h.b16 %v844
    %v2396 = vunpack.c.l.b16 %v845
    %v2397 = vunpack.c.h.b16 %v845
    %v2398 = vunpack.c.l.b16 %v846
    %v2399 = vunpack.c.h.b16 %v846
    %v2400 = vunpack.c.l.b16 %v847
    %v2401 = vunpack.c.h.b16 %v847
    %v2402 = vunpack.c.l.b16 %v848
    %v2403 = vunpack.c.h.b16 %v848
    %v2404 = vunpack.c.l.b16 %v849
    %v2405 = vunpack.c.h.b16 %v849
    %v2406 = vunpack.c.l.b16 %v850
    %v2407 = vunpack.c.h.b16 %v850
    %v2408 = vunpack.c.l.b16 %v851
    %v2409 = vunpack.c.h.b16 %v851
    %v2410 = vunpack.c.l.b16 %v852
    %v2411 = vunpack.c.h.b16 %v852
    %v2412 = vunpack.c.l.b16 %v853
    %v2413 = vunpack.c.h.b16 %v853
    %v2414 = vunpack.c.l.b16 %v854
    %v2415 = vunpack.c.h.b16 %v854
    %v2416 = vunpack.c.l.b16 %v855
    %v2417 = vunpack.c.h.b16 %v855
    %v2418 = vunpack.c.l.b16 %v856
    %v2419 = vunpack.c.h.b16 %v856
    %v2420 = vunpack.c.l.b16 %v857
    %v2421 = vunpack.c.h.b16 %v857
    %v2422 = vunpack.c.l.b16 %v858
    %v2423 = vunpack.c.h.b16 %v858
    %v2424 = vunpack.c.l.b16 %v859
    %v2425 = vunpack.c.h.b16 %v859
    %v2426 = vunpack.c.l.b16 %v860
    %v2427 = vunpack.c.h.b16 %v860
    %v2428 = vunpack.c.l.b16 %v861
    %v2429 = vunpack.c.h.b16 %v861
    %v2430 = vunpack.c.l.b16 %v862
    %v2431 = vunpack.c.h.b16 %v862
    %v2432 = vunpack.c.l.b16 %v863
    %v2433 = vunpack.c.h.b16 %v863
    %v2434 = vunpack.c.l.b16 %v864
    %v2435 = vunpack.c.h.b16 %v864
    %v2436 = vunpack.c.l.b16 %v865
    %v2437 = vunpack.c.h.b16 %v865
    %v2438 = vunpack.c.l.b16 %v866
    %v2439 = vunpack.c.h.b16 %v866
    %v2440 = vunpack.c.l.b16 %v867
    %v2441 = vunpack.c.h.b16 %v867
    %v2442 = vunpack.c.l.b16 %v868
    %v2443 = vunpack.c.h.b16 %v868
    %v2444 = vunpack.c.l.b16 %v869
    %v2445 = vunpack.c.h.b16 %v869
    %v2446 = vunpack.c.l.b16 %v870
    %v2447 = vunpack.c.h.b16 %v870
    %v2448 = vunpack.c.l.b16 %v871
    %v2449 = vunpack.c.h.b16 %v871
    %v2450 = vunpack.c.l.b16 %v872
    %v2451 = vunpack.c.h.b16 %v872
    %v2452 = vunpack.c.l.b16 %v873
    %v2453 = vunpack.c.h.b16 %v873
    %v2454 = vunpack.c.l.b16 %v874
    %v2455 = vunpack.c.h.b16 %v874
    %v2456 = vunpack.c.l.b16 %v875
    %v2457 = vunpack.c.h.b16 %v875
    %v2458 = vunpack.c.l.b16 %v876
    %v2459 = vunpack.c.h.b16 %v876
    %v2460 = vunpack.c.l.b16 %v877
    %v2461 = vunpack.c.h.b16 %v877
    %v2462 = vunpack.c.l.b16 %v878
    %v2463 = vunpack.c.h.b16 %v878
    %v2464 = vunpack.c.l.b16 %v879
    %v2465 = vunpack.c.h.b16 %v879
    %v2466 = vunpack.c.l.b16 %v880
    %v2467 = vunpack.c.h.b16 %v880
    %v2468 = vunpack.c.l.b16 %v881
    %v2469 = vunpack.c.h.b16 %v881
    %v2470 = vunpack.c.l.b16 %v882
    %v2471 = vunpack.c.h.b16 %v882
    %v2472 = vunpack.c.l.b16 %v883
    %v2473 = vunpack.c.h.b16 %v883
    %v2474 = vunpack.c.l.b16 %v884
    %v2475 = vunpack.c.h.b16 %v884
    %v2476 = vunpack.c.l.b16 %v885
    %v2477 = vunpack.c.h.b16 %v885
    %v2478 = vunpack.c.l.b16 %v886
    %v2479 = vunpack.c.h.b16 %v886
    %v2480 = vunpack.c.l.b16 %v887
    %v2481 = vunpack.c.h.b16 %v887
    %v2482 = vunpack.c.l.b16 %v888
    %v2483 = vunpack.c.h.b16 %v888
    %v2484 = vunpack.c.l.b16 %v889
    %v2485 = vunpack.c.h.b16 %v889
    %v2486 = vunpack.c.l.b16 %v890
    %v2487 = vunpack.c.h.b16 %v890
    %v2488 = vunpack.c.l.b16 %v891
    %v2489 = vunpack.c.h.b16 %v891
    %v2490 = vunpack.c.l.b16 %v892
    %v2491 = vunpack.c.h.b16 %v892
    %v2492 = vunpack.c.l.b16 %v893
    %v2493 = vunpack.c.h.b16 %v893
    %v2494 = vunpack.c.l.b16 %v894
    %v2495 = vunpack.c.h.b16 %v894
    %v2496 = vunpack.c.l.b16 %v895
    %v2497 = vunpack.c.h.b16 %v895
    %v2498 = vunpack.c.l.b16 %v896
    %v2499 = vunpack.c.h.b16 %v896
    %v2500 = vunpack.c.l.b16 %v897
    %v2501 = vunpack.c.h.b16 %v897
    %v2502 = vunpack.c.l.b16 %v898
    %v2503 = vunpack.c.h.b16 %v898
    %v2504 = vunpack.c.l.b16 %v899
    %v2505 = vunpack.c.h.b16 %v899
    %v2506 = vunpack.c.l.b16 %v900
    %v2507 = vunpack.c.h.b16 %v900
    %v2508 = vunpack.c.l.b16 %v901
    %v2509 = vunpack.c.h.b16 %v901
    %v2510 = vunpack.c.l.b16 %v902
    %v2511 = vunpack.c.h.b16 %v902
    %v2512 = vunpack.c.l.b16 %v903
    %v2513 = vunpack.c.h.b16 %v903
    %v2514 = vunpack.c.l.b16 %v904
    %v2515 = vunpack.c.h.b16 %v904
    %v2516 = vunpack.c.l.b16 %v905
    %v2517 = vunpack.c.h.b16 %v905
    %v2518 = vunpack.c.l.b16 %v906
    %v2519 = vunpack.c.h.b16 %v906
    %v2520 = vunpack.c.l.b16 %v907
    %v2521 = vunpack.c.h.b16 %v907
    %v2522 = vunpack.c.l.b16 %v908
    %v2523 = vunpack.c.h.b16 %v908
    %v2524 = vunpack.c.l.b16 %v909
    %v2525 = vunpack.c.h.b16 %v909
    %v2526 = vunpack.c.l.b16 %v910
    %v2527 = vunpack.c.h.b16 %v910
    %v2528 = vunpack.c.l.b16 %v911
    %v2529 = vunpack.c.h.b16 %v911
    %v2530 = vunpack.c.l.b16 %v912
    %v2531 = vunpack.c.h.b16 %v912
    %v2532 = vunpack.c.l.b16 %v913
    %v2533 = vunpack.c.h.b16 %v913
    %v2534 = vunpack.c.l.b16 %v914
    %v2535 = vunpack.c.h.b16 %v914
    %v2536 = vunpack.c.l.b16 %v915
    %v2537 = vunpack.c.h.b16 %v915
    %v2538 = vunpack.c.l.b16 %v916
    %v2539 = vunpack.c.h.b16 %v916
    %v2540 = vunpack.c.l.b16 %v917
    %v2541 = vunpack.c.h.b16 %v917
    %v2542 = vunpack.c.l.b16 %v918
    %v2543 = vunpack.c.h.b16 %v918
    %v2544 = vunpack.c.l.b16 %v919
    %v2545 = vunpack.c.h.b16 %v919
    %v2546 = vunpack.c.l.b16 %v920
    %v2547 = vunpack.c.h.b16 %v920
    %v2548 = vunpack.c.l.b16 %v921
    %v2549 = vunpack.c.h.b16 %v921
    %v2550 = vunpack.c.l.b16 %v922
    %v2551 = vunpack.c.h.b16 %v922
    %v2552 = vunpack.c.l.b16 %v923
    %v2553 = vunpack.c.h.b16 %v923
    %v2554 = vunpack.c.l.b16 %v924
    %v2555 = vunpack.c.h.b16 %v924
    %v2556 = vunpack.c.l.b16 %v925
    %v2557 = vunpack.c.h.b16 %v925
    %v2558 = vunpack.c.l.b16 %v926
    %v2559 = vunpack.c.h.b16 %v926
    %v2560 = vunpack.c.l.b16 %v927
    %v2561 = vunpack.c.h.b16 %v927
    %v2562 = vunpack.c.l.b16 %v928
    %v2563 = vunpack.c.h.b16 %v928
    %v2564 = vunpack.c.l.b16 %v929
    %v2565 = vunpack.c.h.b16 %v929
    %v2566 = vunpack.c.l.b16 %v930
    %v2567 = vunpack.c.h.b16 %v930
    %v2568 = vunpack.c.l.b16 %v931
    %v2569 = vunpack.c.h.b16 %v931
    %v2570 = vunpack.c.l.b16 %v932
    %v2571 = vunpack.c.h.b16 %v932
    %v2572 = vunpack.c.l.b16 %v933
    %v2573 = vunpack.c.h.b16 %v933
    %v2574 = vunpack.c.l.b16 %v934
    %v2575 = vunpack.c.h.b16 %v934
    %v2576 = vunpack.c.l.b16 %v935
    %v2577 = vunpack.c.h.b16 %v935
    %v2578 = vunpack.c.l.b16 %v936
    %v2579 = vunpack.c.h.b16 %v936
    %v2580 = vunpack.c.l.b16 %v937
    %v2581 = vunpack.c.h.b16 %v937
    %v2582 = vunpack.c.l.b16 %v938
    %v2583 = vunpack.c.h.b16 %v938
    %v2584 = vunpack.c.l.b16 %v939
    %v2585 = vunpack.c.h.b16 %v939
    %v2586 = vunpack.c.l.b16 %v940
    %v2587 = vunpack.c.h.b16 %v940
    %v2588 = vunpack.c.l.b16 %v941
    %v2589 = vunpack.c.h.b16 %v941
    %v2590 = vunpack.c.l.b16 %v942
    %v2591 = vunpack.c.h.b16 %v942
    %v2592 = vunpack.c.l.b16 %v943
    %v2593 = vunpack.c.h.b16 %v943
    %v2594 = vunpack.c.l.b16 %v944
    %v2595 = vunpack.c.h.b16 %v944
    %v2596 = vunpack.c.l.b16 %v945
    %v2597 = vunpack.c.h.b16 %v945
    %v2598 = vunpack.c.l.b16 %v946
    %v2599 = vunpack.c.h.b16 %v946
    %v2600 = vunpack.c.l.b16 %v947
    %v2601 = vunpack.c.h.b16 %v947
    %v2602 = vunpack.c.l.b16 %v948
    %v2603 = vunpack.c.h.b16 %v948
    %v2604 = vunpack.c.l.b16 %v949
    %v2605 = vunpack.c.h.b16 %v949
    %v2606 = vunpack.c.l.b16 %v950
    %v2607 = vunpack.c.h.b16 %v950
    %v2608 = vunpack.c.l.b16 %v951
    %v2609 = vunpack.c.h.b16 %v951
    %v2610 = vunpack.c.l.b16 %v952
    %v2611 = vunpack.c.h.b16 %v952
    %v2612 = vunpack.c.l.b16 %v953
    %v2613 = vunpack.c.h.b16 %v953
    %v2614 = vunpack.c.l.b16 %v954
    %v2615 = vunpack.c.h.b16 %v954
    %v2616 = vunpack.c.l.b16 %v955
    %v2617 = vunpack.c.h.b16 %v955
    %v2618 = vunpack.c.l.b16 %v956
    %v2619 = vunpack.c.h.b16 %v956
    %v2620 = vunpack.c.l.b16 %v957
    %v2621 = vunpack.c.h.b16 %v957
    %v2622 = vunpack.c.l.b16 %v958
    %v2623 = vunpack.c.h.b16 %v958
    %v2624 = vunpack.c.l.b16 %v959
    %v2625 = vunpack.c.h.b16 %v959
    %v2626 = vunpack.c.l.b16 %v960
    %v2627 = vunpack.c.h.b16 %v960
    %v2628 = vunpack.c.l.b16 %v961
    %v2629 = vunpack.c.h.b16 %v961
    %v2630 = vunpack.c.l.b16 %v962
    %v2631 = vunpack.c.h.b16 %v962
    %v2632 = vunpack.c.l.b16 %v963
    %v2633 = vunpack.c.h.b16 %v963
    %v2634 = vunpack.c.l.b16 %v964
    %v2635 = vunpack.c.h.b16 %v964
    %v2636 = vunpack.c.l.b16 %v965
    %v2637 = vunpack.c.h.b16 %v965
    %v2638 = vunpack.c.l.b16 %v966
    %v2639 = vunpack.c.h.b16 %v966
    %v2640 = vunpack.c.l.b16 %v967
    %v2641 = vunpack.c.h.b16 %v967
    %v2642 = vunpack.c.l.b16 %v968
    %v2643 = vunpack.c.h.b16 %v968
    %v2644 = vunpack.c.l.b16 %v969
    %v2645 = vunpack.c.h.b16 %v969
    %v2646 = vunpack.c.l.b16 %v970
    %v2647 = vunpack.c.h.b16 %v970
    %v2648 = vunpack.c.l.b16 %v971
    %v2649 = vunpack.c.h.b16 %v971
    %v2650 = vunpack.c.l.b16 %v972
    %v2651 = vunpack.c.h.b16 %v972
    %v2652 = vunpack.c.l.b16 %v973
    %v2653 = vunpack.c.h.b16 %v973
    %v2654 = vunpack.c.l.b16 %v974
    %v2655 = vunpack.c.h.b16 %v974
    %v2656 = vunpack.c.l.b16 %v975
    %v2657 = vunpack.c.h.b16 %v975
    %v2658 = vunpack.c.l.b16 %v976
    %v2659 = vunpack.c.h.b16 %v976
    %v2660 = vunpack.c.l.b16 %v977
    %v2661 = vunpack.c.h.b16 %v977
    %v2662 = vunpack.c.l.b16 %v978
    %v2663 = vunpack.c.h.b16 %v978
    %v2664 = vunpack.c.l.b16 %v979
    %v2665 = vunpack.c.h.b16 %v979
    %v2666 = vunpack.c.l.b16 %v980
    %v2667 = vunpack.c.h.b16 %v980
    %v2668 = vunpack.c.l.b16 %v981
    %v2669 = vunpack.c.h.b16 %v981
    %v2670 = vunpack.c.l.b16 %v982
    %v2671 = vunpack.c.h.b16 %v982
    %v2672 = vunpack.c.l.b16 %v983
    %v2673 = vunpack.c.h.b16 %v983
    %v2674 = vunpack.c.l.b16 %v984
    %v2675 = vunpack.c.h.b16 %v984
    %v2676 = vunpack.c.l.b16 %v985
    %v2677 = vunpack.c.h.b16 %v985
    %v2678 = vunpack.c.l.b16 %v986
    %v2679 = vunpack.c.h.b16 %v986
    %v2680 = vunpack.c.l.b16 %v987
    %v2681 = vunpack.c.h.b16 %v987
    %v2682 = vunpack.c.l.b16 %v988
    %v2683 = vunpack.c.h.b16 %v988
    %v2684 = vunpack.c.l.b16 %v989
    %v2685 = vunpack.c.h.b16 %v989
    %v2686 = vunpack.c.l.b16 %v990
    %v2687 = vunpack.c.h.b16 %v990
    %v2688 = vunpack.c.l.b16 %v991
    %v2689 = vunpack.c.h.b16 %v991
    %v2690 = vunpack.c.l.b16 %v992
    %v2691 = vunpack.c.h.b16 %v992
    %v2692 = vunpack.c.l.b16 %v993
    %v2693 = vunpack.c.h.b16 %v993
    %v2694 = vunpack.c.l.b16 %v994
    %v2695 = vunpack.c.h.b16 %v994
    %v2696 = vunpack.c.l.b16 %v995
    %v2697 = vunpack.c.h.b16 %v995
    %v2698 = vunpack.c.l.b16 %v996
    %v2699 = vunpack.c.h.b16 %v996
    %v2700 = vunpack.c.l.b16 %v997
    %v2701 = vunpack.c.h.b16 %v997
    %v2702 = vunpack.c.l.b16 %v998
    %v2703 = vunpack.c.h.b16 %v998
    %v2704 = vunpack.c.l.b16 %v999
    %v2705 = vunpack.c.h.b16 %v999
    %v2706 = vunpack.c.l.b16 %v1000
    %v2707 = vunpack.c.h.b16 %v1000
    %v2708 = vunpack.c.l.b16 %v1001
    %v2709 = vunpack.c.h.b16 %v1001
    %v2710 = vunpack.c.l.b16 %v1002
    %v2711 = vunpack.c.h.b16 %v1002
    %v2712 = vunpack.c.l.b16 %v1003
    %v2713 = vunpack.c.h.b16 %v1003
    %v2714 = vunpack.c.l.b16 %v1004
    %v2715 = vunpack.c.h.b16 %v1004
    %v2716 = vunpack.c.l.b16 %v1005
    %v2717 = vunpack.c.h.b16 %v1005
    %v2718 = vunpack.c.l.b16 %v1006
    %v2719 = vunpack.c.h.b16 %v1006
    %v2720 = vunpack.c.l.b16 %v1007
    %v2721 = vunpack.c.h.b16 %v1007
    %v2722 = vunpack.c.l.b16 %v1008
    %v2723 = vunpack.c.h.b16 %v1008
    %v2724 = vunpack.c.l.b16 %v1009
    %v2725 = vunpack.c.h.b16 %v1009
    %v2726 = vunpack.c.l.b16 %v1010
    %v2727 = vunpack.c.h.b16 %v1010
    %v2728 = vunpack.c.l.b16 %v1011
    %v2729 = vunpack.c.h.b16 %v1011
    %v2730 = vunpack.c.l.b16 %v1012
    %v2731 = vunpack.c.h.b16 %v1012
    %v2732 = vunpack.c.l.b16 %v1013
    %v2733 = vunpack.c.h.b16 %v1013
    %v2734 = vunpack.c.l.b16 %v1014
    %v2735 = vunpack.c.h.b16 %v1014
    %v2736 = vunpack.c.l.b16 %v1015
    %v2737 = vunpack.c.h.b16 %v1015
    %v2738 = vunpack.c.l.b16 %v1016
    %v2739 = vunpack.c.h.b16 %v1016
    %v2740 = vunpack.c.l.b16 %v1017
    %v2741 = vunpack.c.h.b16 %v1017
    %v2742 = vunpack.c.l.b16 %v1018
    %v2743 = vunpack.c.h.b16 %v1018
    %v2744 = vunpack.c.l.b16 %v1019
    %v2745 = vunpack.c.h.b16 %v1019
    %v2746 = vunpack.c.l.b16 %v1020
    %v2747 = vunpack.c.h.b16 %v1020
    %v2748 = vunpack.c.l.b16 %v1021
    %v2749 = vunpack.c.h.b16 %v1021
    %v2750 = vunpack.c.l.b16 %v1022
    %v2751 = vunpack.c.h.b16 %v1022
    %v2752 = vunpack.c.l.b16 %v1023
    %v2753 = vunpack.c.h.b16 %v1023
    %v2754 = vunpack.c.l.b16 %v1024
    %v2755 = vunpack.c.h.b16 %v1024
    %v2756 = vunpack.c.l.b16 %v1025
    %v2757 = vunpack.c.h.b16 %v1025
    %v2758 = vunpack.c.l.b16 %v1026
    %v2759 = vunpack.c.h.b16 %v1026
    %v2760 = vunpack.c.l.b16 %v1027
    %v2761 = vunpack.c.h.b16 %v1027
    %v2762 = vunpack.c.l.b16 %v1028
    %v2763 = vunpack.c.h.b16 %v1028
    %v2764 = vunpack.c.l.b16 %v1029
    %v2765 = vunpack.c.h.b16 %v1029
    %v2766 = vunpack.c.l.b16 %v1030
    %v2767 = vunpack.c.h.b16 %v1030
    %v2768 = vunpack.c.l.b16 %v1031
    %v2769 = vunpack.c.h.b16 %v1031
    %v2770 = vunpack.c.l.b16 %v1032
    %v2771 = vunpack.c.h.b16 %v1032
    %v2772 = vunpack.c.l.b16 %v1033
    %v2773 = vunpack.c.h.b16 %v1033
    %v2774 = vunpack.c.l.b16 %v1034
    %v2775 = vunpack.c.h.b16 %v1034
    %v2776 = vunpack.c.l.b16 %v1035
    %v2777 = vunpack.c.h.b16 %v1035
    %v2778 = vunpack.c.l.b16 %v1036
    %v2779 = vunpack.c.h.b16 %v1036
    %v2780 = vunpack.c.l.b16 %v1037
    %v2781 = vunpack.c.h.b16 %v1037
    %v2782 = vunpack.c.l.b16 %v1038
    %v2783 = vunpack.c.h.b16 %v1038
    %v2784 = vunpack.c.l.b16 %v1039
    %v2785 = vunpack.c.h.b16 %v1039
    %v2786 = vunpack.c.l.b16 %v1040
    %v2787 = vunpack.c.h.b16 %v1040
    %v2788 = vunpack.c.l.b16 %v1041
    %v2789 = vunpack.c.h.b16 %v1041
    %v2790 = vunpack.c.l.b16 %v1042
    %v2791 = vunpack.c.h.b16 %v1042
    %v2792 = vunpack.c.l.b16 %v1043
    %v2793 = vunpack.c.h.b16 %v1043
    %v2794 = vunpack.c.l.b16 %v1044
    %v2795 = vunpack.c.h.b16 %v1044
    %v2796 = vunpack.c.l.b16 %v1045
    %v2797 = vunpack.c.h.b16 %v1045
    %v2798 = vunpack.c.l.b16 %v1046
    %v2799 = vunpack.c.h.b16 %v1046
    %v2800 = vunpack.c.l.b16 %v1047
    %v2801 = vunpack.c.h.b16 %v1047
    %v2802 = vunpack.c.l.b16 %v1048
    %v2803 = vunpack.c.h.b16 %v1048
    %v2804 = vunpack.c.l.b16 %v1049
    %v2805 = vunpack.c.h.b16 %v1049
    %v2806 = vunpack.c.l.b16 %v1050
    %v2807 = vunpack.c.h.b16 %v1050
    %v2808 = vunpack.c.l.b16 %v1051
    %v2809 = vunpack.c.h.b16 %v1051
    %v2810 = vunpack.c.l.b16 %v1052
    %v2811 = vunpack.c.h.b16 %v1052
    %v2812 = vunpack.c.l.b16 %v1053
    %v2813 = vunpack.c.h.b16 %v1053
    %v2814 = vunpack.c.l.b16 %v1054
    %v2815 = vunpack.c.h.b16 %v1054
    %v2816 = vunpack.c.l.b16 %v1055
    %v2817 = vunpack.c.h.b16 %v1055
    %v2818 = vunpack.c.l.b16 %v1056
    %v2819 = vunpack.c.h.b16 %v1056
    %v2820 = vunpack.c.l.b16 %v1057
    %v2821 = vunpack.c.h.b16 %v1057
    %v2822 = vunpack.c.l.b16 %v1058
    %v2823 = vunpack.c.h.b16 %v1058
    %v2824 = vunpack.c.l.b16 %v1059
    %v2825 = vunpack.c.h.b16 %v1059
    %v2826 = vunpack.c.l.b16 %v1060
    %v2827 = vunpack.c.h.b16 %v1060
    %v2828 = vunpack.c.l.b16 %v1061
    %v2829 = vunpack.c.h.b16 %v1061
    %v2830 = vunpack.c.l.b16 %v1062
    %v2831 = vunpack.c.h.b16 %v1062
    %v2832 = vunpack.c.l.b16 %v1063
    %v2833 = vunpack.c.h.b16 %v1063
    %v2834 = vunpack.c.l.b16 %v1064
    %v2835 = vunpack.c.h.b16 %v1064
    %v2836 = vunpack.c.l.b16 %v1065
    %v2837 = vunpack.c.h.b16 %v1065
    %v2838 = vunpack.c.l.b16 %v1066
    %v2839 = vunpack.c.h.b16 %v1066
    %v2840 = vunpack.c.l.b16 %v1067
    %v2841 = vunpack.c.h.b16 %v1067
    %v2842 = vunpack.c.l.b16 %v1068
    %v2843 = vunpack.c.h.b16 %v1068
    %v2844 = vunpack.c.l.b16 %v1069
    %v2845 = vunpack.c.h.b16 %v1069
    %v2846 = vunpack.c.l.b16 %v1070
    %v2847 = vunpack.c.h.b16 %v1070
    %v2848 = vunpack.c.l.b16 %v1071
    %v2849 = vunpack.c.h.b16 %v1071
    %v2850 = vunpack.c.l.b16 %v1072
    %v2851 = vunpack.c.h.b16 %v1072
    %v2852 = vunpack.c.l.b16 %v1073
    %v2853 = vunpack.c.h.b16 %v1073
    %v2854 = vunpack.c.l.b16 %v1074
    %v2855 = vunpack.c.h.b16 %v1074
    %v2856 = vunpack.c.l.b16 %v1075
    %v2857 = vunpack.c.h.b16 %v1075
    %v2858 = vunpack.c.l.b16 %v1076
    %v2859 = vunpack.c.h.b16 %v1076
    %v2860 = vunpack.c.l.b16 %v1077
    %v2861 = vunpack.c.h.b16 %v1077
    %v2862 = vunpack.c.l.b16 %v1078
    %v2863 = vunpack.c.h.b16 %v1078
    %v2864 = vunpack.c.l.b16 %v1079
    %v2865 = vunpack.c.h.b16 %v1079
    %v2866 = vunpack.c.l.b16 %v1080
    %v2867 = vunpack.c.h.b16 %v1080
    %v2868 = vunpack.c.l.b16 %v1081
    %v2869 = vunpack.c.h.b16 %v1081
    %v2870 = vunpack.c.l.b16 %v1082
    %v2871 = vunpack.c.h.b16 %v1082
    %v2872 = vunpack.c.l.b16 %v1083
    %v2873 = vunpack.c.h.b16 %v1083
    %v2874 = vunpack.c.l.b16 %v1084
    %v2875 = vunpack.c.h.b16 %v1084
    %v2876 = vunpack.c.l.b16 %v1085
    %v2877 = vunpack.c.h.b16 %v1085
    %v2878 = vunpack.c.l.b16 %v1086
    %v2879 = vunpack.c.h.b16 %v1086
    %v2880 = vunpack.c.l.b16 %v1087
    %v2881 = vunpack.c.h.b16 %v1087
    %v2882 = vunpack.c.l.b16 %v1088
    %v2883 = vunpack.c.h.b16 %v1088
    %v2884 = vunpack.c.l.b16 %v1089
    %v2885 = vunpack.c.h.b16 %v1089
    %v2886 = vunpack.c.l.b16 %v1090
    %v2887 = vunpack.c.h.b16 %v1090
    %v2888 = vunpack.c.l.b16 %v1091
    %v2889 = vunpack.c.h.b16 %v1091
    %v2890 = vunpack.c.l.b16 %v1092
    %v2891 = vunpack.c.h.b16 %v1092
    %v2892 = vunpack.c.l.b16 %v1093
    %v2893 = vunpack.c.h.b16 %v1093
    %v2894 = vunpack.c.l.b16 %v1094
    %v2895 = vunpack.c.h.b16 %v1094
    %v2896 = vunpack.c.l.b16 %v1095
    %v2897 = vunpack.c.h.b16 %v1095
    %v2898 = vunpack.c.l.b16 %v1096
    %v2899 = vunpack.c.h.b16 %v1096
    %v2900 = vunpack.c.l.b16 %v1097
    %v2901 = vunpack.c.h.b16 %v1097
    %v2902 = vunpack.c.l.b16 %v1098
    %v2903 = vunpack.c.h.b16 %v1098
    %v2904 = vunpack.c.l.b16 %v1099
    %v2905 = vunpack.c.h.b16 %v1099
    %v2906 = vunpack.c.l.b16 %v1100
    %v2907 = vunpack.c.h.b16 %v1100
    %v2908 = vunpack.c.l.b16 %v1101
    %v2909 = vunpack.c.h.b16 %v1101
    %v2910 = vunpack.c.l.b16 %v1102
    %v2911 = vunpack.c.h.b16 %v1102
    %v2912 = vunpack.c.l.b16 %v1103
    %v2913 = vunpack.c.h.b16 %v1103
    %v2914 = vunpack.c.l.b16 %v1104
    %v2915 = vunpack.c.h.b16 %v1104
    %v2916 = vunpack.c.l.b16 %v1105
    %v2917 = vunpack.c.h.b16 %v1105
    %v2918 = vunpack.c.l.b16 %v1106
    %v2919 = vunpack.c.h.b16 %v1106
    %v2920 = vunpack.c.l.b16 %v1107
    %v2921 = vunpack.c.h.b16 %v1107
    %v2922 = vunpack.c.l.b16 %v1108
    %v2923 = vunpack.c.h.b16 %v1108
    %v2924 = vunpack.c.l.b16 %v1109
    %v2925 = vunpack.c.h.b16 %v1109
    %v2926 = vunpack.c.l.b16 %v1110
    %v2927 = vunpack.c.h.b16 %v1110
    %v2928 = vunpack.c.l.b16 %v1111
    %v2929 = vunpack.c.h.b16 %v1111
    %v2930 = vunpack.c.l.b16 %v1112
    %v2931 = vunpack.c.h.b16 %v1112
    %v2932 = vunpack.c.l.b16 %v1113
    %v2933 = vunpack.c.h.b16 %v1113
    %v2934 = vunpack.c.l.b16 %v1114
    %v2935 = vunpack.c.h.b16 %v1114
    %v2936 = vunpack.c.l.b16 %v1115
    %v2937 = vunpack.c.h.b16 %v1115
    %v2938 = vunpack.c.l.b16 %v1116
    %v2939 = vunpack.c.h.b16 %v1116
    %v2940 = vunpack.c.l.b16 %v1117
    %v2941 = vunpack.c.h.b16 %v1117
    %v2942 = vunpack.c.l.b16 %v1118
    %v2943 = vunpack.c.h.b16 %v1118
    %v2944 = vunpack.c.l.b16 %v1119
    %v2945 = vunpack.c.h.b16 %v1119
    %v2946 = vunpack.c.l.b16 %v1120
    %v2947 = vunpack.c.h.b16 %v1120
    %v2948 = vunpack.c.l.b16 %v1121
    %v2949 = vunpack.c.h.b16 %v1121
    %v2950 = vunpack.c.l.b16 %v1122
    %v2951 = vunpack.c.h.b16 %v1122
    %v2952 = vunpack.c.l.b16 %v1123
    %v2953 = vunpack.c.h.b16 %v1123
    %v2954 = vunpack.c.l.b16 %v1124
    %v2955 = vunpack.c.h.b16 %v1124
    %v2956 = vunpack.c.l.b16 %v1125
    %v2957 = vunpack.c.h.b16 %v1125
    %v2958 = vunpack.c.l.b16 %v1126
    %v2959 = vunpack.c.h.b16 %v1126
    %v2960 = vunpack.c.l.b16 %v1127
    %v2961 = vunpack.c.h.b16 %v1127
    %v2962 = vunpack.c.l.b16 %v1128
    %v2963 = vunpack.c.h.b16 %v1128
    %v2964 = vunpack.c.l.b16 %v1129
    %v2965 = vunpack.c.h.b16 %v1129
    %v2966 = vunpack.c.l.b16 %v1130
    %v2967 = vunpack.c.h.b16 %v1130
    %v2968 = vunpack.c.l.b16 %v1131
    %v2969 = vunpack.c.h.b16 %v1131
    %v2970 = vunpack.c.l.b16 %v1132
    %v2971 = vunpack.c.h.b16 %v1132
    %v2972 = vunpack.c.l.b16 %v1133
    %v2973 = vunpack.c.h.b16 %v1133
    %v2974 = vunpack.c.l.b16 %v1134
    %v2975 = vunpack.c.h.b16 %v1134
    %v2976 = vunpack.c.l.b16 %v1135
    %v2977 = vunpack.c.h.b16 %v1135
    %v2978 = vunpack.c.l.b16 %v1136
    %v2979 = vunpack.c.h.b16 %v1136
    %v2980 = vunpack.c.l.b16 %v1137
    %v2981 = vunpack.c.h.b16 %v1137
    %v2982 = vunpack.c.l.b16 %v1138
    %v2983 = vunpack.c.h.b16 %v1138
    %v2984 = vunpack.c.l.b16 %v1139
    %v2985 = vunpack.c.h.b16 %v1139
    %v2986 = vunpack.c.l.b16 %v1140
    %v2987 = vunpack.c.h.b16 %v1140
    %v2988 = vunpack.c.l.b16 %v1141
    %v2989 = vunpack.c.h.b16 %v1141
    %v2990 = vunpack.c.l.b16 %v1142
    %v2991 = vunpack.c.h.b16 %v1142
    %v2992 = vunpack.c.l.b16 %v1143
    %v2993 = vunpack.c.h.b16 %v1143
    %v2994 = vunpack.c.l.b16 %v1144
    %v2995 = vunpack.c.h.b16 %v1144
    %v2996 = vunpack.c.l.b16 %v1145
    %v2997 = vunpack.c.h.b16 %v1145
    %v2998 = vunpack.c.l.b16 %v1146
    %v2999 = vunpack.c.h.b16 %v1146
    %v3000 = vunpack.c.l.b16 %v1147
    %v3001 = vunpack.c.h.b16 %v1147
    %v3002 = vunpack.c.l.b16 %v1148
    %v3003 = vunpack.c.h.b16 %v1148
    %v3004 = vunpack.c.l.b16 %v1149
    %v3005 = vunpack.c.h.b16 %v1149
    %v3006 = vunpack.c.l.b16 %v1150
    %v3007 = vunpack.c.h.b16 %v1150
    %v3008 = vunpack.c.l.b16 %v1151
    %v3009 = vunpack.c.h.b16 %v1151
    %v3010 = vunpack.c.l.b16 %v1152
    %v3011 = vunpack.c.h.b16 %v1152
    %v3012 = vunpack.c.l.b16 %v1153
    %v3013 = vunpack.c.h.b16 %v1153
    %v3014 = vunpack.c.l.b16 %v1154
    %v3015 = vunpack.c.h.b16 %v1154
    %v3016 = vunpack.c.l.b16 %v1155
    %v3017 = vunpack.c.h.b16 %v1155
    %v3018 = vunpack.c.l.b16 %v1156
    %v3019 = vunpack.c.h.b16 %v1156
    %v3020 = vpack.c.b16 %v2004, %v1996
    %v3021 = vpack.c.b16 %v2005, %v1997
    %v3022 = vpack.c.b16 %v2006, %v1998
    %v3023 = vpack.c.b16 %v2007, %v1999
    %v3024 = vpack.c.b16 %v2008, %v2000
    %v3025 = vpack.c.b16 %v2009, %v2001
    %v3026 = vpack.c.b16 %v2010, %v2002
    %v3027 = vpack.c.b16 %v2011, %v2003
    %v3028 = vpack.c.b16 %v2020, %v2012
    %v3029 = vpack.c.b16 %v2021, %v2013
    %v3030 = vpack.c.b16 %v2022, %v2014
    %v3031 = vpack.c.b16 %v2023, %v2015
    %v3032 = vpack.c.b16 %v2024, %v2016
    %v3033 = vpack.c.b16 %v2025, %v2017
    %v3034 = vpack.c.b16 %v2026, %v2018
    %v3035 = vpack.c.b16 %v2027, %v2019
    %v3036 = vpack.c.b16 %v2036, %v2028
    %v3037 = vpack.c.b16 %v2037, %v2029
    %v3038 = vpack.c.b16 %v2038, %v2030
    %v3039 = vpack.c.b16 %v2039, %v2031
    %v3040 = vpack.c.b16 %v2040, %v2032
    %v3041 = vpack.c.b16 %v2041, %v2033
    %v3042 = vpack.c.b16 %v2042, %v2034
    %v3043 = vpack.c.b16 %v2043, %v2035
    %v3044 = vpack.c.b16 %v2052, %v2044
    %v3045 = vpack.c.b16 %v2053, %v2045
    %v3046 = vpack.c.b16 %v2054, %v2046
    %v3047 = vpack.c.b16 %v2055, %v2047
    %v3048 = vpack.c.b16 %v2056, %v2048
    %v3049 = vpack.c.b16 %v2057, %v2049
    %v3050 = vpack.c.b16 %v2058, %v2050
    %v3051 = vpack.c.b16 %v2059, %v2051
    %v3052 = vpack.c.b16 %v2068, %v2060
    %v3053 = vpack.c.b16 %v2069, %v2061
    %v3054 = vpack.c.b16 %v2070, %v2062
    %v3055 = vpack.c.b16 %v2071, %v2063
    %v3056 = vpack.c.b16 %v2072, %v2064
    %v3057 = vpack.c.b16 %v2073, %v2065
    %v3058 = vpack.c.b16 %v2074, %v2066
    %v3059 = vpack.c.b16 %v2075, %v2067
    %v3060 = vpack.c.b16 %v2084, %v2076
    %v3061 = vpack.c.b16 %v2085, %v2077
    %v3062 = vpack.c.b16 %v2086, %v2078
    %v3063 = vpack.c.b16 %v2087, %v2079
    %v3064 = vpack.c.b16 %v2088, %v2080
    %v3065 = vpack.c.b16 %v2089, %v2081
    %v3066 = vpack.c.b16 %v2090, %v2082
    %v3067 = vpack.c.b16 %v2091, %v2083
    %v3068 = vpack.c.b16 %v2100, %v2092
    %v3069 = vpack.c.b16 %v2101, %v2093
    %v3070 = vpack.c.b16 %v2102, %v2094
    %v3071 = vpack.c.b16 %v2103, %v2095
    %v3072 = vpack.c.b16 %v2104, %v2096
    %v3073 = vpack.c.b16 %v2105, %v2097
    %v3074 = vpack.c.b16 %v2106, %v2098
    %v3075 = vpack.c.b16 %v2107, %v2099
    %v3076 = vpack.c.b16 %v2116, %v2108
    %v3077 = vpack.c.b16 %v2117, %v2109
    %v3078 = vpack.c.b16 %v2118, %v2110
    %v3079 = vpack.c.b16 %v2119, %v2111
    %v3080 = vpack.c.b16 %v2120, %v2112
    %v3081 = vpack.c.b16 %v2121, %v2113
    %v3082 = vpack.c.b16 %v2122, %v2114
    %v3083 = vpack.c.b16 %v2123, %v2115
    %v3084 = vpack.c.b16 %v2132, %v2124
    %v3085 = vpack.c.b16 %v2133, %v2125
    %v3086 = vpack.c.b16 %v2134, %v2126
    %v3087 = vpack.c.b16 %v2135, %v2127
    %v3088 = vpack.c.b16 %v2136, %v2128
    %v3089 = vpack.c.b16 %v2137, %v2129
    %v3090 = vpack.c.b16 %v2138, %v2130
    %v3091 = vpack.c.b16 %v2139, %v2131
    %v3092 = vpack.c.b16 %v2148, %v2140
    %v3093 = vpack.c.b16 %v2149, %v2141
    %v3094 = vpack.c.b16 %v2150, %v2142
    %v3095 = vpack.c.b16 %v2151, %v2143
    %v3096 = vpack.c.b16 %v2152, %v2144
    %v3097 = vpack.c.b16 %v2153, %v2145
    %v3098 = vpack.c.b16 %v2154, %v2146
    %v3099 = vpack.c.b16 %v2155, %v2147
    %v3100 = vpack.c.b16 %v2164, %v2156
    %v3101 = vpack.c.b16 %v2165, %v2157
    %v3102 = vpack.c.b16 %v2166, %v2158
    %v3103 = vpack.c.b16 %v2167, %v2159
    %v3104 = vpack.c.b16 %v2168, %v2160
    %v3105 = vpack.c.b16 %v2169, %v2161
    %v3106 = vpack.c.b16 %v2170, %v2162
    %v3107 = vpack.c.b16 %v2171, %v2163
    %v3108 = vpack.c.b16 %v2180, %v2172
    %v3109 = vpack.c.b16 %v2181, %v2173
    %v3110 = vpack.c.b16 %v2182, %v2174
    %v3111 = vpack.c.b16 %v2183, %v2175
    %v3112 = vpack.c.b16 %v2184, %v2176
    %v3113 = vpack.c.b16 %v2185, %v2177
    %v3114 = vpack.c.b16 %v2186, %v2178
    %v3115 = vpack.c.b16 %v2187, %v2179
    %v3116 = vpack.c.b16 %v2196, %v2188
    %v3117 = vpack.c.b16 %v2197, %v2189
    %v3118 = vpack.c.b16 %v2198, %v2190
    %v3119 = vpack.c.b16 %v2199, %v2191
    %v3120 = vpack.c.b16 %v2200, %v2192
    %v3121 = vpack.c.b16 %v2201, %v2193
    %v3122 = vpack.c.b16 %v2202, %v2194
    %v3123 = vpack.c.b16 %v2203, %v2195
    %v3124 = vpack.c.b16 %v2212, %v2204
    %v3125 = vpack.c.b16 %v2213, %v2205
    %v3126 = vpack.c.b16 %v2214, %v2206
    %v3127 = vpack.c.b16 %v2215, %v2207
    %v3128 = vpack.c.b16 %v2216, %v2208
    %v3129 = vpack.c.b16 %v2217, %v2209
    %v3130 = vpack.c.b16 %v2218, %v2210
    %v3131 = vpack.c.b16 %v2219, %v2211
    %v3132 = vpack.c.b16 %v2228, %v2220
    %v3133 = vpack.c.b16 %v2229, %v2221
    %v3134 = vpack.c.b16 %v2230, %v2222
    %v3135 = vpack.c.b16 %v2231, %v2223
    %v3136 = vpack.c.b16 %v2232, %v2224
    %v3137 = vpack.c.b16 %v2233, %v2225
    %v3138 = vpack.c.b16 %v2234, %v2226
    %v3139 = vpack.c.b16 %v2235, %v2227
    %v3140 = vpack.c.b16 %v2244, %v2236
    %v3141 = vpack.c.b16 %v2245, %v2237
    %v3142 = vpack.c.b16 %v2246, %v2238
    %v3143 = vpack.c.b16 %v2247, %v2239
    %v3144 = vpack.c.b16 %v2248, %v2240
    %v3145 = vpack.c.b16 %v2249, %v2241
    %v3146 = vpack.c.b16 %v2250, %v2242
    %v3147 = vpack.c.b16 %v2251, %v2243
    %v3148 = vpack.c.b16 %v2260, %v2252
    %v3149 = vpack.c.b16 %v2261, %v2253
    %v3150 = vpack.c.b16 %v2262, %v2254
    %v3151 = vpack.c.b16 %v2263, %v2255
    %v3152 = vpack.c.b16 %v2264, %v2256
    %v3153 = vpack.c.b16 %v2265, %v2257
    %v3154 = vpack.c.b16 %v2266, %v2258
    %v3155 = vpack.c.b16 %v2267, %v2259
    %v3156 = vpack.c.b16 %v2276, %v2268
    %v3157 = vpack.c.b16 %v2277, %v2269
    %v3158 = vpack.c.b16 %v2278, %v2270
    %v3159 = vpack.c.b16 %v2279, %v2271
    %v3160 = vpack.c.b16 %v2280, %v2272
    %v3161 = vpack.c.b16 %v2281, %v2273
    %v3162 = vpack.c.b16 %v2282, %v2274
    %v3163 = vpack.c.b16 %v2283, %v2275
    %v3164 = vpack.c.b16 %v2292, %v2284
    %v3165 = vpack.c.b16 %v2293, %v2285
    %v3166 = vpack.c.b16 %v2294, %v2286
    %v3167 = vpack.c.b16 %v2295, %v2287
    %v3168 = vpack.c.b16 %v2296, %v2288
    %v3169 = vpack.c.b16 %v2297, %v2289
    %v3170 = vpack.c.b16 %v2298, %v2290
    %v3171 = vpack.c.b16 %v2299, %v2291
    %v3172 = vpack.c.b16 %v2308, %v2300
    %v3173 = vpack.c.b16 %v2309, %v2301
    %v3174 = vpack.c.b16 %v2310, %v2302
    %v3175 = vpack.c.b16 %v2311, %v2303
    %v3176 = vpack.c.b16 %v2312, %v2304
    %v3177 = vpack.c.b16 %v2313, %v2305
    %v3178 = vpack.c.b16 %v2314, %v2306
    %v3179 = vpack.c.b16 %v2315, %v2307
    %v3180 = vpack.c.b16 %v2324, %v2316
    %v3181 = vpack.c.b16 %v2325, %v2317
    %v3182 = vpack.c.b16 %v2326, %v2318
    %v3183 = vpack.c.b16 %v2327, %v2319
    %v3184 = vpack.c.b16 %v2328, %v2320
    %v3185 = vpack.c.b16 %v2329, %v2321
    %v3186 = vpack.c.b16 %v2330, %v2322
    %v3187 = vpack.c.b16 %v2331, %v2323
    %v3188 = vpack.c.b16 %v2340, %v2332
    %v3189 = vpack.c.b16 %v2341, %v2333
    %v3190 = vpack.c.b16 %v2342, %v2334
    %v3191 = vpack.c.b16 %v2343, %v2335
    %v3192 = vpack.c.b16 %v2344, %v2336
    %v3193 = vpack.c.b16 %v2345, %v2337
    %v3194 = vpack.c.b16 %v2346, %v2338
    %v3195 = vpack.c.b16 %v2347, %v2339
    %v3196 = vpack.c.b16 %v2356, %v2348
    %v3197 = vpack.c.b16 %v2357, %v2349
    %v3198 = vpack.c.b16 %v2358, %v2350
    %v3199 = vpack.c.b16 %v2359, %v2351
    %v3200 = vpack.c.b16 %v2360, %v2352
    %v3201 = vpack.c.b16 %v2361, %v2353
    %v3202 = vpack.c.b16 %v2362, %v2354
    %v3203 = vpack.c.b16 %v2363, %v2355
    %v3204 = vpack.c.b16 %v2372, %v2364
    %v3205 = vpack.c.b16 %v2373, %v2365
    %v3206 = vpack.c.b16 %v2374, %v2366
    %v3207 = vpack.c.b16 %v2375, %v2367
    %v3208 = vpack.c.b16 %v2376, %v2368
    %v3209 = vpack.c.b16 %v2377, %v2369
    %v3210 = vpack.c.b16 %v2378, %v2370
    %v3211 = vpack.c.b16 %v2379, %v2371
    %v3212 = vpack.c.b16 %v2388, %v2380
    %v3213 = vpack.c.b16 %v2389, %v2381
    %v3214 = vpack.c.b16 %v2390, %v2382
    %v3215 = vpack.c.b16 %v2391, %v2383
    %v3216 = vpack.c.b16 %v2392, %v2384
    %v3217 = vpack.c.b16 %v2393, %v2385
    %v3218 = vpack.c.b16 %v2394, %v2386
    %v3219 = vpack.c.b16 %v2395, %v2387
    %v3220 = vpack.c.b16 %v2404, %v2396
    %v3221 = vpack.c.b16 %v2405, %v2397
    %v3222 = vpack.c.b16 %v2406, %v2398
    %v3223 = vpack.c.b16 %v2407, %v2399
    %v3224 = vpack.c.b16 %v2408, %v2400
    %v3225 = vpack.c.b16 %v2409, %v2401
    %v3226 = vpack.c.b16 %v2410, %v2402
    %v3227 = vpack.c.b16 %v2411, %v2403
    %v3228 = vpack.c.b16 %v2420, %v2412
    %v3229 = vpack.c.b16 %v2421, %v2413
    %v3230 = vpack.c.b16 %v2422, %v2414
    %v3231 = vpack.c.b16 %v2423, %v2415
    %v3232 = vpack.c.b16 %v2424, %v2416
    %v3233 = vpack.c.b16 %v2425, %v2417
    %v3234 = vpack.c.b16 %v2426, %v2418
    %v3235 = vpack.c.b16 %v2427, %v2419
    %v3236 = vpack.c.b16 %v2436, %v2428
    %v3237 = vpack.c.b16 %v2437, %v2429
    %v3238 = vpack.c.b16 %v2438, %v2430
    %v3239 = vpack.c.b16 %v2439, %v2431
    %v3240 = vpack.c.b16 %v2440, %v2432
    %v3241 = vpack.c.b16 %v2441, %v2433
    %v3242 = vpack.c.b16 %v2442, %v2434
    %v3243 = vpack.c.b16 %v2443, %v2435
    %v3244 = vpack.c.b16 %v2452, %v2444
    %v3245 = vpack.c.b16 %v2453, %v2445
    %v3246 = vpack.c.b16 %v2454, %v2446
    %v3247 = vpack.c.b16 %v2455, %v2447
    %v3248 = vpack.c.b16 %v2456, %v2448
    %v3249 = vpack.c.b16 %v2457, %v2449
    %v3250 = vpack.c.b16 %v2458, %v2450
    %v3251 = vpack.c.b16 %v2459, %v2451
    %v3252 = vpack.c.b16 %v2468, %v2460
    %v3253 = vpack.c.b16 %v2469, %v2461
    %v3254 = vpack.c.b16 %v2470, %v2462
    %v3255 = vpack.c.b16 %v2471, %v2463
    %v3256 = vpack.c.b16 %v2472, %v2464
    %v3257 = vpack.c.b16 %v2473, %v2465
    %v3258 = vpack.c.b16 %v2474, %v2466
    %v3259 = vpack.c.b16 %v2475, %v2467
    %v3260 = vpack.c.b16 %v2484, %v2476
    %v3261 = vpack.c.b16 %v2485, %v2477
    %v3262 = vpack.c.b16 %v2486, %v2478
    %v3263 = vpack.c.b16 %v2487, %v2479
    %v3264 = vpack.c.b16 %v2488, %v2480
    %v3265 = vpack.c.b16 %v2489, %v2481
    %v3266 = vpack.c.b16 %v2490, %v2482
    %v3267 = vpack.c.b16 %v2491, %v2483
    %v3268 = vpack.c.b16 %v2500, %v2492
    %v3269 = vpack.c.b16 %v2501, %v2493
    %v3270 = vpack.c.b16 %v2502, %v2494
    %v3271 = vpack.c.b16 %v2503, %v2495
    %v3272 = vpack.c.b16 %v2504, %v2496
    %v3273 = vpack.c.b16 %v2505, %v2497
    %v3274 = vpack.c.b16 %v2506, %v2498
    %v3275 = vpack.c.b16 %v2507, %v2499
    %v3276 = vpack.c.b16 %v2516, %v2508
    %v3277 = vpack.c.b16 %v2517, %v2509
    %v3278 = vpack.c.b16 %v2518, %v2510
    %v3279 = vpack.c.b16 %v2519, %v2511
    %v3280 = vpack.c.b16 %v2520, %v2512
    %v3281 = vpack.c.b16 %v2521, %v2513
    %v3282 = vpack.c.b16 %v2522, %v2514
    %v3283 = vpack.c.b16 %v2523, %v2515
    %v3284 = vpack.c.b16 %v2532, %v2524
    %v3285 = vpack.c.b16 %v2533, %v2525
    %v3286 = vpack.c.b16 %v2534, %v2526
    %v3287 = vpack.c.b16 %v2535, %v2527
    %v3288 = vpack.c.b16 %v2536, %v2528
    %v3289 = vpack.c.b16 %v2537, %v2529
    %v3290 = vpack.c.b16 %v2538, %v2530
    %v3291 = vpack.c.b16 %v2539, %v2531
    %v3292 = vpack.c.b16 %v2548, %v2540
    %v3293 = vpack.c.b16 %v2549, %v2541
    %v3294 = vpack.c.b16 %v2550, %v2542
    %v3295 = vpack.c.b16 %v2551, %v2543
    %v3296 = vpack.c.b16 %v2552, %v2544
    %v3297 = vpack.c.b16 %v2553, %v2545
    %v3298 = vpack.c.b16 %v2554, %v2546
    %v3299 = vpack.c.b16 %v2555, %v2547
    %v3300 = vpack.c.b16 %v2564, %v2556
    %v3301 = vpack.c.b16 %v2565, %v2557
    %v3302 = vpack.c.b16 %v2566, %v2558
    %v3303 = vpack.c.b16 %v2567, %v2559
    %v3304 = vpack.c.b16 %v2568, %v2560
    %v3305 = vpack.c.b16 %v2569, %v2561
    %v3306 = vpack.c.b16 %v2570, %v2562
    %v3307 = vpack.c.b16 %v2571, %v2563
    %v3308 = vpack.c.b16 %v2580, %v2572
    %v3309 = vpack.c.b16 %v2581, %v2573
    %v3310 = vpack.c.b16 %v2582, %v2574
    %v3311 = vpack.c.b16 %v2583, %v2575
    %v3312 = vpack.c.b16 %v2584, %v2576
    %v3313 = vpack.c.b16 %v2585, %v2577
    %v3314 = vpack.c.b16 %v2586, %v2578
    %v3315 = vpack.c.b16 %v2587, %v2579
    %v3316 = vpack.c.b16 %v2596, %v2588
    %v3317 = vpack.c.b16 %v2597, %v2589
    %v3318 = vpack.c.b16 %v2598, %v2590
    %v3319 = vpack.c.b16 %v2599, %v2591
    %v3320 = vpack.c.b16 %v2600, %v2592
    %v3321 = vpack.c.b16 %v2601, %v2593
    %v3322 = vpack.c.b16 %v2602, %v2594
    %v3323 = vpack.c.b16 %v2603, %v2595
    %v3324 = vpack.c.b16 %v2612, %v2604
    %v3325 = vpack.c.b16 %v2613, %v2605
    %v3326 = vpack.c.b16 %v2614, %v2606
    %v3327 = vpack.c.b16 %v2615, %v2607
    %v3328 = vpack.c.b16 %v2616, %v2608
    %v3329 = vpack.c.b16 %v2617, %v2609
    %v3330 = vpack.c.b16 %v2618, %v2610
    %v3331 = vpack.c.b16 %v2619, %v2611
    %v3332 = vpack.c.b16 %v2628, %v2620
    %v3333 = vpack.c.b16 %v2629, %v2621
    %v3334 = vpack.c.b16 %v2630, %v2622
    %v3335 = vpack.c.b16 %v2631, %v2623
    %v3336 = vpack.c.b16 %v2632, %v2624
    %v3337 = vpack.c.b16 %v2633, %v2625
    %v3338 = vpack.c.b16 %v2634, %v2626
    %v3339 = vpack.c.b16 %v2635, %v2627
    %v3340 = vpack.c.b16 %v2644, %v2636
    %v3341 = vpack.c.b16 %v2645, %v2637
    %v3342 = vpack.c.b16 %v2646, %v2638
    %v3343 = vpack.c.b16 %v2647, %v2639
    %v3344 = vpack.c.b16 %v2648, %v2640
    %v3345 = vpack.c.b16 %v2649, %v2641
    %v3346 = vpack.c.b16 %v2650, %v2642
    %v3347 = vpack.c.b16 %v2651, %v2643
    %v3348 = vpack.c.b16 %v2660, %v2652
    %v3349 = vpack.c.b16 %v2661, %v2653
    %v3350 = vpack.c.b16 %v2662, %v2654
    %v3351 = vpack.c.b16 %v2663, %v2655
    %v3352 = vpack.c.b16 %v2664, %v2656
    %v3353 = vpack.c.b16 %v2665, %v2657
    %v3354 = vpack.c.b16 %v2666, %v2658
    %v3355 = vpack.c.b16 %v2667, %v2659
    %v3356 = vpack.c.b16 %v2676, %v2668
    %v3357 = vpack.c.b16 %v2677, %v2669
    %v3358 = vpack.c.b16 %v2678, %v2670
    %v3359 = vpack.c.b16 %v2679, %v2671
    %v3360 = vpack.c.b16 %v2680, %v2672
    %v3361 = vpack.c.b16 %v2681, %v2673
    %v3362 = vpack.c.b16 %v2682, %v2674
    %v3363 = vpack.c.b16 %v2683, %v2675
    %v3364 = vpack.c.b16 %v2692, %v2684
    %v3365 = vpack.c.b16 %v2693, %v2685
    %v3366 = vpack.c.b16 %v2694, %v2686
    %v3367 = vpack.c.b16 %v2695, %v2687
    %v3368 = vpack.c.b16 %v2696, %v2688
    %v3369 = vpack.c.b16 %v2697, %v2689
    %v3370 = vpack.c.b16 %v2698, %v2690
    %v3371 = vpack.c.b16 %v2699, %v2691
    %v3372 = vpack.c.b16 %v2708, %v2700
    %v3373 = vpack.c.b16 %v2709, %v2701
    %v3374 = vpack.c.b16 %v2710, %v2702
    %v3375 = vpack.c.b16 %v2711, %v2703
    %v3376 = vpack.c.b16 %v2712, %v2704
    %v3377 = vpack.c.b16 %v2713, %v2705
    %v3378 = vpack.c.b16 %v2714, %v2706
    %v3379 = vpack.c.b16 %v2715, %v2707
    %v3380 = vpack.c.b16 %v2724, %v2716
    %v3381 = vpack.c.b16 %v2725, %v2717
    %v3382 = vpack.c.b16 %v2726, %v2718
    %v3383 = vpack.c.b16 %v2727, %v2719
    %v3384 = vpack.c.b16 %v2728, %v2720
    %v3385 = vpack.c.b16 %v2729, %v2721
    %v3386 = vpack.c.b16 %v2730, %v2722
    %v3387 = vpack.c.b16 %v2731, %v2723
    %v3388 = vpack.c.b16 %v2740, %v2732
    %v3389 = vpack.c.b16 %v2741, %v2733
    %v3390 = vpack.c.b16 %v2742, %v2734
    %v3391 = vpack.c.b16 %v2743, %v2735
    %v3392 = vpack.c.b16 %v2744, %v2736
    %v3393 = vpack.c.b16 %v2745, %v2737
    %v3394 = vpack.c.b16 %v2746, %v2738
    %v3395 = vpack.c.b16 %v2747, %v2739
    %v3396 = vpack.c.b16 %v2756, %v2748
    %v3397 = vpack.c.b16 %v2757, %v2749
    %v3398 = vpack.c.b16 %v2758, %v2750
    %v3399 = vpack.c.b16 %v2759, %v2751
    %v3400 = vpack.c.b16 %v2760, %v2752
    %v3401 = vpack.c.b16 %v2761, %v2753
    %v3402 = vpack.c.b16 %v2762, %v2754
    %v3403 = vpack.c.b16 %v2763, %v2755
    %v3404 = vpack.c.b16 %v2772, %v2764
    %v3405 = vpack.c.b16 %v2773, %v2765
    %v3406 = vpack.c.b16 %v2774, %v2766
    %v3407 = vpack.c.b16 %v2775, %v2767
    %v3408 = vpack.c.b16 %v2776, %v2768
    %v3409 = vpack.c.b16 %v2777, %v2769
    %v3410 = vpack.c.b16 %v2778, %v2770
    %v3411 = vpack.c.b16 %v2779, %v2771
    %v3412 = vpack.c.b16 %v2788, %v2780
    %v3413 = vpack.c.b16 %v2789, %v2781
    %v3414 = vpack.c.b16 %v2790, %v2782
    %v3415 = vpack.c.b16 %v2791, %v2783
    %v3416 = vpack.c.b16 %v2792, %v2784
    %v3417 = vpack.c.b16 %v2793, %v2785
    %v3418 = vpack.c.b16 %v2794, %v2786
    %v3419 = vpack.c.b16 %v2795, %v2787
    %v3420 = vpack.c.b16 %v2804, %v2796
    %v3421 = vpack.c.b16 %v2805, %v2797
    %v3422 = vpack.c.b16 %v2806, %v2798
    %v3423 = vpack.c.b16 %v2807, %v2799
    %v3424 = vpack.c.b16 %v2808, %v2800
    %v3425 = vpack.c.b16 %v2809, %v2801
    %v3426 = vpack.c.b16 %v2810, %v2802
    %v3427 = vpack.c.b16 %v2811, %v2803
    %v3428 = vpack.c.b16 %v2820, %v2812
    %v3429 = vpack.c.b16 %v2821, %v2813
    %v3430 = vpack.c.b16 %v2822, %v2814
    %v3431 = vpack.c.b16 %v2823, %v2815
    %v3432 = vpack.c.b16 %v2824, %v2816
    %v3433 = vpack.c.b16 %v2825, %v2817
    %v3434 = vpack.c.b16 %v2826, %v2818
    %v3435 = vpack.c.b16 %v2827, %v2819
    %v3436 = vpack.c.b16 %v2836, %v2828
    %v3437 = vpack.c.b16 %v2837, %v2829
    %v3438 = vpack.c.b16 %v2838, %v2830
    %v3439 = vpack.c.b16 %v2839, %v2831
    %v3440 = vpack.c.b16 %v2840, %v2832
    %v3441 = vpack.c.b16 %v2841, %v2833
    %v3442 = vpack.c.b16 %v2842, %v2834
    %v3443 = vpack.c.b16 %v2843, %v2835
    %v3444 = vpack.c.b16 %v2852, %v2844
    %v3445 = vpack.c.b16 %v2853, %v2845
    %v3446 = vpack.c.b16 %v2854, %v2846
    %v3447 = vpack.c.b16 %v2855, %v2847
    %v3448 = vpack.c.b16 %v2856, %v2848
    %v3449 = vpack.c.b16 %v2857, %v2849
    %v3450 = vpack.c.b16 %v2858, %v2850
    %v3451 = vpack.c.b16 %v2859, %v2851
    %v3452 = vpack.c.b16 %v2868, %v2860
    %v3453 = vpack.c.b16 %v2869, %v2861
    %v3454 = vpack.c.b16 %v2870, %v2862
    %v3455 = vpack.c.b16 %v2871, %v2863
    %v3456 = vpack.c.b16 %v2872, %v2864
    %v3457 = vpack.c.b16 %v2873, %v2865
    %v3458 = vpack.c.b16 %v2874, %v2866
    %v3459 = vpack.c.b16 %v2875, %v2867
    %v3460 = vpack.c.b16 %v2884, %v2876
    %v3461 = vpack.c.b16 %v2885, %v2877
    %v3462 = vpack.c.b16 %v2886, %v2878
    %v3463 = vpack.c.b16 %v2887, %v2879
    %v3464 = vpack.c.b16 %v2888, %v2880
    %v3465 = vpack.c.b16 %v2889, %v2881
    %v3466 = vpack.c.b16 %v2890, %v2882
    %v3467 = vpack.c.b16 %v2891, %v2883
    %v3468 = vpack.c.b16 %v2900, %v2892
    %v3469 = vpack.c.b16 %v2901, %v2893
    %v3470 = vpack.c.b16 %v2902, %v2894
    %v3471 = vpack.c.b16 %v2903, %v2895
    %v3472 = vpack.c.b16 %v2904, %v2896
    %v3473 = vpack.c.b16 %v2905, %v2897
    %v3474 = vpack.c.b16 %v2906, %v2898
    %v3475 = vpack.c.b16 %v2907, %v2899
    %v3476 = vpack.c.b16 %v2916, %v2908
    %v3477 = vpack.c.b16 %v2917, %v2909
    %v3478 = vpack.c.b16 %v2918, %v2910
    %v3479 = vpack.c.b16 %v2919, %v2911
    %v3480 = vpack.c.b16 %v2920, %v2912
    %v3481 = vpack.c.b16 %v2921, %v2913
    %v3482 = vpack.c.b16 %v2922, %v2914
    %v3483 = vpack.c.b16 %v2923, %v2915
    %v3484 = vpack.c.b16 %v2932, %v2924
    %v3485 = vpack.c.b16 %v2933, %v2925
    %v3486 = vpack.c.b16 %v2934, %v2926
    %v3487 = vpack.c.b16 %v2935, %v2927
    %v3488 = vpack.c.b16 %v2936, %v2928
    %v3489 = vpack.c.b16 %v2937, %v2929
    %v3490 = vpack.c.b16 %v2938, %v2930
    %v3491 = vpack.c.b16 %v2939, %v2931
    %v3492 = vpack.c.b16 %v2948, %v2940
    %v3493 = vpack.c.b16 %v2949, %v2941
    %v3494 = vpack.c.b16 %v2950, %v2942
    %v3495 = vpack.c.b16 %v2951, %v2943
    %v3496 = vpack.c.b16 %v2952, %v2944
    %v3497 = vpack.c.b16 %v2953, %v2945
    %v3498 = vpack.c.b16 %v2954, %v2946
    %v3499 = vpack.c.b16 %v2955, %v2947
    %v3500 = vpack.c.b16 %v2964, %v2956
    %v3501 = vpack.c.b16 %v2965, %v2957
    %v3502 = vpack.c.b16 %v2966, %v2958
    %v3503 = vpack.c.b16 %v2967, %v2959
    %v3504 = vpack.c.b16 %v2968, %v2960
    %v3505 = vpack.c.b16 %v2969, %v2961
    %v3506 = vpack.c.b16 %v2970, %v2962
    %v3507 = vpack.c.b16 %v2971, %v2963
    %v3508 = vpack.c.b16 %v2980, %v2972
    %v3509 = vpack.c.b16 %v2981, %v2973
    %v3510 = vpack.c.b16 %v2982, %v2974
    %v3511 = vpack.c.b16 %v2983, %v2975
    %v3512 = vpack.c.b16 %v2984, %v2976
    %v3513 = vpack.c.b16 %v2985, %v2977
    %v3514 = vpack.c.b16 %v2986, %v2978
    %v3515 = vpack.c.b16 %v2987, %v2979
    %v3516 = vpack.c.b16 %v2996, %v2988
    %v3517 = vpack.c.b16 %v2997, %v2989
    %v3518 = vpack.c.b16 %v2998, %v2990
    %v3519 = vpack.c.b16 %v2999, %v2991
    %v3520 = vpack.c.b16 %v3000, %v2992
    %v3521 = vpack.c.b16 %v3001, %v2993
    %v3522 = vpack.c.b16 %v3002, %v2994
    %v3523 = vpack.c.b16 %v3003, %v2995
    %v3524 = vpack.c.b16 %v3012, %v3004
    %v3525 = vpack.c.b16 %v3013, %v3005
    %v3526 = vpack.c.b16 %v3014, %v3006
    %v3527 = vpack.c.b16 %v3015, %v3007
    %v3528 = vpack.c.b16 %v3016, %v3008
    %v3529 = vpack.c.b16 %v3017, %v3009
    %v3530 = vpack.c.b16 %v3018, %v3010
    %v3531 = vpack.c.b16 %v3019, %v3011
    %4044 = vmatprep.subr.bf16.mxu0 %v3021
    %4045 = vmatpush1.bf16.msra.mxu0 %v3020
    %4046 = vmatprep.subr.bf16.mxu0 %v3029
    %4047 = vmatpush1.bf16.msra.mxu0 %v3028
    %4048 = vmatprep.subr.bf16.mxu0 %v3037
    %4049 = vmatpush1.bf16.msra.mxu0 %v3036
    %4050 = vmatprep.subr.bf16.mxu0 %v3045
    %4051 = vmatpush1.bf16.msra.mxu0 %v3044
    %4052 = vmatprep.subr.bf16.mxu0 %v3053
    %4053 = vmatpush1.bf16.msra.mxu0 %v3052
    %4054 = vmatprep.subr.bf16.mxu0 %v3061
    %4055 = vmatpush1.bf16.msra.mxu0 %v3060
    %4056 = vmatprep.subr.bf16.mxu0 %v3069
    %4057 = vmatpush1.bf16.msra.mxu0 %v3068
    %4058 = vmatprep.subr.bf16.mxu0 %v3077
    %4059 = vmatpush1.bf16.msra.mxu0 %v3076
    %4060 = vmatprep.subr.bf16.mxu0 %v3085
    %4061 = vmatpush1.bf16.msra.mxu0 %v3084
    %4062 = vmatprep.subr.bf16.mxu0 %v3093
    %4063 = vmatpush1.bf16.msra.mxu0 %v3092
    %4064 = vmatprep.subr.bf16.mxu0 %v3101
    %4065 = vmatpush1.bf16.msra.mxu0 %v3100
    %4066 = vmatprep.subr.bf16.mxu0 %v3109
    %4067 = vmatpush1.bf16.msra.mxu0 %v3108
    %4068 = vmatprep.subr.bf16.mxu0 %v3117
    %4069 = vmatpush1.bf16.msra.mxu0 %v3116
    %4070 = vmatprep.subr.bf16.mxu0 %v3125
    %4071 = vmatpush1.bf16.msra.mxu0 %v3124
    %4072 = vmatprep.subr.bf16.mxu0 %v3133
    %4073 = vmatpush1.bf16.msra.mxu0 %v3132
    %4074 = vmatprep.subr.bf16.mxu0 %v3141
    %4075 = vmatpush1.bf16.msra.mxu0 %v3140
    %4076 = vmatprep.mubr.bf16.mxu0 %v638
    %4077 = vmatmul.mubr.bf16.gmra.mrb[0].mxu0 %v637
    %v4078 = vpop.f32.mrb[0].mxu0
    %v4079 = vadd.f32 %v1267, %v4078
    %v4080 = vpop.f32.mrb[0].mxu0
    %v4081 = vadd.f32 %v1269, %v4080
    %v4082 = vpop.f32.mrb[0].mxu0
    %v4083 = vpop.f32.mrb[0].mxu0
    %4084 = vdwg.mxu0
    %4085 = vmatprep.subr.bf16.mxu0 %v3149
    %4086 = vmatpush1.bf16.msra.mxu0 %v3148
    %4087 = vmatprep.subr.bf16.mxu0 %v3157
    %4088 = vmatpush1.bf16.msra.mxu0 %v3156
    %4089 = vmatprep.subr.bf16.mxu0 %v3165
    %4090 = vmatpush1.bf16.msra.mxu0 %v3164
    %4091 = vmatprep.subr.bf16.mxu0 %v3173
    %4092 = vmatpush1.bf16.msra.mxu0 %v3172
    %4093 = vmatprep.subr.bf16.mxu0 %v3181
    %4094 = vmatpush1.bf16.msra.mxu0 %v3180
    %4095 = vmatprep.subr.bf16.mxu0 %v3189
    %4096 = vmatpush1.bf16.msra.mxu0 %v3188
    %4097 = vmatprep.subr.bf16.mxu0 %v3197
    %4098 = vmatpush1.bf16.msra.mxu0 %v3196
    %4099 = vmatprep.subr.bf16.mxu0 %v3205
    %4100 = vmatpush1.bf16.msra.mxu0 %v3204
    %4101 = vmatprep.subr.bf16.mxu0 %v3213
    %4102 = vmatpush1.bf16.msra.mxu0 %v3212
    %4103 = vmatprep.subr.bf16.mxu0 %v3221
    %4104 = vmatpush1.bf16.msra.mxu0 %v3220
    %4105 = vmatprep.subr.bf16.mxu0 %v3229
    %4106 = vmatpush1.bf16.msra.mxu0 %v3228
    %4107 = vmatprep.subr.bf16.mxu0 %v3237
    %4108 = vmatpush1.bf16.msra.mxu0 %v3236
    %4109 = vmatprep.subr.bf16.mxu0 %v3245
    %4110 = vmatpush1.bf16.msra.mxu0 %v3244
    %4111 = vmatprep.subr.bf16.mxu0 %v3253
    %4112 = vmatpush1.bf16.msra.mxu0 %v3252
    %4113 = vmatprep.subr.bf16.mxu0 %v3261
    %4114 = vmatpush1.bf16.msra.mxu0 %v3260
    %4115 = vmatprep.subr.bf16.mxu0 %v3269
    %4116 = vmatpush1.bf16.msra.mxu0 %v3268
    %4117 = vmatprep.mubr.bf16.mxu0 %v640
    %4118 = vmatmul.mubr.bf16.gmra.mrb[0].mxu0 %v639
    %v4119 = vpop.f32.mrb[0].mxu0
    %v4120 = vadd.f32 %v4079, %v4119
    %v4121 = vpop.f32.mrb[0].mxu0
    %v4122 = vadd.f32 %v4081, %v4121
    %v4123 = vpop.f32.mrb[0].mxu0
    %v4124 = vpop.f32.mrb[0].mxu0
    %4125 = vdwg.mxu0
    %4126 = vmatprep.subr.bf16.mxu0 %v3277
    %4127 = vmatpush1.bf16.msra.mxu0 %v3276
    %4128 = vmatprep.subr.bf16.mxu0 %v3285
    %4129 = vmatpush1.bf16.msra.mxu0 %v3284
    %4130 = vmatprep.subr.bf16.mxu0 %v3293
    %4131 = vmatpush1.bf16.msra.mxu0 %v3292
    %4132 = vmatprep.subr.bf16.mxu0 %v3301
    %4133 = vmatpush1.bf16.msra.mxu0 %v3300
    %4134 = vmatprep.subr.bf16.mxu0 %v3309
    %4135 = vmatpush1.bf16.msra.mxu0 %v3308
    %4136 = vmatprep.subr.bf16.mxu0 %v3317
    %4137 = vmatpush1.bf16.msra.mxu0 %v3316
    %4138 = vmatprep.subr.bf16.mxu0 %v3325
    %4139 = vmatpush1.bf16.msra.mxu0 %v3324
    %4140 = vmatprep.subr.bf16.mxu0 %v3333
    %4141 = vmatpush1.bf16.msra.mxu0 %v3332
    %4142 = vmatprep.subr.bf16.mxu0 %v3341
    %4143 = vmatpush1.bf16.msra.mxu0 %v3340
    %4144 = vmatprep.subr.bf16.mxu0 %v3349
    %4145 = vmatpush1.bf16.msra.mxu0 %v3348
    %4146 = vmatprep.subr.bf16.mxu0 %v3357
    %4147 = vmatpush1.bf16.msra.mxu0 %v3356
    %4148 = vmatprep.subr.bf16.mxu0 %v3365
    %4149 = vmatpush1.bf16.msra.mxu0 %v3364
    %4150 = vmatprep.subr.bf16.mxu0 %v3373
    %4151 = vmatpush1.bf16.msra.mxu0 %v3372
    %4152 = vmatprep.subr.bf16.mxu0 %v3381
    %4153 = vmatpush1.bf16.msra.mxu0 %v3380
    %4154 = vmatprep.subr.bf16.mxu0 %v3389
    %4155 = vmatpush1.bf16.msra.mxu0 %v3388
    %4156 = vmatprep.subr.bf16.mxu0 %v3397
    %4157 = vmatpush1.bf16.msra.mxu0 %v3396
    %4158 = vmatprep.mubr.bf16.mxu0 %v642
    %4159 = vmatmul.mubr.bf16.gmra.mrb[0].mxu0 %v641
    %v4160 = vpop.f32.mrb[0].mxu0
    %v4161 = vadd.f32 %v4120, %v4160
    %v4162 = vpop.f32.mrb[0].mxu0
    %v4163 = vadd.f32 %v4122, %v4162
    %v4164 = vpop.f32.mrb[0].mxu0
    %v4165 = vpop.f32.mrb[0].mxu0
    %4166 = vdwg.mxu0
    %4167 = vmatprep.subr.bf16.mxu0 %v3405
    %4168 = vmatpush1.bf16.msra.mxu0 %v3404
    %4169 = vmatprep.subr.bf16.mxu0 %v3413
    %4170 = vmatpush1.bf16.msra.mxu0 %v3412
    %4171 = vmatprep.subr.bf16.mxu0 %v3421
    %4172 = vmatpush1.bf16.msra.mxu0 %v3420
    %4173 = vmatprep.subr.bf16.mxu0 %v3429
    %4174 = vmatpush1.bf16.msra.mxu0 %v3428
    %4175 = vmatprep.subr.bf16.mxu0 %v3437
    %4176 = vmatpush1.bf16.msra.mxu0 %v3436
    %4177 = vmatprep.subr.bf16.mxu0 %v3445
    %4178 = vmatpush1.bf16.msra.mxu0 %v3444
    %4179 = vmatprep.subr.bf16.mxu0 %v3453
    %4180 = vmatpush1.bf16.msra.mxu0 %v3452
    %4181 = vmatprep.subr.bf16.mxu0 %v3461
    %4182 = vmatpush1.bf16.msra.mxu0 %v3460
    %4183 = vmatprep.subr.bf16.mxu0 %v3469
    %4184 = vmatpush1.bf16.msra.mxu0 %v3468
    %4185 = vmatprep.subr.bf16.mxu0 %v3477
    %4186 = vmatpush1.bf16.msra.mxu0 %v3476
    %4187 = vmatprep.subr.bf16.mxu0 %v3485
    %4188 = vmatpush1.bf16.msra.mxu0 %v3484
    %4189 = vmatprep.subr.bf16.mxu0 %v3493
    %4190 = vmatpush1.bf16.msra.mxu0 %v3492
    %4191 = vmatprep.subr.bf16.mxu0 %v3501
    %4192 = vmatpush1.bf16.msra.mxu0 %v3500
    %4193 = vmatprep.subr.bf16.mxu0 %v3509
    %4194 = vmatpush1.bf16.msra.mxu0 %v3508
    %4195 = vmatprep.subr.bf16.mxu0 %v3517
    %4196 = vmatpush1.bf16.msra.mxu0 %v3516
    %4197 = vmatprep.subr.bf16.mxu0 %v3525
    %4198 = vmatpush1.bf16.msra.mxu0 %v3524
    %4199 = vmatprep.mubr.bf16.mxu0 %v644
    %4200 = vmatmul.mubr.bf16.gmra.mrb[0].mxu0 %v643
    %v4201 = vpop.f32.mrb[0].mxu0
    %v4202 = vadd.f32 %v4161, %v4201
    %v4203 = vpop.f32.mrb[0].mxu0
    %v4204 = vadd.f32 %v4163, %v4203
    %v4205 = vpop.f32.mrb[0].mxu0
    %v4206 = vpop.f32.mrb[0].mxu0
    %4207 = vdwg.mxu0
    %4208 = vmatprep.subr.bf16.mxu0 %v3023
    %4209 = vmatpush1.bf16.msra.mxu0 %v3022
    %4210 = vmatprep.subr.bf16.mxu0 %v3031
    %4211 = vmatpush1.bf16.msra.mxu0 %v3030
    %4212 = vmatprep.subr.bf16.mxu0 %v3039
    %4213 = vmatpush1.bf16.msra.mxu0 %v3038
    %4214 = vmatprep.subr.bf16.mxu0 %v3047
    %4215 = vmatpush1.bf16.msra.mxu0 %v3046
    %4216 = vmatprep.subr.bf16.mxu0 %v3055
    %4217 = vmatpush1.bf16.msra.mxu0 %v3054
    %4218 = vmatprep.subr.bf16.mxu0 %v3063
    %4219 = vmatpush1.bf16.msra.mxu0 %v3062
    %4220 = vmatprep.subr.bf16.mxu0 %v3071
    %4221 = vmatpush1.bf16.msra.mxu0 %v3070
    %4222 = vmatprep.subr.bf16.mxu0 %v3079
    %4223 = vmatpush1.bf16.msra.mxu0 %v3078
    %4224 = vmatprep.subr.bf16.mxu0 %v3087
    %4225 = vmatpush1.bf16.msra.mxu0 %v3086
    %4226 = vmatprep.subr.bf16.mxu0 %v3095
    %4227 = vmatpush1.bf16.msra.mxu0 %v3094
    %4228 = vmatprep.subr.bf16.mxu0 %v3103
    %4229 = vmatpush1.bf16.msra.mxu0 %v3102
    %4230 = vmatprep.subr.bf16.mxu0 %v3111
    %4231 = vmatpush1.bf16.msra.mxu0 %v3110
    %4232 = vmatprep.subr.bf16.mxu0 %v3119
    %4233 = vmatpush1.bf16.msra.mxu0 %v3118
    %4234 = vmatprep.subr.bf16.mxu0 %v3127
    %4235 = vmatpush1.bf16.msra.mxu0 %v3126
    %4236 = vmatprep.subr.bf16.mxu0 %v3135
    %4237 = vmatpush1.bf16.msra.mxu0 %v3134
    %4238 = vmatprep.subr.bf16.mxu0 %v3143
    %4239 = vmatpush1.bf16.msra.mxu0 %v3142
    %4240 = vmatprep.mubr.bf16.mxu0 %v638
    %4241 = vmatmul.mubr.bf16.gmra.mrb[0].mxu0 %v637
    %v4242 = vpop.f32.mrb[0].mxu0
    %v4243 = vadd.f32 %v1338, %v4242
    %v4244 = vpop.f32.mrb[0].mxu0
    %v4245 = vadd.f32 %v1340, %v4244
    %v4246 = vpop.f32.mrb[0].mxu0
    %v4247 = vpop.f32.mrb[0].mxu0
    %4248 = vdwg.mxu0
    %4249 = vmatprep.subr.bf16.mxu0 %v3151
    %4250 = vmatpush1.bf16.msra.mxu0 %v3150
    %4251 = vmatprep.subr.bf16.mxu0 %v3159
    %4252 = vmatpush1.bf16.msra.mxu0 %v3158
    %4253 = vmatprep.subr.bf16.mxu0 %v3167
    %4254 = vmatpush1.bf16.msra.mxu0 %v3166
    %4255 = vmatprep.subr.bf16.mxu0 %v3175
    %4256 = vmatpush1.bf16.msra.mxu0 %v3174
    %4257 = vmatprep.subr.bf16.mxu0 %v3183
    %4258 = vmatpush1.bf16.msra.mxu0 %v3182
    %4259 = vmatprep.subr.bf16.mxu0 %v3191
    %4260 = vmatpush1.bf16.msra.mxu0 %v3190
    %4261 = vmatprep.subr.bf16.mxu0 %v3199
    %4262 = vmatpush1.bf16.msra.mxu0 %v3198
    %4263 = vmatprep.subr.bf16.mxu0 %v3207
    %4264 = vmatpush1.bf16.msra.mxu0 %v3206
    %4265 = vmatprep.subr.bf16.mxu0 %v3215
    %4266 = vmatpush1.bf16.msra.mxu0 %v3214
    %4267 = vmatprep.subr.bf16.mxu0 %v3223
    %4268 = vmatpush1.bf16.msra.mxu0 %v3222
    %4269 = vmatprep.subr.bf16.mxu0 %v3231
    %4270 = vmatpush1.bf16.msra.mxu0 %v3230
    %4271 = vmatprep.subr.bf16.mxu0 %v3239
    %4272 = vmatpush1.bf16.msra.mxu0 %v3238
    %4273 = vmatprep.subr.bf16.mxu0 %v3247
    %4274 = vmatpush1.bf16.msra.mxu0 %v3246
    %4275 = vmatprep.subr.bf16.mxu0 %v3255
    %4276 = vmatpush1.bf16.msra.mxu0 %v3254
    %4277 = vmatprep.subr.bf16.mxu0 %v3263
    %4278 = vmatpush1.bf16.msra.mxu0 %v3262
    %4279 = vmatprep.subr.bf16.mxu0 %v3271
    %4280 = vmatpush1.bf16.msra.mxu0 %v3270
    %4281 = vmatprep.mubr.bf16.mxu0 %v640
    %4282 = vmatmul.mubr.bf16.gmra.mrb[0].mxu0 %v639
    %v4283 = vpop.f32.mrb[0].mxu0
    %v4284 = vadd.f32 %v4243, %v4283
    %v4285 = vpop.f32.mrb[0].mxu0
    %v4286 = vadd.f32 %v4245, %v4285
    %v4287 = vpop.f32.mrb[0].mxu0
    %v4288 = vpop.f32.mrb[0].mxu0
    %4289 = vdwg.mxu0
    %4290 = vmatprep.subr.bf16.mxu0 %v3279
    %4291 = vmatpush1.bf16.msra.mxu0 %v3278
    %4292 = vmatprep.subr.bf16.mxu0 %v3287
    %4293 = vmatpush1.bf16.msra.mxu0 %v3286
    %4294 = vmatprep.subr.bf16.mxu0 %v3295
    %4295 = vmatpush1.bf16.msra.mxu0 %v3294
    %4296 = vmatprep.subr.bf16.mxu0 %v3303
    %4297 = vmatpush1.bf16.msra.mxu0 %v3302
    %4298 = vmatprep.subr.bf16.mxu0 %v3311
    %4299 = vmatpush1.bf16.msra.mxu0 %v3310
    %4300 = vmatprep.subr.bf16.mxu0 %v3319
    %4301 = vmatpush1.bf16.msra.mxu0 %v3318
    %4302 = vmatprep.subr.bf16.mxu0 %v3327
    %4303 = vmatpush1.bf16.msra.mxu0 %v3326
    %4304 = vmatprep.subr.bf16.mxu0 %v3335
    %4305 = vmatpush1.bf16.msra.mxu0 %v3334
    %4306 = vmatprep.subr.bf16.mxu0 %v3343
    %4307 = vmatpush1.bf16.msra.mxu0 %v3342
    %4308 = vmatprep.subr.bf16.mxu0 %v3351
    %4309 = vmatpush1.bf16.msra.mxu0 %v3350
    %4310 = vmatprep.subr.bf16.mxu0 %v3359
    %4311 = vmatpush1.bf16.msra.mxu0 %v3358
    %4312 = vmatprep.subr.bf16.mxu0 %v3367
    %4313 = vmatpush1.bf16.msra.mxu0 %v3366
    %4314 = vmatprep.subr.bf16.mxu0 %v3375
    %4315 = vmatpush1.bf16.msra.mxu0 %v3374
    %4316 = vmatprep.subr.bf16.mxu0 %v3383
    %4317 = vmatpush1.bf16.msra.mxu0 %v3382
    %4318 = vmatprep.subr.bf16.mxu0 %v3391
    %4319 = vmatpush1.bf16.msra.mxu0 %v3390
    %4320 = vmatprep.subr.bf16.mxu0 %v3399
    %4321 = vmatpush1.bf16.msra.mxu0 %v3398
    %4322 = vmatprep.mubr.bf16.mxu0 %v642
    %4323 = vmatmul.mubr.bf16.gmra.mrb[0].mxu0 %v641
    %v4324 = vpop.f32.mrb[0].mxu0
    %v4325 = vadd.f32 %v4284, %v4324
    %v4326 = vpop.f32.mrb[0].mxu0
    %v4327 = vadd.f32 %v4286, %v4326
    %v4328 = vpop.f32.mrb[0].mxu0
    %v4329 = vpop.f32.mrb[0].mxu0
    %4330 = vdwg.mxu0
    %4331 = vmatprep.subr.bf16.mxu0 %v3407
    %4332 = vmatpush1.bf16.msra.mxu0 %v3406
    %4333 = vmatprep.subr.bf16.mxu0 %v3415
    %4334 = vmatpush1.bf16.msra.mxu0 %v3414
    %4335 = vmatprep.subr.bf16.mxu0 %v3423
    %4336 = vmatpush1.bf16.msra.mxu0 %v3422
    %4337 = vmatprep.subr.bf16.mxu0 %v3431
    %4338 = vmatpush1.bf16.msra.mxu0 %v3430
    %4339 = vmatprep.subr.bf16.mxu0 %v3439
    %4340 = vmatpush1.bf16.msra.mxu0 %v3438
    %4341 = vmatprep.subr.bf16.mxu0 %v3447
    %4342 = vmatpush1.bf16.msra.mxu0 %v3446
    %4343 = vmatprep.subr.bf16.mxu0 %v3455
    %4344 = vmatpush1.bf16.msra.mxu0 %v3454
    %4345 = vmatprep.subr.bf16.mxu0 %v3463
    %4346 = vmatpush1.bf16.msra.mxu0 %v3462
    %4347 = vmatprep.subr.bf16.mxu0 %v3471
    %4348 = vmatpush1.bf16.msra.mxu0 %v3470
    %4349 = vmatprep.subr.bf16.mxu0 %v3479
    %4350 = vmatpush1.bf16.msra.mxu0 %v3478
    %4351 = vmatprep.subr.bf16.mxu0 %v3487
    %4352 = vmatpush1.bf16.msra.mxu0 %v3486
    %4353 = vmatprep.subr.bf16.mxu0 %v3495
    %4354 = vmatpush1.bf16.msra.mxu0 %v3494
    %4355 = vmatprep.subr.bf16.mxu0 %v3503
    %4356 = vmatpush1.bf16.msra.mxu0 %v3502
    %4357 = vmatprep.subr.bf16.mxu0 %v3511
    %4358 = vmatpush1.bf16.msra.mxu0 %v3510
    %4359 = vmatprep.subr.bf16.mxu0 %v3519
    %4360 = vmatpush1.bf16.msra.mxu0 %v3518
    %4361 = vmatprep.subr.bf16.mxu0 %v3527
    %4362 = vmatpush1.bf16.msra.mxu0 %v3526
    %4363 = vmatprep.mubr.bf16.mxu0 %v644
    %4364 = vmatmul.mubr.bf16.gmra.mrb[0].mxu0 %v643
    %v4365 = vpop.f32.mrb[0].mxu0
    %v4366 = vadd.f32 %v4325, %v4365
    %v4367 = vpop.f32.mrb[0].mxu0
    %v4368 = vadd.f32 %v4327, %v4367
    %v4369 = vpop.f32.mrb[0].mxu0
    %v4370 = vpop.f32.mrb[0].mxu0
    %4371 = vdwg.mxu0
    %4372 = vmatprep.subr.bf16.mxu0 %v3025
    %4373 = vmatpush1.bf16.msra.mxu0 %v3024
    %4374 = vmatprep.subr.bf16.mxu0 %v3033
    %4375 = vmatpush1.bf16.msra.mxu0 %v3032
    %4376 = vmatprep.subr.bf16.mxu0 %v3041
    %4377 = vmatpush1.bf16.msra.mxu0 %v3040
    %4378 = vmatprep.subr.bf16.mxu0 %v3049
    %4379 = vmatpush1.bf16.msra.mxu0 %v3048
    %4380 = vmatprep.subr.bf16.mxu0 %v3057
    %4381 = vmatpush1.bf16.msra.mxu0 %v3056
    %4382 = vmatprep.subr.bf16.mxu0 %v3065
    %4383 = vmatpush1.bf16.msra.mxu0 %v3064
    %4384 = vmatprep.subr.bf16.mxu0 %v3073
    %4385 = vmatpush1.bf16.msra.mxu0 %v3072
    %4386 = vmatprep.subr.bf16.mxu0 %v3081
    %4387 = vmatpush1.bf16.msra.mxu0 %v3080
    %4388 = vmatprep.subr.bf16.mxu0 %v3089
    %4389 = vmatpush1.bf16.msra.mxu0 %v3088
    %4390 = vmatprep.subr.bf16.mxu0 %v3097
    %4391 = vmatpush1.bf16.msra.mxu0 %v3096
    %4392 = vmatprep.subr.bf16.mxu0 %v3105
    %4393 = vmatpush1.bf16.msra.mxu0 %v3104
    %4394 = vmatprep.subr.bf16.mxu0 %v3113
    %4395 = vmatpush1.bf16.msra.mxu0 %v3112
    %4396 = vmatprep.subr.bf16.mxu0 %v3121
    %4397 = vmatpush1.bf16.msra.mxu0 %v3120
    %4398 = vmatprep.subr.bf16.mxu0 %v3129
    %4399 = vmatpush1.bf16.msra.mxu0 %v3128
    %4400 = vmatprep.subr.bf16.mxu0 %v3137
    %4401 = vmatpush1.bf16.msra.mxu0 %v3136
    %4402 = vmatprep.subr.bf16.mxu0 %v3145
    %4403 = vmatpush1.bf16.msra.mxu0 %v3144
    %4404 = vmatprep.mubr.bf16.mxu0 %v638
    %4405 = vmatmul.mubr.bf16.gmra.mrb[0].mxu0 %v637
    %v4406 = vpop.f32.mrb[0].mxu0
    %v4407 = vadd.f32 %v1409, %v4406
    %v4408 = vpop.f32.mrb[0].mxu0
    %v4409 = vadd.f32 %v1411, %v4408
    %v4410 = vpop.f32.mrb[0].mxu0
    %v4411 = vpop.f32.mrb[0].mxu0
    %4412 = vdwg.mxu0
    %4413 = vmatprep.subr.bf16.mxu0 %v3153
    %4414 = vmatpush1.bf16.msra.mxu0 %v3152
    %4415 = vmatprep.subr.bf16.mxu0 %v3161
    %4416 = vmatpush1.bf16.msra.mxu0 %v3160
    %4417 = vmatprep.subr.bf16.mxu0 %v3169
    %4418 = vmatpush1.bf16.msra.mxu0 %v3168
    %4419 = vmatprep.subr.bf16.mxu0 %v3177
    %4420 = vmatpush1.bf16.msra.mxu0 %v3176
    %4421 = vmatprep.subr.bf16.mxu0 %v3185
    %4422 = vmatpush1.bf16.msra.mxu0 %v3184
    %4423 = vmatprep.subr.bf16.mxu0 %v3193
    %4424 = vmatpush1.bf16.msra.mxu0 %v3192
    %4425 = vmatprep.subr.bf16.mxu0 %v3201
    %4426 = vmatpush1.bf16.msra.mxu0 %v3200
    %4427 = vmatprep.subr.bf16.mxu0 %v3209
    %4428 = vmatpush1.bf16.msra.mxu0 %v3208
    %4429 = vmatprep.subr.bf16.mxu0 %v3217
    %4430 = vmatpush1.bf16.msra.mxu0 %v3216
    %4431 = vmatprep.subr.bf16.mxu0 %v3225
    %4432 = vmatpush1.bf16.msra.mxu0 %v3224
    %4433 = vmatprep.subr.bf16.mxu0 %v3233
    %4434 = vmatpush1.bf16.msra.mxu0 %v3232
    %4435 = vmatprep.subr.bf16.mxu0 %v3241
    %4436 = vmatpush1.bf16.msra.mxu0 %v3240
    %4437 = vmatprep.subr.bf16.mxu0 %v3249
    %4438 = vmatpush1.bf16.msra.mxu0 %v3248
    %4439 = vmatprep.subr.bf16.mxu0 %v3257
    %4440 = vmatpush1.bf16.msra.mxu0 %v3256
    %4441 = vmatprep.subr.bf16.mxu0 %v3265
    %4442 = vmatpush1.bf16.msra.mxu0 %v3264
    %4443 = vmatprep.subr.bf16.mxu0 %v3273
    %4444 = vmatpush1.bf16.msra.mxu0 %v3272
    %4445 = vmatprep.mubr.bf16.mxu0 %v640
    %4446 = vmatmul.mubr.bf16.gmra.mrb[0].mxu0 %v639
    %v4447 = vpop.f32.mrb[0].mxu0
    %v4448 = vadd.f32 %v4407, %v4447
    %v4449 = vpop.f32.mrb[0].mxu0
    %v4450 = vadd.f32 %v4409, %v4449
    %v4451 = vpop.f32.mrb[0].mxu0
    %v4452 = vpop.f32.mrb[0].mxu0
    %4453 = vdwg.mxu0
    %4454 = vmatprep.subr.bf16.mxu0 %v3281
    %4455 = vmatpush1.bf16.msra.mxu0 %v3280
    %4456 = vmatprep.subr.bf16.mxu0 %v3289
    %4457 = vmatpush1.bf16.msra.mxu0 %v3288
    %4458 = vmatprep.subr.bf16.mxu0 %v3297
    %4459 = vmatpush1.bf16.msra.mxu0 %v3296
    %4460 = vmatprep.subr.bf16.mxu0 %v3305
    %4461 = vmatpush1.bf16.msra.mxu0 %v3304
    %4462 = vmatprep.subr.bf16.mxu0 %v3313
    %4463 = vmatpush1.bf16.msra.mxu0 %v3312
    %4464 = vmatprep.subr.bf16.mxu0 %v3321
    %4465 = vmatpush1.bf16.msra.mxu0 %v3320
    %4466 = vmatprep.subr.bf16.mxu0 %v3329
    %4467 = vmatpush1.bf16.msra.mxu0 %v3328
    %4468 = vmatprep.subr.bf16.mxu0 %v3337
    %4469 = vmatpush1.bf16.msra.mxu0 %v3336
    %4470 = vmatprep.subr.bf16.mxu0 %v3345
    %4471 = vmatpush1.bf16.msra.mxu0 %v3344
    %4472 = vmatprep.subr.bf16.mxu0 %v3353
    %4473 = vmatpush1.bf16.msra.mxu0 %v3352
    %4474 = vmatprep.subr.bf16.mxu0 %v3361
    %4475 = vmatpush1.bf16.msra.mxu0 %v3360
    %4476 = vmatprep.subr.bf16.mxu0 %v3369
    %4477 = vmatpush1.bf16.msra.mxu0 %v3368
    %4478 = vmatprep.subr.bf16.mxu0 %v3377
    %4479 = vmatpush1.bf16.msra.mxu0 %v3376
    %4480 = vmatprep.subr.bf16.mxu0 %v3385
    %4481 = vmatpush1.bf16.msra.mxu0 %v3384
    %4482 = vmatprep.subr.bf16.mxu0 %v3393
    %4483 = vmatpush1.bf16.msra.mxu0 %v3392
    %4484 = vmatprep.subr.bf16.mxu0 %v3401
    %4485 = vmatpush1.bf16.msra.mxu0 %v3400
    %4486 = vmatprep.mubr.bf16.mxu0 %v642
    %4487 = vmatmul.mubr.bf16.gmra.mrb[0].mxu0 %v641
    %v4488 = vpop.f32.mrb[0].mxu0
    %v4489 = vadd.f32 %v4448, %v4488
    %v4490 = vpop.f32.mrb[0].mxu0
    %v4491 = vadd.f32 %v4450, %v4490
    %v4492 = vpop.f32.mrb[0].mxu0
    %v4493 = vpop.f32.mrb[0].mxu0
    %4494 = vdwg.mxu0
    %4495 = vmatprep.subr.bf16.mxu0 %v3409
    %4496 = vmatpush1.bf16.msra.mxu0 %v3408
    %4497 = vmatprep.subr.bf16.mxu0 %v3417
    %4498 = vmatpush1.bf16.msra.mxu0 %v3416
    %4499 = vmatprep.subr.bf16.mxu0 %v3425
    %4500 = vmatpush1.bf16.msra.mxu0 %v3424
    %4501 = vmatprep.subr.bf16.mxu0 %v3433
    %4502 = vmatpush1.bf16.msra.mxu0 %v3432
    %4503 = vmatprep.subr.bf16.mxu0 %v3441
    %4504 = vmatpush1.bf16.msra.mxu0 %v3440
    %4505 = vmatprep.subr.bf16.mxu0 %v3449
    %4506 = vmatpush1.bf16.msra.mxu0 %v3448
    %4507 = vmatprep.subr.bf16.mxu0 %v3457
    %4508 = vmatpush1.bf16.msra.mxu0 %v3456
    %4509 = vmatprep.subr.bf16.mxu0 %v3465
    %4510 = vmatpush1.bf16.msra.mxu0 %v3464
    %4511 = vmatprep.subr.bf16.mxu0 %v3473
    %4512 = vmatpush1.bf16.msra.mxu0 %v3472
    %4513 = vmatprep.subr.bf16.mxu0 %v3481
    %4514 = vmatpush1.bf16.msra.mxu0 %v3480
    %4515 = vmatprep.subr.bf16.mxu0 %v3489
    %4516 = vmatpush1.bf16.msra.mxu0 %v3488
    %4517 = vmatprep.subr.bf16.mxu0 %v3497
    %4518 = vmatpush1.bf16.msra.mxu0 %v3496
    %4519 = vmatprep.subr.bf16.mxu0 %v3505
    %4520 = vmatpush1.bf16.msra.mxu0 %v3504
    %4521 = vmatprep.subr.bf16.mxu0 %v3513
    %4522 = vmatpush1.bf16.msra.mxu0 %v3512
    %4523 = vmatprep.subr.bf16.mxu0 %v3521
    %4524 = vmatpush1.bf16.msra.mxu0 %v3520
    %4525 = vmatprep.subr.bf16.mxu0 %v3529
    %4526 = vmatpush1.bf16.msra.mxu0 %v3528
    %4527 = vmatprep.mubr.bf16.mxu0 %v644
    %4528 = vmatmul.mubr.bf16.gmra.mrb[0].mxu0 %v643
    %v4529 = vpop.f32.mrb[0].mxu0
    %v4530 = vadd.f32 %v4489, %v4529
    %v4531 = vpop.f32.mrb[0].mxu0
    %v4532 = vadd.f32 %v4491, %v4531
    %v4533 = vpop.f32.mrb[0].mxu0
    %v4534 = vpop.f32.mrb[0].mxu0
    %4535 = vdwg.mxu0
    %4536 = vmatprep.subr.bf16.mxu0 %v3027
    %4537 = vmatpush1.bf16.msra.mxu0 %v3026
    %4538 = vmatprep.subr.bf16.mxu0 %v3035
    %4539 = vmatpush1.bf16.msra.mxu0 %v3034
    %4540 = vmatprep.subr.bf16.mxu0 %v3043
    %4541 = vmatpush1.bf16.msra.mxu0 %v3042
    %4542 = vmatprep.subr.bf16.mxu0 %v3051
    %4543 = vmatpush1.bf16.msra.mxu0 %v3050
    %4544 = vmatprep.subr.bf16.mxu0 %v3059
    %4545 = vmatpush1.bf16.msra.mxu0 %v3058
    %4546 = vmatprep.subr.bf16.mxu0 %v3067
    %4547 = vmatpush1.bf16.msra.mxu0 %v3066
    %4548 = vmatprep.subr.bf16.mxu0 %v3075
    %4549 = vmatpush1.bf16.msra.mxu0 %v3074
    %4550 = vmatprep.subr.bf16.mxu0 %v3083
    %4551 = vmatpush1.bf16.msra.mxu0 %v3082
    %4552 = vmatprep.subr.bf16.mxu0 %v3091
    %4553 = vmatpush1.bf16.msra.mxu0 %v3090
    %4554 = vmatprep.subr.bf16.mxu0 %v3099
    %4555 = vmatpush1.bf16.msra.mxu0 %v3098
    %4556 = vmatprep.subr.bf16.mxu0 %v3107
    %4557 = vmatpush1.bf16.msra.mxu0 %v3106
    %4558 = vmatprep.subr.bf16.mxu0 %v3115
    %4559 = vmatpush1.bf16.msra.mxu0 %v3114
    %4560 = vmatprep.subr.bf16.mxu0 %v3123
    %4561 = vmatpush1.bf16.msra.mxu0 %v3122
    %4562 = vmatprep.subr.bf16.mxu0 %v3131
    %4563 = vmatpush1.bf16.msra.mxu0 %v3130
    %4564 = vmatprep.subr.bf16.mxu0 %v3139
    %4565 = vmatpush1.bf16.msra.mxu0 %v3138
    %4566 = vmatprep.subr.bf16.mxu0 %v3147
    %4567 = vmatpush1.bf16.msra.mxu0 %v3146
    %4568 = vmatprep.mubr.bf16.mxu0 %v638
    %4569 = vmatmul.mubr.bf16.gmra.mrb[0].mxu0 %v637
    %v4570 = vpop.f32.mrb[0].mxu0
    %v4571 = vadd.f32 %v1480, %v4570
    %v4572 = vpop.f32.mrb[0].mxu0
    %v4573 = vadd.f32 %v1482, %v4572
    %v4574 = vpop.f32.mrb[0].mxu0
    %v4575 = vpop.f32.mrb[0].mxu0
    %4576 = vdwg.mxu0
    %4577 = vmatprep.subr.bf16.mxu0 %v3155
    %4578 = vmatpush1.bf16.msra.mxu0 %v3154
    %4579 = vmatprep.subr.bf16.mxu0 %v3163
    %4580 = vmatpush1.bf16.msra.mxu0 %v3162
    %4581 = vmatprep.subr.bf16.mxu0 %v3171
    %4582 = vmatpush1.bf16.msra.mxu0 %v3170
    %4583 = vmatprep.subr.bf16.mxu0 %v3179
    %4584 = vmatpush1.bf16.msra.mxu0 %v3178
    %4585 = vmatprep.subr.bf16.mxu0 %v3187
    %4586 = vmatpush1.bf16.msra.mxu0 %v3186
    %4587 = vmatprep.subr.bf16.mxu0 %v3195
    %4588 = vmatpush1.bf16.msra.mxu0 %v3194
    %4589 = vmatprep.subr.bf16.mxu0 %v3203
    %4590 = vmatpush1.bf16.msra.mxu0 %v3202
    %4591 = vmatprep.subr.bf16.mxu0 %v3211
    %4592 = vmatpush1.bf16.msra.mxu0 %v3210
    %4593 = vmatprep.subr.bf16.mxu0 %v3219
    %4594 = vmatpush1.bf16.msra.mxu0 %v3218
    %4595 = vmatprep.subr.bf16.mxu0 %v3227
    %4596 = vmatpush1.bf16.msra.mxu0 %v3226
    %4597 = vmatprep.subr.bf16.mxu0 %v3235
    %4598 = vmatpush1.bf16.msra.mxu0 %v3234
    %4599 = vmatprep.subr.bf16.mxu0 %v3243
    %4600 = vmatpush1.bf16.msra.mxu0 %v3242
    %4601 = vmatprep.subr.bf16.mxu0 %v3251
    %4602 = vmatpush1.bf16.msra.mxu0 %v3250
    %4603 = vmatprep.subr.bf16.mxu0 %v3259
    %4604 = vmatpush1.bf16.msra.mxu0 %v3258
    %4605 = vmatprep.subr.bf16.mxu0 %v3267
    %4606 = vmatpush1.bf16.msra.mxu0 %v3266
    %4607 = vmatprep.subr.bf16.mxu0 %v3275
    %4608 = vmatpush1.bf16.msra.mxu0 %v3274
    %4609 = vmatprep.mubr.bf16.mxu0 %v640
    %4610 = vmatmul.mubr.bf16.gmra.mrb[0].mxu0 %v639
    %v4611 = vpop.f32.mrb[0].mxu0
    %v4612 = vadd.f32 %v4571, %v4611
    %v4613 = vpop.f32.mrb[0].mxu0
    %v4614 = vadd.f32 %v4573, %v4613
    %v4615 = vpop.f32.mrb[0].mxu0
    %v4616 = vpop.f32.mrb[0].mxu0
    %4617 = vdwg.mxu0
    %4618 = vmatprep.subr.bf16.mxu0 %v3283
    %4619 = vmatpush1.bf16.msra.mxu0 %v3282
    %4620 = vmatprep.subr.bf16.mxu0 %v3291
    %4621 = vmatpush1.bf16.msra.mxu0 %v3290
    %4622 = vmatprep.subr.bf16.mxu0 %v3299
    %4623 = vmatpush1.bf16.msra.mxu0 %v3298
    %4624 = vmatprep.subr.bf16.mxu0 %v3307
    %4625 = vmatpush1.bf16.msra.mxu0 %v3306
    %4626 = vmatprep.subr.bf16.mxu0 %v3315
    %4627 = vmatpush1.bf16.msra.mxu0 %v3314
    %4628 = vmatprep.subr.bf16.mxu0 %v3323
    %4629 = vmatpush1.bf16.msra.mxu0 %v3322
    %4630 = vmatprep.subr.bf16.mxu0 %v3331
    %4631 = vmatpush1.bf16.msra.mxu0 %v3330
    %4632 = vmatprep.subr.bf16.mxu0 %v3339
    %4633 = vmatpush1.bf16.msra.mxu0 %v3338
    %4634 = vmatprep.subr.bf16.mxu0 %v3347
    %4635 = vmatpush1.bf16.msra.mxu0 %v3346
    %4636 = vmatprep.subr.bf16.mxu0 %v3355
    %4637 = vmatpush1.bf16.msra.mxu0 %v3354
    %4638 = vmatprep.subr.bf16.mxu0 %v3363
    %4639 = vmatpush1.bf16.msra.mxu0 %v3362
    %4640 = vmatprep.subr.bf16.mxu0 %v3371
    %4641 = vmatpush1.bf16.msra.mxu0 %v3370
    %4642 = vmatprep.subr.bf16.mxu0 %v3379
    %4643 = vmatpush1.bf16.msra.mxu0 %v3378
    %4644 = vmatprep.subr.bf16.mxu0 %v3387
    %4645 = vmatpush1.bf16.msra.mxu0 %v3386
    %4646 = vmatprep.subr.bf16.mxu0 %v3395
    %4647 = vmatpush1.bf16.msra.mxu0 %v3394
    %4648 = vmatprep.subr.bf16.mxu0 %v3403
    %4649 = vmatpush1.bf16.msra.mxu0 %v3402
    %4650 = vmatprep.mubr.bf16.mxu0 %v642
    %4651 = vmatmul.mubr.bf16.gmra.mrb[0].mxu0 %v641
    %v4652 = vpop.f32.mrb[0].mxu0
    %v4653 = vadd.f32 %v4612, %v4652
    %v4654 = vpop.f32.mrb[0].mxu0
    %v4655 = vadd.f32 %v4614, %v4654
    %v4656 = vpop.f32.mrb[0].mxu0
    %v4657 = vpop.f32.mrb[0].mxu0
    %4658 = vdwg.mxu0
    %4659 = vmatprep.subr.bf16.mxu0 %v3411
    %4660 = vmatpush1.bf16.msra.mxu0 %v3410
    %4661 = vmatprep.subr.bf16.mxu0 %v3419
    %4662 = vmatpush1.bf16.msra.mxu0 %v3418
    %4663 = vmatprep.subr.bf16.mxu0 %v3427
    %4664 = vmatpush1.bf16.msra.mxu0 %v3426
    %4665 = vmatprep.subr.bf16.mxu0 %v3435
    %4666 = vmatpush1.bf16.msra.mxu0 %v3434
    %4667 = vmatprep.subr.bf16.mxu0 %v3443
    %4668 = vmatpush1.bf16.msra.mxu0 %v3442
    %4669 = vmatprep.subr.bf16.mxu0 %v3451
    %4670 = vmatpush1.bf16.msra.mxu0 %v3450
    %4671 = vmatprep.subr.bf16.mxu0 %v3459
    %4672 = vmatpush1.bf16.msra.mxu0 %v3458
    %4673 = vmatprep.subr.bf16.mxu0 %v3467
    %4674 = vmatpush1.bf16.msra.mxu0 %v3466
    %4675 = vmatprep.subr.bf16.mxu0 %v3475
    %4676 = vmatpush1.bf16.msra.mxu0 %v3474
    %4677 = vmatprep.subr.bf16.mxu0 %v3483
    %4678 = vmatpush1.bf16.msra.mxu0 %v3482
    %4679 = vmatprep.subr.bf16.mxu0 %v3491
    %4680 = vmatpush1.bf16.msra.mxu0 %v3490
    %4681 = vmatprep.subr.bf16.mxu0 %v3499
    %4682 = vmatpush1.bf16.msra.mxu0 %v3498
    %4683 = vmatprep.subr.bf16.mxu0 %v3507
    %4684 = vmatpush1.bf16.msra.mxu0 %v3506
    %4685 = vmatprep.subr.bf16.mxu0 %v3515
    %4686 = vmatpush1.bf16.msra.mxu0 %v3514
    %4687 = vmatprep.subr.bf16.mxu0 %v3523
    %4688 = vmatpush1.bf16.msra.mxu0 %v3522
    %4689 = vmatprep.subr.bf16.mxu0 %v3531
    %4690 = vmatpush1.bf16.msra.mxu0 %v3530
    %4691 = vmatprep.mubr.bf16.mxu0 %v644
    %4692 = vmatmul.mubr.bf16.gmra.mrb[0].mxu0 %v643
    %v4693 = vpop.f32.mrb[0].mxu0
    %v4694 = vadd.f32 %v4653, %v4693
    %v4695 = vpop.f32.mrb[0].mxu0
    %v4696 = vadd.f32 %v4655, %v4695
    %v4697 = vpop.f32.mrb[0].mxu0
    %v4698 = vpop.f32.mrb[0].mxu0
    %4699 = vdwg.mxu0
    %v4700 = vld [vmem:[#allocation16] sm:$0xff]
    %v4702 = vlaneseq
    %v4703 = vshrl.u32 %v4702, 7
    %v4704 = vsub.s32 0, %v4703
    %v4705 = vrot.slane %v4700, %v4704
    %v4706 = vlaneseq
    %v4707 = vshrl.u32 %v4706, 7
    %v4708 = vsub.s32 1, %v4707
    %v4709 = vrot.slane %v4700, %v4708
    %v4710 = vlaneseq
    %v4711 = vshrl.u32 %v4710, 7
    %v4712 = vsub.s32 2, %v4711
    %v4713 = vrot.slane %v4700, %v4712
    %v4714 = vlaneseq
    %v4715 = vshrl.u32 %v4714, 7
    %v4716 = vsub.s32 3, %v4715
    %v4717 = vrot.slane %v4700, %v4716
    %v4718 = vlaneseq
    %v4719 = vshrl.u32 %v4718, 7
    %v4720 = vsub.s32 4, %v4719
    %v4721 = vrot.slane %v4700, %v4720
    %v4722 = vlaneseq
    %v4723 = vshrl.u32 %v4722, 7
    %v4724 = vsub.s32 5, %v4723
    %v4725 = vrot.slane %v4700, %v4724
    %v4726 = vlaneseq
    %v4727 = vshrl.u32 %v4726, 7
    %v4728 = vsub.s32 6, %v4727
    %v4729 = vrot.slane %v4700, %v4728
    %v4730 = vlaneseq
    %v4731 = vshrl.u32 %v4730, 7
    %v4732 = vsub.s32 7, %v4731
    %v4733 = vrot.slane %v4700, %v4732
    %v4742 = vadd.f32 %v4202, %v4705
    %v4743 = vadd.f32 %v4204, %v4709
    %v4744 = vadd.f32 %v4366, %v4713
    %v4745 = vadd.f32 %v4368, %v4717
    %v4746 = vadd.f32 %v4530, %v4721
    %v4747 = vadd.f32 %v4532, %v4725
    %v4748 = vadd.f32 %v4694, %v4729
    %v4749 = vadd.f32 %v4696, %v4733
    %v4750 = vxor.u32 %v4742, 2147483648
    %v4751 = vxor.u32 %v4743, 2147483648
    %v4752 = vxor.u32 %v4744, 2147483648
    %v4753 = vxor.u32 %v4745, 2147483648
    %v4754 = vxor.u32 %v4746, 2147483648
    %v4755 = vxor.u32 %v4747, 2147483648
    %v4756 = vxor.u32 %v4748, 2147483648
    %v4757 = vxor.u32 %v4749, 2147483648
    %v4758 = vmul.f32 %v4750, 1.442695
    %v4759 = vpow.pop %v4758
    %v4760 = vmul.f32 %v4751, 1.442695
    %v4761 = vpow.pop %v4760
    %v4762 = vmul.f32 %v4752, 1.442695
    %v4763 = vpow.pop %v4762
    %v4764 = vmul.f32 %v4753, 1.442695
    %v4765 = vpow.pop %v4764
    %v4766 = vmul.f32 %v4754, 1.442695
    %v4767 = vpow.pop %v4766
    %v4768 = vmul.f32 %v4755, 1.442695
    %v4769 = vpow.pop %v4768
    %v4770 = vmul.f32 %v4756, 1.442695
    %v4771 = vpow.pop %v4770
    %v4772 = vmul.f32 %v4757, 1.442695
    %v4773 = vpow.pop %v4772
    %v4774 = vadd.f32 %v4759, 1.0
    %v4775 = vadd.f32 %v4761, 1.0
    %v4776 = vadd.f32 %v4763, 1.0
    %v4777 = vadd.f32 %v4765, 1.0
    %v4778 = vadd.f32 %v4767, 1.0
    %v4779 = vadd.f32 %v4769, 1.0
    %v4780 = vadd.f32 %v4771, 1.0
    %v4781 = vadd.f32 %v4773, 1.0
    %v4782 = vrcp.pop %v4774
    %v4783 = vmul.f32 1.0, %v4782
    %v4784 = vrcp.pop %v4775
    %v4785 = vmul.f32 1.0, %v4784
    %v4786 = vrcp.pop %v4776
    %v4787 = vmul.f32 1.0, %v4786
    %v4788 = vrcp.pop %v4777
    %v4789 = vmul.f32 1.0, %v4788
    %v4790 = vrcp.pop %v4778
    %v4791 = vmul.f32 1.0, %v4790
    %v4792 = vrcp.pop %v4779
    %v4793 = vmul.f32 1.0, %v4792
    %v4794 = vrcp.pop %v4780
    %v4795 = vmul.f32 1.0, %v4794
    %v4796 = vrcp.pop %v4781
    %v4797 = vmul.f32 1.0, %v4796
    %v4798 = vpack.c.bf16 %v4783, %v4783
    %v4799 = vpack.c.bf16 %v4785, %v4785
    %v4800 = vpack.c.bf16 %v4787, %v4787
    %v4801 = vpack.c.bf16 %v4789, %v4789
    %v4802 = vpack.c.bf16 %v4791, %v4791
    %v4803 = vpack.c.bf16 %v4793, %v4793
    %v4804 = vpack.c.bf16 %v4795, %v4795
    %v4805 = vpack.c.bf16 %v4797, %v4797
    %v4806 = vld [vmem:[#allocation17] sm:$0xff]
    %v4807 = vld [vmem:[#allocation17 + $0x8] sm:$0xff]
    %v4808 = vld [vmem:[#allocation17 + $0x10] sm:$0xff]
    %v4809 = vld [vmem:[#allocation17 + $0x18] sm:$0xff]
    %v4810 = vld [vmem:[#allocation17 + $0x20] sm:$0xff]
    %v4811 = vld [vmem:[#allocation17 + $0x28] sm:$0xff]
    %v4812 = vld [vmem:[#allocation17 + $0x30] sm:$0xff]
    %v4813 = vld [vmem:[#allocation17 + $0x38] sm:$0xff]
    %v4814 = vld [vmem:[#allocation17 + $0x40] sm:$0xff]
    %v4815 = vld [vmem:[#allocation17 + $0x48] sm:$0xff]
    %v4816 = vld [vmem:[#allocation17 + $0x50] sm:$0xff]
    %v4817 = vld [vmem:[#allocation17 + $0x58] sm:$0xff]
    %v4818 = vld [vmem:[#allocation17 + $0x60] sm:$0xff]
    %v4819 = vld [vmem:[#allocation17 + $0x68] sm:$0xff]
    %v4820 = vld [vmem:[#allocation17 + $0x70] sm:$0xff]
    %v4821 = vld [vmem:[#allocation17 + $0x78] sm:$0xff]
    %v4822 = vld [vmem:[#allocation17 + $0x80] sm:$0xff]
    %v4823 = vld [vmem:[#allocation17 + $0x88] sm:$0xff]
    %v4824 = vld [vmem:[#allocation17 + $0x90] sm:$0xff]
    %v4825 = vld [vmem:[#allocation17 + $0x98] sm:$0xff]
    %v4826 = vld [vmem:[#allocation17 + $0xa0] sm:$0xff]
    %v4827 = vld [vmem:[#allocation17 + $0xa8] sm:$0xff]
    %v4828 = vld [vmem:[#allocation17 + $0xb0] sm:$0xff]
    %v4829 = vld [vmem:[#allocation17 + $0xb8] sm:$0xff]
    %v4830 = vld [vmem:[#allocation17 + $0xc0] sm:$0xff]
    %v4831 = vld [vmem:[#allocation17 + $0xc8] sm:$0xff]
    %v4832 = vld [vmem:[#allocation17 + $0xd0] sm:$0xff]
    %v4833 = vld [vmem:[#allocation17 + $0xd8] sm:$0xff]
    %v4834 = vld [vmem:[#allocation17 + $0xe0] sm:$0xff]
    %v4835 = vld [vmem:[#allocation17 + $0xe8] sm:$0xff]
    %v4836 = vld [vmem:[#allocation17 + $0xf0] sm:$0xff]
    %v4837 = vld [vmem:[#allocation17 + $0xf8] sm:$0xff]
    %v4838 = vld [vmem:[#allocation17 + $0x100] sm:$0xff]
    %v4839 = vld [vmem:[#allocation17 + $0x108] sm:$0xff]
    %v4840 = vld [vmem:[#allocation17 + $0x110] sm:$0xff]
    %v4841 = vld [vmem:[#allocation17 + $0x118] sm:$0xff]
    %v4842 = vld [vmem:[#allocation17 + $0x120] sm:$0xff]
    %v4843 = vld [vmem:[#allocation17 + $0x128] sm:$0xff]
    %v4844 = vld [vmem:[#allocation17 + $0x130] sm:$0xff]
    %v4845 = vld [vmem:[#allocation17 + $0x138] sm:$0xff]
    %v4846 = vld [vmem:[#allocation17 + $0x140] sm:$0xff]
    %v4847 = vld [vmem:[#allocation17 + $0x148] sm:$0xff]
    %v4848 = vld [vmem:[#allocation17 + $0x150] sm:$0xff]
    %v4849 = vld [vmem:[#allocation17 + $0x158] sm:$0xff]
    %v4850 = vld [vmem:[#allocation17 + $0x160] sm:$0xff]
    %v4851 = vld [vmem:[#allocation17 + $0x168] sm:$0xff]
    %v4852 = vld [vmem:[#allocation17 + $0x170] sm:$0xff]
    %v4853 = vld [vmem:[#allocation17 + $0x178] sm:$0xff]
    %v4854 = vld [vmem:[#allocation17 + $0x180] sm:$0xff]
    %v4855 = vld [vmem:[#allocation17 + $0x188] sm:$0xff]
    %v4856 = vld [vmem:[#allocation17 + $0x190] sm:$0xff]
    %v4857 = vld [vmem:[#allocation17 + $0x198] sm:$0xff]
    %v4858 = vld [vmem:[#allocation17 + $0x1a0] sm:$0xff]
    %v4859 = vld [vmem:[#allocation17 + $0x1a8] sm:$0xff]
    %v4860 = vld [vmem:[#allocation17 + $0x1b0] sm:$0xff]
    %v4861 = vld [vmem:[#allocation17 + $0x1b8] sm:$0xff]
    %v4862 = vld [vmem:[#allocation17 + $0x1c0] sm:$0xff]
    %v4863 = vld [vmem:[#allocation17 + $0x1c8] sm:$0xff]
    %v4864 = vld [vmem:[#allocation17 + $0x1d0] sm:$0xff]
    %v4865 = vld [vmem:[#allocation17 + $0x1d8] sm:$0xff]
    %v4866 = vld [vmem:[#allocation17 + $0x1e0] sm:$0xff]
    %v4867 = vld [vmem:[#allocation17 + $0x1e8] sm:$0xff]
    %v4868 = vld [vmem:[#allocation17 + $0x1f0] sm:$0xff]
    %v4869 = vld [vmem:[#allocation17 + $0x1f8] sm:$0xff]
    %v4870 = vld [vmem:[#allocation17 + $0x200] sm:$0xff]
    %v4871 = vld [vmem:[#allocation17 + $0x208] sm:$0xff]
    %v4872 = vld [vmem:[#allocation17 + $0x210] sm:$0xff]
    %v4873 = vld [vmem:[#allocation17 + $0x218] sm:$0xff]
    %v4874 = vld [vmem:[#allocation17 + $0x220] sm:$0xff]
    %v4875 = vld [vmem:[#allocation17 + $0x228] sm:$0xff]
    %v4876 = vld [vmem:[#allocation17 + $0x230] sm:$0xff]
    %v4877 = vld [vmem:[#allocation17 + $0x238] sm:$0xff]
    %v4878 = vld [vmem:[#allocation17 + $0x240] sm:$0xff]
    %v4879 = vld [vmem:[#allocation17 + $0x248] sm:$0xff]
    %v4880 = vld [vmem:[#allocation17 + $0x250] sm:$0xff]
    %v4881 = vld [vmem:[#allocation17 + $0x258] sm:$0xff]
    %v4882 = vld [vmem:[#allocation17 + $0x260] sm:$0xff]
    %v4883 = vld [vmem:[#allocation17 + $0x268] sm:$0xff]
    %v4884 = vld [vmem:[#allocation17 + $0x270] sm:$0xff]
    %v4885 = vld [vmem:[#allocation17 + $0x278] sm:$0xff]
    %v4886 = vld [vmem:[#allocation17 + $0x280] sm:$0xff]
    %v4887 = vld [vmem:[#allocation17 + $0x288] sm:$0xff]
    %v4888 = vld [vmem:[#allocation17 + $0x290] sm:$0xff]
    %v4889 = vld [vmem:[#allocation17 + $0x298] sm:$0xff]
    %v4890 = vld [vmem:[#allocation17 + $0x2a0] sm:$0xff]
    %v4891 = vld [vmem:[#allocation17 + $0x2a8] sm:$0xff]
    %v4892 = vld [vmem:[#allocation17 + $0x2b0] sm:$0xff]
    %v4893 = vld [vmem:[#allocation17 + $0x2b8] sm:$0xff]
    %v4894 = vld [vmem:[#allocation17 + $0x2c0] sm:$0xff]
    %v4895 = vld [vmem:[#allocation17 + $0x2c8] sm:$0xff]
    %v4896 = vld [vmem:[#allocation17 + $0x2d0] sm:$0xff]
    %v4897 = vld [vmem:[#allocation17 + $0x2d8] sm:$0xff]
    %v4898 = vld [vmem:[#allocation17 + $0x2e0] sm:$0xff]
    %v4899 = vld [vmem:[#allocation17 + $0x2e8] sm:$0xff]
    %v4900 = vld [vmem:[#allocation17 + $0x2f0] sm:$0xff]
    %v4901 = vld [vmem:[#allocation17 + $0x2f8] sm:$0xff]
    %v4902 = vld [vmem:[#allocation17 + $0x300] sm:$0xff]
    %v4903 = vld [vmem:[#allocation17 + $0x308] sm:$0xff]
    %v4904 = vld [vmem:[#allocation17 + $0x310] sm:$0xff]
    %v4905 = vld [vmem:[#allocation17 + $0x318] sm:$0xff]
    %v4906 = vld [vmem:[#allocation17 + $0x320] sm:$0xff]
    %v4907 = vld [vmem:[#allocation17 + $0x328] sm:$0xff]
    %v4908 = vld [vmem:[#allocation17 + $0x330] sm:$0xff]
    %v4909 = vld [vmem:[#allocation17 + $0x338] sm:$0xff]
    %v4910 = vld [vmem:[#allocation17 + $0x340] sm:$0xff]
    %v4911 = vld [vmem:[#allocation17 + $0x348] sm:$0xff]
    %v4912 = vld [vmem:[#allocation17 + $0x350] sm:$0xff]
    %v4913 = vld [vmem:[#allocation17 + $0x358] sm:$0xff]
    %v4914 = vld [vmem:[#allocation17 + $0x360] sm:$0xff]
    %v4915 = vld [vmem:[#allocation17 + $0x368] sm:$0xff]
    %v4916 = vld [vmem:[#allocation17 + $0x370] sm:$0xff]
    %v4917 = vld [vmem:[#allocation17 + $0x378] sm:$0xff]
    %v4918 = vld [vmem:[#allocation17 + $0x380] sm:$0xff]
    %v4919 = vld [vmem:[#allocation17 + $0x388] sm:$0xff]
    %v4920 = vld [vmem:[#allocation17 + $0x390] sm:$0xff]
    %v4921 = vld [vmem:[#allocation17 + $0x398] sm:$0xff]
    %v4922 = vld [vmem:[#allocation17 + $0x3a0] sm:$0xff]
    %v4923 = vld [vmem:[#allocation17 + $0x3a8] sm:$0xff]
    %v4924 = vld [vmem:[#allocation17 + $0x3b0] sm:$0xff]
    %v4925 = vld [vmem:[#allocation17 + $0x3b8] sm:$0xff]
    %v4926 = vld [vmem:[#allocation17 + $0x3c0] sm:$0xff]
    %v4927 = vld [vmem:[#allocation17 + $0x3c8] sm:$0xff]
    %v4928 = vld [vmem:[#allocation17 + $0x3d0] sm:$0xff]
    %v4929 = vld [vmem:[#allocation17 + $0x3d8] sm:$0xff]
    %v4930 = vld [vmem:[#allocation17 + $0x3e0] sm:$0xff]
    %v4931 = vld [vmem:[#allocation17 + $0x3e8] sm:$0xff]
    %v4932 = vld [vmem:[#allocation17 + $0x3f0] sm:$0xff]
    %v4933 = vld [vmem:[#allocation17 + $0x3f8] sm:$0xff]
    %v4934 = vld [vmem:[#allocation17 + $0x400] sm:$0xff]
    %v4935 = vld [vmem:[#allocation17 + $0x408] sm:$0xff]
    %v4936 = vld [vmem:[#allocation17 + $0x410] sm:$0xff]
    %v4937 = vld [vmem:[#allocation17 + $0x418] sm:$0xff]
    %v4938 = vld [vmem:[#allocation17 + $0x420] sm:$0xff]
    %v4939 = vld [vmem:[#allocation17 + $0x428] sm:$0xff]
    %v4940 = vld [vmem:[#allocation17 + $0x430] sm:$0xff]
    %v4941 = vld [vmem:[#allocation17 + $0x438] sm:$0xff]
    %v4942 = vld [vmem:[#allocation17 + $0x440] sm:$0xff]
    %v4943 = vld [vmem:[#allocation17 + $0x448] sm:$0xff]
    %v4944 = vld [vmem:[#allocation17 + $0x450] sm:$0xff]
    %v4945 = vld [vmem:[#allocation17 + $0x458] sm:$0xff]
    %v4946 = vld [vmem:[#allocation17 + $0x460] sm:$0xff]
    %v4947 = vld [vmem:[#allocation17 + $0x468] sm:$0xff]
    %v4948 = vld [vmem:[#allocation17 + $0x470] sm:$0xff]
    %v4949 = vld [vmem:[#allocation17 + $0x478] sm:$0xff]
    %v4950 = vld [vmem:[#allocation17 + $0x480] sm:$0xff]
    %v4951 = vld [vmem:[#allocation17 + $0x488] sm:$0xff]
    %v4952 = vld [vmem:[#allocation17 + $0x490] sm:$0xff]
    %v4953 = vld [vmem:[#allocation17 + $0x498] sm:$0xff]
    %v4954 = vld [vmem:[#allocation17 + $0x4a0] sm:$0xff]
    %v4955 = vld [vmem:[#allocation17 + $0x4a8] sm:$0xff]
    %v4956 = vld [vmem:[#allocation17 + $0x4b0] sm:$0xff]
    %v4957 = vld [vmem:[#allocation17 + $0x4b8] sm:$0xff]
    %v4958 = vld [vmem:[#allocation17 + $0x4c0] sm:$0xff]
    %v4959 = vld [vmem:[#allocation17 + $0x4c8] sm:$0xff]
    %v4960 = vld [vmem:[#allocation17 + $0x4d0] sm:$0xff]
    %v4961 = vld [vmem:[#allocation17 + $0x4d8] sm:$0xff]
    %v4962 = vld [vmem:[#allocation17 + $0x4e0] sm:$0xff]
    %v4963 = vld [vmem:[#allocation17 + $0x4e8] sm:$0xff]
    %v4964 = vld [vmem:[#allocation17 + $0x4f0] sm:$0xff]
    %v4965 = vld [vmem:[#allocation17 + $0x4f8] sm:$0xff]
    %v4966 = vld [vmem:[#allocation17 + $0x500] sm:$0xff]
    %v4967 = vld [vmem:[#allocation17 + $0x508] sm:$0xff]
    %v4968 = vld [vmem:[#allocation17 + $0x510] sm:$0xff]
    %v4969 = vld [vmem:[#allocation17 + $0x518] sm:$0xff]
    %v4970 = vld [vmem:[#allocation17 + $0x520] sm:$0xff]
    %v4971 = vld [vmem:[#allocation17 + $0x528] sm:$0xff]
    %v4972 = vld [vmem:[#allocation17 + $0x530] sm:$0xff]
    %v4973 = vld [vmem:[#allocation17 + $0x538] sm:$0xff]
    %v4974 = vld [vmem:[#allocation17 + $0x540] sm:$0xff]
    %v4975 = vld [vmem:[#allocation17 + $0x548] sm:$0xff]
    %v4976 = vld [vmem:[#allocation17 + $0x550] sm:$0xff]
    %v4977 = vld [vmem:[#allocation17 + $0x558] sm:$0xff]
    %v4978 = vld [vmem:[#allocation17 + $0x560] sm:$0xff]
    %v4979 = vld [vmem:[#allocation17 + $0x568] sm:$0xff]
    %v4980 = vld [vmem:[#allocation17 + $0x570] sm:$0xff]
    %v4981 = vld [vmem:[#allocation17 + $0x578] sm:$0xff]
    %v4982 = vld [vmem:[#allocation17 + $0x580] sm:$0xff]
    %v4983 = vld [vmem:[#allocation17 + $0x588] sm:$0xff]
    %v4984 = vld [vmem:[#allocation17 + $0x590] sm:$0xff]
    %v4985 = vld [vmem:[#allocation17 + $0x598] sm:$0xff]
    %v4986 = vld [vmem:[#allocation17 + $0x5a0] sm:$0xff]
    %v4987 = vld [vmem:[#allocation17 + $0x5a8] sm:$0xff]
    %v4988 = vld [vmem:[#allocation17 + $0x5b0] sm:$0xff]
    %v4989 = vld [vmem:[#allocation17 + $0x5b8] sm:$0xff]
    %v4990 = vld [vmem:[#allocation17 + $0x5c0] sm:$0xff]
    %v4991 = vld [vmem:[#allocation17 + $0x5c8] sm:$0xff]
    %v4992 = vld [vmem:[#allocation17 + $0x5d0] sm:$0xff]
    %v4993 = vld [vmem:[#allocation17 + $0x5d8] sm:$0xff]
    %v4994 = vld [vmem:[#allocation17 + $0x5e0] sm:$0xff]
    %v4995 = vld [vmem:[#allocation17 + $0x5e8] sm:$0xff]
    %v4996 = vld [vmem:[#allocation17 + $0x5f0] sm:$0xff]
    %v4997 = vld [vmem:[#allocation17 + $0x5f8] sm:$0xff]
    %v4998 = vld [vmem:[#allocation17 + $0x600] sm:$0xff]
    %v4999 = vld [vmem:[#allocation17 + $0x608] sm:$0xff]
    %v5000 = vld [vmem:[#allocation17 + $0x610] sm:$0xff]
    %v5001 = vld [vmem:[#allocation17 + $0x618] sm:$0xff]
    %v5002 = vld [vmem:[#allocation17 + $0x620] sm:$0xff]
    %v5003 = vld [vmem:[#allocation17 + $0x628] sm:$0xff]
    %v5004 = vld [vmem:[#allocation17 + $0x630] sm:$0xff]
    %v5005 = vld [vmem:[#allocation17 + $0x638] sm:$0xff]
    %v5006 = vld [vmem:[#allocation17 + $0x640] sm:$0xff]
    %v5007 = vld [vmem:[#allocation17 + $0x648] sm:$0xff]
    %v5008 = vld [vmem:[#allocation17 + $0x650] sm:$0xff]
    %v5009 = vld [vmem:[#allocation17 + $0x658] sm:$0xff]
    %v5010 = vld [vmem:[#allocation17 + $0x660] sm:$0xff]
    %v5011 = vld [vmem:[#allocation17 + $0x668] sm:$0xff]
    %v5012 = vld [vmem:[#allocation17 + $0x670] sm:$0xff]
    %v5013 = vld [vmem:[#allocation17 + $0x678] sm:$0xff]
    %v5014 = vld [vmem:[#allocation17 + $0x680] sm:$0xff]
    %v5015 = vld [vmem:[#allocation17 + $0x688] sm:$0xff]
    %v5016 = vld [vmem:[#allocation17 + $0x690] sm:$0xff]
    %v5017 = vld [vmem:[#allocation17 + $0x698] sm:$0xff]
    %v5018 = vld [vmem:[#allocation17 + $0x6a0] sm:$0xff]
    %v5019 = vld [vmem:[#allocation17 + $0x6a8] sm:$0xff]
    %v5020 = vld [vmem:[#allocation17 + $0x6b0] sm:$0xff]
    %v5021 = vld [vmem:[#allocation17 + $0x6b8] sm:$0xff]
    %v5022 = vld [vmem:[#allocation17 + $0x6c0] sm:$0xff]
    %v5023 = vld [vmem:[#allocation17 + $0x6c8] sm:$0xff]
    %v5024 = vld [vmem:[#allocation17 + $0x6d0] sm:$0xff]
    %v5025 = vld [vmem:[#allocation17 + $0x6d8] sm:$0xff]
    %v5026 = vld [vmem:[#allocation17 + $0x6e0] sm:$0xff]
    %v5027 = vld [vmem:[#allocation17 + $0x6e8] sm:$0xff]
    %v5028 = vld [vmem:[#allocation17 + $0x6f0] sm:$0xff]
    %v5029 = vld [vmem:[#allocation17 + $0x6f8] sm:$0xff]
    %v5030 = vld [vmem:[#allocation17 + $0x700] sm:$0xff]
    %v5031 = vld [vmem:[#allocation17 + $0x708] sm:$0xff]
    %v5032 = vld [vmem:[#allocation17 + $0x710] sm:$0xff]
    %v5033 = vld [vmem:[#allocation17 + $0x718] sm:$0xff]
    %v5034 = vld [vmem:[#allocation17 + $0x720] sm:$0xff]
    %v5035 = vld [vmem:[#allocation17 + $0x728] sm:$0xff]
    %v5036 = vld [vmem:[#allocation17 + $0x730] sm:$0xff]
    %v5037 = vld [vmem:[#allocation17 + $0x738] sm:$0xff]
    %v5038 = vld [vmem:[#allocation17 + $0x740] sm:$0xff]
    %v5039 = vld [vmem:[#allocation17 + $0x748] sm:$0xff]
    %v5040 = vld [vmem:[#allocation17 + $0x750] sm:$0xff]
    %v5041 = vld [vmem:[#allocation17 + $0x758] sm:$0xff]
    %v5042 = vld [vmem:[#allocation17 + $0x760] sm:$0xff]
    %v5043 = vld [vmem:[#allocation17 + $0x768] sm:$0xff]
    %v5044 = vld [vmem:[#allocation17 + $0x770] sm:$0xff]
    %v5045 = vld [vmem:[#allocation17 + $0x778] sm:$0xff]
    %v5046 = vld [vmem:[#allocation17 + $0x780] sm:$0xff]
    %v5047 = vld [vmem:[#allocation17 + $0x788] sm:$0xff]
    %v5048 = vld [vmem:[#allocation17 + $0x790] sm:$0xff]
    %v5049 = vld [vmem:[#allocation17 + $0x798] sm:$0xff]
    %v5050 = vld [vmem:[#allocation17 + $0x7a0] sm:$0xff]
    %v5051 = vld [vmem:[#allocation17 + $0x7a8] sm:$0xff]
    %v5052 = vld [vmem:[#allocation17 + $0x7b0] sm:$0xff]
    %v5053 = vld [vmem:[#allocation17 + $0x7b8] sm:$0xff]
    %v5054 = vld [vmem:[#allocation17 + $0x7c0] sm:$0xff]
    %v5055 = vld [vmem:[#allocation17 + $0x7c8] sm:$0xff]
    %v5056 = vld [vmem:[#allocation17 + $0x7d0] sm:$0xff]
    %v5057 = vld [vmem:[#allocation17 + $0x7d8] sm:$0xff]
    %v5058 = vld [vmem:[#allocation17 + $0x7e0] sm:$0xff]
    %v5059 = vld [vmem:[#allocation17 + $0x7e8] sm:$0xff]
    %v5060 = vld [vmem:[#allocation17 + $0x7f0] sm:$0xff]
    %v5061 = vld [vmem:[#allocation17 + $0x7f8] sm:$0xff]
    %v5062 = vld [vmem:[#allocation17 + $0x800] sm:$0xff]
    %v5063 = vld [vmem:[#allocation17 + $0x808] sm:$0xff]
    %v5064 = vld [vmem:[#allocation17 + $0x810] sm:$0xff]
    %v5065 = vld [vmem:[#allocation17 + $0x818] sm:$0xff]
    %v5066 = vld [vmem:[#allocation17 + $0x820] sm:$0xff]
    %v5067 = vld [vmem:[#allocation17 + $0x828] sm:$0xff]
    %v5068 = vld [vmem:[#allocation17 + $0x830] sm:$0xff]
    %v5069 = vld [vmem:[#allocation17 + $0x838] sm:$0xff]
    %v5070 = vld [vmem:[#allocation17 + $0x840] sm:$0xff]
    %v5071 = vld [vmem:[#allocation17 + $0x848] sm:$0xff]
    %v5072 = vld [vmem:[#allocation17 + $0x850] sm:$0xff]
    %v5073 = vld [vmem:[#allocation17 + $0x858] sm:$0xff]
    %v5074 = vld [vmem:[#allocation17 + $0x860] sm:$0xff]
    %v5075 = vld [vmem:[#allocation17 + $0x868] sm:$0xff]
    %v5076 = vld [vmem:[#allocation17 + $0x870] sm:$0xff]
    %v5077 = vld [vmem:[#allocation17 + $0x878] sm:$0xff]
    %v5078 = vld [vmem:[#allocation17 + $0x880] sm:$0xff]
    %v5079 = vld [vmem:[#allocation17 + $0x888] sm:$0xff]
    %v5080 = vld [vmem:[#allocation17 + $0x890] sm:$0xff]
    %v5081 = vld [vmem:[#allocation17 + $0x898] sm:$0xff]
    %v5082 = vld [vmem:[#allocation17 + $0x8a0] sm:$0xff]
    %v5083 = vld [vmem:[#allocation17 + $0x8a8] sm:$0xff]
    %v5084 = vld [vmem:[#allocation17 + $0x8b0] sm:$0xff]
    %v5085 = vld [vmem:[#allocation17 + $0x8b8] sm:$0xff]
    %v5086 = vld [vmem:[#allocation17 + $0x8c0] sm:$0xff]
    %v5087 = vld [vmem:[#allocation17 + $0x8c8] sm:$0xff]
    %v5088 = vld [vmem:[#allocation17 + $0x8d0] sm:$0xff]
    %v5089 = vld [vmem:[#allocation17 + $0x8d8] sm:$0xff]
    %v5090 = vld [vmem:[#allocation17 + $0x8e0] sm:$0xff]
    %v5091 = vld [vmem:[#allocation17 + $0x8e8] sm:$0xff]
    %v5092 = vld [vmem:[#allocation17 + $0x8f0] sm:$0xff]
    %v5093 = vld [vmem:[#allocation17 + $0x8f8] sm:$0xff]
    %v5094 = vld [vmem:[#allocation17 + $0x900] sm:$0xff]
    %v5095 = vld [vmem:[#allocation17 + $0x908] sm:$0xff]
    %v5096 = vld [vmem:[#allocation17 + $0x910] sm:$0xff]
    %v5097 = vld [vmem:[#allocation17 + $0x918] sm:$0xff]
    %v5098 = vld [vmem:[#allocation17 + $0x920] sm:$0xff]
    %v5099 = vld [vmem:[#allocation17 + $0x928] sm:$0xff]
    %v5100 = vld [vmem:[#allocation17 + $0x930] sm:$0xff]
    %v5101 = vld [vmem:[#allocation17 + $0x938] sm:$0xff]
    %v5102 = vld [vmem:[#allocation17 + $0x940] sm:$0xff]
    %v5103 = vld [vmem:[#allocation17 + $0x948] sm:$0xff]
    %v5104 = vld [vmem:[#allocation17 + $0x950] sm:$0xff]
    %v5105 = vld [vmem:[#allocation17 + $0x958] sm:$0xff]
    %v5106 = vld [vmem:[#allocation17 + $0x960] sm:$0xff]
    %v5107 = vld [vmem:[#allocation17 + $0x968] sm:$0xff]
    %v5108 = vld [vmem:[#allocation17 + $0x970] sm:$0xff]
    %v5109 = vld [vmem:[#allocation17 + $0x978] sm:$0xff]
    %v5110 = vld [vmem:[#allocation17 + $0x980] sm:$0xff]
    %v5111 = vld [vmem:[#allocation17 + $0x988] sm:$0xff]
    %v5112 = vld [vmem:[#allocation17 + $0x990] sm:$0xff]
    %v5113 = vld [vmem:[#allocation17 + $0x998] sm:$0xff]
    %v5114 = vld [vmem:[#allocation17 + $0x9a0] sm:$0xff]
    %v5115 = vld [vmem:[#allocation17 + $0x9a8] sm:$0xff]
    %v5116 = vld [vmem:[#allocation17 + $0x9b0] sm:$0xff]
    %v5117 = vld [vmem:[#allocation17 + $0x9b8] sm:$0xff]
    %v5118 = vld [vmem:[#allocation17 + $0x9c0] sm:$0xff]
    %v5119 = vld [vmem:[#allocation17 + $0x9c8] sm:$0xff]
    %v5120 = vld [vmem:[#allocation17 + $0x9d0] sm:$0xff]
    %v5121 = vld [vmem:[#allocation17 + $0x9d8] sm:$0xff]
    %v5122 = vld [vmem:[#allocation17 + $0x9e0] sm:$0xff]
    %v5123 = vld [vmem:[#allocation17 + $0x9e8] sm:$0xff]
    %v5124 = vld [vmem:[#allocation17 + $0x9f0] sm:$0xff]
    %v5125 = vld [vmem:[#allocation17 + $0x9f8] sm:$0xff]
    %v5126 = vld [vmem:[#allocation17 + $0xa00] sm:$0xff]
    %v5127 = vld [vmem:[#allocation17 + $0xa08] sm:$0xff]
    %v5128 = vld [vmem:[#allocation17 + $0xa10] sm:$0xff]
    %v5129 = vld [vmem:[#allocation17 + $0xa18] sm:$0xff]
    %v5130 = vld [vmem:[#allocation17 + $0xa20] sm:$0xff]
    %v5131 = vld [vmem:[#allocation17 + $0xa28] sm:$0xff]
    %v5132 = vld [vmem:[#allocation17 + $0xa30] sm:$0xff]
    %v5133 = vld [vmem:[#allocation17 + $0xa38] sm:$0xff]
    %v5134 = vld [vmem:[#allocation17 + $0xa40] sm:$0xff]
    %v5135 = vld [vmem:[#allocation17 + $0xa48] sm:$0xff]
    %v5136 = vld [vmem:[#allocation17 + $0xa50] sm:$0xff]
    %v5137 = vld [vmem:[#allocation17 + $0xa58] sm:$0xff]
    %v5138 = vld [vmem:[#allocation17 + $0xa60] sm:$0xff]
    %v5139 = vld [vmem:[#allocation17 + $0xa68] sm:$0xff]
    %v5140 = vld [vmem:[#allocation17 + $0xa70] sm:$0xff]
    %v5141 = vld [vmem:[#allocation17 + $0xa78] sm:$0xff]
    %v5142 = vld [vmem:[#allocation17 + $0xa80] sm:$0xff]
    %v5143 = vld [vmem:[#allocation17 + $0xa88] sm:$0xff]
    %v5144 = vld [vmem:[#allocation17 + $0xa90] sm:$0xff]
    %v5145 = vld [vmem:[#allocation17 + $0xa98] sm:$0xff]
    %v5146 = vld [vmem:[#allocation17 + $0xaa0] sm:$0xff]
    %v5147 = vld [vmem:[#allocation17 + $0xaa8] sm:$0xff]
    %v5148 = vld [vmem:[#allocation17 + $0xab0] sm:$0xff]
    %v5149 = vld [vmem:[#allocation17 + $0xab8] sm:$0xff]
    %v5150 = vld [vmem:[#allocation17 + $0xac0] sm:$0xff]
    %v5151 = vld [vmem:[#allocation17 + $0xac8] sm:$0xff]
    %v5152 = vld [vmem:[#allocation17 + $0xad0] sm:$0xff]
    %v5153 = vld [vmem:[#allocation17 + $0xad8] sm:$0xff]
    %v5154 = vld [vmem:[#allocation17 + $0xae0] sm:$0xff]
    %v5155 = vld [vmem:[#allocation17 + $0xae8] sm:$0xff]
    %v5156 = vld [vmem:[#allocation17 + $0xaf0] sm:$0xff]
    %v5157 = vld [vmem:[#allocation17 + $0xaf8] sm:$0xff]
    %v5158 = vld [vmem:[#allocation17 + $0xb00] sm:$0xff]
    %v5159 = vld [vmem:[#allocation17 + $0xb08] sm:$0xff]
    %v5160 = vld [vmem:[#allocation17 + $0xb10] sm:$0xff]
    %v5161 = vld [vmem:[#allocation17 + $0xb18] sm:$0xff]
    %v5162 = vld [vmem:[#allocation17 + $0xb20] sm:$0xff]
    %v5163 = vld [vmem:[#allocation17 + $0xb28] sm:$0xff]
    %v5164 = vld [vmem:[#allocation17 + $0xb30] sm:$0xff]
    %v5165 = vld [vmem:[#allocation17 + $0xb38] sm:$0xff]
    %v5166 = vld [vmem:[#allocation17 + $0xb40] sm:$0xff]
    %v5167 = vld [vmem:[#allocation17 + $0xb48] sm:$0xff]
    %v5168 = vld [vmem:[#allocation17 + $0xb50] sm:$0xff]
    %v5169 = vld [vmem:[#allocation17 + $0xb58] sm:$0xff]
    %v5170 = vld [vmem:[#allocation17 + $0xb60] sm:$0xff]
    %v5171 = vld [vmem:[#allocation17 + $0xb68] sm:$0xff]
    %v5172 = vld [vmem:[#allocation17 + $0xb70] sm:$0xff]
    %v5173 = vld [vmem:[#allocation17 + $0xb78] sm:$0xff]
    %v5174 = vld [vmem:[#allocation17 + $0xb80] sm:$0xff]
    %v5175 = vld [vmem:[#allocation17 + $0xb88] sm:$0xff]
    %v5176 = vld [vmem:[#allocation17 + $0xb90] sm:$0xff]
    %v5177 = vld [vmem:[#allocation17 + $0xb98] sm:$0xff]
    %v5178 = vld [vmem:[#allocation17 + $0xba0] sm:$0xff]
    %v5179 = vld [vmem:[#allocation17 + $0xba8] sm:$0xff]
    %v5180 = vld [vmem:[#allocation17 + $0xbb0] sm:$0xff]
    %v5181 = vld [vmem:[#allocation17 + $0xbb8] sm:$0xff]
    %v5182 = vld [vmem:[#allocation17 + $0xbc0] sm:$0xff]
    %v5183 = vld [vmem:[#allocation17 + $0xbc8] sm:$0xff]
    %v5184 = vld [vmem:[#allocation17 + $0xbd0] sm:$0xff]
    %v5185 = vld [vmem:[#allocation17 + $0xbd8] sm:$0xff]
    %v5186 = vld [vmem:[#allocation17 + $0xbe0] sm:$0xff]
    %v5187 = vld [vmem:[#allocation17 + $0xbe8] sm:$0xff]
    %v5188 = vld [vmem:[#allocation17 + $0xbf0] sm:$0xff]
    %v5189 = vld [vmem:[#allocation17 + $0xbf8] sm:$0xff]
    %v5190 = vld [vmem:[#allocation17 + $0xc00] sm:$0xff]
    %v5191 = vld [vmem:[#allocation17 + $0xc08] sm:$0xff]
    %v5192 = vld [vmem:[#allocation17 + $0xc10] sm:$0xff]
    %v5193 = vld [vmem:[#allocation17 + $0xc18] sm:$0xff]
    %v5194 = vld [vmem:[#allocation17 + $0xc20] sm:$0xff]
    %v5195 = vld [vmem:[#allocation17 + $0xc28] sm:$0xff]
    %v5196 = vld [vmem:[#allocation17 + $0xc30] sm:$0xff]
    %v5197 = vld [vmem:[#allocation17 + $0xc38] sm:$0xff]
    %v5198 = vld [vmem:[#allocation17 + $0xc40] sm:$0xff]
    %v5199 = vld [vmem:[#allocation17 + $0xc48] sm:$0xff]
    %v5200 = vld [vmem:[#allocation17 + $0xc50] sm:$0xff]
    %v5201 = vld [vmem:[#allocation17 + $0xc58] sm:$0xff]
    %v5202 = vld [vmem:[#allocation17 + $0xc60] sm:$0xff]
    %v5203 = vld [vmem:[#allocation17 + $0xc68] sm:$0xff]
    %v5204 = vld [vmem:[#allocation17 + $0xc70] sm:$0xff]
    %v5205 = vld [vmem:[#allocation17 + $0xc78] sm:$0xff]
    %v5206 = vld [vmem:[#allocation17 + $0xc80] sm:$0xff]
    %v5207 = vld [vmem:[#allocation17 + $0xc88] sm:$0xff]
    %v5208 = vld [vmem:[#allocation17 + $0xc90] sm:$0xff]
    %v5209 = vld [vmem:[#allocation17 + $0xc98] sm:$0xff]
    %v5210 = vld [vmem:[#allocation17 + $0xca0] sm:$0xff]
    %v5211 = vld [vmem:[#allocation17 + $0xca8] sm:$0xff]
    %v5212 = vld [vmem:[#allocation17 + $0xcb0] sm:$0xff]
    %v5213 = vld [vmem:[#allocation17 + $0xcb8] sm:$0xff]
    %v5214 = vld [vmem:[#allocation17 + $0xcc0] sm:$0xff]
    %v5215 = vld [vmem:[#allocation17 + $0xcc8] sm:$0xff]
    %v5216 = vld [vmem:[#allocation17 + $0xcd0] sm:$0xff]
    %v5217 = vld [vmem:[#allocation17 + $0xcd8] sm:$0xff]
    %v5218 = vld [vmem:[#allocation17 + $0xce0] sm:$0xff]
    %v5219 = vld [vmem:[#allocation17 + $0xce8] sm:$0xff]
    %v5220 = vld [vmem:[#allocation17 + $0xcf0] sm:$0xff]
    %v5221 = vld [vmem:[#allocation17 + $0xcf8] sm:$0xff]
    %v5222 = vld [vmem:[#allocation17 + $0xd00] sm:$0xff]
    %v5223 = vld [vmem:[#allocation17 + $0xd08] sm:$0xff]
    %v5224 = vld [vmem:[#allocation17 + $0xd10] sm:$0xff]
    %v5225 = vld [vmem:[#allocation17 + $0xd18] sm:$0xff]
    %v5226 = vld [vmem:[#allocation17 + $0xd20] sm:$0xff]
    %v5227 = vld [vmem:[#allocation17 + $0xd28] sm:$0xff]
    %v5228 = vld [vmem:[#allocation17 + $0xd30] sm:$0xff]
    %v5229 = vld [vmem:[#allocation17 + $0xd38] sm:$0xff]
    %v5230 = vld [vmem:[#allocation17 + $0xd40] sm:$0xff]
    %v5231 = vld [vmem:[#allocation17 + $0xd48] sm:$0xff]
    %v5232 = vld [vmem:[#allocation17 + $0xd50] sm:$0xff]
    %v5233 = vld [vmem:[#allocation17 + $0xd58] sm:$0xff]
    %v5234 = vld [vmem:[#allocation17 + $0xd60] sm:$0xff]
    %v5235 = vld [vmem:[#allocation17 + $0xd68] sm:$0xff]
    %v5236 = vld [vmem:[#allocation17 + $0xd70] sm:$0xff]
    %v5237 = vld [vmem:[#allocation17 + $0xd78] sm:$0xff]
    %v5238 = vld [vmem:[#allocation17 + $0xd80] sm:$0xff]
    %v5239 = vld [vmem:[#allocation17 + $0xd88] sm:$0xff]
    %v5240 = vld [vmem:[#allocation17 + $0xd90] sm:$0xff]
    %v5241 = vld [vmem:[#allocation17 + $0xd98] sm:$0xff]
    %v5242 = vld [vmem:[#allocation17 + $0xda0] sm:$0xff]
    %v5243 = vld [vmem:[#allocation17 + $0xda8] sm:$0xff]
    %v5244 = vld [vmem:[#allocation17 + $0xdb0] sm:$0xff]
    %v5245 = vld [vmem:[#allocation17 + $0xdb8] sm:$0xff]
    %v5246 = vld [vmem:[#allocation17 + $0xdc0] sm:$0xff]
    %v5247 = vld [vmem:[#allocation17 + $0xdc8] sm:$0xff]
    %v5248 = vld [vmem:[#allocation17 + $0xdd0] sm:$0xff]
    %v5249 = vld [vmem:[#allocation17 + $0xdd8] sm:$0xff]
    %v5250 = vld [vmem:[#allocation17 + $0xde0] sm:$0xff]
    %v5251 = vld [vmem:[#allocation17 + $0xde8] sm:$0xff]
    %v5252 = vld [vmem:[#allocation17 + $0xdf0] sm:$0xff]
    %v5253 = vld [vmem:[#allocation17 + $0xdf8] sm:$0xff]
    %v5254 = vld [vmem:[#allocation17 + $0xe00] sm:$0xff]
    %v5255 = vld [vmem:[#allocation17 + $0xe08] sm:$0xff]
    %v5256 = vld [vmem:[#allocation17 + $0xe10] sm:$0xff]
    %v5257 = vld [vmem:[#allocation17 + $0xe18] sm:$0xff]
    %v5258 = vld [vmem:[#allocation17 + $0xe20] sm:$0xff]
    %v5259 = vld [vmem:[#allocation17 + $0xe28] sm:$0xff]
    %v5260 = vld [vmem:[#allocation17 + $0xe30] sm:$0xff]
    %v5261 = vld [vmem:[#allocation17 + $0xe38] sm:$0xff]
    %v5262 = vld [vmem:[#allocation17 + $0xe40] sm:$0xff]
    %v5263 = vld [vmem:[#allocation17 + $0xe48] sm:$0xff]
    %v5264 = vld [vmem:[#allocation17 + $0xe50] sm:$0xff]
    %v5265 = vld [vmem:[#allocation17 + $0xe58] sm:$0xff]
    %v5266 = vld [vmem:[#allocation17 + $0xe60] sm:$0xff]
    %v5267 = vld [vmem:[#allocation17 + $0xe68] sm:$0xff]
    %v5268 = vld [vmem:[#allocation17 + $0xe70] sm:$0xff]
    %v5269 = vld [vmem:[#allocation17 + $0xe78] sm:$0xff]
    %v5270 = vld [vmem:[#allocation17 + $0xe80] sm:$0xff]
    %v5271 = vld [vmem:[#allocation17 + $0xe88] sm:$0xff]
    %v5272 = vld [vmem:[#allocation17 + $0xe90] sm:$0xff]
    %v5273 = vld [vmem:[#allocation17 + $0xe98] sm:$0xff]
    %v5274 = vld [vmem:[#allocation17 + $0xea0] sm:$0xff]
    %v5275 = vld [vmem:[#allocation17 + $0xea8] sm:$0xff]
    %v5276 = vld [vmem:[#allocation17 + $0xeb0] sm:$0xff]
    %v5277 = vld [vmem:[#allocation17 + $0xeb8] sm:$0xff]
    %v5278 = vld [vmem:[#allocation17 + $0xec0] sm:$0xff]
    %v5279 = vld [vmem:[#allocation17 + $0xec8] sm:$0xff]
    %v5280 = vld [vmem:[#allocation17 + $0xed0] sm:$0xff]
    %v5281 = vld [vmem:[#allocation17 + $0xed8] sm:$0xff]
    %v5282 = vld [vmem:[#allocation17 + $0xee0] sm:$0xff]
    %v5283 = vld [vmem:[#allocation17 + $0xee8] sm:$0xff]
    %v5284 = vld [vmem:[#allocation17 + $0xef0] sm:$0xff]
    %v5285 = vld [vmem:[#allocation17 + $0xef8] sm:$0xff]
    %v5286 = vld [vmem:[#allocation17 + $0xf00] sm:$0xff]
    %v5287 = vld [vmem:[#allocation17 + $0xf08] sm:$0xff]
    %v5288 = vld [vmem:[#allocation17 + $0xf10] sm:$0xff]
    %v5289 = vld [vmem:[#allocation17 + $0xf18] sm:$0xff]
    %v5290 = vld [vmem:[#allocation17 + $0xf20] sm:$0xff]
    %v5291 = vld [vmem:[#allocation17 + $0xf28] sm:$0xff]
    %v5292 = vld [vmem:[#allocation17 + $0xf30] sm:$0xff]
    %v5293 = vld [vmem:[#allocation17 + $0xf38] sm:$0xff]
    %v5294 = vld [vmem:[#allocation17 + $0xf40] sm:$0xff]
    %v5295 = vld [vmem:[#allocation17 + $0xf48] sm:$0xff]
    %v5296 = vld [vmem:[#allocation17 + $0xf50] sm:$0xff]
    %v5297 = vld [vmem:[#allocation17 + $0xf58] sm:$0xff]
    %v5298 = vld [vmem:[#allocation17 + $0xf60] sm:$0xff]
    %v5299 = vld [vmem:[#allocation17 + $0xf68] sm:$0xff]
    %v5300 = vld [vmem:[#allocation17 + $0xf70] sm:$0xff]
    %v5301 = vld [vmem:[#allocation17 + $0xf78] sm:$0xff]
    %v5302 = vld [vmem:[#allocation17 + $0xf80] sm:$0xff]
    %v5303 = vld [vmem:[#allocation17 + $0xf88] sm:$0xff]
    %v5304 = vld [vmem:[#allocation17 + $0xf90] sm:$0xff]
    %v5305 = vld [vmem:[#allocation17 + $0xf98] sm:$0xff]
    %v5306 = vld [vmem:[#allocation17 + $0xfa0] sm:$0xff]
    %v5307 = vld [vmem:[#allocation17 + $0xfa8] sm:$0xff]
    %v5308 = vld [vmem:[#allocation17 + $0xfb0] sm:$0xff]
    %v5309 = vld [vmem:[#allocation17 + $0xfb8] sm:$0xff]
    %v5310 = vld [vmem:[#allocation17 + $0xfc0] sm:$0xff]
    %v5311 = vld [vmem:[#allocation17 + $0xfc8] sm:$0xff]
    %v5312 = vld [vmem:[#allocation17 + $0xfd0] sm:$0xff]
    %v5313 = vld [vmem:[#allocation17 + $0xfd8] sm:$0xff]
    %v5314 = vld [vmem:[#allocation17 + $0xfe0] sm:$0xff]
    %v5315 = vld [vmem:[#allocation17 + $0xfe8] sm:$0xff]
    %v5316 = vld [vmem:[#allocation17 + $0xff0] sm:$0xff]
    %v5317 = vld [vmem:[#allocation17 + $0xff8] sm:$0xff]
    %v5830 = vunpack.c.l.b16 %v4806
    %v5831 = vunpack.c.h.b16 %v4806
    %v5832 = vunpack.c.l.b16 %v4807
    %v5833 = vunpack.c.h.b16 %v4807
    %v5834 = vunpack.c.l.b16 %v4808
    %v5835 = vunpack.c.h.b16 %v4808
    %v5836 = vunpack.c.l.b16 %v4809
    %v5837 = vunpack.c.h.b16 %v4809
    %v5838 = vunpack.c.l.b16 %v4810
    %v5839 = vunpack.c.h.b16 %v4810
    %v5840 = vunpack.c.l.b16 %v4811
    %v5841 = vunpack.c.h.b16 %v4811
    %v5842 = vunpack.c.l.b16 %v4812
    %v5843 = vunpack.c.h.b16 %v4812
    %v5844 = vunpack.c.l.b16 %v4813
    %v5845 = vunpack.c.h.b16 %v4813
    %v5846 = vunpack.c.l.b16 %v4814
    %v5847 = vunpack.c.h.b16 %v4814
    %v5848 = vunpack.c.l.b16 %v4815
    %v5849 = vunpack.c.h.b16 %v4815
    %v5850 = vunpack.c.l.b16 %v4816
    %v5851 = vunpack.c.h.b16 %v4816
    %v5852 = vunpack.c.l.b16 %v4817
    %v5853 = vunpack.c.h.b16 %v4817
    %v5854 = vunpack.c.l.b16 %v4818
    %v5855 = vunpack.c.h.b16 %v4818
    %v5856 = vunpack.c.l.b16 %v4819
    %v5857 = vunpack.c.h.b16 %v4819
    %v5858 = vunpack.c.l.b16 %v4820
    %v5859 = vunpack.c.h.b16 %v4820
    %v5860 = vunpack.c.l.b16 %v4821
    %v5861 = vunpack.c.h.b16 %v4821
    %v5862 = vunpack.c.l.b16 %v4822
    %v5863 = vunpack.c.h.b16 %v4822
    %v5864 = vunpack.c.l.b16 %v4823
    %v5865 = vunpack.c.h.b16 %v4823
    %v5866 = vunpack.c.l.b16 %v4824
    %v5867 = vunpack.c.h.b16 %v4824
    %v5868 = vunpack.c.l.b16 %v4825
    %v5869 = vunpack.c.h.b16 %v4825
    %v5870 = vunpack.c.l.b16 %v4826
    %v5871 = vunpack.c.h.b16 %v4826
    %v5872 = vunpack.c.l.b16 %v4827
    %v5873 = vunpack.c.h.b16 %v4827
    %v5874 = vunpack.c.l.b16 %v4828
    %v5875 = vunpack.c.h.b16 %v4828
    %v5876 = vunpack.c.l.b16 %v4829
    %v5877 = vunpack.c.h.b16 %v4829
    %v5878 = vunpack.c.l.b16 %v4830
    %v5879 = vunpack.c.h.b16 %v4830
    %v5880 = vunpack.c.l.b16 %v4831
    %v5881 = vunpack.c.h.b16 %v4831
    %v5882 = vunpack.c.l.b16 %v4832
    %v5883 = vunpack.c.h.b16 %v4832
    %v5884 = vunpack.c.l.b16 %v4833
    %v5885 = vunpack.c.h.b16 %v4833
    %v5886 = vunpack.c.l.b16 %v4834
    %v5887 = vunpack.c.h.b16 %v4834
    %v5888 = vunpack.c.l.b16 %v4835
    %v5889 = vunpack.c.h.b16 %v4835
    %v5890 = vunpack.c.l.b16 %v4836
    %v5891 = vunpack.c.h.b16 %v4836
    %v5892 = vunpack.c.l.b16 %v4837
    %v5893 = vunpack.c.h.b16 %v4837
    %v5894 = vunpack.c.l.b16 %v4838
    %v5895 = vunpack.c.h.b16 %v4838
    %v5896 = vunpack.c.l.b16 %v4839
    %v5897 = vunpack.c.h.b16 %v4839
    %v5898 = vunpack.c.l.b16 %v4840
    %v5899 = vunpack.c.h.b16 %v4840
    %v5900 = vunpack.c.l.b16 %v4841
    %v5901 = vunpack.c.h.b16 %v4841
    %v5902 = vunpack.c.l.b16 %v4842
    %v5903 = vunpack.c.h.b16 %v4842
    %v5904 = vunpack.c.l.b16 %v4843
    %v5905 = vunpack.c.h.b16 %v4843
    %v5906 = vunpack.c.l.b16 %v4844
    %v5907 = vunpack.c.h.b16 %v4844
    %v5908 = vunpack.c.l.b16 %v4845
    %v5909 = vunpack.c.h.b16 %v4845
    %v5910 = vunpack.c.l.b16 %v4846
    %v5911 = vunpack.c.h.b16 %v4846
    %v5912 = vunpack.c.l.b16 %v4847
    %v5913 = vunpack.c.h.b16 %v4847
    %v5914 = vunpack.c.l.b16 %v4848
    %v5915 = vunpack.c.h.b16 %v4848
    %v5916 = vunpack.c.l.b16 %v4849
    %v5917 = vunpack.c.h.b16 %v4849
    %v5918 = vunpack.c.l.b16 %v4850
    %v5919 = vunpack.c.h.b16 %v4850
    %v5920 = vunpack.c.l.b16 %v4851
    %v5921 = vunpack.c.h.b16 %v4851
    %v5922 = vunpack.c.l.b16 %v4852
    %v5923 = vunpack.c.h.b16 %v4852
    %v5924 = vunpack.c.l.b16 %v4853
    %v5925 = vunpack.c.h.b16 %v4853
    %v5926 = vunpack.c.l.b16 %v4854
    %v5927 = vunpack.c.h.b16 %v4854
    %v5928 = vunpack.c.l.b16 %v4855
    %v5929 = vunpack.c.h.b16 %v4855
    %v5930 = vunpack.c.l.b16 %v4856
    %v5931 = vunpack.c.h.b16 %v4856
    %v5932 = vunpack.c.l.b16 %v4857
    %v5933 = vunpack.c.h.b16 %v4857
    %v5934 = vunpack.c.l.b16 %v4858
    %v5935 = vunpack.c.h.b16 %v4858
    %v5936 = vunpack.c.l.b16 %v4859
    %v5937 = vunpack.c.h.b16 %v4859
    %v5938 = vunpack.c.l.b16 %v4860
    %v5939 = vunpack.c.h.b16 %v4860
    %v5940 = vunpack.c.l.b16 %v4861
    %v5941 = vunpack.c.h.b16 %v4861
    %v5942 = vunpack.c.l.b16 %v4862
    %v5943 = vunpack.c.h.b16 %v4862
    %v5944 = vunpack.c.l.b16 %v4863
    %v5945 = vunpack.c.h.b16 %v4863
    %v5946 = vunpack.c.l.b16 %v4864
    %v5947 = vunpack.c.h.b16 %v4864
    %v5948 = vunpack.c.l.b16 %v4865
    %v5949 = vunpack.c.h.b16 %v4865
    %v5950 = vunpack.c.l.b16 %v4866
    %v5951 = vunpack.c.h.b16 %v4866
    %v5952 = vunpack.c.l.b16 %v4867
    %v5953 = vunpack.c.h.b16 %v4867
    %v5954 = vunpack.c.l.b16 %v4868
    %v5955 = vunpack.c.h.b16 %v4868
    %v5956 = vunpack.c.l.b16 %v4869
    %v5957 = vunpack.c.h.b16 %v4869
    %v5958 = vunpack.c.l.b16 %v4870
    %v5959 = vunpack.c.h.b16 %v4870
    %v5960 = vunpack.c.l.b16 %v4871
    %v5961 = vunpack.c.h.b16 %v4871
    %v5962 = vunpack.c.l.b16 %v4872
    %v5963 = vunpack.c.h.b16 %v4872
    %v5964 = vunpack.c.l.b16 %v4873
    %v5965 = vunpack.c.h.b16 %v4873
    %v5966 = vunpack.c.l.b16 %v4874
    %v5967 = vunpack.c.h.b16 %v4874
    %v5968 = vunpack.c.l.b16 %v4875
    %v5969 = vunpack.c.h.b16 %v4875
    %v5970 = vunpack.c.l.b16 %v4876
    %v5971 = vunpack.c.h.b16 %v4876
    %v5972 = vunpack.c.l.b16 %v4877
    %v5973 = vunpack.c.h.b16 %v4877
    %v5974 = vunpack.c.l.b16 %v4878
    %v5975 = vunpack.c.h.b16 %v4878
    %v5976 = vunpack.c.l.b16 %v4879
    %v5977 = vunpack.c.h.b16 %v4879
    %v5978 = vunpack.c.l.b16 %v4880
    %v5979 = vunpack.c.h.b16 %v4880
    %v5980 = vunpack.c.l.b16 %v4881
    %v5981 = vunpack.c.h.b16 %v4881
    %v5982 = vunpack.c.l.b16 %v4882
    %v5983 = vunpack.c.h.b16 %v4882
    %v5984 = vunpack.c.l.b16 %v4883
    %v5985 = vunpack.c.h.b16 %v4883
    %v5986 = vunpack.c.l.b16 %v4884
    %v5987 = vunpack.c.h.b16 %v4884
    %v5988 = vunpack.c.l.b16 %v4885
    %v5989 = vunpack.c.h.b16 %v4885
    %v5990 = vunpack.c.l.b16 %v4886
    %v5991 = vunpack.c.h.b16 %v4886
    %v5992 = vunpack.c.l.b16 %v4887
    %v5993 = vunpack.c.h.b16 %v4887
    %v5994 = vunpack.c.l.b16 %v4888
    %v5995 = vunpack.c.h.b16 %v4888
    %v5996 = vunpack.c.l.b16 %v4889
    %v5997 = vunpack.c.h.b16 %v4889
    %v5998 = vunpack.c.l.b16 %v4890
    %v5999 = vunpack.c.h.b16 %v4890
    %v6000 = vunpack.c.l.b16 %v4891
    %v6001 = vunpack.c.h.b16 %v4891
    %v6002 = vunpack.c.l.b16 %v4892
    %v6003 = vunpack.c.h.b16 %v4892
    %v6004 = vunpack.c.l.b16 %v4893
    %v6005 = vunpack.c.h.b16 %v4893
    %v6006 = vunpack.c.l.b16 %v4894
    %v6007 = vunpack.c.h.b16 %v4894
    %v6008 = vunpack.c.l.b16 %v4895
    %v6009 = vunpack.c.h.b16 %v4895
    %v6010 = vunpack.c.l.b16 %v4896
    %v6011 = vunpack.c.h.b16 %v4896
    %v6012 = vunpack.c.l.b16 %v4897
    %v6013 = vunpack.c.h.b16 %v4897
    %v6014 = vunpack.c.l.b16 %v4898
    %v6015 = vunpack.c.h.b16 %v4898
    %v6016 = vunpack.c.l.b16 %v4899
    %v6017 = vunpack.c.h.b16 %v4899
    %v6018 = vunpack.c.l.b16 %v4900
    %v6019 = vunpack.c.h.b16 %v4900
    %v6020 = vunpack.c.l.b16 %v4901
    %v6021 = vunpack.c.h.b16 %v4901
    %v6022 = vunpack.c.l.b16 %v4902
    %v6023 = vunpack.c.h.b16 %v4902
    %v6024 = vunpack.c.l.b16 %v4903
    %v6025 = vunpack.c.h.b16 %v4903
    %v6026 = vunpack.c.l.b16 %v4904
    %v6027 = vunpack.c.h.b16 %v4904
    %v6028 = vunpack.c.l.b16 %v4905
    %v6029 = vunpack.c.h.b16 %v4905
    %v6030 = vunpack.c.l.b16 %v4906
    %v6031 = vunpack.c.h.b16 %v4906
    %v6032 = vunpack.c.l.b16 %v4907
    %v6033 = vunpack.c.h.b16 %v4907
    %v6034 = vunpack.c.l.b16 %v4908
    %v6035 = vunpack.c.h.b16 %v4908
    %v6036 = vunpack.c.l.b16 %v4909
    %v6037 = vunpack.c.h.b16 %v4909
    %v6038 = vunpack.c.l.b16 %v4910
    %v6039 = vunpack.c.h.b16 %v4910
    %v6040 = vunpack.c.l.b16 %v4911
    %v6041 = vunpack.c.h.b16 %v4911
    %v6042 = vunpack.c.l.b16 %v4912
    %v6043 = vunpack.c.h.b16 %v4912
    %v6044 = vunpack.c.l.b16 %v4913
    %v6045 = vunpack.c.h.b16 %v4913
    %v6046 = vunpack.c.l.b16 %v4914
    %v6047 = vunpack.c.h.b16 %v4914
    %v6048 = vunpack.c.l.b16 %v4915
    %v6049 = vunpack.c.h.b16 %v4915
    %v6050 = vunpack.c.l.b16 %v4916
    %v6051 = vunpack.c.h.b16 %v4916
    %v6052 = vunpack.c.l.b16 %v4917
    %v6053 = vunpack.c.h.b16 %v4917
    %v6054 = vunpack.c.l.b16 %v4918
    %v6055 = vunpack.c.h.b16 %v4918
    %v6056 = vunpack.c.l.b16 %v4919
    %v6057 = vunpack.c.h.b16 %v4919
    %v6058 = vunpack.c.l.b16 %v4920
    %v6059 = vunpack.c.h.b16 %v4920
    %v6060 = vunpack.c.l.b16 %v4921
    %v6061 = vunpack.c.h.b16 %v4921
    %v6062 = vunpack.c.l.b16 %v4922
    %v6063 = vunpack.c.h.b16 %v4922
    %v6064 = vunpack.c.l.b16 %v4923
    %v6065 = vunpack.c.h.b16 %v4923
    %v6066 = vunpack.c.l.b16 %v4924
    %v6067 = vunpack.c.h.b16 %v4924
    %v6068 = vunpack.c.l.b16 %v4925
    %v6069 = vunpack.c.h.b16 %v4925
    %v6070 = vunpack.c.l.b16 %v4926
    %v6071 = vunpack.c.h.b16 %v4926
    %v6072 = vunpack.c.l.b16 %v4927
    %v6073 = vunpack.c.h.b16 %v4927
    %v6074 = vunpack.c.l.b16 %v4928
    %v6075 = vunpack.c.h.b16 %v4928
    %v6076 = vunpack.c.l.b16 %v4929
    %v6077 = vunpack.c.h.b16 %v4929
    %v6078 = vunpack.c.l.b16 %v4930
    %v6079 = vunpack.c.h.b16 %v4930
    %v6080 = vunpack.c.l.b16 %v4931
    %v6081 = vunpack.c.h.b16 %v4931
    %v6082 = vunpack.c.l.b16 %v4932
    %v6083 = vunpack.c.h.b16 %v4932
    %v6084 = vunpack.c.l.b16 %v4933
    %v6085 = vunpack.c.h.b16 %v4933
    %v6086 = vunpack.c.l.b16 %v4934
    %v6087 = vunpack.c.h.b16 %v4934
    %v6088 = vunpack.c.l.b16 %v4935
    %v6089 = vunpack.c.h.b16 %v4935
    %v6090 = vunpack.c.l.b16 %v4936
    %v6091 = vunpack.c.h.b16 %v4936
    %v6092 = vunpack.c.l.b16 %v4937
    %v6093 = vunpack.c.h.b16 %v4937
    %v6094 = vunpack.c.l.b16 %v4938
    %v6095 = vunpack.c.h.b16 %v4938
    %v6096 = vunpack.c.l.b16 %v4939
    %v6097 = vunpack.c.h.b16 %v4939
    %v6098 = vunpack.c.l.b16 %v4940
    %v6099 = vunpack.c.h.b16 %v4940
    %v6100 = vunpack.c.l.b16 %v4941
    %v6101 = vunpack.c.h.b16 %v4941
    %v6102 = vunpack.c.l.b16 %v4942
    %v6103 = vunpack.c.h.b16 %v4942
    %v6104 = vunpack.c.l.b16 %v4943
    %v6105 = vunpack.c.h.b16 %v4943
    %v6106 = vunpack.c.l.b16 %v4944
    %v6107 = vunpack.c.h.b16 %v4944
    %v6108 = vunpack.c.l.b16 %v4945
    %v6109 = vunpack.c.h.b16 %v4945
    %v6110 = vunpack.c.l.b16 %v4946
    %v6111 = vunpack.c.h.b16 %v4946
    %v6112 = vunpack.c.l.b16 %v4947
    %v6113 = vunpack.c.h.b16 %v4947
    %v6114 = vunpack.c.l.b16 %v4948
    %v6115 = vunpack.c.h.b16 %v4948
    %v6116 = vunpack.c.l.b16 %v4949
    %v6117 = vunpack.c.h.b16 %v4949
    %v6118 = vunpack.c.l.b16 %v4950
    %v6119 = vunpack.c.h.b16 %v4950
    %v6120 = vunpack.c.l.b16 %v4951
    %v6121 = vunpack.c.h.b16 %v4951
    %v6122 = vunpack.c.l.b16 %v4952
    %v6123 = vunpack.c.h.b16 %v4952
    %v6124 = vunpack.c.l.b16 %v4953
    %v6125 = vunpack.c.h.b16 %v4953
    %v6126 = vunpack.c.l.b16 %v4954
    %v6127 = vunpack.c.h.b16 %v4954
    %v6128 = vunpack.c.l.b16 %v4955
    %v6129 = vunpack.c.h.b16 %v4955
    %v6130 = vunpack.c.l.b16 %v4956
    %v6131 = vunpack.c.h.b16 %v4956
    %v6132 = vunpack.c.l.b16 %v4957
    %v6133 = vunpack.c.h.b16 %v4957
    %v6134 = vunpack.c.l.b16 %v4958
    %v6135 = vunpack.c.h.b16 %v4958
    %v6136 = vunpack.c.l.b16 %v4959
    %v6137 = vunpack.c.h.b16 %v4959
    %v6138 = vunpack.c.l.b16 %v4960
    %v6139 = vunpack.c.h.b16 %v4960
    %v6140 = vunpack.c.l.b16 %v4961
    %v6141 = vunpack.c.h.b16 %v4961
    %v6142 = vunpack.c.l.b16 %v4962
    %v6143 = vunpack.c.h.b16 %v4962
    %v6144 = vunpack.c.l.b16 %v4963
    %v6145 = vunpack.c.h.b16 %v4963
    %v6146 = vunpack.c.l.b16 %v4964
    %v6147 = vunpack.c.h.b16 %v4964
    %v6148 = vunpack.c.l.b16 %v4965
    %v6149 = vunpack.c.h.b16 %v4965
    %v6150 = vunpack.c.l.b16 %v4966
    %v6151 = vunpack.c.h.b16 %v4966
    %v6152 = vunpack.c.l.b16 %v4967
    %v6153 = vunpack.c.h.b16 %v4967
    %v6154 = vunpack.c.l.b16 %v4968
    %v6155 = vunpack.c.h.b16 %v4968
    %v6156 = vunpack.c.l.b16 %v4969
    %v6157 = vunpack.c.h.b16 %v4969
    %v6158 = vunpack.c.l.b16 %v4970
    %v6159 = vunpack.c.h.b16 %v4970
    %v6160 = vunpack.c.l.b16 %v4971
    %v6161 = vunpack.c.h.b16 %v4971
    %v6162 = vunpack.c.l.b16 %v4972
    %v6163 = vunpack.c.h.b16 %v4972
    %v6164 = vunpack.c.l.b16 %v4973
    %v6165 = vunpack.c.h.b16 %v4973
    %v6166 = vunpack.c.l.b16 %v4974
    %v6167 = vunpack.c.h.b16 %v4974
    %v6168 = vunpack.c.l.b16 %v4975
    %v6169 = vunpack.c.h.b16 %v4975
    %v6170 = vunpack.c.l.b16 %v4976
    %v6171 = vunpack.c.h.b16 %v4976
    %v6172 = vunpack.c.l.b16 %v4977
    %v6173 = vunpack.c.h.b16 %v4977
    %v6174 = vunpack.c.l.b16 %v4978
    %v6175 = vunpack.c.h.b16 %v4978
    %v6176 = vunpack.c.l.b16 %v4979
    %v6177 = vunpack.c.h.b16 %v4979
    %v6178 = vunpack.c.l.b16 %v4980
    %v6179 = vunpack.c.h.b16 %v4980
    %v6180 = vunpack.c.l.b16 %v4981
    %v6181 = vunpack.c.h.b16 %v4981
    %v6182 = vunpack.c.l.b16 %v4982
    %v6183 = vunpack.c.h.b16 %v4982
    %v6184 = vunpack.c.l.b16 %v4983
    %v6185 = vunpack.c.h.b16 %v4983
    %v6186 = vunpack.c.l.b16 %v4984
    %v6187 = vunpack.c.h.b16 %v4984
    %v6188 = vunpack.c.l.b16 %v4985
    %v6189 = vunpack.c.h.b16 %v4985
    %v6190 = vunpack.c.l.b16 %v4986
    %v6191 = vunpack.c.h.b16 %v4986
    %v6192 = vunpack.c.l.b16 %v4987
    %v6193 = vunpack.c.h.b16 %v4987
    %v6194 = vunpack.c.l.b16 %v4988
    %v6195 = vunpack.c.h.b16 %v4988
    %v6196 = vunpack.c.l.b16 %v4989
    %v6197 = vunpack.c.h.b16 %v4989
    %v6198 = vunpack.c.l.b16 %v4990
    %v6199 = vunpack.c.h.b16 %v4990
    %v6200 = vunpack.c.l.b16 %v4991
    %v6201 = vunpack.c.h.b16 %v4991
    %v6202 = vunpack.c.l.b16 %v4992
    %v6203 = vunpack.c.h.b16 %v4992
    %v6204 = vunpack.c.l.b16 %v4993
    %v6205 = vunpack.c.h.b16 %v4993
    %v6206 = vunpack.c.l.b16 %v4994
    %v6207 = vunpack.c.h.b16 %v4994
    %v6208 = vunpack.c.l.b16 %v4995
    %v6209 = vunpack.c.h.b16 %v4995
    %v6210 = vunpack.c.l.b16 %v4996
    %v6211 = vunpack.c.h.b16 %v4996
    %v6212 = vunpack.c.l.b16 %v4997
    %v6213 = vunpack.c.h.b16 %v4997
    %v6214 = vunpack.c.l.b16 %v4998
    %v6215 = vunpack.c.h.b16 %v4998
    %v6216 = vunpack.c.l.b16 %v4999
    %v6217 = vunpack.c.h.b16 %v4999
    %v6218 = vunpack.c.l.b16 %v5000
    %v6219 = vunpack.c.h.b16 %v5000
    %v6220 = vunpack.c.l.b16 %v5001
    %v6221 = vunpack.c.h.b16 %v5001
    %v6222 = vunpack.c.l.b16 %v5002
    %v6223 = vunpack.c.h.b16 %v5002
    %v6224 = vunpack.c.l.b16 %v5003
    %v6225 = vunpack.c.h.b16 %v5003
    %v6226 = vunpack.c.l.b16 %v5004
    %v6227 = vunpack.c.h.b16 %v5004
    %v6228 = vunpack.c.l.b16 %v5005
    %v6229 = vunpack.c.h.b16 %v5005
    %v6230 = vunpack.c.l.b16 %v5006
    %v6231 = vunpack.c.h.b16 %v5006
    %v6232 = vunpack.c.l.b16 %v5007
    %v6233 = vunpack.c.h.b16 %v5007
    %v6234 = vunpack.c.l.b16 %v5008
    %v6235 = vunpack.c.h.b16 %v5008
    %v6236 = vunpack.c.l.b16 %v5009
    %v6237 = vunpack.c.h.b16 %v5009
    %v6238 = vunpack.c.l.b16 %v5010
    %v6239 = vunpack.c.h.b16 %v5010
    %v6240 = vunpack.c.l.b16 %v5011
    %v6241 = vunpack.c.h.b16 %v5011
    %v6242 = vunpack.c.l.b16 %v5012
    %v6243 = vunpack.c.h.b16 %v5012
    %v6244 = vunpack.c.l.b16 %v5013
    %v6245 = vunpack.c.h.b16 %v5013
    %v6246 = vunpack.c.l.b16 %v5014
    %v6247 = vunpack.c.h.b16 %v5014
    %v6248 = vunpack.c.l.b16 %v5015
    %v6249 = vunpack.c.h.b16 %v5015
    %v6250 = vunpack.c.l.b16 %v5016
    %v6251 = vunpack.c.h.b16 %v5016
    %v6252 = vunpack.c.l.b16 %v5017
    %v6253 = vunpack.c.h.b16 %v5017
    %v6254 = vunpack.c.l.b16 %v5018
    %v6255 = vunpack.c.h.b16 %v5018
    %v6256 = vunpack.c.l.b16 %v5019
    %v6257 = vunpack.c.h.b16 %v5019
    %v6258 = vunpack.c.l.b16 %v5020
    %v6259 = vunpack.c.h.b16 %v5020
    %v6260 = vunpack.c.l.b16 %v5021
    %v6261 = vunpack.c.h.b16 %v5021
    %v6262 = vunpack.c.l.b16 %v5022
    %v6263 = vunpack.c.h.b16 %v5022
    %v6264 = vunpack.c.l.b16 %v5023
    %v6265 = vunpack.c.h.b16 %v5023
    %v6266 = vunpack.c.l.b16 %v5024
    %v6267 = vunpack.c.h.b16 %v5024
    %v6268 = vunpack.c.l.b16 %v5025
    %v6269 = vunpack.c.h.b16 %v5025
    %v6270 = vunpack.c.l.b16 %v5026
    %v6271 = vunpack.c.h.b16 %v5026
    %v6272 = vunpack.c.l.b16 %v5027
    %v6273 = vunpack.c.h.b16 %v5027
    %v6274 = vunpack.c.l.b16 %v5028
    %v6275 = vunpack.c.h.b16 %v5028
    %v6276 = vunpack.c.l.b16 %v5029
    %v6277 = vunpack.c.h.b16 %v5029
    %v6278 = vunpack.c.l.b16 %v5030
    %v6279 = vunpack.c.h.b16 %v5030
    %v6280 = vunpack.c.l.b16 %v5031
    %v6281 = vunpack.c.h.b16 %v5031
    %v6282 = vunpack.c.l.b16 %v5032
    %v6283 = vunpack.c.h.b16 %v5032
    %v6284 = vunpack.c.l.b16 %v5033
    %v6285 = vunpack.c.h.b16 %v5033
    %v6286 = vunpack.c.l.b16 %v5034
    %v6287 = vunpack.c.h.b16 %v5034
    %v6288 = vunpack.c.l.b16 %v5035
    %v6289 = vunpack.c.h.b16 %v5035
    %v6290 = vunpack.c.l.b16 %v5036
    %v6291 = vunpack.c.h.b16 %v5036
    %v6292 = vunpack.c.l.b16 %v5037
    %v6293 = vunpack.c.h.b16 %v5037
    %v6294 = vunpack.c.l.b16 %v5038
    %v6295 = vunpack.c.h.b16 %v5038
    %v6296 = vunpack.c.l.b16 %v5039
    %v6297 = vunpack.c.h.b16 %v5039
    %v6298 = vunpack.c.l.b16 %v5040
    %v6299 = vunpack.c.h.b16 %v5040
    %v6300 = vunpack.c.l.b16 %v5041
    %v6301 = vunpack.c.h.b16 %v5041
    %v6302 = vunpack.c.l.b16 %v5042
    %v6303 = vunpack.c.h.b16 %v5042
    %v6304 = vunpack.c.l.b16 %v5043
    %v6305 = vunpack.c.h.b16 %v5043
    %v6306 = vunpack.c.l.b16 %v5044
    %v6307 = vunpack.c.h.b16 %v5044
    %v6308 = vunpack.c.l.b16 %v5045
    %v6309 = vunpack.c.h.b16 %v5045
    %v6310 = vunpack.c.l.b16 %v5046
    %v6311 = vunpack.c.h.b16 %v5046
    %v6312 = vunpack.c.l.b16 %v5047
    %v6313 = vunpack.c.h.b16 %v5047
    %v6314 = vunpack.c.l.b16 %v5048
    %v6315 = vunpack.c.h.b16 %v5048
    %v6316 = vunpack.c.l.b16 %v5049
    %v6317 = vunpack.c.h.b16 %v5049
    %v6318 = vunpack.c.l.b16 %v5050
    %v6319 = vunpack.c.h.b16 %v5050
    %v6320 = vunpack.c.l.b16 %v5051
    %v6321 = vunpack.c.h.b16 %v5051
    %v6322 = vunpack.c.l.b16 %v5052
    %v6323 = vunpack.c.h.b16 %v5052
    %v6324 = vunpack.c.l.b16 %v5053
    %v6325 = vunpack.c.h.b16 %v5053
    %v6326 = vunpack.c.l.b16 %v5054
    %v6327 = vunpack.c.h.b16 %v5054
    %v6328 = vunpack.c.l.b16 %v5055
    %v6329 = vunpack.c.h.b16 %v5055
    %v6330 = vunpack.c.l.b16 %v5056
    %v6331 = vunpack.c.h.b16 %v5056
    %v6332 = vunpack.c.l.b16 %v5057
    %v6333 = vunpack.c.h.b16 %v5057
    %v6334 = vunpack.c.l.b16 %v5058
    %v6335 = vunpack.c.h.b16 %v5058
    %v6336 = vunpack.c.l.b16 %v5059
    %v6337 = vunpack.c.h.b16 %v5059
    %v6338 = vunpack.c.l.b16 %v5060
    %v6339 = vunpack.c.h.b16 %v5060
    %v6340 = vunpack.c.l.b16 %v5061
    %v6341 = vunpack.c.h.b16 %v5061
    %v6342 = vunpack.c.l.b16 %v5062
    %v6343 = vunpack.c.h.b16 %v5062
    %v6344 = vunpack.c.l.b16 %v5063
    %v6345 = vunpack.c.h.b16 %v5063
    %v6346 = vunpack.c.l.b16 %v5064
    %v6347 = vunpack.c.h.b16 %v5064
    %v6348 = vunpack.c.l.b16 %v5065
    %v6349 = vunpack.c.h.b16 %v5065
    %v6350 = vunpack.c.l.b16 %v5066
    %v6351 = vunpack.c.h.b16 %v5066
    %v6352 = vunpack.c.l.b16 %v5067
    %v6353 = vunpack.c.h.b16 %v5067
    %v6354 = vunpack.c.l.b16 %v5068
    %v6355 = vunpack.c.h.b16 %v5068
    %v6356 = vunpack.c.l.b16 %v5069
    %v6357 = vunpack.c.h.b16 %v5069
    %v6358 = vunpack.c.l.b16 %v5070
    %v6359 = vunpack.c.h.b16 %v5070
    %v6360 = vunpack.c.l.b16 %v5071
    %v6361 = vunpack.c.h.b16 %v5071
    %v6362 = vunpack.c.l.b16 %v5072
    %v6363 = vunpack.c.h.b16 %v5072
    %v6364 = vunpack.c.l.b16 %v5073
    %v6365 = vunpack.c.h.b16 %v5073
    %v6366 = vunpack.c.l.b16 %v5074
    %v6367 = vunpack.c.h.b16 %v5074
    %v6368 = vunpack.c.l.b16 %v5075
    %v6369 = vunpack.c.h.b16 %v5075
    %v6370 = vunpack.c.l.b16 %v5076
    %v6371 = vunpack.c.h.b16 %v5076
    %v6372 = vunpack.c.l.b16 %v5077
    %v6373 = vunpack.c.h.b16 %v5077
    %v6374 = vunpack.c.l.b16 %v5078
    %v6375 = vunpack.c.h.b16 %v5078
    %v6376 = vunpack.c.l.b16 %v5079
    %v6377 = vunpack.c.h.b16 %v5079
    %v6378 = vunpack.c.l.b16 %v5080
    %v6379 = vunpack.c.h.b16 %v5080
    %v6380 = vunpack.c.l.b16 %v5081
    %v6381 = vunpack.c.h.b16 %v5081
    %v6382 = vunpack.c.l.b16 %v5082
    %v6383 = vunpack.c.h.b16 %v5082
    %v6384 = vunpack.c.l.b16 %v5083
    %v6385 = vunpack.c.h.b16 %v5083
    %v6386 = vunpack.c.l.b16 %v5084
    %v6387 = vunpack.c.h.b16 %v5084
    %v6388 = vunpack.c.l.b16 %v5085
    %v6389 = vunpack.c.h.b16 %v5085
    %v6390 = vunpack.c.l.b16 %v5086
    %v6391 = vunpack.c.h.b16 %v5086
    %v6392 = vunpack.c.l.b16 %v5087
    %v6393 = vunpack.c.h.b16 %v5087
    %v6394 = vunpack.c.l.b16 %v5088
    %v6395 = vunpack.c.h.b16 %v5088
    %v6396 = vunpack.c.l.b16 %v5089
    %v6397 = vunpack.c.h.b16 %v5089
    %v6398 = vunpack.c.l.b16 %v5090
    %v6399 = vunpack.c.h.b16 %v5090
    %v6400 = vunpack.c.l.b16 %v5091
    %v6401 = vunpack.c.h.b16 %v5091
    %v6402 = vunpack.c.l.b16 %v5092
    %v6403 = vunpack.c.h.b16 %v5092
    %v6404 = vunpack.c.l.b16 %v5093
    %v6405 = vunpack.c.h.b16 %v5093
    %v6406 = vunpack.c.l.b16 %v5094
    %v6407 = vunpack.c.h.b16 %v5094
    %v6408 = vunpack.c.l.b16 %v5095
    %v6409 = vunpack.c.h.b16 %v5095
    %v6410 = vunpack.c.l.b16 %v5096
    %v6411 = vunpack.c.h.b16 %v5096
    %v6412 = vunpack.c.l.b16 %v5097
    %v6413 = vunpack.c.h.b16 %v5097
    %v6414 = vunpack.c.l.b16 %v5098
    %v6415 = vunpack.c.h.b16 %v5098
    %v6416 = vunpack.c.l.b16 %v5099
    %v6417 = vunpack.c.h.b16 %v5099
    %v6418 = vunpack.c.l.b16 %v5100
    %v6419 = vunpack.c.h.b16 %v5100
    %v6420 = vunpack.c.l.b16 %v5101
    %v6421 = vunpack.c.h.b16 %v5101
    %v6422 = vunpack.c.l.b16 %v5102
    %v6423 = vunpack.c.h.b16 %v5102
    %v6424 = vunpack.c.l.b16 %v5103
    %v6425 = vunpack.c.h.b16 %v5103
    %v6426 = vunpack.c.l.b16 %v5104
    %v6427 = vunpack.c.h.b16 %v5104
    %v6428 = vunpack.c.l.b16 %v5105
    %v6429 = vunpack.c.h.b16 %v5105
    %v6430 = vunpack.c.l.b16 %v5106
    %v6431 = vunpack.c.h.b16 %v5106
    %v6432 = vunpack.c.l.b16 %v5107
    %v6433 = vunpack.c.h.b16 %v5107
    %v6434 = vunpack.c.l.b16 %v5108
    %v6435 = vunpack.c.h.b16 %v5108
    %v6436 = vunpack.c.l.b16 %v5109
    %v6437 = vunpack.c.h.b16 %v5109
    %v6438 = vunpack.c.l.b16 %v5110
    %v6439 = vunpack.c.h.b16 %v5110
    %v6440 = vunpack.c.l.b16 %v5111
    %v6441 = vunpack.c.h.b16 %v5111
    %v6442 = vunpack.c.l.b16 %v5112
    %v6443 = vunpack.c.h.b16 %v5112
    %v6444 = vunpack.c.l.b16 %v5113
    %v6445 = vunpack.c.h.b16 %v5113
    %v6446 = vunpack.c.l.b16 %v5114
    %v6447 = vunpack.c.h.b16 %v5114
    %v6448 = vunpack.c.l.b16 %v5115
    %v6449 = vunpack.c.h.b16 %v5115
    %v6450 = vunpack.c.l.b16 %v5116
    %v6451 = vunpack.c.h.b16 %v5116
    %v6452 = vunpack.c.l.b16 %v5117
    %v6453 = vunpack.c.h.b16 %v5117
    %v6454 = vunpack.c.l.b16 %v5118
    %v6455 = vunpack.c.h.b16 %v5118
    %v6456 = vunpack.c.l.b16 %v5119
    %v6457 = vunpack.c.h.b16 %v5119
    %v6458 = vunpack.c.l.b16 %v5120
    %v6459 = vunpack.c.h.b16 %v5120
    %v6460 = vunpack.c.l.b16 %v5121
    %v6461 = vunpack.c.h.b16 %v5121
    %v6462 = vunpack.c.l.b16 %v5122
    %v6463 = vunpack.c.h.b16 %v5122
    %v6464 = vunpack.c.l.b16 %v5123
    %v6465 = vunpack.c.h.b16 %v5123
    %v6466 = vunpack.c.l.b16 %v5124
    %v6467 = vunpack.c.h.b16 %v5124
    %v6468 = vunpack.c.l.b16 %v5125
    %v6469 = vunpack.c.h.b16 %v5125
    %v6470 = vunpack.c.l.b16 %v5126
    %v6471 = vunpack.c.h.b16 %v5126
    %v6472 = vunpack.c.l.b16 %v5127
    %v6473 = vunpack.c.h.b16 %v5127
    %v6474 = vunpack.c.l.b16 %v5128
    %v6475 = vunpack.c.h.b16 %v5128
    %v6476 = vunpack.c.l.b16 %v5129
    %v6477 = vunpack.c.h.b16 %v5129
    %v6478 = vunpack.c.l.b16 %v5130
    %v6479 = vunpack.c.h.b16 %v5130
    %v6480 = vunpack.c.l.b16 %v5131
    %v6481 = vunpack.c.h.b16 %v5131
    %v6482 = vunpack.c.l.b16 %v5132
    %v6483 = vunpack.c.h.b16 %v5132
    %v6484 = vunpack.c.l.b16 %v5133
    %v6485 = vunpack.c.h.b16 %v5133
    %v6486 = vunpack.c.l.b16 %v5134
    %v6487 = vunpack.c.h.b16 %v5134
    %v6488 = vunpack.c.l.b16 %v5135
    %v6489 = vunpack.c.h.b16 %v5135
    %v6490 = vunpack.c.l.b16 %v5136
    %v6491 = vunpack.c.h.b16 %v5136
    %v6492 = vunpack.c.l.b16 %v5137
    %v6493 = vunpack.c.h.b16 %v5137
    %v6494 = vunpack.c.l.b16 %v5138
    %v6495 = vunpack.c.h.b16 %v5138
    %v6496 = vunpack.c.l.b16 %v5139
    %v6497 = vunpack.c.h.b16 %v5139
    %v6498 = vunpack.c.l.b16 %v5140
    %v6499 = vunpack.c.h.b16 %v5140
    %v6500 = vunpack.c.l.b16 %v5141
    %v6501 = vunpack.c.h.b16 %v5141
    %v6502 = vunpack.c.l.b16 %v5142
    %v6503 = vunpack.c.h.b16 %v5142
    %v6504 = vunpack.c.l.b16 %v5143
    %v6505 = vunpack.c.h.b16 %v5143
    %v6506 = vunpack.c.l.b16 %v5144
    %v6507 = vunpack.c.h.b16 %v5144
    %v6508 = vunpack.c.l.b16 %v5145
    %v6509 = vunpack.c.h.b16 %v5145
    %v6510 = vunpack.c.l.b16 %v5146
    %v6511 = vunpack.c.h.b16 %v5146
    %v6512 = vunpack.c.l.b16 %v5147
    %v6513 = vunpack.c.h.b16 %v5147
    %v6514 = vunpack.c.l.b16 %v5148
    %v6515 = vunpack.c.h.b16 %v5148
    %v6516 = vunpack.c.l.b16 %v5149
    %v6517 = vunpack.c.h.b16 %v5149
    %v6518 = vunpack.c.l.b16 %v5150
    %v6519 = vunpack.c.h.b16 %v5150
    %v6520 = vunpack.c.l.b16 %v5151
    %v6521 = vunpack.c.h.b16 %v5151
    %v6522 = vunpack.c.l.b16 %v5152
    %v6523 = vunpack.c.h.b16 %v5152
    %v6524 = vunpack.c.l.b16 %v5153
    %v6525 = vunpack.c.h.b16 %v5153
    %v6526 = vunpack.c.l.b16 %v5154
    %v6527 = vunpack.c.h.b16 %v5154
    %v6528 = vunpack.c.l.b16 %v5155
    %v6529 = vunpack.c.h.b16 %v5155
    %v6530 = vunpack.c.l.b16 %v5156
    %v6531 = vunpack.c.h.b16 %v5156
    %v6532 = vunpack.c.l.b16 %v5157
    %v6533 = vunpack.c.h.b16 %v5157
    %v6534 = vunpack.c.l.b16 %v5158
    %v6535 = vunpack.c.h.b16 %v5158
    %v6536 = vunpack.c.l.b16 %v5159
    %v6537 = vunpack.c.h.b16 %v5159
    %v6538 = vunpack.c.l.b16 %v5160
    %v6539 = vunpack.c.h.b16 %v5160
    %v6540 = vunpack.c.l.b16 %v5161
    %v6541 = vunpack.c.h.b16 %v5161
    %v6542 = vunpack.c.l.b16 %v5162
    %v6543 = vunpack.c.h.b16 %v5162
    %v6544 = vunpack.c.l.b16 %v5163
    %v6545 = vunpack.c.h.b16 %v5163
    %v6546 = vunpack.c.l.b16 %v5164
    %v6547 = vunpack.c.h.b16 %v5164
    %v6548 = vunpack.c.l.b16 %v5165
    %v6549 = vunpack.c.h.b16 %v5165
    %v6550 = vunpack.c.l.b16 %v5166
    %v6551 = vunpack.c.h.b16 %v5166
    %v6552 = vunpack.c.l.b16 %v5167
    %v6553 = vunpack.c.h.b16 %v5167
    %v6554 = vunpack.c.l.b16 %v5168
    %v6555 = vunpack.c.h.b16 %v5168
    %v6556 = vunpack.c.l.b16 %v5169
    %v6557 = vunpack.c.h.b16 %v5169
    %v6558 = vunpack.c.l.b16 %v5170
    %v6559 = vunpack.c.h.b16 %v5170
    %v6560 = vunpack.c.l.b16 %v5171
    %v6561 = vunpack.c.h.b16 %v5171
    %v6562 = vunpack.c.l.b16 %v5172
    %v6563 = vunpack.c.h.b16 %v5172
    %v6564 = vunpack.c.l.b16 %v5173
    %v6565 = vunpack.c.h.b16 %v5173
    %v6566 = vunpack.c.l.b16 %v5174
    %v6567 = vunpack.c.h.b16 %v5174
    %v6568 = vunpack.c.l.b16 %v5175
    %v6569 = vunpack.c.h.b16 %v5175
    %v6570 = vunpack.c.l.b16 %v5176
    %v6571 = vunpack.c.h.b16 %v5176
    %v6572 = vunpack.c.l.b16 %v5177
    %v6573 = vunpack.c.h.b16 %v5177
    %v6574 = vunpack.c.l.b16 %v5178
    %v6575 = vunpack.c.h.b16 %v5178
    %v6576 = vunpack.c.l.b16 %v5179
    %v6577 = vunpack.c.h.b16 %v5179
    %v6578 = vunpack.c.l.b16 %v5180
    %v6579 = vunpack.c.h.b16 %v5180
    %v6580 = vunpack.c.l.b16 %v5181
    %v6581 = vunpack.c.h.b16 %v5181
    %v6582 = vunpack.c.l.b16 %v5182
    %v6583 = vunpack.c.h.b16 %v5182
    %v6584 = vunpack.c.l.b16 %v5183
    %v6585 = vunpack.c.h.b16 %v5183
    %v6586 = vunpack.c.l.b16 %v5184
    %v6587 = vunpack.c.h.b16 %v5184
    %v6588 = vunpack.c.l.b16 %v5185
    %v6589 = vunpack.c.h.b16 %v5185
    %v6590 = vunpack.c.l.b16 %v5186
    %v6591 = vunpack.c.h.b16 %v5186
    %v6592 = vunpack.c.l.b16 %v5187
    %v6593 = vunpack.c.h.b16 %v5187
    %v6594 = vunpack.c.l.b16 %v5188
    %v6595 = vunpack.c.h.b16 %v5188
    %v6596 = vunpack.c.l.b16 %v5189
    %v6597 = vunpack.c.h.b16 %v5189
    %v6598 = vunpack.c.l.b16 %v5190
    %v6599 = vunpack.c.h.b16 %v5190
    %v6600 = vunpack.c.l.b16 %v5191
    %v6601 = vunpack.c.h.b16 %v5191
    %v6602 = vunpack.c.l.b16 %v5192
    %v6603 = vunpack.c.h.b16 %v5192
    %v6604 = vunpack.c.l.b16 %v5193
    %v6605 = vunpack.c.h.b16 %v5193
    %v6606 = vunpack.c.l.b16 %v5194
    %v6607 = vunpack.c.h.b16 %v5194
    %v6608 = vunpack.c.l.b16 %v5195
    %v6609 = vunpack.c.h.b16 %v5195
    %v6610 = vunpack.c.l.b16 %v5196
    %v6611 = vunpack.c.h.b16 %v5196
    %v6612 = vunpack.c.l.b16 %v5197
    %v6613 = vunpack.c.h.b16 %v5197
    %v6614 = vunpack.c.l.b16 %v5198
    %v6615 = vunpack.c.h.b16 %v5198
    %v6616 = vunpack.c.l.b16 %v5199
    %v6617 = vunpack.c.h.b16 %v5199
    %v6618 = vunpack.c.l.b16 %v5200
    %v6619 = vunpack.c.h.b16 %v5200
    %v6620 = vunpack.c.l.b16 %v5201
    %v6621 = vunpack.c.h.b16 %v5201
    %v6622 = vunpack.c.l.b16 %v5202
    %v6623 = vunpack.c.h.b16 %v5202
    %v6624 = vunpack.c.l.b16 %v5203
    %v6625 = vunpack.c.h.b16 %v5203
    %v6626 = vunpack.c.l.b16 %v5204
    %v6627 = vunpack.c.h.b16 %v5204
    %v6628 = vunpack.c.l.b16 %v5205
    %v6629 = vunpack.c.h.b16 %v5205
    %v6630 = vunpack.c.l.b16 %v5206
    %v6631 = vunpack.c.h.b16 %v5206
    %v6632 = vunpack.c.l.b16 %v5207
    %v6633 = vunpack.c.h.b16 %v5207
    %v6634 = vunpack.c.l.b16 %v5208
    %v6635 = vunpack.c.h.b16 %v5208
    %v6636 = vunpack.c.l.b16 %v5209
    %v6637 = vunpack.c.h.b16 %v5209
    %v6638 = vunpack.c.l.b16 %v5210
    %v6639 = vunpack.c.h.b16 %v5210
    %v6640 = vunpack.c.l.b16 %v5211
    %v6641 = vunpack.c.h.b16 %v5211
    %v6642 = vunpack.c.l.b16 %v5212
    %v6643 = vunpack.c.h.b16 %v5212
    %v6644 = vunpack.c.l.b16 %v5213
    %v6645 = vunpack.c.h.b16 %v5213
    %v6646 = vunpack.c.l.b16 %v5214
    %v6647 = vunpack.c.h.b16 %v5214
    %v6648 = vunpack.c.l.b16 %v5215
    %v6649 = vunpack.c.h.b16 %v5215
    %v6650 = vunpack.c.l.b16 %v5216
    %v6651 = vunpack.c.h.b16 %v5216
    %v6652 = vunpack.c.l.b16 %v5217
    %v6653 = vunpack.c.h.b16 %v5217
    %v6654 = vunpack.c.l.b16 %v5218
    %v6655 = vunpack.c.h.b16 %v5218
    %v6656 = vunpack.c.l.b16 %v5219
    %v6657 = vunpack.c.h.b16 %v5219
    %v6658 = vunpack.c.l.b16 %v5220
    %v6659 = vunpack.c.h.b16 %v5220
    %v6660 = vunpack.c.l.b16 %v5221
    %v6661 = vunpack.c.h.b16 %v5221
    %v6662 = vunpack.c.l.b16 %v5222
    %v6663 = vunpack.c.h.b16 %v5222
    %v6664 = vunpack.c.l.b16 %v5223
    %v6665 = vunpack.c.h.b16 %v5223
    %v6666 = vunpack.c.l.b16 %v5224
    %v6667 = vunpack.c.h.b16 %v5224
    %v6668 = vunpack.c.l.b16 %v5225
    %v6669 = vunpack.c.h.b16 %v5225
    %v6670 = vunpack.c.l.b16 %v5226
    %v6671 = vunpack.c.h.b16 %v5226
    %v6672 = vunpack.c.l.b16 %v5227
    %v6673 = vunpack.c.h.b16 %v5227
    %v6674 = vunpack.c.l.b16 %v5228
    %v6675 = vunpack.c.h.b16 %v5228
    %v6676 = vunpack.c.l.b16 %v5229
    %v6677 = vunpack.c.h.b16 %v5229
    %v6678 = vunpack.c.l.b16 %v5230
    %v6679 = vunpack.c.h.b16 %v5230
    %v6680 = vunpack.c.l.b16 %v5231
    %v6681 = vunpack.c.h.b16 %v5231
    %v6682 = vunpack.c.l.b16 %v5232
    %v6683 = vunpack.c.h.b16 %v5232
    %v6684 = vunpack.c.l.b16 %v5233
    %v6685 = vunpack.c.h.b16 %v5233
    %v6686 = vunpack.c.l.b16 %v5234
    %v6687 = vunpack.c.h.b16 %v5234
    %v6688 = vunpack.c.l.b16 %v5235
    %v6689 = vunpack.c.h.b16 %v5235
    %v6690 = vunpack.c.l.b16 %v5236
    %v6691 = vunpack.c.h.b16 %v5236
    %v6692 = vunpack.c.l.b16 %v5237
    %v6693 = vunpack.c.h.b16 %v5237
    %v6694 = vunpack.c.l.b16 %v5238
    %v6695 = vunpack.c.h.b16 %v5238
    %v6696 = vunpack.c.l.b16 %v5239
    %v6697 = vunpack.c.h.b16 %v5239
    %v6698 = vunpack.c.l.b16 %v5240
    %v6699 = vunpack.c.h.b16 %v5240
    %v6700 = vunpack.c.l.b16 %v5241
    %v6701 = vunpack.c.h.b16 %v5241
    %v6702 = vunpack.c.l.b16 %v5242
    %v6703 = vunpack.c.h.b16 %v5242
    %v6704 = vunpack.c.l.b16 %v5243
    %v6705 = vunpack.c.h.b16 %v5243
    %v6706 = vunpack.c.l.b16 %v5244
    %v6707 = vunpack.c.h.b16 %v5244
    %v6708 = vunpack.c.l.b16 %v5245
    %v6709 = vunpack.c.h.b16 %v5245
    %v6710 = vunpack.c.l.b16 %v5246
    %v6711 = vunpack.c.h.b16 %v5246
    %v6712 = vunpack.c.l.b16 %v5247
    %v6713 = vunpack.c.h.b16 %v5247
    %v6714 = vunpack.c.l.b16 %v5248
    %v6715 = vunpack.c.h.b16 %v5248
    %v6716 = vunpack.c.l.b16 %v5249
    %v6717 = vunpack.c.h.b16 %v5249
    %v6718 = vunpack.c.l.b16 %v5250
    %v6719 = vunpack.c.h.b16 %v5250
    %v6720 = vunpack.c.l.b16 %v5251
    %v6721 = vunpack.c.h.b16 %v5251
    %v6722 = vunpack.c.l.b16 %v5252
    %v6723 = vunpack.c.h.b16 %v5252
    %v6724 = vunpack.c.l.b16 %v5253
    %v6725 = vunpack.c.h.b16 %v5253
    %v6726 = vunpack.c.l.b16 %v5254
    %v6727 = vunpack.c.h.b16 %v5254
    %v6728 = vunpack.c.l.b16 %v5255
    %v6729 = vunpack.c.h.b16 %v5255
    %v6730 = vunpack.c.l.b16 %v5256
    %v6731 = vunpack.c.h.b16 %v5256
    %v6732 = vunpack.c.l.b16 %v5257
    %v6733 = vunpack.c.h.b16 %v5257
    %v6734 = vunpack.c.l.b16 %v5258
    %v6735 = vunpack.c.h.b16 %v5258
    %v6736 = vunpack.c.l.b16 %v5259
    %v6737 = vunpack.c.h.b16 %v5259
    %v6738 = vunpack.c.l.b16 %v5260
    %v6739 = vunpack.c.h.b16 %v5260
    %v6740 = vunpack.c.l.b16 %v5261
    %v6741 = vunpack.c.h.b16 %v5261
    %v6742 = vunpack.c.l.b16 %v5262
    %v6743 = vunpack.c.h.b16 %v5262
    %v6744 = vunpack.c.l.b16 %v5263
    %v6745 = vunpack.c.h.b16 %v5263
    %v6746 = vunpack.c.l.b16 %v5264
    %v6747 = vunpack.c.h.b16 %v5264
    %v6748 = vunpack.c.l.b16 %v5265
    %v6749 = vunpack.c.h.b16 %v5265
    %v6750 = vunpack.c.l.b16 %v5266
    %v6751 = vunpack.c.h.b16 %v5266
    %v6752 = vunpack.c.l.b16 %v5267
    %v6753 = vunpack.c.h.b16 %v5267
    %v6754 = vunpack.c.l.b16 %v5268
    %v6755 = vunpack.c.h.b16 %v5268
    %v6756 = vunpack.c.l.b16 %v5269
    %v6757 = vunpack.c.h.b16 %v5269
    %v6758 = vunpack.c.l.b16 %v5270
    %v6759 = vunpack.c.h.b16 %v5270
    %v6760 = vunpack.c.l.b16 %v5271
    %v6761 = vunpack.c.h.b16 %v5271
    %v6762 = vunpack.c.l.b16 %v5272
    %v6763 = vunpack.c.h.b16 %v5272
    %v6764 = vunpack.c.l.b16 %v5273
    %v6765 = vunpack.c.h.b16 %v5273
    %v6766 = vunpack.c.l.b16 %v5274
    %v6767 = vunpack.c.h.b16 %v5274
    %v6768 = vunpack.c.l.b16 %v5275
    %v6769 = vunpack.c.h.b16 %v5275
    %v6770 = vunpack.c.l.b16 %v5276
    %v6771 = vunpack.c.h.b16 %v5276
    %v6772 = vunpack.c.l.b16 %v5277
    %v6773 = vunpack.c.h.b16 %v5277
    %v6774 = vunpack.c.l.b16 %v5278
    %v6775 = vunpack.c.h.b16 %v5278
    %v6776 = vunpack.c.l.b16 %v5279
    %v6777 = vunpack.c.h.b16 %v5279
    %v6778 = vunpack.c.l.b16 %v5280
    %v6779 = vunpack.c.h.b16 %v5280
    %v6780 = vunpack.c.l.b16 %v5281
    %v6781 = vunpack.c.h.b16 %v5281
    %v6782 = vunpack.c.l.b16 %v5282
    %v6783 = vunpack.c.h.b16 %v5282
    %v6784 = vunpack.c.l.b16 %v5283
    %v6785 = vunpack.c.h.b16 %v5283
    %v6786 = vunpack.c.l.b16 %v5284
    %v6787 = vunpack.c.h.b16 %v5284
    %v6788 = vunpack.c.l.b16 %v5285
    %v6789 = vunpack.c.h.b16 %v5285
    %v6790 = vunpack.c.l.b16 %v5286
    %v6791 = vunpack.c.h.b16 %v5286
    %v6792 = vunpack.c.l.b16 %v5287
    %v6793 = vunpack.c.h.b16 %v5287
    %v6794 = vunpack.c.l.b16 %v5288
    %v6795 = vunpack.c.h.b16 %v5288
    %v6796 = vunpack.c.l.b16 %v5289
    %v6797 = vunpack.c.h.b16 %v5289
    %v6798 = vunpack.c.l.b16 %v5290
    %v6799 = vunpack.c.h.b16 %v5290
    %v6800 = vunpack.c.l.b16 %v5291
    %v6801 = vunpack.c.h.b16 %v5291
    %v6802 = vunpack.c.l.b16 %v5292
    %v6803 = vunpack.c.h.b16 %v5292
    %v6804 = vunpack.c.l.b16 %v5293
    %v6805 = vunpack.c.h.b16 %v5293
    %v6806 = vunpack.c.l.b16 %v5294
    %v6807 = vunpack.c.h.b16 %v5294
    %v6808 = vunpack.c.l.b16 %v5295
    %v6809 = vunpack.c.h.b16 %v5295
    %v6810 = vunpack.c.l.b16 %v5296
    %v6811 = vunpack.c.h.b16 %v5296
    %v6812 = vunpack.c.l.b16 %v5297
    %v6813 = vunpack.c.h.b16 %v5297
    %v6814 = vunpack.c.l.b16 %v5298
    %v6815 = vunpack.c.h.b16 %v5298
    %v6816 = vunpack.c.l.b16 %v5299
    %v6817 = vunpack.c.h.b16 %v5299
    %v6818 = vunpack.c.l.b16 %v5300
    %v6819 = vunpack.c.h.b16 %v5300
    %v6820 = vunpack.c.l.b16 %v5301
    %v6821 = vunpack.c.h.b16 %v5301
    %v6822 = vunpack.c.l.b16 %v5302
    %v6823 = vunpack.c.h.b16 %v5302
    %v6824 = vunpack.c.l.b16 %v5303
    %v6825 = vunpack.c.h.b16 %v5303
    %v6826 = vunpack.c.l.b16 %v5304
    %v6827 = vunpack.c.h.b16 %v5304
    %v6828 = vunpack.c.l.b16 %v5305
    %v6829 = vunpack.c.h.b16 %v5305
    %v6830 = vunpack.c.l.b16 %v5306
    %v6831 = vunpack.c.h.b16 %v5306
    %v6832 = vunpack.c.l.b16 %v5307
    %v6833 = vunpack.c.h.b16 %v5307
    %v6834 = vunpack.c.l.b16 %v5308
    %v6835 = vunpack.c.h.b16 %v5308
    %v6836 = vunpack.c.l.b16 %v5309
    %v6837 = vunpack.c.h.b16 %v5309
    %v6838 = vunpack.c.l.b16 %v5310
    %v6839 = vunpack.c.h.b16 %v5310
    %v6840 = vunpack.c.l.b16 %v5311
    %v6841 = vunpack.c.h.b16 %v5311
    %v6842 = vunpack.c.l.b16 %v5312
    %v6843 = vunpack.c.h.b16 %v5312
    %v6844 = vunpack.c.l.b16 %v5313
    %v6845 = vunpack.c.h.b16 %v5313
    %v6846 = vunpack.c.l.b16 %v5314
    %v6847 = vunpack.c.h.b16 %v5314
    %v6848 = vunpack.c.l.b16 %v5315
    %v6849 = vunpack.c.h.b16 %v5315
    %v6850 = vunpack.c.l.b16 %v5316
    %v6851 = vunpack.c.h.b16 %v5316
    %v6852 = vunpack.c.l.b16 %v5317
    %v6853 = vunpack.c.h.b16 %v5317
    %v6854 = vpack.c.b16 %v5838, %v5830
    %v6855 = vpack.c.b16 %v5839, %v5831
    %v6856 = vpack.c.b16 %v5840, %v5832
    %v6857 = vpack.c.b16 %v5841, %v5833
    %v6858 = vpack.c.b16 %v5842, %v5834
    %v6859 = vpack.c.b16 %v5843, %v5835
    %v6860 = vpack.c.b16 %v5844, %v5836
    %v6861 = vpack.c.b16 %v5845, %v5837
    %v6862 = vpack.c.b16 %v5854, %v5846
    %v6863 = vpack.c.b16 %v5855, %v5847
    %v6864 = vpack.c.b16 %v5856, %v5848
    %v6865 = vpack.c.b16 %v5857, %v5849
    %v6866 = vpack.c.b16 %v5858, %v5850
    %v6867 = vpack.c.b16 %v5859, %v5851
    %v6868 = vpack.c.b16 %v5860, %v5852
    %v6869 = vpack.c.b16 %v5861, %v5853
    %v6870 = vpack.c.b16 %v5870, %v5862
    %v6871 = vpack.c.b16 %v5871, %v5863
    %v6872 = vpack.c.b16 %v5872, %v5864
    %v6873 = vpack.c.b16 %v5873, %v5865
    %v6874 = vpack.c.b16 %v5874, %v5866
    %v6875 = vpack.c.b16 %v5875, %v5867
    %v6876 = vpack.c.b16 %v5876, %v5868
    %v6877 = vpack.c.b16 %v5877, %v5869
    %v6878 = vpack.c.b16 %v5886, %v5878
    %v6879 = vpack.c.b16 %v5887, %v5879
    %v6880 = vpack.c.b16 %v5888, %v5880
    %v6881 = vpack.c.b16 %v5889, %v5881
    %v6882 = vpack.c.b16 %v5890, %v5882
    %v6883 = vpack.c.b16 %v5891, %v5883
    %v6884 = vpack.c.b16 %v5892, %v5884
    %v6885 = vpack.c.b16 %v5893, %v5885
    %v6886 = vpack.c.b16 %v5902, %v5894
    %v6887 = vpack.c.b16 %v5903, %v5895
    %v6888 = vpack.c.b16 %v5904, %v5896
    %v6889 = vpack.c.b16 %v5905, %v5897
    %v6890 = vpack.c.b16 %v5906, %v5898
    %v6891 = vpack.c.b16 %v5907, %v5899
    %v6892 = vpack.c.b16 %v5908, %v5900
    %v6893 = vpack.c.b16 %v5909, %v5901
    %v6894 = vpack.c.b16 %v5918, %v5910
    %v6895 = vpack.c.b16 %v5919, %v5911
    %v6896 = vpack.c.b16 %v5920, %v5912
    %v6897 = vpack.c.b16 %v5921, %v5913
    %v6898 = vpack.c.b16 %v5922, %v5914
    %v6899 = vpack.c.b16 %v5923, %v5915
    %v6900 = vpack.c.b16 %v5924, %v5916
    %v6901 = vpack.c.b16 %v5925, %v5917
    %v6902 = vpack.c.b16 %v5934, %v5926
    %v6903 = vpack.c.b16 %v5935, %v5927
    %v6904 = vpack.c.b16 %v5936, %v5928
    %v6905 = vpack.c.b16 %v5937, %v5929
    %v6906 = vpack.c.b16 %v5938, %v5930
    %v6907 = vpack.c.b16 %v5939, %v5931
    %v6908 = vpack.c.b16 %v5940, %v5932
    %v6909 = vpack.c.b16 %v5941, %v5933
    %v6910 = vpack.c.b16 %v5950, %v5942
    %v6911 = vpack.c.b16 %v5951, %v5943
    %v6912 = vpack.c.b16 %v5952, %v5944
    %v6913 = vpack.c.b16 %v5953, %v5945
    %v6914 = vpack.c.b16 %v5954, %v5946
    %v6915 = vpack.c.b16 %v5955, %v5947
    %v6916 = vpack.c.b16 %v5956, %v5948
    %v6917 = vpack.c.b16 %v5957, %v5949
    %v6918 = vpack.c.b16 %v5966, %v5958
    %v6919 = vpack.c.b16 %v5967, %v5959
    %v6920 = vpack.c.b16 %v5968, %v5960
    %v6921 = vpack.c.b16 %v5969, %v5961
    %v6922 = vpack.c.b16 %v5970, %v5962
    %v6923 = vpack.c.b16 %v5971, %v5963
    %v6924 = vpack.c.b16 %v5972, %v5964
    %v6925 = vpack.c.b16 %v5973, %v5965
    %v6926 = vpack.c.b16 %v5982, %v5974
    %v6927 = vpack.c.b16 %v5983, %v5975
    %v6928 = vpack.c.b16 %v5984, %v5976
    %v6929 = vpack.c.b16 %v5985, %v5977
    %v6930 = vpack.c.b16 %v5986, %v5978
    %v6931 = vpack.c.b16 %v5987, %v5979
    %v6932 = vpack.c.b16 %v5988, %v5980
    %v6933 = vpack.c.b16 %v5989, %v5981
    %v6934 = vpack.c.b16 %v5998, %v5990
    %v6935 = vpack.c.b16 %v5999, %v5991
    %v6936 = vpack.c.b16 %v6000, %v5992
    %v6937 = vpack.c.b16 %v6001, %v5993
    %v6938 = vpack.c.b16 %v6002, %v5994
    %v6939 = vpack.c.b16 %v6003, %v5995
    %v6940 = vpack.c.b16 %v6004, %v5996
    %v6941 = vpack.c.b16 %v6005, %v5997
    %v6942 = vpack.c.b16 %v6014, %v6006
    %v6943 = vpack.c.b16 %v6015, %v6007
    %v6944 = vpack.c.b16 %v6016, %v6008
    %v6945 = vpack.c.b16 %v6017, %v6009
    %v6946 = vpack.c.b16 %v6018, %v6010
    %v6947 = vpack.c.b16 %v6019, %v6011
    %v6948 = vpack.c.b16 %v6020, %v6012
    %v6949 = vpack.c.b16 %v6021, %v6013
    %v6950 = vpack.c.b16 %v6030, %v6022
    %v6951 = vpack.c.b16 %v6031, %v6023
    %v6952 = vpack.c.b16 %v6032, %v6024
    %v6953 = vpack.c.b16 %v6033, %v6025
    %v6954 = vpack.c.b16 %v6034, %v6026
    %v6955 = vpack.c.b16 %v6035, %v6027
    %v6956 = vpack.c.b16 %v6036, %v6028
    %v6957 = vpack.c.b16 %v6037, %v6029
    %v6958 = vpack.c.b16 %v6046, %v6038
    %v6959 = vpack.c.b16 %v6047, %v6039
    %v6960 = vpack.c.b16 %v6048, %v6040
    %v6961 = vpack.c.b16 %v6049, %v6041
    %v6962 = vpack.c.b16 %v6050, %v6042
    %v6963 = vpack.c.b16 %v6051, %v6043
    %v6964 = vpack.c.b16 %v6052, %v6044
    %v6965 = vpack.c.b16 %v6053, %v6045
    %v6966 = vpack.c.b16 %v6062, %v6054
    %v6967 = vpack.c.b16 %v6063, %v6055
    %v6968 = vpack.c.b16 %v6064, %v6056
    %v6969 = vpack.c.b16 %v6065, %v6057
    %v6970 = vpack.c.b16 %v6066, %v6058
    %v6971 = vpack.c.b16 %v6067, %v6059
    %v6972 = vpack.c.b16 %v6068, %v6060
    %v6973 = vpack.c.b16 %v6069, %v6061
    %v6974 = vpack.c.b16 %v6078, %v6070
    %v6975 = vpack.c.b16 %v6079, %v6071
    %v6976 = vpack.c.b16 %v6080, %v6072
    %v6977 = vpack.c.b16 %v6081, %v6073
    %v6978 = vpack.c.b16 %v6082, %v6074
    %v6979 = vpack.c.b16 %v6083, %v6075
    %v6980 = vpack.c.b16 %v6084, %v6076
    %v6981 = vpack.c.b16 %v6085, %v6077
    %v6982 = vpack.c.b16 %v6094, %v6086
    %v6983 = vpack.c.b16 %v6095, %v6087
    %v6984 = vpack.c.b16 %v6096, %v6088
    %v6985 = vpack.c.b16 %v6097, %v6089
    %v6986 = vpack.c.b16 %v6098, %v6090
    %v6987 = vpack.c.b16 %v6099, %v6091
    %v6988 = vpack.c.b16 %v6100, %v6092
    %v6989 = vpack.c.b16 %v6101, %v6093
    %v6990 = vpack.c.b16 %v6110, %v6102
    %v6991 = vpack.c.b16 %v6111, %v6103
    %v6992 = vpack.c.b16 %v6112, %v6104
    %v6993 = vpack.c.b16 %v6113, %v6105
    %v6994 = vpack.c.b16 %v6114, %v6106
    %v6995 = vpack.c.b16 %v6115, %v6107
    %v6996 = vpack.c.b16 %v6116, %v6108
    %v6997 = vpack.c.b16 %v6117, %v6109
    %v6998 = vpack.c.b16 %v6126, %v6118
    %v6999 = vpack.c.b16 %v6127, %v6119
    %v7000 = vpack.c.b16 %v6128, %v6120
    %v7001 = vpack.c.b16 %v6129, %v6121
    %v7002 = vpack.c.b16 %v6130, %v6122
    %v7003 = vpack.c.b16 %v6131, %v6123
    %v7004 = vpack.c.b16 %v6132, %v6124
    %v7005 = vpack.c.b16 %v6133, %v6125
    %v7006 = vpack.c.b16 %v6142, %v6134
    %v7007 = vpack.c.b16 %v6143, %v6135
    %v7008 = vpack.c.b16 %v6144, %v6136
    %v7009 = vpack.c.b16 %v6145, %v6137
    %v7010 = vpack.c.b16 %v6146, %v6138
    %v7011 = vpack.c.b16 %v6147, %v6139
    %v7012 = vpack.c.b16 %v6148, %v6140
    %v7013 = vpack.c.b16 %v6149, %v6141
    %v7014 = vpack.c.b16 %v6158, %v6150
    %v7015 = vpack.c.b16 %v6159, %v6151
    %v7016 = vpack.c.b16 %v6160, %v6152
    %v7017 = vpack.c.b16 %v6161, %v6153
    %v7018 = vpack.c.b16 %v6162, %v6154
    %v7019 = vpack.c.b16 %v6163, %v6155
    %v7020 = vpack.c.b16 %v6164, %v6156
    %v7021 = vpack.c.b16 %v6165, %v6157
    %v7022 = vpack.c.b16 %v6174, %v6166
    %v7023 = vpack.c.b16 %v6175, %v6167
    %v7024 = vpack.c.b16 %v6176, %v6168
    %v7025 = vpack.c.b16 %v6177, %v6169
    %v7026 = vpack.c.b16 %v6178, %v6170
    %v7027 = vpack.c.b16 %v6179, %v6171
    %v7028 = vpack.c.b16 %v6180, %v6172
    %v7029 = vpack.c.b16 %v6181, %v6173
    %v7030 = vpack.c.b16 %v6190, %v6182
    %v7031 = vpack.c.b16 %v6191, %v6183
    %v7032 = vpack.c.b16 %v6192, %v6184
    %v7033 = vpack.c.b16 %v6193, %v6185
    %v7034 = vpack.c.b16 %v6194, %v6186
    %v7035 = vpack.c.b16 %v6195, %v6187
    %v7036 = vpack.c.b16 %v6196, %v6188
    %v7037 = vpack.c.b16 %v6197, %v6189
    %v7038 = vpack.c.b16 %v6206, %v6198
    %v7039 = vpack.c.b16 %v6207, %v6199
    %v7040 = vpack.c.b16 %v6208, %v6200
    %v7041 = vpack.c.b16 %v6209, %v6201
    %v7042 = vpack.c.b16 %v6210, %v6202
    %v7043 = vpack.c.b16 %v6211, %v6203
    %v7044 = vpack.c.b16 %v6212, %v6204
    %v7045 = vpack.c.b16 %v6213, %v6205
    %v7046 = vpack.c.b16 %v6222, %v6214
    %v7047 = vpack.c.b16 %v6223, %v6215
    %v7048 = vpack.c.b16 %v6224, %v6216
    %v7049 = vpack.c.b16 %v6225, %v6217
    %v7050 = vpack.c.b16 %v6226, %v6218
    %v7051 = vpack.c.b16 %v6227, %v6219
    %v7052 = vpack.c.b16 %v6228, %v6220
    %v7053 = vpack.c.b16 %v6229, %v6221
    %v7054 = vpack.c.b16 %v6238, %v6230
    %v7055 = vpack.c.b16 %v6239, %v6231
    %v7056 = vpack.c.b16 %v6240, %v6232
    %v7057 = vpack.c.b16 %v6241, %v6233
    %v7058 = vpack.c.b16 %v6242, %v6234
    %v7059 = vpack.c.b16 %v6243, %v6235
    %v7060 = vpack.c.b16 %v6244, %v6236
    %v7061 = vpack.c.b16 %v6245, %v6237
    %v7062 = vpack.c.b16 %v6254, %v6246
    %v7063 = vpack.c.b16 %v6255, %v6247
    %v7064 = vpack.c.b16 %v6256, %v6248
    %v7065 = vpack.c.b16 %v6257, %v6249
    %v7066 = vpack.c.b16 %v6258, %v6250
    %v7067 = vpack.c.b16 %v6259, %v6251
    %v7068 = vpack.c.b16 %v6260, %v6252
    %v7069 = vpack.c.b16 %v6261, %v6253
    %v7070 = vpack.c.b16 %v6270, %v6262
    %v7071 = vpack.c.b16 %v6271, %v6263
    %v7072 = vpack.c.b16 %v6272, %v6264
    %v7073 = vpack.c.b16 %v6273, %v6265
    %v7074 = vpack.c.b16 %v6274, %v6266
    %v7075 = vpack.c.b16 %v6275, %v6267
    %v7076 = vpack.c.b16 %v6276, %v6268
    %v7077 = vpack.c.b16 %v6277, %v6269
    %v7078 = vpack.c.b16 %v6286, %v6278
    %v7079 = vpack.c.b16 %v6287, %v6279
    %v7080 = vpack.c.b16 %v6288, %v6280
    %v7081 = vpack.c.b16 %v6289, %v6281
    %v7082 = vpack.c.b16 %v6290, %v6282
    %v7083 = vpack.c.b16 %v6291, %v6283
    %v7084 = vpack.c.b16 %v6292, %v6284
    %v7085 = vpack.c.b16 %v6293, %v6285
    %v7086 = vpack.c.b16 %v6302, %v6294
    %v7087 = vpack.c.b16 %v6303, %v6295
    %v7088 = vpack.c.b16 %v6304, %v6296
    %v7089 = vpack.c.b16 %v6305, %v6297
    %v7090 = vpack.c.b16 %v6306, %v6298
    %v7091 = vpack.c.b16 %v6307, %v6299
    %v7092 = vpack.c.b16 %v6308, %v6300
    %v7093 = vpack.c.b16 %v6309, %v6301
    %v7094 = vpack.c.b16 %v6318, %v6310
    %v7095 = vpack.c.b16 %v6319, %v6311
    %v7096 = vpack.c.b16 %v6320, %v6312
    %v7097 = vpack.c.b16 %v6321, %v6313
    %v7098 = vpack.c.b16 %v6322, %v6314
    %v7099 = vpack.c.b16 %v6323, %v6315
    %v7100 = vpack.c.b16 %v6324, %v6316
    %v7101 = vpack.c.b16 %v6325, %v6317
    %v7102 = vpack.c.b16 %v6334, %v6326
    %v7103 = vpack.c.b16 %v6335, %v6327
    %v7104 = vpack.c.b16 %v6336, %v6328
    %v7105 = vpack.c.b16 %v6337, %v6329
    %v7106 = vpack.c.b16 %v6338, %v6330
    %v7107 = vpack.c.b16 %v6339, %v6331
    %v7108 = vpack.c.b16 %v6340, %v6332
    %v7109 = vpack.c.b16 %v6341, %v6333
    %v7110 = vpack.c.b16 %v6350, %v6342
    %v7111 = vpack.c.b16 %v6351, %v6343
    %v7112 = vpack.c.b16 %v6352, %v6344
    %v7113 = vpack.c.b16 %v6353, %v6345
    %v7114 = vpack.c.b16 %v6354, %v6346
    %v7115 = vpack.c.b16 %v6355, %v6347
    %v7116 = vpack.c.b16 %v6356, %v6348
    %v7117 = vpack.c.b16 %v6357, %v6349
    %v7118 = vpack.c.b16 %v6366, %v6358
    %v7119 = vpack.c.b16 %v6367, %v6359
    %v7120 = vpack.c.b16 %v6368, %v6360
    %v7121 = vpack.c.b16 %v6369, %v6361
    %v7122 = vpack.c.b16 %v6370, %v6362
    %v7123 = vpack.c.b16 %v6371, %v6363
    %v7124 = vpack.c.b16 %v6372, %v6364
    %v7125 = vpack.c.b16 %v6373, %v6365
    %v7126 = vpack.c.b16 %v6382, %v6374
    %v7127 = vpack.c.b16 %v6383, %v6375
    %v7128 = vpack.c.b16 %v6384, %v6376
    %v7129 = vpack.c.b16 %v6385, %v6377
    %v7130 = vpack.c.b16 %v6386, %v6378
    %v7131 = vpack.c.b16 %v6387, %v6379
    %v7132 = vpack.c.b16 %v6388, %v6380
    %v7133 = vpack.c.b16 %v6389, %v6381
    %v7134 = vpack.c.b16 %v6398, %v6390
    %v7135 = vpack.c.b16 %v6399, %v6391
    %v7136 = vpack.c.b16 %v6400, %v6392
    %v7137 = vpack.c.b16 %v6401, %v6393
    %v7138 = vpack.c.b16 %v6402, %v6394
    %v7139 = vpack.c.b16 %v6403, %v6395
    %v7140 = vpack.c.b16 %v6404, %v6396
    %v7141 = vpack.c.b16 %v6405, %v6397
    %v7142 = vpack.c.b16 %v6414, %v6406
    %v7143 = vpack.c.b16 %v6415, %v6407
    %v7144 = vpack.c.b16 %v6416, %v6408
    %v7145 = vpack.c.b16 %v6417, %v6409
    %v7146 = vpack.c.b16 %v6418, %v6410
    %v7147 = vpack.c.b16 %v6419, %v6411
    %v7148 = vpack.c.b16 %v6420, %v6412
    %v7149 = vpack.c.b16 %v6421, %v6413
    %v7150 = vpack.c.b16 %v6430, %v6422
    %v7151 = vpack.c.b16 %v6431, %v6423
    %v7152 = vpack.c.b16 %v6432, %v6424
    %v7153 = vpack.c.b16 %v6433, %v6425
    %v7154 = vpack.c.b16 %v6434, %v6426
    %v7155 = vpack.c.b16 %v6435, %v6427
    %v7156 = vpack.c.b16 %v6436, %v6428
    %v7157 = vpack.c.b16 %v6437, %v6429
    %v7158 = vpack.c.b16 %v6446, %v6438
    %v7159 = vpack.c.b16 %v6447, %v6439
    %v7160 = vpack.c.b16 %v6448, %v6440
    %v7161 = vpack.c.b16 %v6449, %v6441
    %v7162 = vpack.c.b16 %v6450, %v6442
    %v7163 = vpack.c.b16 %v6451, %v6443
    %v7164 = vpack.c.b16 %v6452, %v6444
    %v7165 = vpack.c.b16 %v6453, %v6445
    %v7166 = vpack.c.b16 %v6462, %v6454
    %v7167 = vpack.c.b16 %v6463, %v6455
    %v7168 = vpack.c.b16 %v6464, %v6456
    %v7169 = vpack.c.b16 %v6465, %v6457
    %v7170 = vpack.c.b16 %v6466, %v6458
    %v7171 = vpack.c.b16 %v6467, %v6459
    %v7172 = vpack.c.b16 %v6468, %v6460
    %v7173 = vpack.c.b16 %v6469, %v6461
    %v7174 = vpack.c.b16 %v6478, %v6470
    %v7175 = vpack.c.b16 %v6479, %v6471
    %v7176 = vpack.c.b16 %v6480, %v6472
    %v7177 = vpack.c.b16 %v6481, %v6473
    %v7178 = vpack.c.b16 %v6482, %v6474
    %v7179 = vpack.c.b16 %v6483, %v6475
    %v7180 = vpack.c.b16 %v6484, %v6476
    %v7181 = vpack.c.b16 %v6485, %v6477
    %v7182 = vpack.c.b16 %v6494, %v6486
    %v7183 = vpack.c.b16 %v6495, %v6487
    %v7184 = vpack.c.b16 %v6496, %v6488
    %v7185 = vpack.c.b16 %v6497, %v6489
    %v7186 = vpack.c.b16 %v6498, %v6490
    %v7187 = vpack.c.b16 %v6499, %v6491
    %v7188 = vpack.c.b16 %v6500, %v6492
    %v7189 = vpack.c.b16 %v6501, %v6493
    %v7190 = vpack.c.b16 %v6510, %v6502
    %v7191 = vpack.c.b16 %v6511, %v6503
    %v7192 = vpack.c.b16 %v6512, %v6504
    %v7193 = vpack.c.b16 %v6513, %v6505
    %v7194 = vpack.c.b16 %v6514, %v6506
    %v7195 = vpack.c.b16 %v6515, %v6507
    %v7196 = vpack.c.b16 %v6516, %v6508
    %v7197 = vpack.c.b16 %v6517, %v6509
    %v7198 = vpack.c.b16 %v6526, %v6518
    %v7199 = vpack.c.b16 %v6527, %v6519
    %v7200 = vpack.c.b16 %v6528, %v6520
    %v7201 = vpack.c.b16 %v6529, %v6521
    %v7202 = vpack.c.b16 %v6530, %v6522
    %v7203 = vpack.c.b16 %v6531, %v6523
    %v7204 = vpack.c.b16 %v6532, %v6524
    %v7205 = vpack.c.b16 %v6533, %v6525
    %v7206 = vpack.c.b16 %v6542, %v6534
    %v7207 = vpack.c.b16 %v6543, %v6535
    %v7208 = vpack.c.b16 %v6544, %v6536
    %v7209 = vpack.c.b16 %v6545, %v6537
    %v7210 = vpack.c.b16 %v6546, %v6538
    %v7211 = vpack.c.b16 %v6547, %v6539
    %v7212 = vpack.c.b16 %v6548, %v6540
    %v7213 = vpack.c.b16 %v6549, %v6541
    %v7214 = vpack.c.b16 %v6558, %v6550
    %v7215 = vpack.c.b16 %v6559, %v6551
    %v7216 = vpack.c.b16 %v6560, %v6552
    %v7217 = vpack.c.b16 %v6561, %v6553
    %v7218 = vpack.c.b16 %v6562, %v6554
    %v7219 = vpack.c.b16 %v6563, %v6555
    %v7220 = vpack.c.b16 %v6564, %v6556
    %v7221 = vpack.c.b16 %v6565, %v6557
    %v7222 = vpack.c.b16 %v6574, %v6566
    %v7223 = vpack.c.b16 %v6575, %v6567
    %v7224 = vpack.c.b16 %v6576, %v6568
    %v7225 = vpack.c.b16 %v6577, %v6569
    %v7226 = vpack.c.b16 %v6578, %v6570
    %v7227 = vpack.c.b16 %v6579, %v6571
    %v7228 = vpack.c.b16 %v6580, %v6572
    %v7229 = vpack.c.b16 %v6581, %v6573
    %v7230 = vpack.c.b16 %v6590, %v6582
    %v7231 = vpack.c.b16 %v6591, %v6583
    %v7232 = vpack.c.b16 %v6592, %v6584
    %v7233 = vpack.c.b16 %v6593, %v6585
    %v7234 = vpack.c.b16 %v6594, %v6586
    %v7235 = vpack.c.b16 %v6595, %v6587
    %v7236 = vpack.c.b16 %v6596, %v6588
    %v7237 = vpack.c.b16 %v6597, %v6589
    %v7238 = vpack.c.b16 %v6606, %v6598
    %v7239 = vpack.c.b16 %v6607, %v6599
    %v7240 = vpack.c.b16 %v6608, %v6600
    %v7241 = vpack.c.b16 %v6609, %v6601
    %v7242 = vpack.c.b16 %v6610, %v6602
    %v7243 = vpack.c.b16 %v6611, %v6603
    %v7244 = vpack.c.b16 %v6612, %v6604
    %v7245 = vpack.c.b16 %v6613, %v6605
    %v7246 = vpack.c.b16 %v6622, %v6614
    %v7247 = vpack.c.b16 %v6623, %v6615
    %v7248 = vpack.c.b16 %v6624, %v6616
    %v7249 = vpack.c.b16 %v6625, %v6617
    %v7250 = vpack.c.b16 %v6626, %v6618
    %v7251 = vpack.c.b16 %v6627, %v6619
    %v7252 = vpack.c.b16 %v6628, %v6620
    %v7253 = vpack.c.b16 %v6629, %v6621
    %v7254 = vpack.c.b16 %v6638, %v6630
    %v7255 = vpack.c.b16 %v6639, %v6631
    %v7256 = vpack.c.b16 %v6640, %v6632
    %v7257 = vpack.c.b16 %v6641, %v6633
    %v7258 = vpack.c.b16 %v6642, %v6634
    %v7259 = vpack.c.b16 %v6643, %v6635
    %v7260 = vpack.c.b16 %v6644, %v6636
    %v7261 = vpack.c.b16 %v6645, %v6637
    %v7262 = vpack.c.b16 %v6654, %v6646
    %v7263 = vpack.c.b16 %v6655, %v6647
    %v7264 = vpack.c.b16 %v6656, %v6648
    %v7265 = vpack.c.b16 %v6657, %v6649
    %v7266 = vpack.c.b16 %v6658, %v6650
    %v7267 = vpack.c.b16 %v6659, %v6651
    %v7268 = vpack.c.b16 %v6660, %v6652
    %v7269 = vpack.c.b16 %v6661, %v6653
    %v7270 = vpack.c.b16 %v6670, %v6662
    %v7271 = vpack.c.b16 %v6671, %v6663
    %v7272 = vpack.c.b16 %v6672, %v6664
    %v7273 = vpack.c.b16 %v6673, %v6665
    %v7274 = vpack.c.b16 %v6674, %v6666
    %v7275 = vpack.c.b16 %v6675, %v6667
    %v7276 = vpack.c.b16 %v6676, %v6668
    %v7277 = vpack.c.b16 %v6677, %v6669
    %v7278 = vpack.c.b16 %v6686, %v6678
    %v7279 = vpack.c.b16 %v6687, %v6679
    %v7280 = vpack.c.b16 %v6688, %v6680
    %v7281 = vpack.c.b16 %v6689, %v6681
    %v7282 = vpack.c.b16 %v6690, %v6682
    %v7283 = vpack.c.b16 %v6691, %v6683
    %v7284 = vpack.c.b16 %v6692, %v6684
    %v7285 = vpack.c.b16 %v6693, %v6685
    %v7286 = vpack.c.b16 %v6702, %v6694
    %v7287 = vpack.c.b16 %v6703, %v6695
    %v7288 = vpack.c.b16 %v6704, %v6696
    %v7289 = vpack.c.b16 %v6705, %v6697
    %v7290 = vpack.c.b16 %v6706, %v6698
    %v7291 = vpack.c.b16 %v6707, %v6699
    %v7292 = vpack.c.b16 %v6708, %v6700
    %v7293 = vpack.c.b16 %v6709, %v6701
    %v7294 = vpack.c.b16 %v6718, %v6710
    %v7295 = vpack.c.b16 %v6719, %v6711
    %v7296 = vpack.c.b16 %v6720, %v6712
    %v7297 = vpack.c.b16 %v6721, %v6713
    %v7298 = vpack.c.b16 %v6722, %v6714
    %v7299 = vpack.c.b16 %v6723, %v6715
    %v7300 = vpack.c.b16 %v6724, %v6716
    %v7301 = vpack.c.b16 %v6725, %v6717
    %v7302 = vpack.c.b16 %v6734, %v6726
    %v7303 = vpack.c.b16 %v6735, %v6727
    %v7304 = vpack.c.b16 %v6736, %v6728
    %v7305 = vpack.c.b16 %v6737, %v6729
    %v7306 = vpack.c.b16 %v6738, %v6730
    %v7307 = vpack.c.b16 %v6739, %v6731
    %v7308 = vpack.c.b16 %v6740, %v6732
    %v7309 = vpack.c.b16 %v6741, %v6733
    %v7310 = vpack.c.b16 %v6750, %v6742
    %v7311 = vpack.c.b16 %v6751, %v6743
    %v7312 = vpack.c.b16 %v6752, %v6744
    %v7313 = vpack.c.b16 %v6753, %v6745
    %v7314 = vpack.c.b16 %v6754, %v6746
    %v7315 = vpack.c.b16 %v6755, %v6747
    %v7316 = vpack.c.b16 %v6756, %v6748
    %v7317 = vpack.c.b16 %v6757, %v6749
    %v7318 = vpack.c.b16 %v6766, %v6758
    %v7319 = vpack.c.b16 %v6767, %v6759
    %v7320 = vpack.c.b16 %v6768, %v6760
    %v7321 = vpack.c.b16 %v6769, %v6761
    %v7322 = vpack.c.b16 %v6770, %v6762
    %v7323 = vpack.c.b16 %v6771, %v6763
    %v7324 = vpack.c.b16 %v6772, %v6764
    %v7325 = vpack.c.b16 %v6773, %v6765
    %v7326 = vpack.c.b16 %v6782, %v6774
    %v7327 = vpack.c.b16 %v6783, %v6775
    %v7328 = vpack.c.b16 %v6784, %v6776
    %v7329 = vpack.c.b16 %v6785, %v6777
    %v7330 = vpack.c.b16 %v6786, %v6778
    %v7331 = vpack.c.b16 %v6787, %v6779
    %v7332 = vpack.c.b16 %v6788, %v6780
    %v7333 = vpack.c.b16 %v6789, %v6781
    %v7334 = vpack.c.b16 %v6798, %v6790
    %v7335 = vpack.c.b16 %v6799, %v6791
    %v7336 = vpack.c.b16 %v6800, %v6792
    %v7337 = vpack.c.b16 %v6801, %v6793
    %v7338 = vpack.c.b16 %v6802, %v6794
    %v7339 = vpack.c.b16 %v6803, %v6795
    %v7340 = vpack.c.b16 %v6804, %v6796
    %v7341 = vpack.c.b16 %v6805, %v6797
    %v7342 = vpack.c.b16 %v6814, %v6806
    %v7343 = vpack.c.b16 %v6815, %v6807
    %v7344 = vpack.c.b16 %v6816, %v6808
    %v7345 = vpack.c.b16 %v6817, %v6809
    %v7346 = vpack.c.b16 %v6818, %v6810
    %v7347 = vpack.c.b16 %v6819, %v6811
    %v7348 = vpack.c.b16 %v6820, %v6812
    %v7349 = vpack.c.b16 %v6821, %v6813
    %v7350 = vpack.c.b16 %v6830, %v6822
    %v7351 = vpack.c.b16 %v6831, %v6823
    %v7352 = vpack.c.b16 %v6832, %v6824
    %v7353 = vpack.c.b16 %v6833, %v6825
    %v7354 = vpack.c.b16 %v6834, %v6826
    %v7355 = vpack.c.b16 %v6835, %v6827
    %v7356 = vpack.c.b16 %v6836, %v6828
    %v7357 = vpack.c.b16 %v6837, %v6829
    %v7358 = vpack.c.b16 %v6846, %v6838
    %v7359 = vpack.c.b16 %v6847, %v6839
    %v7360 = vpack.c.b16 %v6848, %v6840
    %v7361 = vpack.c.b16 %v6849, %v6841
    %v7362 = vpack.c.b16 %v6850, %v6842
    %v7363 = vpack.c.b16 %v6851, %v6843
    %v7364 = vpack.c.b16 %v6852, %v6844
    %v7365 = vpack.c.b16 %v6853, %v6845
    %7878 = vmatprep.subr.bf16.mxu0 %v6855
    %7879 = vmatpush1.bf16.msra.mxu0 %v6854
    %7880 = vmatprep.subr.bf16.mxu0 %v6863
    %7881 = vmatpush1.bf16.msra.mxu0 %v6862
    %7882 = vmatprep.subr.bf16.mxu0 %v6871
    %7883 = vmatpush1.bf16.msra.mxu0 %v6870
    %7884 = vmatprep.subr.bf16.mxu0 %v6879
    %7885 = vmatpush1.bf16.msra.mxu0 %v6878
    %7886 = vmatprep.subr.bf16.mxu0 %v6887
    %7887 = vmatpush1.bf16.msra.mxu0 %v6886
    %7888 = vmatprep.subr.bf16.mxu0 %v6895
    %7889 = vmatpush1.bf16.msra.mxu0 %v6894
    %7890 = vmatprep.subr.bf16.mxu0 %v6903
    %7891 = vmatpush1.bf16.msra.mxu0 %v6902
    %7892 = vmatprep.subr.bf16.mxu0 %v6911
    %7893 = vmatpush1.bf16.msra.mxu0 %v6910
    %7894 = vmatprep.subr.bf16.mxu0 %v6919
    %7895 = vmatpush1.bf16.msra.mxu0 %v6918
    %7896 = vmatprep.subr.bf16.mxu0 %v6927
    %7897 = vmatpush1.bf16.msra.mxu0 %v6926
    %7898 = vmatprep.subr.bf16.mxu0 %v6935
    %7899 = vmatpush1.bf16.msra.mxu0 %v6934
    %7900 = vmatprep.subr.bf16.mxu0 %v6943
    %7901 = vmatpush1.bf16.msra.mxu0 %v6942
    %7902 = vmatprep.subr.bf16.mxu0 %v6951
    %7903 = vmatpush1.bf16.msra.mxu0 %v6950
    %7904 = vmatprep.subr.bf16.mxu0 %v6959
    %7905 = vmatpush1.bf16.msra.mxu0 %v6958
    %7906 = vmatprep.subr.bf16.mxu0 %v6967
    %7907 = vmatpush1.bf16.msra.mxu0 %v6966
    %7908 = vmatprep.subr.bf16.mxu0 %v6975
    %7909 = vmatpush1.bf16.msra.mxu0 %v6974
    %7910 = vmatprep.mubr.bf16.mxu0 %v4799
    %7911 = vmatmul.mubr.bf16.gmra.mrb[0].mxu0 %v4798
    %v7912 = vpop.f32.mrb[0].mxu0
    %v7913 = vadd.f32 0.0, %v7912
    %v7914 = vpop.f32.mrb[0].mxu0
    %v7915 = vadd.f32 0.0, %v7914
    %v7916 = vpop.f32.mrb[0].mxu0
    %v7917 = vpop.f32.mrb[0].mxu0
    %7918 = vdwg.mxu0
    %7919 = vmatprep.subr.bf16.mxu0 %v6983
    %7920 = vmatpush1.bf16.msra.mxu0 %v6982
    %7921 = vmatprep.subr.bf16.mxu0 %v6991
    %7922 = vmatpush1.bf16.msra.mxu0 %v6990
    %7923 = vmatprep.subr.bf16.mxu0 %v6999
    %7924 = vmatpush1.bf16.msra.mxu0 %v6998
    %7925 = vmatprep.subr.bf16.mxu0 %v7007
    %7926 = vmatpush1.bf16.msra.mxu0 %v7006
    %7927 = vmatprep.subr.bf16.mxu0 %v7015
    %7928 = vmatpush1.bf16.msra.mxu0 %v7014
    %7929 = vmatprep.subr.bf16.mxu0 %v7023
    %7930 = vmatpush1.bf16.msra.mxu0 %v7022
    %7931 = vmatprep.subr.bf16.mxu0 %v7031
    %7932 = vmatpush1.bf16.msra.mxu0 %v7030
    %7933 = vmatprep.subr.bf16.mxu0 %v7039
    %7934 = vmatpush1.bf16.msra.mxu0 %v7038
    %7935 = vmatprep.subr.bf16.mxu0 %v7047
    %7936 = vmatpush1.bf16.msra.mxu0 %v7046
    %7937 = vmatprep.subr.bf16.mxu0 %v7055
    %7938 = vmatpush1.bf16.msra.mxu0 %v7054
    %7939 = vmatprep.subr.bf16.mxu0 %v7063
    %7940 = vmatpush1.bf16.msra.mxu0 %v7062
    %7941 = vmatprep.subr.bf16.mxu0 %v7071
    %7942 = vmatpush1.bf16.msra.mxu0 %v7070
    %7943 = vmatprep.subr.bf16.mxu0 %v7079
    %7944 = vmatpush1.bf16.msra.mxu0 %v7078
    %7945 = vmatprep.subr.bf16.mxu0 %v7087
    %7946 = vmatpush1.bf16.msra.mxu0 %v7086
    %7947 = vmatprep.subr.bf16.mxu0 %v7095
    %7948 = vmatpush1.bf16.msra.mxu0 %v7094
    %7949 = vmatprep.subr.bf16.mxu0 %v7103
    %7950 = vmatpush1.bf16.msra.mxu0 %v7102
    %7951 = vmatprep.mubr.bf16.mxu0 %v4801
    %7952 = vmatmul.mubr.bf16.gmra.mrb[0].mxu0 %v4800
    %v7953 = vpop.f32.mrb[0].mxu0
    %v7954 = vadd.f32 %v7913, %v7953
    %v7955 = vpop.f32.mrb[0].mxu0
    %v7956 = vadd.f32 %v7915, %v7955
    %v7957 = vpop.f32.mrb[0].mxu0
    %v7958 = vpop.f32.mrb[0].mxu0
    %7959 = vdwg.mxu0
    %7960 = vmatprep.subr.bf16.mxu0 %v7111
    %7961 = vmatpush1.bf16.msra.mxu0 %v7110
    %7962 = vmatprep.subr.bf16.mxu0 %v7119
    %7963 = vmatpush1.bf16.msra.mxu0 %v7118
    %7964 = vmatprep.subr.bf16.mxu0 %v7127
    %7965 = vmatpush1.bf16.msra.mxu0 %v7126
    %7966 = vmatprep.subr.bf16.mxu0 %v7135
    %7967 = vmatpush1.bf16.msra.mxu0 %v7134
    %7968 = vmatprep.subr.bf16.mxu0 %v7143
    %7969 = vmatpush1.bf16.msra.mxu0 %v7142
    %7970 = vmatprep.subr.bf16.mxu0 %v7151
    %7971 = vmatpush1.bf16.msra.mxu0 %v7150
    %7972 = vmatprep.subr.bf16.mxu0 %v7159
    %7973 = vmatpush1.bf16.msra.mxu0 %v7158
    %7974 = vmatprep.subr.bf16.mxu0 %v7167
    %7975 = vmatpush1.bf16.msra.mxu0 %v7166
    %7976 = vmatprep.subr.bf16.mxu0 %v7175
    %7977 = vmatpush1.bf16.msra.mxu0 %v7174
    %7978 = vmatprep.subr.bf16.mxu0 %v7183
    %7979 = vmatpush1.bf16.msra.mxu0 %v7182
    %7980 = vmatprep.subr.bf16.mxu0 %v7191
    %7981 = vmatpush1.bf16.msra.mxu0 %v7190
    %7982 = vmatprep.subr.bf16.mxu0 %v7199
    %7983 = vmatpush1.bf16.msra.mxu0 %v7198
    %7984 = vmatprep.subr.bf16.mxu0 %v7207
    %7985 = vmatpush1.bf16.msra.mxu0 %v7206
    %7986 = vmatprep.subr.bf16.mxu0 %v7215
    %7987 = vmatpush1.bf16.msra.mxu0 %v7214
    %7988 = vmatprep.subr.bf16.mxu0 %v7223
    %7989 = vmatpush1.bf16.msra.mxu0 %v7222
    %7990 = vmatprep.subr.bf16.mxu0 %v7231
    %7991 = vmatpush1.bf16.msra.mxu0 %v7230
    %7992 = vmatprep.mubr.bf16.mxu0 %v4803
    %7993 = vmatmul.mubr.bf16.gmra.mrb[0].mxu0 %v4802
    %v7994 = vpop.f32.mrb[0].mxu0
    %v7995 = vadd.f32 %v7954, %v7994
    %v7996 = vpop.f32.mrb[0].mxu0
    %v7997 = vadd.f32 %v7956, %v7996
    %v7998 = vpop.f32.mrb[0].mxu0
    %v7999 = vpop.f32.mrb[0].mxu0
    %8000 = vdwg.mxu0
    %8001 = vmatprep.subr.bf16.mxu0 %v7239
    %8002 = vmatpush1.bf16.msra.mxu0 %v7238
    %8003 = vmatprep.subr.bf16.mxu0 %v7247
    %8004 = vmatpush1.bf16.msra.mxu0 %v7246
    %8005 = vmatprep.subr.bf16.mxu0 %v7255
    %8006 = vmatpush1.bf16.msra.mxu0 %v7254
    %8007 = vmatprep.subr.bf16.mxu0 %v7263
    %8008 = vmatpush1.bf16.msra.mxu0 %v7262
    %8009 = vmatprep.subr.bf16.mxu0 %v7271
    %8010 = vmatpush1.bf16.msra.mxu0 %v7270
    %8011 = vmatprep.subr.bf16.mxu0 %v7279
    %8012 = vmatpush1.bf16.msra.mxu0 %v7278
    %8013 = vmatprep.subr.bf16.mxu0 %v7287
    %8014 = vmatpush1.bf16.msra.mxu0 %v7286
    %8015 = vmatprep.subr.bf16.mxu0 %v7295
    %8016 = vmatpush1.bf16.msra.mxu0 %v7294
    %8017 = vmatprep.subr.bf16.mxu0 %v7303
    %8018 = vmatpush1.bf16.msra.mxu0 %v7302
    %8019 = vmatprep.subr.bf16.mxu0 %v7311
    %8020 = vmatpush1.bf16.msra.mxu0 %v7310
    %8021 = vmatprep.subr.bf16.mxu0 %v7319
    %8022 = vmatpush1.bf16.msra.mxu0 %v7318
    %8023 = vmatprep.subr.bf16.mxu0 %v7327
    %8024 = vmatpush1.bf16.msra.mxu0 %v7326
    %8025 = vmatprep.subr.bf16.mxu0 %v7335
    %8026 = vmatpush1.bf16.msra.mxu0 %v7334
    %8027 = vmatprep.subr.bf16.mxu0 %v7343
    %8028 = vmatpush1.bf16.msra.mxu0 %v7342
    %8029 = vmatprep.subr.bf16.mxu0 %v7351
    %8030 = vmatpush1.bf16.msra.mxu0 %v7350
    %8031 = vmatprep.subr.bf16.mxu0 %v7359
    %8032 = vmatpush1.bf16.msra.mxu0 %v7358
    %8033 = vmatprep.mubr.bf16.mxu0 %v4805
    %8034 = vmatmul.mubr.bf16.gmra.mrb[0].mxu0 %v4804
    %v8035 = vpop.f32.mrb[0].mxu0
    %v8036 = vadd.f32 %v7995, %v8035
    %v8037 = vpop.f32.mrb[0].mxu0
    %v8038 = vadd.f32 %v7997, %v8037
    %v8039 = vpop.f32.mrb[0].mxu0
    %v8040 = vpop.f32.mrb[0].mxu0
    %8041 = vdwg.mxu0
    %8042 = vmatprep.subr.bf16.mxu0 %v6857
    %8043 = vmatpush1.bf16.msra.mxu0 %v6856
    %8044 = vmatprep.subr.bf16.mxu0 %v6865
    %8045 = vmatpush1.bf16.msra.mxu0 %v6864
    %8046 = vmatprep.subr.bf16.mxu0 %v6873
    %8047 = vmatpush1.bf16.msra.mxu0 %v6872
    %8048 = vmatprep.subr.bf16.mxu0 %v6881
    %8049 = vmatpush1.bf16.msra.mxu0 %v6880
    %8050 = vmatprep.subr.bf16.mxu0 %v6889
    %8051 = vmatpush1.bf16.msra.mxu0 %v6888
    %8052 = vmatprep.subr.bf16.mxu0 %v6897
    %8053 = vmatpush1.bf16.msra.mxu0 %v6896
    %8054 = vmatprep.subr.bf16.mxu0 %v6905
    %8055 = vmatpush1.bf16.msra.mxu0 %v6904
    %8056 = vmatprep.subr.bf16.mxu0 %v6913
    %8057 = vmatpush1.bf16.msra.mxu0 %v6912
    %8058 = vmatprep.subr.bf16.mxu0 %v6921
    %8059 = vmatpush1.bf16.msra.mxu0 %v6920
    %8060 = vmatprep.subr.bf16.mxu0 %v6929
    %8061 = vmatpush1.bf16.msra.mxu0 %v6928
    %8062 = vmatprep.subr.bf16.mxu0 %v6937
    %8063 = vmatpush1.bf16.msra.mxu0 %v6936
    %8064 = vmatprep.subr.bf16.mxu0 %v6945
    %8065 = vmatpush1.bf16.msra.mxu0 %v6944
    %8066 = vmatprep.subr.bf16.mxu0 %v6953
    %8067 = vmatpush1.bf16.msra.mxu0 %v6952
    %8068 = vmatprep.subr.bf16.mxu0 %v6961
    %8069 = vmatpush1.bf16.msra.mxu0 %v6960
    %8070 = vmatprep.subr.bf16.mxu0 %v6969
    %8071 = vmatpush1.bf16.msra.mxu0 %v6968
    %8072 = vmatprep.subr.bf16.mxu0 %v6977
    %8073 = vmatpush1.bf16.msra.mxu0 %v6976
    %8074 = vmatprep.mubr.bf16.mxu0 %v4799
    %8075 = vmatmul.mubr.bf16.gmra.mrb[0].mxu0 %v4798
    %v8076 = vpop.f32.mrb[0].mxu0
    %v8077 = vadd.f32 0.0, %v8076
    %v8078 = vpop.f32.mrb[0].mxu0
    %v8079 = vadd.f32 0.0, %v8078
    %v8080 = vpop.f32.mrb[0].mxu0
    %v8081 = vpop.f32.mrb[0].mxu0
    %8082 = vdwg.mxu0
    %8083 = vmatprep.subr.bf16.mxu0 %v6985
    %8084 = vmatpush1.bf16.msra.mxu0 %v6984
    %8085 = vmatprep.subr.bf16.mxu0 %v6993
    %8086 = vmatpush1.bf16.msra.mxu0 %v6992
    %8087 = vmatprep.subr.bf16.mxu0 %v7001
    %8088 = vmatpush1.bf16.msra.mxu0 %v7000
    %8089 = vmatprep.subr.bf16.mxu0 %v7009
    %8090 = vmatpush1.bf16.msra.mxu0 %v7008
    %8091 = vmatprep.subr.bf16.mxu0 %v7017
    %8092 = vmatpush1.bf16.msra.mxu0 %v7016
    %8093 = vmatprep.subr.bf16.mxu0 %v7025
    %8094 = vmatpush1.bf16.msra.mxu0 %v7024
    %8095 = vmatprep.subr.bf16.mxu0 %v7033
    %8096 = vmatpush1.bf16.msra.mxu0 %v7032
    %8097 = vmatprep.subr.bf16.mxu0 %v7041
    %8098 = vmatpush1.bf16.msra.mxu0 %v7040
    %8099 = vmatprep.subr.bf16.mxu0 %v7049
    %8100 = vmatpush1.bf16.msra.mxu0 %v7048
    %8101 = vmatprep.subr.bf16.mxu0 %v7057
    %8102 = vmatpush1.bf16.msra.mxu0 %v7056
    %8103 = vmatprep.subr.bf16.mxu0 %v7065
    %8104 = vmatpush1.bf16.msra.mxu0 %v7064
    %8105 = vmatprep.subr.bf16.mxu0 %v7073
    %8106 = vmatpush1.bf16.msra.mxu0 %v7072
    %8107 = vmatprep.subr.bf16.mxu0 %v7081
    %8108 = vmatpush1.bf16.msra.mxu0 %v7080
    %8109 = vmatprep.subr.bf16.mxu0 %v7089
    %8110 = vmatpush1.bf16.msra.mxu0 %v7088
    %8111 = vmatprep.subr.bf16.mxu0 %v7097
    %8112 = vmatpush1.bf16.msra.mxu0 %v7096
    %8113 = vmatprep.subr.bf16.mxu0 %v7105
    %8114 = vmatpush1.bf16.msra.mxu0 %v7104
    %8115 = vmatprep.mubr.bf16.mxu0 %v4801
    %8116 = vmatmul.mubr.bf16.gmra.mrb[0].mxu0 %v4800
    %v8117 = vpop.f32.mrb[0].mxu0
    %v8118 = vadd.f32 %v8077, %v8117
    %v8119 = vpop.f32.mrb[0].mxu0
    %v8120 = vadd.f32 %v8079, %v8119
    %v8121 = vpop.f32.mrb[0].mxu0
    %v8122 = vpop.f32.mrb[0].mxu0
    %8123 = vdwg.mxu0
    %8124 = vmatprep.subr.bf16.mxu0 %v7113
    %8125 = vmatpush1.bf16.msra.mxu0 %v7112
    %8126 = vmatprep.subr.bf16.mxu0 %v7121
    %8127 = vmatpush1.bf16.msra.mxu0 %v7120
    %8128 = vmatprep.subr.bf16.mxu0 %v7129
    %8129 = vmatpush1.bf16.msra.mxu0 %v7128
    %8130 = vmatprep.subr.bf16.mxu0 %v7137
    %8131 = vmatpush1.bf16.msra.mxu0 %v7136
    %8132 = vmatprep.subr.bf16.mxu0 %v7145
    %8133 = vmatpush1.bf16.msra.mxu0 %v7144
    %8134 = vmatprep.subr.bf16.mxu0 %v7153
    %8135 = vmatpush1.bf16.msra.mxu0 %v7152
    %8136 = vmatprep.subr.bf16.mxu0 %v7161
    %8137 = vmatpush1.bf16.msra.mxu0 %v7160
    %8138 = vmatprep.subr.bf16.mxu0 %v7169
    %8139 = vmatpush1.bf16.msra.mxu0 %v7168
    %8140 = vmatprep.subr.bf16.mxu0 %v7177
    %8141 = vmatpush1.bf16.msra.mxu0 %v7176
    %8142 = vmatprep.subr.bf16.mxu0 %v7185
    %8143 = vmatpush1.bf16.msra.mxu0 %v7184
    %8144 = vmatprep.subr.bf16.mxu0 %v7193
    %8145 = vmatpush1.bf16.msra.mxu0 %v7192
    %8146 = vmatprep.subr.bf16.mxu0 %v7201
    %8147 = vmatpush1.bf16.msra.mxu0 %v7200
    %8148 = vmatprep.subr.bf16.mxu0 %v7209
    %8149 = vmatpush1.bf16.msra.mxu0 %v7208
    %8150 = vmatprep.subr.bf16.mxu0 %v7217
    %8151 = vmatpush1.bf16.msra.mxu0 %v7216
    %8152 = vmatprep.subr.bf16.mxu0 %v7225
    %8153 = vmatpush1.bf16.msra.mxu0 %v7224
    %8154 = vmatprep.subr.bf16.mxu0 %v7233
    %8155 = vmatpush1.bf16.msra.mxu0 %v7232
    %8156 = vmatprep.mubr.bf16.mxu0 %v4803
    %8157 = vmatmul.mubr.bf16.gmra.mrb[0].mxu0 %v4802
    %v8158 = vpop.f32.mrb[0].mxu0
    %v8159 = vadd.f32 %v8118, %v8158
    %v8160 = vpop.f32.mrb[0].mxu0
    %v8161 = vadd.f32 %v8120, %v8160
    %v8162 = vpop.f32.mrb[0].mxu0
    %v8163 = vpop.f32.mrb[0].mxu0
    %8164 = vdwg.mxu0
    %8165 = vmatprep.subr.bf16.mxu0 %v7241
    %8166 = vmatpush1.bf16.msra.mxu0 %v7240
    %8167 = vmatprep.subr.bf16.mxu0 %v7249
    %8168 = vmatpush1.bf16.msra.mxu0 %v7248
    %8169 = vmatprep.subr.bf16.mxu0 %v7257
    %8170 = vmatpush1.bf16.msra.mxu0 %v7256
    %8171 = vmatprep.subr.bf16.mxu0 %v7265
    %8172 = vmatpush1.bf16.msra.mxu0 %v7264
    %8173 = vmatprep.subr.bf16.mxu0 %v7273
    %8174 = vmatpush1.bf16.msra.mxu0 %v7272
    %8175 = vmatprep.subr.bf16.mxu0 %v7281
    %8176 = vmatpush1.bf16.msra.mxu0 %v7280
    %8177 = vmatprep.subr.bf16.mxu0 %v7289
    %8178 = vmatpush1.bf16.msra.mxu0 %v7288
    %8179 = vmatprep.subr.bf16.mxu0 %v7297
    %8180 = vmatpush1.bf16.msra.mxu0 %v7296
    %8181 = vmatprep.subr.bf16.mxu0 %v7305
    %8182 = vmatpush1.bf16.msra.mxu0 %v7304
    %8183 = vmatprep.subr.bf16.mxu0 %v7313
    %8184 = vmatpush1.bf16.msra.mxu0 %v7312
    %8185 = vmatprep.subr.bf16.mxu0 %v7321
    %8186 = vmatpush1.bf16.msra.mxu0 %v7320
    %8187 = vmatprep.subr.bf16.mxu0 %v7329
    %8188 = vmatpush1.bf16.msra.mxu0 %v7328
    %8189 = vmatprep.subr.bf16.mxu0 %v7337
    %8190 = vmatpush1.bf16.msra.mxu0 %v7336
    %8191 = vmatprep.subr.bf16.mxu0 %v7345
    %8192 = vmatpush1.bf16.msra.mxu0 %v7344
    %8193 = vmatprep.subr.bf16.mxu0 %v7353
    %8194 = vmatpush1.bf16.msra.mxu0 %v7352
    %8195 = vmatprep.subr.bf16.mxu0 %v7361
    %8196 = vmatpush1.bf16.msra.mxu0 %v7360
    %8197 = vmatprep.mubr.bf16.mxu0 %v4805
    %8198 = vmatmul.mubr.bf16.gmra.mrb[0].mxu0 %v4804
    %v8199 = vpop.f32.mrb[0].mxu0
    %v8200 = vadd.f32 %v8159, %v8199
    %v8201 = vpop.f32.mrb[0].mxu0
    %v8202 = vadd.f32 %v8161, %v8201
    %v8203 = vpop.f32.mrb[0].mxu0
    %v8204 = vpop.f32.mrb[0].mxu0
    %8205 = vdwg.mxu0
    %8206 = vmatprep.subr.bf16.mxu0 %v6859
    %8207 = vmatpush1.bf16.msra.mxu0 %v6858
    %8208 = vmatprep.subr.bf16.mxu0 %v6867
    %8209 = vmatpush1.bf16.msra.mxu0 %v6866
    %8210 = vmatprep.subr.bf16.mxu0 %v6875
    %8211 = vmatpush1.bf16.msra.mxu0 %v6874
    %8212 = vmatprep.subr.bf16.mxu0 %v6883
    %8213 = vmatpush1.bf16.msra.mxu0 %v6882
    %8214 = vmatprep.subr.bf16.mxu0 %v6891
    %8215 = vmatpush1.bf16.msra.mxu0 %v6890
    %8216 = vmatprep.subr.bf16.mxu0 %v6899
    %8217 = vmatpush1.bf16.msra.mxu0 %v6898
    %8218 = vmatprep.subr.bf16.mxu0 %v6907
    %8219 = vmatpush1.bf16.msra.mxu0 %v6906
    %8220 = vmatprep.subr.bf16.mxu0 %v6915
    %8221 = vmatpush1.bf16.msra.mxu0 %v6914
    %8222 = vmatprep.subr.bf16.mxu0 %v6923
    %8223 = vmatpush1.bf16.msra.mxu0 %v6922
    %8224 = vmatprep.subr.bf16.mxu0 %v6931
    %8225 = vmatpush1.bf16.msra.mxu0 %v6930
    %8226 = vmatprep.subr.bf16.mxu0 %v6939
    %8227 = vmatpush1.bf16.msra.mxu0 %v6938
    %8228 = vmatprep.subr.bf16.mxu0 %v6947
    %8229 = vmatpush1.bf16.msra.mxu0 %v6946
    %8230 = vmatprep.subr.bf16.mxu0 %v6955
    %8231 = vmatpush1.bf16.msra.mxu0 %v6954
    %8232 = vmatprep.subr.bf16.mxu0 %v6963
    %8233 = vmatpush1.bf16.msra.mxu0 %v6962
    %8234 = vmatprep.subr.bf16.mxu0 %v6971
    %8235 = vmatpush1.bf16.msra.mxu0 %v6970
    %8236 = vmatprep.subr.bf16.mxu0 %v6979
    %8237 = vmatpush1.bf16.msra.mxu0 %v6978
    %8238 = vmatprep.mubr.bf16.mxu0 %v4799
    %8239 = vmatmul.mubr.bf16.gmra.mrb[0].mxu0 %v4798
    %v8240 = vpop.f32.mrb[0].mxu0
    %v8241 = vadd.f32 0.0, %v8240
    %v8242 = vpop.f32.mrb[0].mxu0
    %v8243 = vadd.f32 0.0, %v8242
    %v8244 = vpop.f32.mrb[0].mxu0
    %v8245 = vpop.f32.mrb[0].mxu0
    %8246 = vdwg.mxu0
    %8247 = vmatprep.subr.bf16.mxu0 %v6987
    %8248 = vmatpush1.bf16.msra.mxu0 %v6986
    %8249 = vmatprep.subr.bf16.mxu0 %v6995
    %8250 = vmatpush1.bf16.msra.mxu0 %v6994
    %8251 = vmatprep.subr.bf16.mxu0 %v7003
    %8252 = vmatpush1.bf16.msra.mxu0 %v7002
    %8253 = vmatprep.subr.bf16.mxu0 %v7011
    %8254 = vmatpush1.bf16.msra.mxu0 %v7010
    %8255 = vmatprep.subr.bf16.mxu0 %v7019
    %8256 = vmatpush1.bf16.msra.mxu0 %v7018
    %8257 = vmatprep.subr.bf16.mxu0 %v7027
    %8258 = vmatpush1.bf16.msra.mxu0 %v7026
    %8259 = vmatprep.subr.bf16.mxu0 %v7035
    %8260 = vmatpush1.bf16.msra.mxu0 %v7034
    %8261 = vmatprep.subr.bf16.mxu0 %v7043
    %8262 = vmatpush1.bf16.msra.mxu0 %v7042
    %8263 = vmatprep.subr.bf16.mxu0 %v7051
    %8264 = vmatpush1.bf16.msra.mxu0 %v7050
    %8265 = vmatprep.subr.bf16.mxu0 %v7059
    %8266 = vmatpush1.bf16.msra.mxu0 %v7058
    %8267 = vmatprep.subr.bf16.mxu0 %v7067
    %8268 = vmatpush1.bf16.msra.mxu0 %v7066
    %8269 = vmatprep.subr.bf16.mxu0 %v7075
    %8270 = vmatpush1.bf16.msra.mxu0 %v7074
    %8271 = vmatprep.subr.bf16.mxu0 %v7083
    %8272 = vmatpush1.bf16.msra.mxu0 %v7082
    %8273 = vmatprep.subr.bf16.mxu0 %v7091
    %8274 = vmatpush1.bf16.msra.mxu0 %v7090
    %8275 = vmatprep.subr.bf16.mxu0 %v7099
    %8276 = vmatpush1.bf16.msra.mxu0 %v7098
    %8277 = vmatprep.subr.bf16.mxu0 %v7107
    %8278 = vmatpush1.bf16.msra.mxu0 %v7106
    %8279 = vmatprep.mubr.bf16.mxu0 %v4801
    %8280 = vmatmul.mubr.bf16.gmra.mrb[0].mxu0 %v4800
    %v8281 = vpop.f32.mrb[0].mxu0
    %v8282 = vadd.f32 %v8241, %v8281
    %v8283 = vpop.f32.mrb[0].mxu0
    %v8284 = vadd.f32 %v8243, %v8283
    %v8285 = vpop.f32.mrb[0].mxu0
    %v8286 = vpop.f32.mrb[0].mxu0
    %8287 = vdwg.mxu0
    %8288 = vmatprep.subr.bf16.mxu0 %v7115
    %8289 = vmatpush1.bf16.msra.mxu0 %v7114
    %8290 = vmatprep.subr.bf16.mxu0 %v7123
    %8291 = vmatpush1.bf16.msra.mxu0 %v7122
    %8292 = vmatprep.subr.bf16.mxu0 %v7131
    %8293 = vmatpush1.bf16.msra.mxu0 %v7130
    %8294 = vmatprep.subr.bf16.mxu0 %v7139
    %8295 = vmatpush1.bf16.msra.mxu0 %v7138
    %8296 = vmatprep.subr.bf16.mxu0 %v7147
    %8297 = vmatpush1.bf16.msra.mxu0 %v7146
    %8298 = vmatprep.subr.bf16.mxu0 %v7155
    %8299 = vmatpush1.bf16.msra.mxu0 %v7154
    %8300 = vmatprep.subr.bf16.mxu0 %v7163
    %8301 = vmatpush1.bf16.msra.mxu0 %v7162
    %8302 = vmatprep.subr.bf16.mxu0 %v7171
    %8303 = vmatpush1.bf16.msra.mxu0 %v7170
    %8304 = vmatprep.subr.bf16.mxu0 %v7179
    %8305 = vmatpush1.bf16.msra.mxu0 %v7178
    %8306 = vmatprep.subr.bf16.mxu0 %v7187
    %8307 = vmatpush1.bf16.msra.mxu0 %v7186
    %8308 = vmatprep.subr.bf16.mxu0 %v7195
    %8309 = vmatpush1.bf16.msra.mxu0 %v7194
    %8310 = vmatprep.subr.bf16.mxu0 %v7203
    %8311 = vmatpush1.bf16.msra.mxu0 %v7202
    %8312 = vmatprep.subr.bf16.mxu0 %v7211
    %8313 = vmatpush1.bf16.msra.mxu0 %v7210
    %8314 = vmatprep.subr.bf16.mxu0 %v7219
    %8315 = vmatpush1.bf16.msra.mxu0 %v7218
    %8316 = vmatprep.subr.bf16.mxu0 %v7227
    %8317 = vmatpush1.bf16.msra.mxu0 %v7226
    %8318 = vmatprep.subr.bf16.mxu0 %v7235
    %8319 = vmatpush1.bf16.msra.mxu0 %v7234
    %8320 = vmatprep.mubr.bf16.mxu0 %v4803
    %8321 = vmatmul.mubr.bf16.gmra.mrb[0].mxu0 %v4802
    %v8322 = vpop.f32.mrb[0].mxu0
    %v8323 = vadd.f32 %v8282, %v8322
    %v8324 = vpop.f32.mrb[0].mxu0
    %v8325 = vadd.f32 %v8284, %v8324
    %v8326 = vpop.f32.mrb[0].mxu0
    %v8327 = vpop.f32.mrb[0].mxu0
    %8328 = vdwg.mxu0
    %8329 = vmatprep.subr.bf16.mxu0 %v7243
    %8330 = vmatpush1.bf16.msra.mxu0 %v7242
    %8331 = vmatprep.subr.bf16.mxu0 %v7251
    %8332 = vmatpush1.bf16.msra.mxu0 %v7250
    %8333 = vmatprep.subr.bf16.mxu0 %v7259
    %8334 = vmatpush1.bf16.msra.mxu0 %v7258
    %8335 = vmatprep.subr.bf16.mxu0 %v7267
    %8336 = vmatpush1.bf16.msra.mxu0 %v7266
    %8337 = vmatprep.subr.bf16.mxu0 %v7275
    %8338 = vmatpush1.bf16.msra.mxu0 %v7274
    %8339 = vmatprep.subr.bf16.mxu0 %v7283
    %8340 = vmatpush1.bf16.msra.mxu0 %v7282
    %8341 = vmatprep.subr.bf16.mxu0 %v7291
    %8342 = vmatpush1.bf16.msra.mxu0 %v7290
    %8343 = vmatprep.subr.bf16.mxu0 %v7299
    %8344 = vmatpush1.bf16.msra.mxu0 %v7298
    %8345 = vmatprep.subr.bf16.mxu0 %v7307
    %8346 = vmatpush1.bf16.msra.mxu0 %v7306
    %8347 = vmatprep.subr.bf16.mxu0 %v7315
    %8348 = vmatpush1.bf16.msra.mxu0 %v7314
    %8349 = vmatprep.subr.bf16.mxu0 %v7323
    %8350 = vmatpush1.bf16.msra.mxu0 %v7322
    %8351 = vmatprep.subr.bf16.mxu0 %v7331
    %8352 = vmatpush1.bf16.msra.mxu0 %v7330
    %8353 = vmatprep.subr.bf16.mxu0 %v7339
    %8354 = vmatpush1.bf16.msra.mxu0 %v7338
    %8355 = vmatprep.subr.bf16.mxu0 %v7347
    %8356 = vmatpush1.bf16.msra.mxu0 %v7346
    %8357 = vmatprep.subr.bf16.mxu0 %v7355
    %8358 = vmatpush1.bf16.msra.mxu0 %v7354
    %8359 = vmatprep.subr.bf16.mxu0 %v7363
    %8360 = vmatpush1.bf16.msra.mxu0 %v7362
    %8361 = vmatprep.mubr.bf16.mxu0 %v4805
    %8362 = vmatmul.mubr.bf16.gmra.mrb[0].mxu0 %v4804
    %v8363 = vpop.f32.mrb[0].mxu0
    %v8364 = vadd.f32 %v8323, %v8363
    %v8365 = vpop.f32.mrb[0].mxu0
    %v8366 = vadd.f32 %v8325, %v8365
    %v8367 = vpop.f32.mrb[0].mxu0
    %v8368 = vpop.f32.mrb[0].mxu0
    %8369 = vdwg.mxu0
    %8370 = vmatprep.subr.bf16.mxu0 %v6861
    %8371 = vmatpush1.bf16.msra.mxu0 %v6860
    %8372 = vmatprep.subr.bf16.mxu0 %v6869
    %8373 = vmatpush1.bf16.msra.mxu0 %v6868
    %8374 = vmatprep.subr.bf16.mxu0 %v6877
    %8375 = vmatpush1.bf16.msra.mxu0 %v6876
    %8376 = vmatprep.subr.bf16.mxu0 %v6885
    %8377 = vmatpush1.bf16.msra.mxu0 %v6884
    %8378 = vmatprep.subr.bf16.mxu0 %v6893
    %8379 = vmatpush1.bf16.msra.mxu0 %v6892
    %8380 = vmatprep.subr.bf16.mxu0 %v6901
    %8381 = vmatpush1.bf16.msra.mxu0 %v6900
    %8382 = vmatprep.subr.bf16.mxu0 %v6909
    %8383 = vmatpush1.bf16.msra.mxu0 %v6908
    %8384 = vmatprep.subr.bf16.mxu0 %v6917
    %8385 = vmatpush1.bf16.msra.mxu0 %v6916
    %8386 = vmatprep.subr.bf16.mxu0 %v6925
    %8387 = vmatpush1.bf16.msra.mxu0 %v6924
    %8388 = vmatprep.subr.bf16.mxu0 %v6933
    %8389 = vmatpush1.bf16.msra.mxu0 %v6932
    %8390 = vmatprep.subr.bf16.mxu0 %v6941
    %8391 = vmatpush1.bf16.msra.mxu0 %v6940
    %8392 = vmatprep.subr.bf16.mxu0 %v6949
    %8393 = vmatpush1.bf16.msra.mxu0 %v6948
    %8394 = vmatprep.subr.bf16.mxu0 %v6957
    %8395 = vmatpush1.bf16.msra.mxu0 %v6956
    %8396 = vmatprep.subr.bf16.mxu0 %v6965
    %8397 = vmatpush1.bf16.msra.mxu0 %v6964
    %8398 = vmatprep.subr.bf16.mxu0 %v6973
    %8399 = vmatpush1.bf16.msra.mxu0 %v6972
    %8400 = vmatprep.subr.bf16.mxu0 %v6981
    %8401 = vmatpush1.bf16.msra.mxu0 %v6980
    %8402 = vmatprep.mubr.bf16.mxu0 %v4799
    %8403 = vmatmul.mubr.bf16.gmra.mrb[0].mxu0 %v4798
    %v8404 = vpop.f32.mrb[0].mxu0
    %v8405 = vadd.f32 0.0, %v8404
    %v8406 = vpop.f32.mrb[0].mxu0
    %v8407 = vadd.f32 0.0, %v8406
    %v8408 = vpop.f32.mrb[0].mxu0
    %v8409 = vpop.f32.mrb[0].mxu0
    %8410 = vdwg.mxu0
    %8411 = vmatprep.subr.bf16.mxu0 %v6989
    %8412 = vmatpush1.bf16.msra.mxu0 %v6988
    %8413 = vmatprep.subr.bf16.mxu0 %v6997
    %8414 = vmatpush1.bf16.msra.mxu0 %v6996
    %8415 = vmatprep.subr.bf16.mxu0 %v7005
    %8416 = vmatpush1.bf16.msra.mxu0 %v7004
    %8417 = vmatprep.subr.bf16.mxu0 %v7013
    %8418 = vmatpush1.bf16.msra.mxu0 %v7012
    %8419 = vmatprep.subr.bf16.mxu0 %v7021
    %8420 = vmatpush1.bf16.msra.mxu0 %v7020
    %8421 = vmatprep.subr.bf16.mxu0 %v7029
    %8422 = vmatpush1.bf16.msra.mxu0 %v7028
    %8423 = vmatprep.subr.bf16.mxu0 %v7037
    %8424 = vmatpush1.bf16.msra.mxu0 %v7036
    %8425 = vmatprep.subr.bf16.mxu0 %v7045
    %8426 = vmatpush1.bf16.msra.mxu0 %v7044
    %8427 = vmatprep.subr.bf16.mxu0 %v7053
    %8428 = vmatpush1.bf16.msra.mxu0 %v7052
    %8429 = vmatprep.subr.bf16.mxu0 %v7061
    %8430 = vmatpush1.bf16.msra.mxu0 %v7060
    %8431 = vmatprep.subr.bf16.mxu0 %v7069
    %8432 = vmatpush1.bf16.msra.mxu0 %v7068
    %8433 = vmatprep.subr.bf16.mxu0 %v7077
    %8434 = vmatpush1.bf16.msra.mxu0 %v7076
    %8435 = vmatprep.subr.bf16.mxu0 %v7085
    %8436 = vmatpush1.bf16.msra.mxu0 %v7084
    %8437 = vmatprep.subr.bf16.mxu0 %v7093
    %8438 = vmatpush1.bf16.msra.mxu0 %v7092
    %8439 = vmatprep.subr.bf16.mxu0 %v7101
    %8440 = vmatpush1.bf16.msra.mxu0 %v7100
    %8441 = vmatprep.subr.bf16.mxu0 %v7109
    %8442 = vmatpush1.bf16.msra.mxu0 %v7108
    %8443 = vmatprep.mubr.bf16.mxu0 %v4801
    %8444 = vmatmul.mubr.bf16.gmra.mrb[0].mxu0 %v4800
    %v8445 = vpop.f32.mrb[0].mxu0
    %v8446 = vadd.f32 %v8405, %v8445
    %v8447 = vpop.f32.mrb[0].mxu0
    %v8448 = vadd.f32 %v8407, %v8447
    %v8449 = vpop.f32.mrb[0].mxu0
    %v8450 = vpop.f32.mrb[0].mxu0
    %8451 = vdwg.mxu0
    %8452 = vmatprep.subr.bf16.mxu0 %v7117
    %8453 = vmatpush1.bf16.msra.mxu0 %v7116
    %8454 = vmatprep.subr.bf16.mxu0 %v7125
    %8455 = vmatpush1.bf16.msra.mxu0 %v7124
    %8456 = vmatprep.subr.bf16.mxu0 %v7133
    %8457 = vmatpush1.bf16.msra.mxu0 %v7132
    %8458 = vmatprep.subr.bf16.mxu0 %v7141
    %8459 = vmatpush1.bf16.msra.mxu0 %v7140
    %8460 = vmatprep.subr.bf16.mxu0 %v7149
    %8461 = vmatpush1.bf16.msra.mxu0 %v7148
    %8462 = vmatprep.subr.bf16.mxu0 %v7157
    %8463 = vmatpush1.bf16.msra.mxu0 %v7156
    %8464 = vmatprep.subr.bf16.mxu0 %v7165
    %8465 = vmatpush1.bf16.msra.mxu0 %v7164
    %8466 = vmatprep.subr.bf16.mxu0 %v7173
    %8467 = vmatpush1.bf16.msra.mxu0 %v7172
    %8468 = vmatprep.subr.bf16.mxu0 %v7181
    %8469 = vmatpush1.bf16.msra.mxu0 %v7180
    %8470 = vmatprep.subr.bf16.mxu0 %v7189
    %8471 = vmatpush1.bf16.msra.mxu0 %v7188
    %8472 = vmatprep.subr.bf16.mxu0 %v7197
    %8473 = vmatpush1.bf16.msra.mxu0 %v7196
    %8474 = vmatprep.subr.bf16.mxu0 %v7205
    %8475 = vmatpush1.bf16.msra.mxu0 %v7204
    %8476 = vmatprep.subr.bf16.mxu0 %v7213
    %8477 = vmatpush1.bf16.msra.mxu0 %v7212
    %8478 = vmatprep.subr.bf16.mxu0 %v7221
    %8479 = vmatpush1.bf16.msra.mxu0 %v7220
    %8480 = vmatprep.subr.bf16.mxu0 %v7229
    %8481 = vmatpush1.bf16.msra.mxu0 %v7228
    %8482 = vmatprep.subr.bf16.mxu0 %v7237
    %8483 = vmatpush1.bf16.msra.mxu0 %v7236
    %8484 = vmatprep.mubr.bf16.mxu0 %v4803
    %8485 = vmatmul.mubr.bf16.gmra.mrb[0].mxu0 %v4802
    %v8486 = vpop.f32.mrb[0].mxu0
    %v8487 = vadd.f32 %v8446, %v8486
    %v8488 = vpop.f32.mrb[0].mxu0
    %v8489 = vadd.f32 %v8448, %v8488
    %v8490 = vpop.f32.mrb[0].mxu0
    %v8491 = vpop.f32.mrb[0].mxu0
    %8492 = vdwg.mxu0
    %8493 = vmatprep.subr.bf16.mxu0 %v7245
    %8494 = vmatpush1.bf16.msra.mxu0 %v7244
    %8495 = vmatprep.subr.bf16.mxu0 %v7253
    %8496 = vmatpush1.bf16.msra.mxu0 %v7252
    %8497 = vmatprep.subr.bf16.mxu0 %v7261
    %8498 = vmatpush1.bf16.msra.mxu0 %v7260
    %8499 = vmatprep.subr.bf16.mxu0 %v7269
    %8500 = vmatpush1.bf16.msra.mxu0 %v7268
    %8501 = vmatprep.subr.bf16.mxu0 %v7277
    %8502 = vmatpush1.bf16.msra.mxu0 %v7276
    %8503 = vmatprep.subr.bf16.mxu0 %v7285
    %8504 = vmatpush1.bf16.msra.mxu0 %v7284
    %8505 = vmatprep.subr.bf16.mxu0 %v7293
    %8506 = vmatpush1.bf16.msra.mxu0 %v7292
    %8507 = vmatprep.subr.bf16.mxu0 %v7301
    %8508 = vmatpush1.bf16.msra.mxu0 %v7300
    %8509 = vmatprep.subr.bf16.mxu0 %v7309
    %8510 = vmatpush1.bf16.msra.mxu0 %v7308
    %8511 = vmatprep.subr.bf16.mxu0 %v7317
    %8512 = vmatpush1.bf16.msra.mxu0 %v7316
    %8513 = vmatprep.subr.bf16.mxu0 %v7325
    %8514 = vmatpush1.bf16.msra.mxu0 %v7324
    %8515 = vmatprep.subr.bf16.mxu0 %v7333
    %8516 = vmatpush1.bf16.msra.mxu0 %v7332
    %8517 = vmatprep.subr.bf16.mxu0 %v7341
    %8518 = vmatpush1.bf16.msra.mxu0 %v7340
    %8519 = vmatprep.subr.bf16.mxu0 %v7349
    %8520 = vmatpush1.bf16.msra.mxu0 %v7348
    %8521 = vmatprep.subr.bf16.mxu0 %v7357
    %8522 = vmatpush1.bf16.msra.mxu0 %v7356
    %8523 = vmatprep.subr.bf16.mxu0 %v7365
    %8524 = vmatpush1.bf16.msra.mxu0 %v7364
    %8525 = vmatprep.mubr.bf16.mxu0 %v4805
    %8526 = vmatmul.mubr.bf16.gmra.mrb[0].mxu0 %v4804
    %v8527 = vpop.f32.mrb[0].mxu0
    %v8528 = vadd.f32 %v8487, %v8527
    %v8529 = vpop.f32.mrb[0].mxu0
    %v8530 = vadd.f32 %v8489, %v8529
    %v8531 = vpop.f32.mrb[0].mxu0
    %v8532 = vpop.f32.mrb[0].mxu0
    %8533 = vdwg.mxu0
    %v8534 = vmax.f32 %v8036, 0.0
    %v8535 = vmax.f32 %v8038, 0.0
    %v8536 = vmax.f32 %v8200, 0.0
    %v8537 = vmax.f32 %v8202, 0.0
    %v8538 = vmax.f32 %v8364, 0.0
    %v8539 = vmax.f32 %v8366, 0.0
    %v8540 = vmax.f32 %v8528, 0.0
    %v8541 = vmax.f32 %v8530, 0.0
    %8542 = vst [vmem:[#allocation19] sm:$0xff] %v8534
    %8543 = vst [vmem:[#allocation19 + $0x8] sm:$0xff] %v8535
    %8544 = vst [vmem:[#allocation19 + $0x10] sm:$0xff] %v8536
    %8545 = vst [vmem:[#allocation19 + $0x18] sm:$0xff] %v8537
    %8546 = vst [vmem:[#allocation19 + $0x20] sm:$0xff] %v8538
    %8547 = vst [vmem:[#allocation19 + $0x28] sm:$0xff] %v8539
    %8548 = vst [vmem:[#allocation19 + $0x30] sm:$0xff] %v8540
    %8549 = vst [vmem:[#allocation19 + $0x38] sm:$0xff] %v8541
    // Predicated region
    $region86: #{tpu_custom_call.1} parent=1 // pred_check
      _
    $region87: #{tpu_custom_call.1} parent=1 // pred_check_branch
      %8551 = sbr.rel (0) target = $region89
    $region88: #{tpu_custom_call.1} parent=1 // pred_region
      %s8553 = ssub.s32 1024, 1024
      %8554 = vsyncadd [#allocation4], %s8553
      %s8556 = sshll.u32 [#allocation19], 4
      %s8557 = int_to_ptr.vmem [resolvable:$true] %s8556
      %8559 = dma.vmem_to_hbm [thread:$0]  %s8557, 1024, %s11, [#allocation4]
    $region89: #{tpu_custom_call.1} parent=1 // pred_fallthru
      _
    // Predicated region
    $region90: #{tpu_custom_call.1} parent=1 // pred_check
      _
    $region91: #{tpu_custom_call.1} parent=1 // pred_check_branch
      %8561 = sbr.rel (0) target = $region93
    $region92: #{tpu_custom_call.1} parent=1 // pred_region
      %8562 = dma.done [#allocation4], 1024
    $region93: #{tpu_custom_call.1} parent=1 // pred_fallthru
      _
    %8563 = vsyncpa [#allocation3], 1
    %8564 = vsyncpa [#allocation6], 1
    %8565 = vsyncpa [#allocation9], 1
    %8566 = vsyncpa [#allocation12], 1
    %8567 = vsyncpa [#allocation15], 1
    %8568 = vsyncpa [#allocation18], 1
    %8569 = vsyncpa [#allocation4], 1

</llo_original>
